<compile_context>
chip_gen: v7x
topology: tpu7x:2x2x1
jax: 0.10.0
libtpu: 0.0.40
codegen_flags: <defaults>
</compile_context>

<pallas_src>
import functools
from typing import Tuple

import jax
import jax.numpy as jnp
from jax import lax
from jax.experimental import pallas as pl
from jax.experimental.pallas import tpu as pltpu

LANE = 128                 # channel padding granularity (TPU lane width)
MAX_ROWS_PER_TILE = 1024   # split the per-sample row dimension only above this


def _round_up(x: int, m: int) -> int:
    return ((x + m - 1) // m) * m


# ---------------------------------------------------------------------------
# Pallas kernel: fused (im2col-patches x weight) matmul + bias + optional SiLU
# ---------------------------------------------------------------------------
def _conv_matmul_kernel(p_ref, w_ref, b_ref, o_ref, *, apply_silu: bool):
    # p_ref: (1, TM, K)   w_ref: (K, Cp)   b_ref: (1, Cp)   o_ref: (1, TM, Cp)
    acc = jnp.dot(p_ref[0], w_ref[...], preferred_element_type=jnp.float32)
    acc = acc + b_ref[...]
    if apply_silu:
        acc = acc * jax.nn.sigmoid(acc)     # SiLU fused with the (lane-dense) store
    o_ref[0] = acc.astype(o_ref.dtype)


def _pallas_conv_matmul(patches, weight, bias, apply_silu, mxu_dtype):
    """patches: (N, M, K) f32; weight: (K, Cp) f32; bias: (Cp,) f32.
    K and Cp are multiples of 128, so MXU operands and output stores are lane-dense."""
    N, M, K = patches.shape
    Cp = weight.shape[1]

    if jnp.dtype(mxu_dtype) != jnp.dtype(jnp.float32):
        # Optional v6e/v7x fast path: bf16 MXU inputs, f32 accumulate/bias/SiLU.
        patches = patches.astype(mxu_dtype)
        weight = weight.astype(mxu_dtype)
    bias2d = bias.reshape(1, Cp).astype(jnp.float32)

    # Whole-sample tile unless the row count is very large (real-sized inputs).
    if M <= MAX_ROWS_PER_TILE:
        tm, m_pad = M, M
    else:
        tm = MAX_ROWS_PER_TILE
        m_pad = _round_up(M, tm)
        patches = jnp.pad(patches, ((0, 0), (0, m_pad - M), (0, 0)))

    itemsize = jnp.dtype(patches.dtype).itemsize
    cost = pl.CostEstimate(
        flops=2 * N * m_pad * K * Cp,
        transcendentals=(N * m_pad * Cp) if apply_silu else 0,
        bytes_accessed=int(N * m_pad * K * itemsize + K * Cp * itemsize
                           + Cp * 4 + N * m_pad * Cp * 4),
    )

    kernel = functools.partial(_conv_matmul_kernel, apply_silu=apply_silu)
    out = pl.pallas_call(
        kernel,
        out_shape=jax.ShapeDtypeStruct((N, m_pad, Cp), jnp.float32),
        grid_spec=pltpu.PrefetchScalarGridSpec(
            num_scalar_prefetch=0,
            grid=(N, m_pad // tm),
            in_specs=[
                pl.BlockSpec((1, tm, K), lambda n, m: (n, m, 0)),
                pl.BlockSpec((K, Cp), lambda n, m: (0, 0)),
                pl.BlockSpec((1, Cp), lambda n, m: (0, 0)),
            ],
            out_specs=pl.BlockSpec((1, tm, Cp), lambda n, m: (n, m, 0)),
        ),
        compiler_params=pltpu.CompilerParams(
            dimension_semantics=("parallel", "parallel")),
        cost_estimate=cost,
    )(patches, weight, bias2d)
    return out[:, :M] if m_pad != M else out


# ---------------------------------------------------------------------------
# Conv2d (NHWC / HWIO, channel-padded) via im2col + Pallas fused matmul
# ---------------------------------------------------------------------------
def conv2d_pallas_nhwc(x, w, b, stride, padding, apply_silu,
                       mxu_dtype=jnp.float32):
    """x: (N,H,W,Cin_p) channel-padded NHWC; w: (KH,KW,Cin_p,Cout_p) HWIO with
    zero-padded channels; b: (Cout_p,). PyTorch-style symmetric padding (ph, pw)."""
    N, H, W, cin_p = x.shape
    KH, KW, wcin, cout_p = w.shape
    assert wcin == cin_p
    sh, sw = stride
    ph, pw = padding
    Hout = (H + 2 * ph - KH) // sh + 1
    Wout = (W + 2 * pw - KW) // sw + 1

    xp = jnp.pad(x, ((0, 0), (ph, ph), (pw, pw), (0, 0)))

    # im2col (XLA glue): KH*KW shifted/strided views concatenated on channels.
    # TODO(synk): fold this patch extraction (and ultimately the whole conv stack)
    # into the kernel via strided in-kernel reads to drop the KH*KW-duplicated HBM
    # patch tensor; kept in the wrapper here for lowering robustness.
    taps = []
    for i in range(KH):
        for j in range(KW):
            taps.append(xp[:, i:i + sh * (Hout - 1) + 1:sh,
                            j:j + sw * (Wout - 1) + 1:sw, :])
    patches = jnp.concatenate(taps, axis=-1)               # (N,Hout,Wout,KH*KW*Cin_p)
    patches = patches.reshape(N, Hout * Wout, KH * KW * cin_p)

    out = _pallas_conv_matmul(patches, w.reshape(KH * KW * cin_p, cout_p),
                              b, apply_silu, mxu_dtype)
    return out.reshape(N, Hout, Wout, cout_p)


# ---------------------------------------------------------------------------
# Parameter construction (Gaussian init; conv_out zeroed as in zero_module)
# ---------------------------------------------------------------------------
def build_params(key,
                 conditioning_channels: int,
                 block_out_channels: Tuple[int, ...],
                 conditioning_embedding_channels: int,
                 zero_final: bool = True):
    # Each layer: (Cin, Cout, stride, padding, apply_silu)
    specs = [(conditioning_channels, block_out_channels[0], (1, 1), (1, 1), True)]
    for i in range(len(block_out_channels) - 2):
        ci, co = block_out_channels[i], block_out_channels[i + 1]
        specs.append((ci, ci, (1, 1), (1, 1), True))
        specs.append((ci, co, (2, 2), (2, 1), True))
    ci, co = block_out_channels[-2], block_out_channels[-1]
    specs.append((ci, ci, (1, 1), (2, 1), True))
    specs.append((ci, co, (2, 1), (2, 1), True))
    specs.append((co, conditioning_embedding_channels, (1, 1), (1, 1), False))

    params = []
    keys = jax.random.split(key, len(specs))
    for idx, (cin, cout, stride, padding, act) in enumerate(specs):
        is_conv_out = (idx == len(specs) - 1)
        if is_conv_out and zero_final:
            w = jnp.zeros((3, 3, cin, cout), jnp.float32)
            b = jnp.zeros((cout,), jnp.float32)
        else:
            scale = (2.0 / (9.0 * cin)) ** 0.5     # keep activations O(1) through the stack
            w = scale * jax.random.normal(keys[idx], (3, 3, cin, cout), jnp.float32)
            b = 0.2 * jax.random.normal(
                jax.random.fold_in(keys[idx], 1), (cout,), jnp.float32)
        params.append({"w": w, "b": b, "stride": stride,
                       "padding": padding, "silu": act})
    return params


# ---------------------------------------------------------------------------
# Forward pass (matches BEVControlNetConditioningEmbedding.forward)
# ---------------------------------------------------------------------------
def bev_controlnet_embedding_forward(conditioning_nchw, params, repeat=6,
                                     mxu_dtype=jnp.float32):
    # NCHW -> NHWC, pad channels to a multiple of 128 (lane-dense everywhere).
    x = jnp.transpose(conditioning_nchw, (0, 2, 3, 1)).astype(jnp.float32)
    cpad = _round_up(x.shape[-1], LANE)
    x = jnp.pad(x, ((0, 0), (0, 0), (0, 0), (0, cpad - x.shape[-1])))

    for layer in params:
        w, b = layer["w"], layer["b"]
        KH, KW, cin, cout = w.shape
        cin_p = _round_up(cin, LANE)
        cout_p = _round_up(cout, LANE)
        assert cin_p == x.shape[-1]
        w_p = jnp.pad(w, ((0, 0), (0, 0), (0, cin_p - cin), (0, cout_p - cout)))
        b_p = jnp.pad(b, (0, cout_p - cout))
        x = conv2d_pallas_nhwc(x, w_p, b_p, layer["stride"], layer["padding"],
                               layer["silu"], mxu_dtype=mxu_dtype)

    cout_final = params[-1]["w"].shape[-1]
    x = x[..., :cout_final]                      # drop channel padding once, at the end
    x = jnp.transpose(x, (0, 3, 1, 2))           # NHWC -> NCHW
    # repeat(conditioning, 'b ... -> (b repeat) ...') hoisted to AFTER the conv
    # stack: convs act per-sample, so this is mathematically identical and 6x cheaper.
    return jnp.repeat(x, repeat, axis=0)


# ---------------------------------------------------------------------------
# Pure-JAX reference: follows the PyTorch module exactly (repeat FIRST, lax.conv)
# ---------------------------------------------------------------------------
def reference_forward(conditioning_nchw, params, repeat=6):
    x = jnp.repeat(conditioning_nchw, repeat, axis=0)
    x = jnp.transpose(x, (0, 2, 3, 1)).astype(jnp.float32)
    for layer in params:
        ph, pw = layer["padding"]
        y = lax.conv_general_dilated(
            x, layer["w"], window_strides=layer["stride"],
            padding=[(ph, ph), (pw, pw)],
            dimension_numbers=("NHWC", "HWIO", "NHWC"),
            precision=lax.Precision.HIGHEST)
        y = y + layer["b"]
        if layer["silu"]:
            y = y * jax.nn.sigmoid(y)
        x = y
    return jnp.transpose(x, (0, 3, 1, 2))


if __name__ == "__main__":
    key = jax.random.PRNGKey(0)
    k_x, k_p = jax.random.split(key)

    # Small shapes consistent with the module:
    #   conditioning_size=(4, 16, 16), block_out_channels=(8, 16, 32, 64),
    #   conditioning_embedding_channels=32, batch=2.
    cond_channels = 4
    block_out = (8, 16, 32, 64)
    embed_channels = 32
    x = jax.random.normal(k_x, (2, cond_channels, 16, 16), jnp.float32)  # NCHW

    # (1) Spec-faithful params (conv_out zero-initialised, as zero_module does).
    params = build_params(k_p, cond_channels, block_out, embed_channels,
                          zero_final=True)
    fwd = jax.jit(functools.partial(bev_controlnet_embedding_forward, params=params))
    out = jax.block_until_ready(fwd(x))
    ref = jax.block_until_ready(reference_forward(x, params))
    assert out.shape == ref.shape, (out.shape, ref.shape)
    assert out.shape[0] == 2 * 6 and out.shape[1] == embed_channels, out.shape
    assert jnp.allclose(out, ref, atol=1e-6), "spec (zero conv_out) mismatch"

    # (2) Non-zero final conv so the comparison actually exercises the Pallas path
    #     (with zero_module the real output is identically zero -> vacuous check).
    params_nz = build_params(k_p, cond_channels, block_out, embed_channels,
                             zero_final=False)
    fwd_nz = jax.jit(functools.partial(bev_controlnet_embedding_forward,
                                       params=params_nz))
    out_nz = jax.block_until_ready(fwd_nz(x))
    ref_nz = jax.block_until_ready(reference_forward(x, params_nz))
    assert out_nz.shape == ref_nz.shape, (out_nz.shape, ref_nz.shape)
    assert float(jnp.max(jnp.abs(ref_nz))) > 0.1, "degenerate validation reference"
    # Loose-ish tolerance: conv-vs-matmul contraction order / default MXU f32
    # precision may differ slightly; real bugs (taps/stride/bias/SiLU) are O(1).
    assert jnp.allclose(out_nz, ref_nz, atol=5e-2, rtol=5e-2), \
        "mismatch vs conv reference"

    print("KERNEL_OK")
</pallas_src>

<mosaic_0001>
module attributes {stable_mosaic.version = 11 : i64} {
  func.func @_conv_matmul_kernel(%arg0: i32, %arg1: i32, %arg2: memref<1x256x1152xf32, #tpu.memory_space<vmem>>, %arg3: memref<1152x128xf32, #tpu.memory_space<vmem>>, %arg4: memref<1x128xf32, #tpu.memory_space<vmem>>, %arg5: memref<1x256x128xf32, #tpu.memory_space<vmem>>) attributes {dimension_semantics = [#tpu.dimension_semantics<parallel>, #tpu.dimension_semantics<parallel>], iteration_bounds = array<i64: 2, 1>, scalar_prefetch = 0 : i64, scratch_operands = 0 : i64, tpu.core_type = #tpu.core_type<tc>, window_params = [{transform_indices = @transform_0, window_bounds = array<i64: 1, 256, 1152>}, {pipeline_mode = #tpu.pipeline_mode<synchronous>, transform_indices = @transform_1, window_bounds = array<i64: 1152, 128>}, {pipeline_mode = #tpu.pipeline_mode<synchronous>, transform_indices = @transform_2, window_bounds = array<i64: 1, 128>}, {transform_indices = @transform_3, window_bounds = array<i64: 1, 256, 128>}]} {
    %c0 = arith.constant 0 : index
    %c0_0 = arith.constant 0 : index
    %c0_1 = arith.constant 0 : index
    %0 = vector.load %arg2[%c0, %c0_0, %c0_1] : memref<1x256x1152xf32, #tpu.memory_space<vmem>>, vector<1x256x1152xf32>
    %1 = vector.shape_cast %0 : vector<1x256x1152xf32> to vector<256x1152xf32>
    %c0_2 = arith.constant 0 : index
    %c0_3 = arith.constant 0 : index
    %2 = vector.load %arg3[%c0_2, %c0_3] : memref<1152x128xf32, #tpu.memory_space<vmem>>, vector<1152x128xf32>
    %cst = arith.constant dense<0.000000e+00> : vector<256x128xf32>
    %3 = tpu.matmul %1, %2, %cst {dimension_numbers = #tpu.dot_dimension_numbers<[1], [0], [0], [1], [0, 0, 1, 1], [], []>} : vector<256x1152xf32>, vector<1152x128xf32>, vector<256x128xf32> -> vector<256x128xf32>
    %c0_4 = arith.constant 0 : index
    %c0_5 = arith.constant 0 : index
    %4 = vector.load %arg4[%c0_4, %c0_5] : memref<1x128xf32, #tpu.memory_space<vmem>>, vector<1x128xf32>
    %5 = vector.broadcast %4 : vector<1x128xf32> to vector<256x128xf32>
    %6 = arith.addf %3, %5 : vector<256x128xf32>
    %7 = arith.negf %6 : vector<256x128xf32>
    %8 = math.exp %7 : vector<256x128xf32>
    %cst_6 = arith.constant 1.000000e+00 : f32
    %9 = vector.broadcast %cst_6 : f32 to vector<256x128xf32>
    %10 = arith.addf %9, %8 : vector<256x128xf32>
    %11 = arith.divf %9, %10 : vector<256x128xf32>
    %12 = arith.mulf %6, %11 : vector<256x128xf32>
    %c0_7 = arith.constant 0 : index
    %c0_8 = arith.constant 0 : index
    %c0_9 = arith.constant 0 : index
    %13 = vector.load %arg5[%c0_7, %c0_8, %c0_9] : memref<1x256x128xf32, #tpu.memory_space<vmem>>, vector<1x256x128xf32>
    %14 = vector.shape_cast %13 : vector<1x256x128xf32> to vector<256x128xf32>
    %15 = vector.shape_cast %12 : vector<256x128xf32> to vector<1x256x128xf32>
    tpu.vector_store %arg5[%c0_7, %c0_8, %c0_9], %15 {strides = array<i32>} : memref<1x256x128xf32, #tpu.memory_space<vmem>>, vector<1x256x128xf32>,
    return
  }
  func.func @transform_0(%arg0: i32, %arg1: i32) -> (i32, i32, i32) {
    %c0_i32 = arith.constant 0 : i32
    %c0_i32_0 = arith.constant 0 : i32
    return %arg0, %arg1, %c0_i32 : i32, i32, i32
  }
  func.func @transform_1(%arg0: i32, %arg1: i32) -> (i32, i32) {
    %c0_i32 = arith.constant 0 : i32
    %c0_i32_0 = arith.constant 0 : i32
    %c0_i32_1 = arith.constant 0 : i32
    return %c0_i32, %c0_i32_0 : i32, i32
  }
  func.func @transform_2(%arg0: i32, %arg1: i32) -> (i32, i32) {
    %c0_i32 = arith.constant 0 : i32
    %c0_i32_0 = arith.constant 0 : i32
    %c0_i32_1 = arith.constant 0 : i32
    return %c0_i32, %c0_i32_0 : i32, i32
  }
  func.func @transform_3(%arg0: i32, %arg1: i32) -> (i32, i32, i32) {
    %c0_i32 = arith.constant 0 : i32
    %c0_i32_0 = arith.constant 0 : i32
    return %arg0, %arg1, %c0_i32 : i32, i32, i32
  }
}

module attributes {stable_mosaic.version = 11 : i64} {
  func.func @_conv_matmul_kernel(%arg0: i32, %arg1: i32, %arg2: memref<1x72x1152xf32, #tpu.memory_space<vmem>>, %arg3: memref<1152x128xf32, #tpu.memory_space<vmem>>, %arg4: memref<1x128xf32, #tpu.memory_space<vmem>>, %arg5: memref<1x72x128xf32, #tpu.memory_space<vmem>>) attributes {dimension_semantics = [#tpu.dimension_semantics<parallel>, #tpu.dimension_semantics<parallel>], iteration_bounds = array<i64: 2, 1>, scalar_prefetch = 0 : i64, scratch_operands = 0 : i64, tpu.core_type = #tpu.core_type<tc>, window_params = [{transform_indices = @transform_0, window_bounds = array<i64: 1, 72, 1152>}, {pipeline_mode = #tpu.pipeline_mode<synchronous>, transform_indices = @transform_1, window_bounds = array<i64: 1152, 128>}, {pipeline_mode = #tpu.pipeline_mode<synchronous>, transform_indices = @transform_2, window_bounds = array<i64: 1, 128>}, {transform_indices = @transform_3, window_bounds = array<i64: 1, 72, 128>}]} {
    %c0 = arith.constant 0 : index
    %c0_0 = arith.constant 0 : index
    %c0_1 = arith.constant 0 : index
    %0 = vector.load %arg2[%c0, %c0_0, %c0_1] : memref<1x72x1152xf32, #tpu.memory_space<vmem>>, vector<1x72x1152xf32>
    %1 = vector.shape_cast %0 : vector<1x72x1152xf32> to vector<72x1152xf32>
    %c0_2 = arith.constant 0 : index
    %c0_3 = arith.constant 0 : index
    %2 = vector.load %arg3[%c0_2, %c0_3] : memref<1152x128xf32, #tpu.memory_space<vmem>>, vector<1152x128xf32>
    %cst = arith.constant dense<0.000000e+00> : vector<72x128xf32>
    %3 = tpu.matmul %1, %2, %cst {dimension_numbers = #tpu.dot_dimension_numbers<[1], [0], [0], [1], [0, 0, 1, 1], [], []>} : vector<72x1152xf32>, vector<1152x128xf32>, vector<72x128xf32> -> vector<72x128xf32>
    %c0_4 = arith.constant 0 : index
    %c0_5 = arith.constant 0 : index
    %4 = vector.load %arg4[%c0_4, %c0_5] : memref<1x128xf32, #tpu.memory_space<vmem>>, vector<1x128xf32>
    %5 = vector.broadcast %4 : vector<1x128xf32> to vector<72x128xf32>
    %6 = arith.addf %3, %5 : vector<72x128xf32>
    %7 = arith.negf %6 : vector<72x128xf32>
    %8 = math.exp %7 : vector<72x128xf32>
    %cst_6 = arith.constant 1.000000e+00 : f32
    %9 = vector.broadcast %cst_6 : f32 to vector<72x128xf32>
    %10 = arith.addf %9, %8 : vector<72x128xf32>
    %11 = arith.divf %9, %10 : vector<72x128xf32>
    %12 = arith.mulf %6, %11 : vector<72x128xf32>
    %c0_7 = arith.constant 0 : index
    %c0_8 = arith.constant 0 : index
    %c0_9 = arith.constant 0 : index
    %13 = vector.load %arg5[%c0_7, %c0_8, %c0_9] : memref<1x72x128xf32, #tpu.memory_space<vmem>>, vector<1x72x128xf32>
    %14 = vector.shape_cast %13 : vector<1x72x128xf32> to vector<72x128xf32>
    %15 = vector.shape_cast %12 : vector<72x128xf32> to vector<1x72x128xf32>
    tpu.vector_store %arg5[%c0_7, %c0_8, %c0_9], %15 {strides = array<i32>} : memref<1x72x128xf32, #tpu.memory_space<vmem>>, vector<1x72x128xf32>,
    return
  }
  func.func @transform_0(%arg0: i32, %arg1: i32) -> (i32, i32, i32) {
    %c0_i32 = arith.constant 0 : i32
    %c0_i32_0 = arith.constant 0 : i32
    return %arg0, %arg1, %c0_i32 : i32, i32, i32
  }
  func.func @transform_1(%arg0: i32, %arg1: i32) -> (i32, i32) {
    %c0_i32 = arith.constant 0 : i32
    %c0_i32_0 = arith.constant 0 : i32
    %c0_i32_1 = arith.constant 0 : i32
    return %c0_i32, %c0_i32_0 : i32, i32
  }
  func.func @transform_2(%arg0: i32, %arg1: i32) -> (i32, i32) {
    %c0_i32 = arith.constant 0 : i32
    %c0_i32_0 = arith.constant 0 : i32
    %c0_i32_1 = arith.constant 0 : i32
    return %c0_i32, %c0_i32_0 : i32, i32
  }
  func.func @transform_3(%arg0: i32, %arg1: i32) -> (i32, i32, i32) {
    %c0_i32 = arith.constant 0 : i32
    %c0_i32_0 = arith.constant 0 : i32
    return %arg0, %arg1, %c0_i32 : i32, i32, i32
  }
}

module attributes {stable_mosaic.version = 11 : i64} {
  func.func @_conv_matmul_kernel(%arg0: i32, %arg1: i32, %arg2: memref<1x24x1152xf32, #tpu.memory_space<vmem>>, %arg3: memref<1152x128xf32, #tpu.memory_space<vmem>>, %arg4: memref<1x128xf32, #tpu.memory_space<vmem>>, %arg5: memref<1x24x128xf32, #tpu.memory_space<vmem>>) attributes {dimension_semantics = [#tpu.dimension_semantics<parallel>, #tpu.dimension_semantics<parallel>], iteration_bounds = array<i64: 2, 1>, scalar_prefetch = 0 : i64, scratch_operands = 0 : i64, tpu.core_type = #tpu.core_type<tc>, window_params = [{transform_indices = @transform_0, window_bounds = array<i64: 1, 24, 1152>}, {pipeline_mode = #tpu.pipeline_mode<synchronous>, transform_indices = @transform_1, window_bounds = array<i64: 1152, 128>}, {pipeline_mode = #tpu.pipeline_mode<synchronous>, transform_indices = @transform_2, window_bounds = array<i64: 1, 128>}, {transform_indices = @transform_3, window_bounds = array<i64: 1, 24, 128>}]} {
    %c0 = arith.constant 0 : index
    %c0_0 = arith.constant 0 : index
    %c0_1 = arith.constant 0 : index
    %0 = vector.load %arg2[%c0, %c0_0, %c0_1] : memref<1x24x1152xf32, #tpu.memory_space<vmem>>, vector<1x24x1152xf32>
    %1 = vector.shape_cast %0 : vector<1x24x1152xf32> to vector<24x1152xf32>
    %c0_2 = arith.constant 0 : index
    %c0_3 = arith.constant 0 : index
    %2 = vector.load %arg3[%c0_2, %c0_3] : memref<1152x128xf32, #tpu.memory_space<vmem>>, vector<1152x128xf32>
    %cst = arith.constant dense<0.000000e+00> : vector<24x128xf32>
    %3 = tpu.matmul %1, %2, %cst {dimension_numbers = #tpu.dot_dimension_numbers<[1], [0], [0], [1], [0, 0, 1, 1], [], []>} : vector<24x1152xf32>, vector<1152x128xf32>, vector<24x128xf32> -> vector<24x128xf32>
    %c0_4 = arith.constant 0 : index
    %c0_5 = arith.constant 0 : index
    %4 = vector.load %arg4[%c0_4, %c0_5] : memref<1x128xf32, #tpu.memory_space<vmem>>, vector<1x128xf32>
    %5 = vector.broadcast %4 : vector<1x128xf32> to vector<24x128xf32>
    %6 = arith.addf %3, %5 : vector<24x128xf32>
    %7 = arith.negf %6 : vector<24x128xf32>
    %8 = math.exp %7 : vector<24x128xf32>
    %cst_6 = arith.constant 1.000000e+00 : f32
    %9 = vector.broadcast %cst_6 : f32 to vector<24x128xf32>
    %10 = arith.addf %9, %8 : vector<24x128xf32>
    %11 = arith.divf %9, %10 : vector<24x128xf32>
    %12 = arith.mulf %6, %11 : vector<24x128xf32>
    %c0_7 = arith.constant 0 : index
    %c0_8 = arith.constant 0 : index
    %c0_9 = arith.constant 0 : index
    %13 = vector.load %arg5[%c0_7, %c0_8, %c0_9] : memref<1x24x128xf32, #tpu.memory_space<vmem>>, vector<1x24x128xf32>
    %14 = vector.shape_cast %13 : vector<1x24x128xf32> to vector<24x128xf32>
    %15 = vector.shape_cast %12 : vector<24x128xf32> to vector<1x24x128xf32>
    tpu.vector_store %arg5[%c0_7, %c0_8, %c0_9], %15 {strides = array<i32>} : memref<1x24x128xf32, #tpu.memory_space<vmem>>, vector<1x24x128xf32>,
    return
  }
  func.func @transform_0(%arg0: i32, %arg1: i32) -> (i32, i32, i32) {
    %c0_i32 = arith.constant 0 : i32
    %c0_i32_0 = arith.constant 0 : i32
    return %arg0, %arg1, %c0_i32 : i32, i32, i32
  }
  func.func @transform_1(%arg0: i32, %arg1: i32) -> (i32, i32) {
    %c0_i32 = arith.constant 0 : i32
    %c0_i32_0 = arith.constant 0 : i32
    %c0_i32_1 = arith.constant 0 : i32
    return %c0_i32, %c0_i32_0 : i32, i32
  }
  func.func @transform_2(%arg0: i32, %arg1: i32) -> (i32, i32) {
    %c0_i32 = arith.constant 0 : i32
    %c0_i32_0 = arith.constant 0 : i32
    %c0_i32_1 = arith.constant 0 : i32
    return %c0_i32, %c0_i32_0 : i32, i32
  }
  func.func @transform_3(%arg0: i32, %arg1: i32) -> (i32, i32, i32) {
    %c0_i32 = arith.constant 0 : i32
    %c0_i32_0 = arith.constant 0 : i32
    return %arg0, %arg1, %c0_i32 : i32, i32, i32
  }
}

module attributes {stable_mosaic.version = 11 : i64} {
  func.func @_conv_matmul_kernel(%arg0: i32, %arg1: i32, %arg2: memref<1x32x1152xf32, #tpu.memory_space<vmem>>, %arg3: memref<1152x128xf32, #tpu.memory_space<vmem>>, %arg4: memref<1x128xf32, #tpu.memory_space<vmem>>, %arg5: memref<1x32x128xf32, #tpu.memory_space<vmem>>) attributes {dimension_semantics = [#tpu.dimension_semantics<parallel>, #tpu.dimension_semantics<parallel>], iteration_bounds = array<i64: 2, 1>, scalar_prefetch = 0 : i64, scratch_operands = 0 : i64, tpu.core_type = #tpu.core_type<tc>, window_params = [{transform_indices = @transform_0, window_bounds = array<i64: 1, 32, 1152>}, {pipeline_mode = #tpu.pipeline_mode<synchronous>, transform_indices = @transform_1, window_bounds = array<i64: 1152, 128>}, {pipeline_mode = #tpu.pipeline_mode<synchronous>, transform_indices = @transform_2, window_bounds = array<i64: 1, 128>}, {transform_indices = @transform_3, window_bounds = array<i64: 1, 32, 128>}]} {
    %c0 = arith.constant 0 : index
    %c0_0 = arith.constant 0 : index
    %c0_1 = arith.constant 0 : index
    %0 = vector.load %arg2[%c0, %c0_0, %c0_1] : memref<1x32x1152xf32, #tpu.memory_space<vmem>>, vector<1x32x1152xf32>
    %1 = vector.shape_cast %0 : vector<1x32x1152xf32> to vector<32x1152xf32>
    %c0_2 = arith.constant 0 : index
    %c0_3 = arith.constant 0 : index
    %2 = vector.load %arg3[%c0_2, %c0_3] : memref<1152x128xf32, #tpu.memory_space<vmem>>, vector<1152x128xf32>
    %cst = arith.constant dense<0.000000e+00> : vector<32x128xf32>
    %3 = tpu.matmul %1, %2, %cst {dimension_numbers = #tpu.dot_dimension_numbers<[1], [0], [0], [1], [0, 0, 1, 1], [], []>} : vector<32x1152xf32>, vector<1152x128xf32>, vector<32x128xf32> -> vector<32x128xf32>
    %c0_4 = arith.constant 0 : index
    %c0_5 = arith.constant 0 : index
    %4 = vector.load %arg4[%c0_4, %c0_5] : memref<1x128xf32, #tpu.memory_space<vmem>>, vector<1x128xf32>
    %5 = vector.broadcast %4 : vector<1x128xf32> to vector<32x128xf32>
    %6 = arith.addf %3, %5 : vector<32x128xf32>
    %7 = arith.negf %6 : vector<32x128xf32>
    %8 = math.exp %7 : vector<32x128xf32>
    %cst_6 = arith.constant 1.000000e+00 : f32
    %9 = vector.broadcast %cst_6 : f32 to vector<32x128xf32>
    %10 = arith.addf %9, %8 : vector<32x128xf32>
    %11 = arith.divf %9, %10 : vector<32x128xf32>
    %12 = arith.mulf %6, %11 : vector<32x128xf32>
    %c0_7 = arith.constant 0 : index
    %c0_8 = arith.constant 0 : index
    %c0_9 = arith.constant 0 : index
    %13 = vector.load %arg5[%c0_7, %c0_8, %c0_9] : memref<1x32x128xf32, #tpu.memory_space<vmem>>, vector<1x32x128xf32>
    %14 = vector.shape_cast %13 : vector<1x32x128xf32> to vector<32x128xf32>
    %15 = vector.shape_cast %12 : vector<32x128xf32> to vector<1x32x128xf32>
    tpu.vector_store %arg5[%c0_7, %c0_8, %c0_9], %15 {strides = array<i32>} : memref<1x32x128xf32, #tpu.memory_space<vmem>>, vector<1x32x128xf32>,
    return
  }
  func.func @transform_0(%arg0: i32, %arg1: i32) -> (i32, i32, i32) {
    %c0_i32 = arith.constant 0 : i32
    %c0_i32_0 = arith.constant 0 : i32
    return %arg0, %arg1, %c0_i32 : i32, i32, i32
  }
  func.func @transform_1(%arg0: i32, %arg1: i32) -> (i32, i32) {
    %c0_i32 = arith.constant 0 : i32
    %c0_i32_0 = arith.constant 0 : i32
    %c0_i32_1 = arith.constant 0 : i32
    return %c0_i32, %c0_i32_0 : i32, i32
  }
  func.func @transform_2(%arg0: i32, %arg1: i32) -> (i32, i32) {
    %c0_i32 = arith.constant 0 : i32
    %c0_i32_0 = arith.constant 0 : i32
    %c0_i32_1 = arith.constant 0 : i32
    return %c0_i32, %c0_i32_0 : i32, i32
  }
  func.func @transform_3(%arg0: i32, %arg1: i32) -> (i32, i32, i32) {
    %c0_i32 = arith.constant 0 : i32
    %c0_i32_0 = arith.constant 0 : i32
    return %arg0, %arg1, %c0_i32 : i32, i32, i32
  }
}

module attributes {stable_mosaic.version = 11 : i64} {
  func.func @_conv_matmul_kernel(%arg0: i32, %arg1: i32, %arg2: memref<1x20x1152xf32, #tpu.memory_space<vmem>>, %arg3: memref<1152x128xf32, #tpu.memory_space<vmem>>, %arg4: memref<1x128xf32, #tpu.memory_space<vmem>>, %arg5: memref<1x20x128xf32, #tpu.memory_space<vmem>>) attributes {dimension_semantics = [#tpu.dimension_semantics<parallel>, #tpu.dimension_semantics<parallel>], iteration_bounds = array<i64: 2, 1>, scalar_prefetch = 0 : i64, scratch_operands = 0 : i64, tpu.core_type = #tpu.core_type<tc>, window_params = [{transform_indices = @transform_0, window_bounds = array<i64: 1, 20, 1152>}, {pipeline_mode = #tpu.pipeline_mode<synchronous>, transform_indices = @transform_1, window_bounds = array<i64: 1152, 128>}, {pipeline_mode = #tpu.pipeline_mode<synchronous>, transform_indices = @transform_2, window_bounds = array<i64: 1, 128>}, {transform_indices = @transform_3, window_bounds = array<i64: 1, 20, 128>}]} {
    %c0 = arith.constant 0 : index
    %c0_0 = arith.constant 0 : index
    %c0_1 = arith.constant 0 : index
    %0 = vector.load %arg2[%c0, %c0_0, %c0_1] : memref<1x20x1152xf32, #tpu.memory_space<vmem>>, vector<1x20x1152xf32>
    %1 = vector.shape_cast %0 : vector<1x20x1152xf32> to vector<20x1152xf32>
    %c0_2 = arith.constant 0 : index
    %c0_3 = arith.constant 0 : index
    %2 = vector.load %arg3[%c0_2, %c0_3] : memref<1152x128xf32, #tpu.memory_space<vmem>>, vector<1152x128xf32>
    %cst = arith.constant dense<0.000000e+00> : vector<20x128xf32>
    %3 = tpu.matmul %1, %2, %cst {dimension_numbers = #tpu.dot_dimension_numbers<[1], [0], [0], [1], [0, 0, 1, 1], [], []>} : vector<20x1152xf32>, vector<1152x128xf32>, vector<20x128xf32> -> vector<20x128xf32>
    %c0_4 = arith.constant 0 : index
    %c0_5 = arith.constant 0 : index
    %4 = vector.load %arg4[%c0_4, %c0_5] : memref<1x128xf32, #tpu.memory_space<vmem>>, vector<1x128xf32>
    %5 = vector.broadcast %4 : vector<1x128xf32> to vector<20x128xf32>
    %6 = arith.addf %3, %5 : vector<20x128xf32>
    %7 = arith.negf %6 : vector<20x128xf32>
    %8 = math.exp %7 : vector<20x128xf32>
    %cst_6 = arith.constant 1.000000e+00 : f32
    %9 = vector.broadcast %cst_6 : f32 to vector<20x128xf32>
    %10 = arith.addf %9, %8 : vector<20x128xf32>
    %11 = arith.divf %9, %10 : vector<20x128xf32>
    %12 = arith.mulf %6, %11 : vector<20x128xf32>
    %c0_7 = arith.constant 0 : index
    %c0_8 = arith.constant 0 : index
    %c0_9 = arith.constant 0 : index
    %13 = vector.load %arg5[%c0_7, %c0_8, %c0_9] : memref<1x20x128xf32, #tpu.memory_space<vmem>>, vector<1x20x128xf32>
    %14 = vector.shape_cast %13 : vector<1x20x128xf32> to vector<20x128xf32>
    %15 = vector.shape_cast %12 : vector<20x128xf32> to vector<1x20x128xf32>
    tpu.vector_store %arg5[%c0_7, %c0_8, %c0_9], %15 {strides = array<i32>} : memref<1x20x128xf32, #tpu.memory_space<vmem>>, vector<1x20x128xf32>,
    return
  }
  func.func @transform_0(%arg0: i32, %arg1: i32) -> (i32, i32, i32) {
    %c0_i32 = arith.constant 0 : i32
    %c0_i32_0 = arith.constant 0 : i32
    return %arg0, %arg1, %c0_i32 : i32, i32, i32
  }
  func.func @transform_1(%arg0: i32, %arg1: i32) -> (i32, i32) {
    %c0_i32 = arith.constant 0 : i32
    %c0_i32_0 = arith.constant 0 : i32
    %c0_i32_1 = arith.constant 0 : i32
    return %c0_i32, %c0_i32_0 : i32, i32
  }
  func.func @transform_2(%arg0: i32, %arg1: i32) -> (i32, i32) {
    %c0_i32 = arith.constant 0 : i32
    %c0_i32_0 = arith.constant 0 : i32
    %c0_i32_1 = arith.constant 0 : i32
    return %c0_i32, %c0_i32_0 : i32, i32
  }
  func.func @transform_3(%arg0: i32, %arg1: i32) -> (i32, i32, i32) {
    %c0_i32 = arith.constant 0 : i32
    %c0_i32_0 = arith.constant 0 : i32
    return %arg0, %arg1, %c0_i32 : i32, i32, i32
  }
}

module attributes {stable_mosaic.version = 11 : i64} {
  func.func @_conv_matmul_kernel(%arg0: i32, %arg1: i32, %arg2: memref<1x20x1152xf32, #tpu.memory_space<vmem>>, %arg3: memref<1152x128xf32, #tpu.memory_space<vmem>>, %arg4: memref<1x128xf32, #tpu.memory_space<vmem>>, %arg5: memref<1x20x128xf32, #tpu.memory_space<vmem>>) attributes {dimension_semantics = [#tpu.dimension_semantics<parallel>, #tpu.dimension_semantics<parallel>], iteration_bounds = array<i64: 2, 1>, scalar_prefetch = 0 : i64, scratch_operands = 0 : i64, tpu.core_type = #tpu.core_type<tc>, window_params = [{transform_indices = @transform_0, window_bounds = array<i64: 1, 20, 1152>}, {pipeline_mode = #tpu.pipeline_mode<synchronous>, transform_indices = @transform_1, window_bounds = array<i64: 1152, 128>}, {pipeline_mode = #tpu.pipeline_mode<synchronous>, transform_indices = @transform_2, window_bounds = array<i64: 1, 128>}, {transform_indices = @transform_3, window_bounds = array<i64: 1, 20, 128>}]} {
    %c0 = arith.constant 0 : index
    %c0_0 = arith.constant 0 : index
    %c0_1 = arith.constant 0 : index
    %0 = vector.load %arg2[%c0, %c0_0, %c0_1] : memref<1x20x1152xf32, #tpu.memory_space<vmem>>, vector<1x20x1152xf32>
    %1 = vector.shape_cast %0 : vector<1x20x1152xf32> to vector<20x1152xf32>
    %c0_2 = arith.constant 0 : index
    %c0_3 = arith.constant 0 : index
    %2 = vector.load %arg3[%c0_2, %c0_3] : memref<1152x128xf32, #tpu.memory_space<vmem>>, vector<1152x128xf32>
    %cst = arith.constant dense<0.000000e+00> : vector<20x128xf32>
    %3 = tpu.matmul %1, %2, %cst {dimension_numbers = #tpu.dot_dimension_numbers<[1], [0], [0], [1], [0, 0, 1, 1], [], []>} : vector<20x1152xf32>, vector<1152x128xf32>, vector<20x128xf32> -> vector<20x128xf32>
    %c0_4 = arith.constant 0 : index
    %c0_5 = arith.constant 0 : index
    %4 = vector.load %arg4[%c0_4, %c0_5] : memref<1x128xf32, #tpu.memory_space<vmem>>, vector<1x128xf32>
    %5 = vector.broadcast %4 : vector<1x128xf32> to vector<20x128xf32>
    %6 = arith.addf %3, %5 : vector<20x128xf32>
    %c0_6 = arith.constant 0 : index
    %c0_7 = arith.constant 0 : index
    %c0_8 = arith.constant 0 : index
    %7 = vector.load %arg5[%c0_6, %c0_7, %c0_8] : memref<1x20x128xf32, #tpu.memory_space<vmem>>, vector<1x20x128xf32>
    %8 = vector.shape_cast %7 : vector<1x20x128xf32> to vector<20x128xf32>
    %9 = vector.shape_cast %6 : vector<20x128xf32> to vector<1x20x128xf32>
    tpu.vector_store %arg5[%c0_6, %c0_7, %c0_8], %9 {strides = array<i32>} : memref<1x20x128xf32, #tpu.memory_space<vmem>>, vector<1x20x128xf32>,
    return
  }
  func.func @transform_0(%arg0: i32, %arg1: i32) -> (i32, i32, i32) {
    %c0_i32 = arith.constant 0 : i32
    %c0_i32_0 = arith.constant 0 : i32
    return %arg0, %arg1, %c0_i32 : i32, i32, i32
  }
  func.func @transform_1(%arg0: i32, %arg1: i32) -> (i32, i32) {
    %c0_i32 = arith.constant 0 : i32
    %c0_i32_0 = arith.constant 0 : i32
    %c0_i32_1 = arith.constant 0 : i32
    return %c0_i32, %c0_i32_0 : i32, i32
  }
  func.func @transform_2(%arg0: i32, %arg1: i32) -> (i32, i32) {
    %c0_i32 = arith.constant 0 : i32
    %c0_i32_0 = arith.constant 0 : i32
    %c0_i32_1 = arith.constant 0 : i32
    return %c0_i32, %c0_i32_0 : i32, i32
  }
  func.func @transform_3(%arg0: i32, %arg1: i32) -> (i32, i32, i32) {
    %c0_i32 = arith.constant 0 : i32
    %c0_i32_0 = arith.constant 0 : i32
    return %arg0, %arg1, %c0_i32 : i32, i32, i32
  }
}

</mosaic_0001>

<llo_original>
// kernel: bev_controlnet_embedding_forward.8
$region0: #{bev_controlnet_embedding_forward.8}
  #allocation0 [shape = 'u32[]', space=smem, size = 0x4, offset = 0x4, fixed_abs, tag = 'smem constant byte address 0x4 - core index']
  #allocation1 [shape = 'u32[144,128]{1,0:T(1,128)}', space=vmem, size = 0x12000, scoped, tag = 'internal scratch']
  %s0 = inlined_call_operand.vmem [shape: f32[2,256,1152], index: 0, kind: input, shape index: {}]
  %s1 = inlined_call_operand.vmem [shape: f32[1152,128], index: 1, kind: input, shape index: {}]
  %s2 = inlined_call_operand.vmem [shape: f32[1,128], index: 2, kind: input, shape index: {}]
  %s3 = inlined_call_operand.vmem [shape: f32[2,256,128], index: 3, kind: output, shape index: {}]
  %s4 = sld [smem:[#allocation0]]
  $region45: #{bev_controlnet_embedding_forward.8} parent=0
    _
  %s6 = ssub.s32 1, %s4
  %s7 = scalar_select 0, %s6, %s4
  loop: start=0, step=1, limit=4
  $region2: #{bev_controlnet_embedding_forward.8} parent=0 // loop_pre_header
    _
  $region3: #{bev_controlnet_embedding_forward.8} parent=0 // loop_header
    %s9 = sphi 0, %s13
    %p10 = scmp.ge.s32.totalorder %s9, 4
    %s16 = sphi 0, %s28
    %s17 = sphi 0, %s24
    %s18 = sphi 0, %s16
    %s19 = sphi 0, %s17
    %s20 = sphi 0, %s18
    %s21 = sphi 0, %s19
    %s33 = sphi 0, %s35
    %s36 = sphi 0, %s33
    %s37 = sphi 0, %s36
    %s53 = sphi 0, %s37
    %s57 = sphi 0, %s57
    %s59 = sphi 0, %s57
    %s60 = sphi 0, %s59
    %s74 = sphi 0, %s60
    %s78 = sphi 0, %s78
    %s80 = sphi 0, %s78
    %s81 = sphi 0, %s80
    %s95 = sphi 0, %s81
    %s103 = sphi 0, %s105
    %s106 = sphi 0, %s103
    %s107 = sphi 0, %s106
    %s123 = sphi 0, %s107
  $region4: #{bev_controlnet_embedding_forward.8} parent=0 // loop_header_branch
    %12 = sbr.rel (%p10) target = $region8
  $region5: #{bev_controlnet_embedding_forward.8} parent=0 // loop_body
    %s14 = ssub.s32 %s9, 1
    %s15 = ssub.s32 %s9, 2
    %s22 = sadd.s32 1, %s17
    %p23 = scmp.ge.s32.totalorder %s22, 1
    %s24 = scalar_select %p23, 0, %s22
    %s25 = sadd.s32 1, %s16
    %s26 = scalar_select %p23, %s25, %s16
    %p27 = scmp.ge.s32.totalorder %s26, 2
    %s28 = scalar_select %p27, 0, %s26
    %s29 = ssub.s32 %s16, %s28
    %s30 = ssub.s32 %s17, %s24
    %s31 = sor.u32 %s29, %s30
    %p32 = scmp.eq.s32.totalorder %s31, 0
    %s34 = sadd.s32 %s33, 1
    %s35 = scalar_select %p32, %s33, %s34
    %p38 = pneg %p32
    %p39 = scmp.eq.s32.totalorder %s9, 1
    %p40 = por %p38, %p39
    %p41 = scmp.ne.s32.totalorder %s33, %s36
    %p42 = scmp.eq.s32.totalorder %s9, 0
    %p43 = por %p41, %p42
    %p44 = scmp.ne.s32.totalorder %s33, %s36
    %p45 = scmp.eq.s32.totalorder %s14, 1
    %p46 = por %p44, %p45
    %p47 = scmp.ne.s32.totalorder %s36, %s37
    %p48 = scmp.eq.s32.totalorder %s14, 0
    %p49 = por %p47, %p48
    %p50 = scmp.ne.s32.totalorder %s36, %s37
    %p51 = scmp.eq.s32.totalorder %s15, 1
    %p52 = por %p50, %p51
    %p54 = scmp.ne.s32.totalorder %s37, %s53
    %p55 = scmp.eq.s32.totalorder %s15, 0
    %p56 = por %p54, %p55
    %s58 = sadd.s32 %s57, 1
    %p61 = scmp.eq.s32.totalorder %s9, 1
    %p62 = scmp.ne.s32.totalorder %s57, %s59
    %p63 = scmp.eq.s32.totalorder %s9, 0
    %p64 = por %p62, %p63
    %p65 = scmp.ne.s32.totalorder %s57, %s59
    %p66 = scmp.eq.s32.totalorder %s14, 1
    %p67 = por %p65, %p66
    %p68 = scmp.ne.s32.totalorder %s59, %s60
    %p69 = scmp.eq.s32.totalorder %s14, 0
    %p70 = por %p68, %p69
    %p71 = scmp.ne.s32.totalorder %s59, %s60
    %p72 = scmp.eq.s32.totalorder %s15, 1
    %p73 = por %p71, %p72
    %p75 = scmp.ne.s32.totalorder %s60, %s74
    %p76 = scmp.eq.s32.totalorder %s15, 0
    %p77 = por %p75, %p76
    %s79 = sadd.s32 %s78, 1
    %p82 = scmp.eq.s32.totalorder %s9, 1
    %p83 = scmp.ne.s32.totalorder %s78, %s80
    %p84 = scmp.eq.s32.totalorder %s9, 0
    %p85 = por %p83, %p84
    %p86 = scmp.ne.s32.totalorder %s78, %s80
    %p87 = scmp.eq.s32.totalorder %s14, 1
    %p88 = por %p86, %p87
    %p89 = scmp.ne.s32.totalorder %s80, %s81
    %p90 = scmp.eq.s32.totalorder %s14, 0
    %p91 = por %p89, %p90
    %p92 = scmp.ne.s32.totalorder %s80, %s81
    %p93 = scmp.eq.s32.totalorder %s15, 1
    %p94 = por %p92, %p93
    %p96 = scmp.ne.s32.totalorder %s81, %s95
    %p97 = scmp.eq.s32.totalorder %s15, 0
    %p98 = por %p96, %p97
    %s99 = ssub.s32 %s16, %s28
    %s100 = ssub.s32 %s17, %s24
    %s101 = sor.u32 %s99, %s100
    %p102 = scmp.eq.s32.totalorder %s101, 0
    %s104 = sadd.s32 %s103, 1
    %s105 = scalar_select %p102, %s103, %s104
    %p108 = pneg %p102
    %p109 = scmp.eq.s32.totalorder %s9, 1
    %p110 = por %p108, %p109
    %p111 = scmp.ne.s32.totalorder %s103, %s106
    %p112 = scmp.eq.s32.totalorder %s9, 0
    %p113 = por %p111, %p112
    %p114 = scmp.ne.s32.totalorder %s103, %s106
    %p115 = scmp.eq.s32.totalorder %s14, 1
    %p116 = por %p114, %p115
    %p117 = scmp.ne.s32.totalorder %s106, %s107
    %p118 = scmp.eq.s32.totalorder %s14, 0
    %p119 = por %p117, %p118
    %p120 = scmp.ne.s32.totalorder %s106, %s107
    %p121 = scmp.eq.s32.totalorder %s15, 1
    %p122 = por %p120, %p121
    %p124 = scmp.ne.s32.totalorder %s107, %s123
    %p125 = scmp.eq.s32.totalorder %s15, 0
    %p126 = por %p124, %p125
    %p127 = scmp.le.s32.totalorder 1, %s9
    %p128 = scmp.lt.s32.totalorder %s9, 3
    %p129 = pnand %p127, %p128
    %p130 = pneg %p129
    // Predicated region
    $region9: #{bev_controlnet_embedding_forward.8} parent=5 // pred_check
      _
    $region10: #{bev_controlnet_embedding_forward.8} parent=5 // pred_check_branch
      %132 = sbr.rel (%p129) target = $region12
    $region11: #{bev_controlnet_embedding_forward.8} parent=5 // pred_region
      %s133 = ssub.s32 %s9, 1
      // Predicated region
      $region13: #{bev_controlnet_embedding_forward.8} parent=11 // pred_check
        %p134 = pneg %p70
      $region14: #{bev_controlnet_embedding_forward.8} parent=11 // pred_check_branch
        %136 = sbr.rel (%p134) target = $region16
      $region15: #{bev_controlnet_embedding_forward.8} parent=11 // pred_region
        _
      $region16: #{bev_controlnet_embedding_forward.8} parent=11 // pred_fallthru
        _
      // Predicated region
      $region17: #{bev_controlnet_embedding_forward.8} parent=11 // pred_check
        %p137 = pneg %p91
      $region18: #{bev_controlnet_embedding_forward.8} parent=11 // pred_check_branch
        %139 = sbr.rel (%p137) target = $region20
      $region19: #{bev_controlnet_embedding_forward.8} parent=11 // pred_region
        _
      $region20: #{bev_controlnet_embedding_forward.8} parent=11 // pred_fallthru
        _
    $region12: #{bev_controlnet_embedding_forward.8} parent=5 // pred_fallthru
      _
    %p140 = scmp.lt.s32.totalorder %s9, 2
    // Predicated region
    $region21: #{bev_controlnet_embedding_forward.8} parent=5 // pred_check
      %p141 = pneg %p140
    $region22: #{bev_controlnet_embedding_forward.8} parent=5 // pred_check_branch
      %143 = sbr.rel (%p141) target = $region24
    $region23: #{bev_controlnet_embedding_forward.8} parent=5 // pred_region
      // Predicated region
      $region25: #{bev_controlnet_embedding_forward.8} parent=23 // pred_check
        %p144 = pneg %p43
      $region26: #{bev_controlnet_embedding_forward.8} parent=23 // pred_check_branch
        %146 = sbr.rel (%p144) target = $region28
      $region27: #{bev_controlnet_embedding_forward.8} parent=23 // pred_region
        %s147 = smul.u32 32, %s17
        %p148 = scmp.lt.s32.totalorder %s16, 1
        %s149 = scalar_select %p148, %s16, 1
        %p150 = scmp.lt.s32.totalorder %s147, 31
        %s151 = scalar_select %p150, %s147, 31
        %s152 = smul.addr %s151, 9
        %s153 = smul.addr %s149, 288
        %s154 = sadd.s32 %s152, %s153
        %s155 = smul.addr %s154, 8
        %s156 = scalar_lea.vmem %s0, %s155
        %s157 = smul.u32 32, %s17
      $region28: #{bev_controlnet_embedding_forward.8} parent=23 // pred_fallthru
        _
    $region24: #{bev_controlnet_embedding_forward.8} parent=5 // pred_fallthru
      _
    %p158 = scmp.le.s32.totalorder 1, %s9
    %p159 = scmp.lt.s32.totalorder %s9, 3
    %p160 = pnand %p158, %p159
    %p161 = pneg %p160
    // Predicated region
    $region29: #{bev_controlnet_embedding_forward.8} parent=5 // pred_check
      _
    $region30: #{bev_controlnet_embedding_forward.8} parent=5 // pred_check_branch
      %163 = sbr.rel (%p160) target = $region32
    $region31: #{bev_controlnet_embedding_forward.8} parent=5 // pred_region
      %s164 = ssub.s32 %s9, 1
      %s165 = smul.u32 32, %s19
      %p166 = scmp.lt.s32.totalorder %s18, 1
      %s167 = scalar_select %p166, %s18, 1
      %p168 = scmp.lt.s32.totalorder %s165, 31
      %s169 = scalar_select %p168, %s165, 31
      %s170 = smul.addr %s169, 9
      %s171 = smul.addr %s167, 288
      %s172 = sadd.s32 %s170, %s171
      %s173 = smul.addr %s172, 8
      %s174 = scalar_lea.vmem %s0, %s173
      %p175 = pneg %p49
      %p176 = pneg %p46
      %p177 = pneg %p70
      %p178 = pneg %p67
      %p179 = pneg %p91
      %p180 = pneg %p88
      %p181 = pneg %p119
      %p182 = pneg %p116
      %s183 = smul.u32 32, %s19
      %p184 = scmp.lt.s32.totalorder %s18, 1
      %s185 = scalar_select %p184, %s18, 1
      %p186 = scmp.lt.s32.totalorder %s183, 31
      %s187 = scalar_select %p186, %s183, 31
      %s188 = smul.addr %s185, 32
      %s189 = sadd.s32 %s187, %s188
      %s190 = smul.addr %s189, 8
      %s191 = scalar_lea.vmem %s3, %s190
      %s192 = smul.u32 32, %s19
      %p193 = scmp.lt.s32.totalorder %s18, 1
      %s194 = scalar_select %p193, %s18, 1
      %p195 = scmp.lt.s32.totalorder %s192, 31
      %s196 = scalar_select %p195, %s192, 31
      %s197 = smul.addr %s196, 9
      %s198 = smul.addr %s194, 288
      %s199 = sadd.s32 %s197, %s198
      %s200 = smul.addr %s199, 8
      %s201 = scalar_lea.vmem %s0, %s200
      %s202 = smul.u32 32, %s19
      %s203 = smul.u32 32, %s19
      %p204 = scmp.lt.s32.totalorder %s18, 1
      %s205 = scalar_select %p204, %s18, 1
      %p206 = scmp.lt.s32.totalorder %s203, 31
      %s207 = scalar_select %p206, %s203, 31
      %s208 = smul.addr %s205, 32
      %s209 = sadd.s32 %s207, %s208
      %s210 = smul.addr %s209, 8
      %s211 = scalar_lea.vmem %s3, %s210
      %s212 = smul.u32 32, %s19
      %v213 = vld [vmem:[%s201] sm:$0xff]
      %v214 = vld [vmem:[%s201 + $0x8] sm:$0xff]
      %v215 = vld [vmem:[%s201 + $0x10] sm:$0xff]
      %v216 = vld [vmem:[%s201 + $0x18] sm:$0xff]
      %v217 = vld [vmem:[%s201 + $0x20] sm:$0xff]
      %v218 = vld [vmem:[%s201 + $0x28] sm:$0xff]
      %v219 = vld [vmem:[%s201 + $0x30] sm:$0xff]
      %v220 = vld [vmem:[%s201 + $0x38] sm:$0xff]
      %v221 = vld [vmem:[%s201 + $0x40] sm:$0xff]
      %v222 = vld [vmem:[%s201 + $0x48] sm:$0xff]
      %v223 = vld [vmem:[%s201 + $0x50] sm:$0xff]
      %v224 = vld [vmem:[%s201 + $0x58] sm:$0xff]
      %v225 = vld [vmem:[%s201 + $0x60] sm:$0xff]
      %v226 = vld [vmem:[%s201 + $0x68] sm:$0xff]
      %v227 = vld [vmem:[%s201 + $0x70] sm:$0xff]
      %v228 = vld [vmem:[%s201 + $0x78] sm:$0xff]
      %v229 = vld [vmem:[%s201 + $0x80] sm:$0xff]
      %v230 = vld [vmem:[%s201 + $0x88] sm:$0xff]
      %v231 = vld [vmem:[%s201 + $0x90] sm:$0xff]
      %v232 = vld [vmem:[%s201 + $0x98] sm:$0xff]
      %v233 = vld [vmem:[%s201 + $0xa0] sm:$0xff]
      %v234 = vld [vmem:[%s201 + $0xa8] sm:$0xff]
      %v235 = vld [vmem:[%s201 + $0xb0] sm:$0xff]
      %v236 = vld [vmem:[%s201 + $0xb8] sm:$0xff]
      %v237 = vld [vmem:[%s201 + $0xc0] sm:$0xff]
      %v238 = vld [vmem:[%s201 + $0xc8] sm:$0xff]
      %v239 = vld [vmem:[%s201 + $0xd0] sm:$0xff]
      %v240 = vld [vmem:[%s201 + $0xd8] sm:$0xff]
      %v241 = vld [vmem:[%s201 + $0xe0] sm:$0xff]
      %v242 = vld [vmem:[%s201 + $0xe8] sm:$0xff]
      %v243 = vld [vmem:[%s201 + $0xf0] sm:$0xff]
      %v244 = vld [vmem:[%s201 + $0xf8] sm:$0xff]
      %v245 = vld [vmem:[%s201 + $0x100] sm:$0xff]
      %v246 = vld [vmem:[%s201 + $0x108] sm:$0xff]
      %v247 = vld [vmem:[%s201 + $0x110] sm:$0xff]
      %v248 = vld [vmem:[%s201 + $0x118] sm:$0xff]
      %v249 = vld [vmem:[%s201 + $0x120] sm:$0xff]
      %v250 = vld [vmem:[%s201 + $0x128] sm:$0xff]
      %v251 = vld [vmem:[%s201 + $0x130] sm:$0xff]
      %v252 = vld [vmem:[%s201 + $0x138] sm:$0xff]
      %v253 = vld [vmem:[%s201 + $0x140] sm:$0xff]
      %v254 = vld [vmem:[%s201 + $0x148] sm:$0xff]
      %v255 = vld [vmem:[%s201 + $0x150] sm:$0xff]
      %v256 = vld [vmem:[%s201 + $0x158] sm:$0xff]
      %v257 = vld [vmem:[%s201 + $0x160] sm:$0xff]
      %v258 = vld [vmem:[%s201 + $0x168] sm:$0xff]
      %v259 = vld [vmem:[%s201 + $0x170] sm:$0xff]
      %v260 = vld [vmem:[%s201 + $0x178] sm:$0xff]
      %v261 = vld [vmem:[%s201 + $0x180] sm:$0xff]
      %v262 = vld [vmem:[%s201 + $0x188] sm:$0xff]
      %v263 = vld [vmem:[%s201 + $0x190] sm:$0xff]
      %v264 = vld [vmem:[%s201 + $0x198] sm:$0xff]
      %v265 = vld [vmem:[%s201 + $0x1a0] sm:$0xff]
      %v266 = vld [vmem:[%s201 + $0x1a8] sm:$0xff]
      %v267 = vld [vmem:[%s201 + $0x1b0] sm:$0xff]
      %v268 = vld [vmem:[%s201 + $0x1b8] sm:$0xff]
      %v269 = vld [vmem:[%s201 + $0x1c0] sm:$0xff]
      %v270 = vld [vmem:[%s201 + $0x1c8] sm:$0xff]
      %v271 = vld [vmem:[%s201 + $0x1d0] sm:$0xff]
      %v272 = vld [vmem:[%s201 + $0x1d8] sm:$0xff]
      %v273 = vld [vmem:[%s201 + $0x1e0] sm:$0xff]
      %v274 = vld [vmem:[%s201 + $0x1e8] sm:$0xff]
      %v275 = vld [vmem:[%s201 + $0x1f0] sm:$0xff]
      %v276 = vld [vmem:[%s201 + $0x1f8] sm:$0xff]
      %v277 = vld [vmem:[%s201 + $0x200] sm:$0xff]
      %v278 = vld [vmem:[%s201 + $0x208] sm:$0xff]
      %v279 = vld [vmem:[%s201 + $0x210] sm:$0xff]
      %v280 = vld [vmem:[%s201 + $0x218] sm:$0xff]
      %v281 = vld [vmem:[%s201 + $0x220] sm:$0xff]
      %v282 = vld [vmem:[%s201 + $0x228] sm:$0xff]
      %v283 = vld [vmem:[%s201 + $0x230] sm:$0xff]
      %v284 = vld [vmem:[%s201 + $0x238] sm:$0xff]
      %v285 = vld [vmem:[%s201 + $0x240] sm:$0xff]
      %v286 = vld [vmem:[%s201 + $0x248] sm:$0xff]
      %v287 = vld [vmem:[%s201 + $0x250] sm:$0xff]
      %v288 = vld [vmem:[%s201 + $0x258] sm:$0xff]
      %v289 = vld [vmem:[%s201 + $0x260] sm:$0xff]
      %v290 = vld [vmem:[%s201 + $0x268] sm:$0xff]
      %v291 = vld [vmem:[%s201 + $0x270] sm:$0xff]
      %v292 = vld [vmem:[%s201 + $0x278] sm:$0xff]
      %v293 = vld [vmem:[%s201 + $0x280] sm:$0xff]
      %v294 = vld [vmem:[%s201 + $0x288] sm:$0xff]
      %v295 = vld [vmem:[%s201 + $0x290] sm:$0xff]
      %v296 = vld [vmem:[%s201 + $0x298] sm:$0xff]
      %v297 = vld [vmem:[%s201 + $0x2a0] sm:$0xff]
      %v298 = vld [vmem:[%s201 + $0x2a8] sm:$0xff]
      %v299 = vld [vmem:[%s201 + $0x2b0] sm:$0xff]
      %v300 = vld [vmem:[%s201 + $0x2b8] sm:$0xff]
      %v301 = vld [vmem:[%s201 + $0x2c0] sm:$0xff]
      %v302 = vld [vmem:[%s201 + $0x2c8] sm:$0xff]
      %v303 = vld [vmem:[%s201 + $0x2d0] sm:$0xff]
      %v304 = vld [vmem:[%s201 + $0x2d8] sm:$0xff]
      %v305 = vld [vmem:[%s201 + $0x2e0] sm:$0xff]
      %v306 = vld [vmem:[%s201 + $0x2e8] sm:$0xff]
      %v307 = vld [vmem:[%s201 + $0x2f0] sm:$0xff]
      %v308 = vld [vmem:[%s201 + $0x2f8] sm:$0xff]
      %v309 = vld [vmem:[%s201 + $0x300] sm:$0xff]
      %v310 = vld [vmem:[%s201 + $0x308] sm:$0xff]
      %v311 = vld [vmem:[%s201 + $0x310] sm:$0xff]
      %v312 = vld [vmem:[%s201 + $0x318] sm:$0xff]
      %v313 = vld [vmem:[%s201 + $0x320] sm:$0xff]
      %v314 = vld [vmem:[%s201 + $0x328] sm:$0xff]
      %v315 = vld [vmem:[%s201 + $0x330] sm:$0xff]
      %v316 = vld [vmem:[%s201 + $0x338] sm:$0xff]
      %v317 = vld [vmem:[%s201 + $0x340] sm:$0xff]
      %v318 = vld [vmem:[%s201 + $0x348] sm:$0xff]
      %v319 = vld [vmem:[%s201 + $0x350] sm:$0xff]
      %v320 = vld [vmem:[%s201 + $0x358] sm:$0xff]
      %v321 = vld [vmem:[%s201 + $0x360] sm:$0xff]
      %v322 = vld [vmem:[%s201 + $0x368] sm:$0xff]
      %v323 = vld [vmem:[%s201 + $0x370] sm:$0xff]
      %v324 = vld [vmem:[%s201 + $0x378] sm:$0xff]
      %v325 = vld [vmem:[%s201 + $0x380] sm:$0xff]
      %v326 = vld [vmem:[%s201 + $0x388] sm:$0xff]
      %v327 = vld [vmem:[%s201 + $0x390] sm:$0xff]
      %v328 = vld [vmem:[%s201 + $0x398] sm:$0xff]
      %v329 = vld [vmem:[%s201 + $0x3a0] sm:$0xff]
      %v330 = vld [vmem:[%s201 + $0x3a8] sm:$0xff]
      %v331 = vld [vmem:[%s201 + $0x3b0] sm:$0xff]
      %v332 = vld [vmem:[%s201 + $0x3b8] sm:$0xff]
      %v333 = vld [vmem:[%s201 + $0x3c0] sm:$0xff]
      %v334 = vld [vmem:[%s201 + $0x3c8] sm:$0xff]
      %v335 = vld [vmem:[%s201 + $0x3d0] sm:$0xff]
      %v336 = vld [vmem:[%s201 + $0x3d8] sm:$0xff]
      %v337 = vld [vmem:[%s201 + $0x3e0] sm:$0xff]
      %v338 = vld [vmem:[%s201 + $0x3e8] sm:$0xff]
      %v339 = vld [vmem:[%s201 + $0x3f0] sm:$0xff]
      %v340 = vld [vmem:[%s201 + $0x3f8] sm:$0xff]
      %v341 = vld [vmem:[%s201 + $0x400] sm:$0xff]
      %v342 = vld [vmem:[%s201 + $0x408] sm:$0xff]
      %v343 = vld [vmem:[%s201 + $0x410] sm:$0xff]
      %v344 = vld [vmem:[%s201 + $0x418] sm:$0xff]
      %v345 = vld [vmem:[%s201 + $0x420] sm:$0xff]
      %v346 = vld [vmem:[%s201 + $0x428] sm:$0xff]
      %v347 = vld [vmem:[%s201 + $0x430] sm:$0xff]
      %v348 = vld [vmem:[%s201 + $0x438] sm:$0xff]
      %v349 = vld [vmem:[%s201 + $0x440] sm:$0xff]
      %v350 = vld [vmem:[%s201 + $0x448] sm:$0xff]
      %v351 = vld [vmem:[%s201 + $0x450] sm:$0xff]
      %v352 = vld [vmem:[%s201 + $0x458] sm:$0xff]
      %v353 = vld [vmem:[%s201 + $0x460] sm:$0xff]
      %v354 = vld [vmem:[%s201 + $0x468] sm:$0xff]
      %v355 = vld [vmem:[%s201 + $0x470] sm:$0xff]
      %v356 = vld [vmem:[%s201 + $0x478] sm:$0xff]
      %v357 = vld [vmem:[%s201 + $0x480] sm:$0xff]
      %v358 = vld [vmem:[%s201 + $0x488] sm:$0xff]
      %v359 = vld [vmem:[%s201 + $0x490] sm:$0xff]
      %v360 = vld [vmem:[%s201 + $0x498] sm:$0xff]
      %v361 = vld [vmem:[%s201 + $0x4a0] sm:$0xff]
      %v362 = vld [vmem:[%s201 + $0x4a8] sm:$0xff]
      %v363 = vld [vmem:[%s201 + $0x4b0] sm:$0xff]
      %v364 = vld [vmem:[%s201 + $0x4b8] sm:$0xff]
      %v365 = vld [vmem:[%s201 + $0x4c0] sm:$0xff]
      %v366 = vld [vmem:[%s201 + $0x4c8] sm:$0xff]
      %v367 = vld [vmem:[%s201 + $0x4d0] sm:$0xff]
      %v368 = vld [vmem:[%s201 + $0x4d8] sm:$0xff]
      %v369 = vld [vmem:[%s201 + $0x4e0] sm:$0xff]
      %v370 = vld [vmem:[%s201 + $0x4e8] sm:$0xff]
      %v371 = vld [vmem:[%s201 + $0x4f0] sm:$0xff]
      %v372 = vld [vmem:[%s201 + $0x4f8] sm:$0xff]
      %v373 = vld [vmem:[%s201 + $0x500] sm:$0xff]
      %v374 = vld [vmem:[%s201 + $0x508] sm:$0xff]
      %v375 = vld [vmem:[%s201 + $0x510] sm:$0xff]
      %v376 = vld [vmem:[%s201 + $0x518] sm:$0xff]
      %v377 = vld [vmem:[%s201 + $0x520] sm:$0xff]
      %v378 = vld [vmem:[%s201 + $0x528] sm:$0xff]
      %v379 = vld [vmem:[%s201 + $0x530] sm:$0xff]
      %v380 = vld [vmem:[%s201 + $0x538] sm:$0xff]
      %v381 = vld [vmem:[%s201 + $0x540] sm:$0xff]
      %v382 = vld [vmem:[%s201 + $0x548] sm:$0xff]
      %v383 = vld [vmem:[%s201 + $0x550] sm:$0xff]
      %v384 = vld [vmem:[%s201 + $0x558] sm:$0xff]
      %v385 = vld [vmem:[%s201 + $0x560] sm:$0xff]
      %v386 = vld [vmem:[%s201 + $0x568] sm:$0xff]
      %v387 = vld [vmem:[%s201 + $0x570] sm:$0xff]
      %v388 = vld [vmem:[%s201 + $0x578] sm:$0xff]
      %v389 = vld [vmem:[%s201 + $0x580] sm:$0xff]
      %v390 = vld [vmem:[%s201 + $0x588] sm:$0xff]
      %v391 = vld [vmem:[%s201 + $0x590] sm:$0xff]
      %v392 = vld [vmem:[%s201 + $0x598] sm:$0xff]
      %v393 = vld [vmem:[%s201 + $0x5a0] sm:$0xff]
      %v394 = vld [vmem:[%s201 + $0x5a8] sm:$0xff]
      %v395 = vld [vmem:[%s201 + $0x5b0] sm:$0xff]
      %v396 = vld [vmem:[%s201 + $0x5b8] sm:$0xff]
      %v397 = vld [vmem:[%s201 + $0x5c0] sm:$0xff]
      %v398 = vld [vmem:[%s201 + $0x5c8] sm:$0xff]
      %v399 = vld [vmem:[%s201 + $0x5d0] sm:$0xff]
      %v400 = vld [vmem:[%s201 + $0x5d8] sm:$0xff]
      %v401 = vld [vmem:[%s201 + $0x5e0] sm:$0xff]
      %v402 = vld [vmem:[%s201 + $0x5e8] sm:$0xff]
      %v403 = vld [vmem:[%s201 + $0x5f0] sm:$0xff]
      %v404 = vld [vmem:[%s201 + $0x5f8] sm:$0xff]
      %v405 = vld [vmem:[%s201 + $0x600] sm:$0xff]
      %v406 = vld [vmem:[%s201 + $0x608] sm:$0xff]
      %v407 = vld [vmem:[%s201 + $0x610] sm:$0xff]
      %v408 = vld [vmem:[%s201 + $0x618] sm:$0xff]
      %v409 = vld [vmem:[%s201 + $0x620] sm:$0xff]
      %v410 = vld [vmem:[%s201 + $0x628] sm:$0xff]
      %v411 = vld [vmem:[%s201 + $0x630] sm:$0xff]
      %v412 = vld [vmem:[%s201 + $0x638] sm:$0xff]
      %v413 = vld [vmem:[%s201 + $0x640] sm:$0xff]
      %v414 = vld [vmem:[%s201 + $0x648] sm:$0xff]
      %v415 = vld [vmem:[%s201 + $0x650] sm:$0xff]
      %v416 = vld [vmem:[%s201 + $0x658] sm:$0xff]
      %v417 = vld [vmem:[%s201 + $0x660] sm:$0xff]
      %v418 = vld [vmem:[%s201 + $0x668] sm:$0xff]
      %v419 = vld [vmem:[%s201 + $0x670] sm:$0xff]
      %v420 = vld [vmem:[%s201 + $0x678] sm:$0xff]
      %v421 = vld [vmem:[%s201 + $0x680] sm:$0xff]
      %v422 = vld [vmem:[%s201 + $0x688] sm:$0xff]
      %v423 = vld [vmem:[%s201 + $0x690] sm:$0xff]
      %v424 = vld [vmem:[%s201 + $0x698] sm:$0xff]
      %v425 = vld [vmem:[%s201 + $0x6a0] sm:$0xff]
      %v426 = vld [vmem:[%s201 + $0x6a8] sm:$0xff]
      %v427 = vld [vmem:[%s201 + $0x6b0] sm:$0xff]
      %v428 = vld [vmem:[%s201 + $0x6b8] sm:$0xff]
      %v429 = vld [vmem:[%s201 + $0x6c0] sm:$0xff]
      %v430 = vld [vmem:[%s201 + $0x6c8] sm:$0xff]
      %v431 = vld [vmem:[%s201 + $0x6d0] sm:$0xff]
      %v432 = vld [vmem:[%s201 + $0x6d8] sm:$0xff]
      %v433 = vld [vmem:[%s201 + $0x6e0] sm:$0xff]
      %v434 = vld [vmem:[%s201 + $0x6e8] sm:$0xff]
      %v435 = vld [vmem:[%s201 + $0x6f0] sm:$0xff]
      %v436 = vld [vmem:[%s201 + $0x6f8] sm:$0xff]
      %v437 = vld [vmem:[%s201 + $0x700] sm:$0xff]
      %v438 = vld [vmem:[%s201 + $0x708] sm:$0xff]
      %v439 = vld [vmem:[%s201 + $0x710] sm:$0xff]
      %v440 = vld [vmem:[%s201 + $0x718] sm:$0xff]
      %v441 = vld [vmem:[%s201 + $0x720] sm:$0xff]
      %v442 = vld [vmem:[%s201 + $0x728] sm:$0xff]
      %v443 = vld [vmem:[%s201 + $0x730] sm:$0xff]
      %v444 = vld [vmem:[%s201 + $0x738] sm:$0xff]
      %v445 = vld [vmem:[%s201 + $0x740] sm:$0xff]
      %v446 = vld [vmem:[%s201 + $0x748] sm:$0xff]
      %v447 = vld [vmem:[%s201 + $0x750] sm:$0xff]
      %v448 = vld [vmem:[%s201 + $0x758] sm:$0xff]
      %v449 = vld [vmem:[%s201 + $0x760] sm:$0xff]
      %v450 = vld [vmem:[%s201 + $0x768] sm:$0xff]
      %v451 = vld [vmem:[%s201 + $0x770] sm:$0xff]
      %v452 = vld [vmem:[%s201 + $0x778] sm:$0xff]
      %v453 = vld [vmem:[%s201 + $0x780] sm:$0xff]
      %v454 = vld [vmem:[%s201 + $0x788] sm:$0xff]
      %v455 = vld [vmem:[%s201 + $0x790] sm:$0xff]
      %v456 = vld [vmem:[%s201 + $0x798] sm:$0xff]
      %v457 = vld [vmem:[%s201 + $0x7a0] sm:$0xff]
      %v458 = vld [vmem:[%s201 + $0x7a8] sm:$0xff]
      %v459 = vld [vmem:[%s201 + $0x7b0] sm:$0xff]
      %v460 = vld [vmem:[%s201 + $0x7b8] sm:$0xff]
      %v461 = vld [vmem:[%s201 + $0x7c0] sm:$0xff]
      %v462 = vld [vmem:[%s201 + $0x7c8] sm:$0xff]
      %v463 = vld [vmem:[%s201 + $0x7d0] sm:$0xff]
      %v464 = vld [vmem:[%s201 + $0x7d8] sm:$0xff]
      %v465 = vld [vmem:[%s201 + $0x7e0] sm:$0xff]
      %v466 = vld [vmem:[%s201 + $0x7e8] sm:$0xff]
      %v467 = vld [vmem:[%s201 + $0x7f0] sm:$0xff]
      %v468 = vld [vmem:[%s201 + $0x7f8] sm:$0xff]
      %v469 = vld [vmem:[%s201 + $0x800] sm:$0xff]
      %v470 = vld [vmem:[%s201 + $0x808] sm:$0xff]
      %v471 = vld [vmem:[%s201 + $0x810] sm:$0xff]
      %v472 = vld [vmem:[%s201 + $0x818] sm:$0xff]
      %v473 = vld [vmem:[%s201 + $0x820] sm:$0xff]
      %v474 = vld [vmem:[%s201 + $0x828] sm:$0xff]
      %v475 = vld [vmem:[%s201 + $0x830] sm:$0xff]
      %v476 = vld [vmem:[%s201 + $0x838] sm:$0xff]
      %v477 = vld [vmem:[%s201 + $0x840] sm:$0xff]
      %v478 = vld [vmem:[%s201 + $0x848] sm:$0xff]
      %v479 = vld [vmem:[%s201 + $0x850] sm:$0xff]
      %v480 = vld [vmem:[%s201 + $0x858] sm:$0xff]
      %v481 = vld [vmem:[%s201 + $0x860] sm:$0xff]
      %v482 = vld [vmem:[%s201 + $0x868] sm:$0xff]
      %v483 = vld [vmem:[%s201 + $0x870] sm:$0xff]
      %v484 = vld [vmem:[%s201 + $0x878] sm:$0xff]
      %v485 = vld [vmem:[%s201 + $0x880] sm:$0xff]
      %v486 = vld [vmem:[%s201 + $0x888] sm:$0xff]
      %v487 = vld [vmem:[%s201 + $0x890] sm:$0xff]
      %v488 = vld [vmem:[%s201 + $0x898] sm:$0xff]
      %v489 = vld [vmem:[%s201 + $0x8a0] sm:$0xff]
      %v490 = vld [vmem:[%s201 + $0x8a8] sm:$0xff]
      %v491 = vld [vmem:[%s201 + $0x8b0] sm:$0xff]
      %v492 = vld [vmem:[%s201 + $0x8b8] sm:$0xff]
      %v493 = vld [vmem:[%s201 + $0x8c0] sm:$0xff]
      %v494 = vld [vmem:[%s201 + $0x8c8] sm:$0xff]
      %v495 = vld [vmem:[%s201 + $0x8d0] sm:$0xff]
      %v496 = vld [vmem:[%s201 + $0x8d8] sm:$0xff]
      %v497 = vld [vmem:[%s201 + $0x8e0] sm:$0xff]
      %v498 = vld [vmem:[%s201 + $0x8e8] sm:$0xff]
      %v499 = vld [vmem:[%s201 + $0x8f0] sm:$0xff]
      %v500 = vld [vmem:[%s201 + $0x8f8] sm:$0xff]
      %v501 = vld [vmem:[%s1] sm:$0xff]
      %v502 = vld [vmem:[%s1 + $0x8] sm:$0xff]
      %v503 = vld [vmem:[%s1 + $0x10] sm:$0xff]
      %v504 = vld [vmem:[%s1 + $0x18] sm:$0xff]
      %v505 = vld [vmem:[%s1 + $0x20] sm:$0xff]
      %v506 = vld [vmem:[%s1 + $0x28] sm:$0xff]
      %v507 = vld [vmem:[%s1 + $0x30] sm:$0xff]
      %v508 = vld [vmem:[%s1 + $0x38] sm:$0xff]
      %v509 = vld [vmem:[%s1 + $0x40] sm:$0xff]
      %v510 = vld [vmem:[%s1 + $0x48] sm:$0xff]
      %v511 = vld [vmem:[%s1 + $0x50] sm:$0xff]
      %v512 = vld [vmem:[%s1 + $0x58] sm:$0xff]
      %v513 = vld [vmem:[%s1 + $0x60] sm:$0xff]
      %v514 = vld [vmem:[%s1 + $0x68] sm:$0xff]
      %v515 = vld [vmem:[%s1 + $0x70] sm:$0xff]
      %v516 = vld [vmem:[%s1 + $0x78] sm:$0xff]
      %v517 = vld [vmem:[%s1 + $0x80] sm:$0xff]
      %v518 = vld [vmem:[%s1 + $0x88] sm:$0xff]
      %v519 = vld [vmem:[%s1 + $0x90] sm:$0xff]
      %v520 = vld [vmem:[%s1 + $0x98] sm:$0xff]
      %v521 = vld [vmem:[%s1 + $0xa0] sm:$0xff]
      %v522 = vld [vmem:[%s1 + $0xa8] sm:$0xff]
      %v523 = vld [vmem:[%s1 + $0xb0] sm:$0xff]
      %v524 = vld [vmem:[%s1 + $0xb8] sm:$0xff]
      %v525 = vld [vmem:[%s1 + $0xc0] sm:$0xff]
      %v526 = vld [vmem:[%s1 + $0xc8] sm:$0xff]
      %v527 = vld [vmem:[%s1 + $0xd0] sm:$0xff]
      %v528 = vld [vmem:[%s1 + $0xd8] sm:$0xff]
      %v529 = vld [vmem:[%s1 + $0xe0] sm:$0xff]
      %v530 = vld [vmem:[%s1 + $0xe8] sm:$0xff]
      %v531 = vld [vmem:[%s1 + $0xf0] sm:$0xff]
      %v532 = vld [vmem:[%s1 + $0xf8] sm:$0xff]
      %v533 = vld [vmem:[%s1 + $0x100] sm:$0xff]
      %v534 = vld [vmem:[%s1 + $0x108] sm:$0xff]
      %v535 = vld [vmem:[%s1 + $0x110] sm:$0xff]
      %v536 = vld [vmem:[%s1 + $0x118] sm:$0xff]
      %v537 = vld [vmem:[%s1 + $0x120] sm:$0xff]
      %v538 = vld [vmem:[%s1 + $0x128] sm:$0xff]
      %v539 = vld [vmem:[%s1 + $0x130] sm:$0xff]
      %v540 = vld [vmem:[%s1 + $0x138] sm:$0xff]
      %v541 = vld [vmem:[%s1 + $0x140] sm:$0xff]
      %v542 = vld [vmem:[%s1 + $0x148] sm:$0xff]
      %v543 = vld [vmem:[%s1 + $0x150] sm:$0xff]
      %v544 = vld [vmem:[%s1 + $0x158] sm:$0xff]
      %v545 = vld [vmem:[%s1 + $0x160] sm:$0xff]
      %v546 = vld [vmem:[%s1 + $0x168] sm:$0xff]
      %v547 = vld [vmem:[%s1 + $0x170] sm:$0xff]
      %v548 = vld [vmem:[%s1 + $0x178] sm:$0xff]
      %v549 = vld [vmem:[%s1 + $0x180] sm:$0xff]
      %v550 = vld [vmem:[%s1 + $0x188] sm:$0xff]
      %v551 = vld [vmem:[%s1 + $0x190] sm:$0xff]
      %v552 = vld [vmem:[%s1 + $0x198] sm:$0xff]
      %v553 = vld [vmem:[%s1 + $0x1a0] sm:$0xff]
      %v554 = vld [vmem:[%s1 + $0x1a8] sm:$0xff]
      %v555 = vld [vmem:[%s1 + $0x1b0] sm:$0xff]
      %v556 = vld [vmem:[%s1 + $0x1b8] sm:$0xff]
      %v557 = vld [vmem:[%s1 + $0x1c0] sm:$0xff]
      %v558 = vld [vmem:[%s1 + $0x1c8] sm:$0xff]
      %v559 = vld [vmem:[%s1 + $0x1d0] sm:$0xff]
      %v560 = vld [vmem:[%s1 + $0x1d8] sm:$0xff]
      %v561 = vld [vmem:[%s1 + $0x1e0] sm:$0xff]
      %v562 = vld [vmem:[%s1 + $0x1e8] sm:$0xff]
      %v563 = vld [vmem:[%s1 + $0x1f0] sm:$0xff]
      %v564 = vld [vmem:[%s1 + $0x1f8] sm:$0xff]
      %v565 = vld [vmem:[%s1 + $0x200] sm:$0xff]
      %v566 = vld [vmem:[%s1 + $0x208] sm:$0xff]
      %v567 = vld [vmem:[%s1 + $0x210] sm:$0xff]
      %v568 = vld [vmem:[%s1 + $0x218] sm:$0xff]
      %v569 = vld [vmem:[%s1 + $0x220] sm:$0xff]
      %v570 = vld [vmem:[%s1 + $0x228] sm:$0xff]
      %v571 = vld [vmem:[%s1 + $0x230] sm:$0xff]
      %v572 = vld [vmem:[%s1 + $0x238] sm:$0xff]
      %v573 = vld [vmem:[%s1 + $0x240] sm:$0xff]
      %v574 = vld [vmem:[%s1 + $0x248] sm:$0xff]
      %v575 = vld [vmem:[%s1 + $0x250] sm:$0xff]
      %v576 = vld [vmem:[%s1 + $0x258] sm:$0xff]
      %v577 = vld [vmem:[%s1 + $0x260] sm:$0xff]
      %v578 = vld [vmem:[%s1 + $0x268] sm:$0xff]
      %v579 = vld [vmem:[%s1 + $0x270] sm:$0xff]
      %v580 = vld [vmem:[%s1 + $0x278] sm:$0xff]
      %v581 = vld [vmem:[%s1 + $0x280] sm:$0xff]
      %v582 = vld [vmem:[%s1 + $0x288] sm:$0xff]
      %v583 = vld [vmem:[%s1 + $0x290] sm:$0xff]
      %v584 = vld [vmem:[%s1 + $0x298] sm:$0xff]
      %v585 = vld [vmem:[%s1 + $0x2a0] sm:$0xff]
      %v586 = vld [vmem:[%s1 + $0x2a8] sm:$0xff]
      %v587 = vld [vmem:[%s1 + $0x2b0] sm:$0xff]
      %v588 = vld [vmem:[%s1 + $0x2b8] sm:$0xff]
      %v589 = vld [vmem:[%s1 + $0x2c0] sm:$0xff]
      %v590 = vld [vmem:[%s1 + $0x2c8] sm:$0xff]
      %v591 = vld [vmem:[%s1 + $0x2d0] sm:$0xff]
      %v592 = vld [vmem:[%s1 + $0x2d8] sm:$0xff]
      %v593 = vld [vmem:[%s1 + $0x2e0] sm:$0xff]
      %v594 = vld [vmem:[%s1 + $0x2e8] sm:$0xff]
      %v595 = vld [vmem:[%s1 + $0x2f0] sm:$0xff]
      %v596 = vld [vmem:[%s1 + $0x2f8] sm:$0xff]
      %v597 = vld [vmem:[%s1 + $0x300] sm:$0xff]
      %v598 = vld [vmem:[%s1 + $0x308] sm:$0xff]
      %v599 = vld [vmem:[%s1 + $0x310] sm:$0xff]
      %v600 = vld [vmem:[%s1 + $0x318] sm:$0xff]
      %v601 = vld [vmem:[%s1 + $0x320] sm:$0xff]
      %v602 = vld [vmem:[%s1 + $0x328] sm:$0xff]
      %v603 = vld [vmem:[%s1 + $0x330] sm:$0xff]
      %v604 = vld [vmem:[%s1 + $0x338] sm:$0xff]
      %v605 = vld [vmem:[%s1 + $0x340] sm:$0xff]
      %v606 = vld [vmem:[%s1 + $0x348] sm:$0xff]
      %v607 = vld [vmem:[%s1 + $0x350] sm:$0xff]
      %v608 = vld [vmem:[%s1 + $0x358] sm:$0xff]
      %v609 = vld [vmem:[%s1 + $0x360] sm:$0xff]
      %v610 = vld [vmem:[%s1 + $0x368] sm:$0xff]
      %v611 = vld [vmem:[%s1 + $0x370] sm:$0xff]
      %v612 = vld [vmem:[%s1 + $0x378] sm:$0xff]
      %v613 = vld [vmem:[%s1 + $0x380] sm:$0xff]
      %v614 = vld [vmem:[%s1 + $0x388] sm:$0xff]
      %v615 = vld [vmem:[%s1 + $0x390] sm:$0xff]
      %v616 = vld [vmem:[%s1 + $0x398] sm:$0xff]
      %v617 = vld [vmem:[%s1 + $0x3a0] sm:$0xff]
      %v618 = vld [vmem:[%s1 + $0x3a8] sm:$0xff]
      %v619 = vld [vmem:[%s1 + $0x3b0] sm:$0xff]
      %v620 = vld [vmem:[%s1 + $0x3b8] sm:$0xff]
      %v621 = vld [vmem:[%s1 + $0x3c0] sm:$0xff]
      %v622 = vld [vmem:[%s1 + $0x3c8] sm:$0xff]
      %v623 = vld [vmem:[%s1 + $0x3d0] sm:$0xff]
      %v624 = vld [vmem:[%s1 + $0x3d8] sm:$0xff]
      %v625 = vld [vmem:[%s1 + $0x3e0] sm:$0xff]
      %v626 = vld [vmem:[%s1 + $0x3e8] sm:$0xff]
      %v627 = vld [vmem:[%s1 + $0x3f0] sm:$0xff]
      %v628 = vld [vmem:[%s1 + $0x3f8] sm:$0xff]
      %v629 = vld [vmem:[%s1 + $0x400] sm:$0xff]
      %v630 = vld [vmem:[%s1 + $0x408] sm:$0xff]
      %v631 = vld [vmem:[%s1 + $0x410] sm:$0xff]
      %v632 = vld [vmem:[%s1 + $0x418] sm:$0xff]
      %v633 = vld [vmem:[%s1 + $0x420] sm:$0xff]
      %v634 = vld [vmem:[%s1 + $0x428] sm:$0xff]
      %v635 = vld [vmem:[%s1 + $0x430] sm:$0xff]
      %v636 = vld [vmem:[%s1 + $0x438] sm:$0xff]
      %v637 = vld [vmem:[%s1 + $0x440] sm:$0xff]
      %v638 = vld [vmem:[%s1 + $0x448] sm:$0xff]
      %v639 = vld [vmem:[%s1 + $0x450] sm:$0xff]
      %v640 = vld [vmem:[%s1 + $0x458] sm:$0xff]
      %v641 = vld [vmem:[%s1 + $0x460] sm:$0xff]
      %v642 = vld [vmem:[%s1 + $0x468] sm:$0xff]
      %v643 = vld [vmem:[%s1 + $0x470] sm:$0xff]
      %v644 = vld [vmem:[%s1 + $0x478] sm:$0xff]
      %v645 = vld [vmem:[%s2] sm:$0x1]
      %v647 = vlaneseq
      %v648 = vshrl.u32 %v647, 7
      %v649 = vsub.s32 0, %v648
      %v650 = vrot.slane %v645, %v649
      %652 = vmatprep.subr.mxu0 0.0
      %653 = vmatpush1.msra.mxu0 %v501
      %654 = vmatprep.subr.mxu0 0.0
      %655 = vmatpush1.msra.mxu0 %v502
      %656 = vmatprep.subr.mxu0 0.0
      %657 = vmatpush1.msra.mxu0 %v503
      %658 = vmatprep.subr.mxu0 0.0
      %659 = vmatpush1.msra.mxu0 %v504
      %660 = vmatprep.subr.mxu0 0.0
      %661 = vmatpush1.msra.mxu0 %v505
      %662 = vmatprep.subr.mxu0 0.0
      %663 = vmatpush1.msra.mxu0 %v506
      %664 = vmatprep.subr.mxu0 0.0
      %665 = vmatpush1.msra.mxu0 %v507
      %666 = vmatprep.subr.mxu0 0.0
      %667 = vmatpush1.msra.mxu0 %v508
      %668 = vmatprep.subr.mxu0 0.0
      %669 = vmatpush1.msra.mxu0 %v509
      %670 = vmatprep.subr.mxu0 0.0
      %671 = vmatpush1.msra.mxu0 %v510
      %672 = vmatprep.subr.mxu0 0.0
      %673 = vmatpush1.msra.mxu0 %v511
      %674 = vmatprep.subr.mxu0 0.0
      %675 = vmatpush1.msra.mxu0 %v512
      %676 = vmatprep.subr.mxu0 0.0
      %677 = vmatpush1.msra.mxu0 %v513
      %678 = vmatprep.subr.mxu0 0.0
      %679 = vmatpush1.msra.mxu0 %v514
      %680 = vmatprep.subr.mxu0 0.0
      %681 = vmatpush1.msra.mxu0 %v515
      %682 = vmatprep.subr.mxu0 0.0
      %683 = vmatpush1.msra.mxu0 %v516
      %684 = vmatprep.subr.mxu0 0.0
      %685 = vmatpush1.msra.mxu0 %v517
      %686 = vmatprep.subr.mxu0 0.0
      %687 = vmatpush1.msra.mxu0 %v518
      %688 = vmatprep.subr.mxu0 0.0
      %689 = vmatpush1.msra.mxu0 %v519
      %690 = vmatprep.subr.mxu0 0.0
      %691 = vmatpush1.msra.mxu0 %v520
      %692 = vmatprep.subr.mxu0 0.0
      %693 = vmatpush1.msra.mxu0 %v521
      %694 = vmatprep.subr.mxu0 0.0
      %695 = vmatpush1.msra.mxu0 %v522
      %696 = vmatprep.subr.mxu0 0.0
      %697 = vmatpush1.msra.mxu0 %v523
      %698 = vmatprep.subr.mxu0 0.0
      %699 = vmatpush1.msra.mxu0 %v524
      %700 = vmatprep.subr.mxu0 0.0
      %701 = vmatpush1.msra.mxu0 %v525
      %702 = vmatprep.subr.mxu0 0.0
      %703 = vmatpush1.msra.mxu0 %v526
      %704 = vmatprep.subr.mxu0 0.0
      %705 = vmatpush1.msra.mxu0 %v527
      %706 = vmatprep.subr.mxu0 0.0
      %707 = vmatpush1.msra.mxu0 %v528
      %708 = vmatprep.subr.mxu0 0.0
      %709 = vmatpush1.msra.mxu0 %v529
      %710 = vmatprep.subr.mxu0 0.0
      %711 = vmatpush1.msra.mxu0 %v530
      %712 = vmatprep.subr.mxu0 0.0
      %713 = vmatpush1.msra.mxu0 %v531
      %714 = vmatprep.subr.mxu0 0.0
      %715 = vmatpush1.msra.mxu0 %v532
      %716 = vmatprep.mubr.f32.mxu0 %v214
      %717 = vmatmul.mubr.f32.gmra.mrb[0].mxu0 %v213
      %v718 = vpop.f32.mrb[0].mxu0
      %v719 = vadd.f32 %v650, %v718
      %v720 = vpop.f32.mrb[0].mxu0
      %721 = vmatprep.mubr.f32.mxu0 %v223
      %722 = vmatmul.mubr.f32.gmra.mrb[0].mxu0 %v222
      %v723 = vpop.f32.mrb[0].mxu0
      %v724 = vadd.f32 %v650, %v723
      %v725 = vpop.f32.mrb[0].mxu0
      %726 = vmatprep.mubr.f32.mxu0 %v232
      %727 = vmatmul.mubr.f32.gmra.mrb[0].mxu0 %v231
      %v728 = vpop.f32.mrb[0].mxu0
      %v729 = vadd.f32 %v650, %v728
      %v730 = vpop.f32.mrb[0].mxu0
      %731 = vmatprep.mubr.f32.mxu0 %v241
      %732 = vmatmul.mubr.f32.gmra.mrb[0].mxu0 %v240
      %v733 = vpop.f32.mrb[0].mxu0
      %v734 = vadd.f32 %v650, %v733
      %v735 = vpop.f32.mrb[0].mxu0
      %736 = vmatprep.mubr.f32.mxu0 %v250
      %737 = vmatmul.mubr.f32.gmra.mrb[0].mxu0 %v249
      %v738 = vpop.f32.mrb[0].mxu0
      %v739 = vadd.f32 %v650, %v738
      %v740 = vpop.f32.mrb[0].mxu0
      %741 = vmatprep.mubr.f32.mxu0 %v259
      %742 = vmatmul.mubr.f32.gmra.mrb[0].mxu0 %v258
      %v743 = vpop.f32.mrb[0].mxu0
      %v744 = vadd.f32 %v650, %v743
      %v745 = vpop.f32.mrb[0].mxu0
      %746 = vmatprep.mubr.f32.mxu0 %v268
      %747 = vmatmul.mubr.f32.gmra.mrb[0].mxu0 %v267
      %v748 = vpop.f32.mrb[0].mxu0
      %v749 = vadd.f32 %v650, %v748
      %v750 = vpop.f32.mrb[0].mxu0
      %751 = vmatprep.mubr.f32.mxu0 %v277
      %752 = vmatmul.mubr.f32.gmra.mrb[0].mxu0 %v276
      %v753 = vpop.f32.mrb[0].mxu0
      %v754 = vadd.f32 %v650, %v753
      %v755 = vpop.f32.mrb[0].mxu0
      %756 = vmatprep.mubr.f32.mxu0 %v286
      %757 = vmatmul.mubr.f32.gmra.mrb[0].mxu0 %v285
      %v758 = vpop.f32.mrb[0].mxu0
      %v759 = vadd.f32 %v650, %v758
      %v760 = vpop.f32.mrb[0].mxu0
      %761 = vmatprep.mubr.f32.mxu0 %v295
      %762 = vmatmul.mubr.f32.gmra.mrb[0].mxu0 %v294
      %v763 = vpop.f32.mrb[0].mxu0
      %v764 = vadd.f32 %v650, %v763
      %v765 = vpop.f32.mrb[0].mxu0
      %766 = vmatprep.mubr.f32.mxu0 %v304
      %767 = vmatmul.mubr.f32.gmra.mrb[0].mxu0 %v303
      %v768 = vpop.f32.mrb[0].mxu0
      %v769 = vadd.f32 %v650, %v768
      %v770 = vpop.f32.mrb[0].mxu0
      %771 = vmatprep.mubr.f32.mxu0 %v313
      %772 = vmatmul.mubr.f32.gmra.mrb[0].mxu0 %v312
      %v773 = vpop.f32.mrb[0].mxu0
      %v774 = vadd.f32 %v650, %v773
      %v775 = vpop.f32.mrb[0].mxu0
      %776 = vmatprep.mubr.f32.mxu0 %v322
      %777 = vmatmul.mubr.f32.gmra.mrb[0].mxu0 %v321
      %v778 = vpop.f32.mrb[0].mxu0
      %v779 = vadd.f32 %v650, %v778
      %v780 = vpop.f32.mrb[0].mxu0
      %781 = vmatprep.mubr.f32.mxu0 %v331
      %782 = vmatmul.mubr.f32.gmra.mrb[0].mxu0 %v330
      %v783 = vpop.f32.mrb[0].mxu0
      %v784 = vadd.f32 %v650, %v783
      %v785 = vpop.f32.mrb[0].mxu0
      %786 = vmatprep.mubr.f32.mxu0 %v340
      %787 = vmatmul.mubr.f32.gmra.mrb[0].mxu0 %v339
      %v788 = vpop.f32.mrb[0].mxu0
      %v789 = vadd.f32 %v650, %v788
      %v790 = vpop.f32.mrb[0].mxu0
      %791 = vmatprep.mubr.f32.mxu0 %v349
      %792 = vmatmul.mubr.f32.gmra.mrb[0].mxu0 %v348
      %v793 = vpop.f32.mrb[0].mxu0
      %v794 = vadd.f32 %v650, %v793
      %v795 = vpop.f32.mrb[0].mxu0
      %796 = vmatprep.mubr.f32.mxu0 %v358
      %797 = vmatmul.mubr.f32.gmra.mrb[0].mxu0 %v357
      %v798 = vpop.f32.mrb[0].mxu0
      %v799 = vadd.f32 %v650, %v798
      %v800 = vpop.f32.mrb[0].mxu0
      %801 = vmatprep.mubr.f32.mxu0 %v367
      %802 = vmatmul.mubr.f32.gmra.mrb[0].mxu0 %v366
      %v803 = vpop.f32.mrb[0].mxu0
      %v804 = vadd.f32 %v650, %v803
      %v805 = vpop.f32.mrb[0].mxu0
      %806 = vmatprep.mubr.f32.mxu0 %v376
      %807 = vmatmul.mubr.f32.gmra.mrb[0].mxu0 %v375
      %v808 = vpop.f32.mrb[0].mxu0
      %v809 = vadd.f32 %v650, %v808
      %v810 = vpop.f32.mrb[0].mxu0
      %811 = vmatprep.mubr.f32.mxu0 %v385
      %812 = vmatmul.mubr.f32.gmra.mrb[0].mxu0 %v384
      %v813 = vpop.f32.mrb[0].mxu0
      %v814 = vadd.f32 %v650, %v813
      %v815 = vpop.f32.mrb[0].mxu0
      %816 = vmatprep.mubr.f32.mxu0 %v394
      %817 = vmatmul.mubr.f32.gmra.mrb[0].mxu0 %v393
      %v818 = vpop.f32.mrb[0].mxu0
      %v819 = vadd.f32 %v650, %v818
      %v820 = vpop.f32.mrb[0].mxu0
      %821 = vmatprep.mubr.f32.mxu0 %v403
      %822 = vmatmul.mubr.f32.gmra.mrb[0].mxu0 %v402
      %v823 = vpop.f32.mrb[0].mxu0
      %v824 = vadd.f32 %v650, %v823
      %v825 = vpop.f32.mrb[0].mxu0
      %826 = vmatprep.mubr.f32.mxu0 %v412
      %827 = vmatmul.mubr.f32.gmra.mrb[0].mxu0 %v411
      %v828 = vpop.f32.mrb[0].mxu0
      %v829 = vadd.f32 %v650, %v828
      %v830 = vpop.f32.mrb[0].mxu0
      %831 = vmatprep.mubr.f32.mxu0 %v421
      %832 = vmatmul.mubr.f32.gmra.mrb[0].mxu0 %v420
      %v833 = vpop.f32.mrb[0].mxu0
      %v834 = vadd.f32 %v650, %v833
      %v835 = vpop.f32.mrb[0].mxu0
      %836 = vmatprep.mubr.f32.mxu0 %v430
      %837 = vmatmul.mubr.f32.gmra.mrb[0].mxu0 %v429
      %v838 = vpop.f32.mrb[0].mxu0
      %v839 = vadd.f32 %v650, %v838
      %v840 = vpop.f32.mrb[0].mxu0
      %841 = vmatprep.mubr.f32.mxu0 %v439
      %842 = vmatmul.mubr.f32.gmra.mrb[0].mxu0 %v438
      %v843 = vpop.f32.mrb[0].mxu0
      %v844 = vadd.f32 %v650, %v843
      %v845 = vpop.f32.mrb[0].mxu0
      %846 = vmatprep.mubr.f32.mxu0 %v448
      %847 = vmatmul.mubr.f32.gmra.mrb[0].mxu0 %v447
      %v848 = vpop.f32.mrb[0].mxu0
      %v849 = vadd.f32 %v650, %v848
      %v850 = vpop.f32.mrb[0].mxu0
      %851 = vmatprep.mubr.f32.mxu0 %v457
      %852 = vmatmul.mubr.f32.gmra.mrb[0].mxu0 %v456
      %v853 = vpop.f32.mrb[0].mxu0
      %v854 = vadd.f32 %v650, %v853
      %v855 = vpop.f32.mrb[0].mxu0
      %856 = vmatprep.mubr.f32.mxu0 %v466
      %857 = vmatmul.mubr.f32.gmra.mrb[0].mxu0 %v465
      %v858 = vpop.f32.mrb[0].mxu0
      %v859 = vadd.f32 %v650, %v858
      %v860 = vpop.f32.mrb[0].mxu0
      %861 = vmatprep.mubr.f32.mxu0 %v475
      %862 = vmatmul.mubr.f32.gmra.mrb[0].mxu0 %v474
      %v863 = vpop.f32.mrb[0].mxu0
      %v864 = vadd.f32 %v650, %v863
      %v865 = vpop.f32.mrb[0].mxu0
      %866 = vmatprep.mubr.f32.mxu0 %v484
      %867 = vmatmul.mubr.f32.gmra.mrb[0].mxu0 %v483
      %v868 = vpop.f32.mrb[0].mxu0
      %v869 = vadd.f32 %v650, %v868
      %v870 = vpop.f32.mrb[0].mxu0
      %871 = vmatprep.mubr.f32.mxu0 %v493
      %872 = vmatmul.mubr.f32.gmra.mrb[0].mxu0 %v492
      %v873 = vpop.f32.mrb[0].mxu0
      %v874 = vadd.f32 %v650, %v873
      %v875 = vpop.f32.mrb[0].mxu0
      %876 = vdwg.mxu0
      %877 = vmatprep.subr.mxu0 0.0
      %878 = vmatpush1.msra.mxu0 %v533
      %879 = vmatprep.subr.mxu0 0.0
      %880 = vmatpush1.msra.mxu0 %v534
      %881 = vmatprep.subr.mxu0 0.0
      %882 = vmatpush1.msra.mxu0 %v535
      %883 = vmatprep.subr.mxu0 0.0
      %884 = vmatpush1.msra.mxu0 %v536
      %885 = vmatprep.subr.mxu0 0.0
      %886 = vmatpush1.msra.mxu0 %v537
      %887 = vmatprep.subr.mxu0 0.0
      %888 = vmatpush1.msra.mxu0 %v538
      %889 = vmatprep.subr.mxu0 0.0
      %890 = vmatpush1.msra.mxu0 %v539
      %891 = vmatprep.subr.mxu0 0.0
      %892 = vmatpush1.msra.mxu0 %v540
      %893 = vmatprep.subr.mxu0 0.0
      %894 = vmatpush1.msra.mxu0 %v541
      %895 = vmatprep.subr.mxu0 0.0
      %896 = vmatpush1.msra.mxu0 %v542
      %897 = vmatprep.subr.mxu0 0.0
      %898 = vmatpush1.msra.mxu0 %v543
      %899 = vmatprep.subr.mxu0 0.0
      %900 = vmatpush1.msra.mxu0 %v544
      %901 = vmatprep.subr.mxu0 0.0
      %902 = vmatpush1.msra.mxu0 %v545
      %903 = vmatprep.subr.mxu0 0.0
      %904 = vmatpush1.msra.mxu0 %v546
      %905 = vmatprep.subr.mxu0 0.0
      %906 = vmatpush1.msra.mxu0 %v547
      %907 = vmatprep.subr.mxu0 0.0
      %908 = vmatpush1.msra.mxu0 %v548
      %909 = vmatprep.subr.mxu0 0.0
      %910 = vmatpush1.msra.mxu0 %v549
      %911 = vmatprep.subr.mxu0 0.0
      %912 = vmatpush1.msra.mxu0 %v550
      %913 = vmatprep.subr.mxu0 0.0
      %914 = vmatpush1.msra.mxu0 %v551
      %915 = vmatprep.subr.mxu0 0.0
      %916 = vmatpush1.msra.mxu0 %v552
      %917 = vmatprep.subr.mxu0 0.0
      %918 = vmatpush1.msra.mxu0 %v553
      %919 = vmatprep.subr.mxu0 0.0
      %920 = vmatpush1.msra.mxu0 %v554
      %921 = vmatprep.subr.mxu0 0.0
      %922 = vmatpush1.msra.mxu0 %v555
      %923 = vmatprep.subr.mxu0 0.0
      %924 = vmatpush1.msra.mxu0 %v556
      %925 = vmatprep.subr.mxu0 0.0
      %926 = vmatpush1.msra.mxu0 %v557
      %927 = vmatprep.subr.mxu0 0.0
      %928 = vmatpush1.msra.mxu0 %v558
      %929 = vmatprep.subr.mxu0 0.0
      %930 = vmatpush1.msra.mxu0 %v559
      %931 = vmatprep.subr.mxu0 0.0
      %932 = vmatpush1.msra.mxu0 %v560
      %933 = vmatprep.subr.mxu0 0.0
      %934 = vmatpush1.msra.mxu0 %v561
      %935 = vmatprep.subr.mxu0 0.0
      %936 = vmatpush1.msra.mxu0 %v562
      %937 = vmatprep.subr.mxu0 0.0
      %938 = vmatpush1.msra.mxu0 %v563
      %939 = vmatprep.subr.mxu0 0.0
      %940 = vmatpush1.msra.mxu0 %v564
      %941 = vmatprep.mubr.f32.mxu0 %v216
      %942 = vmatmul.mubr.f32.gmra.mrb[0].mxu0 %v215
      %v943 = vpop.f32.mrb[0].mxu0
      %v944 = vadd.f32 %v719, %v943
      %v945 = vpop.f32.mrb[0].mxu0
      %946 = vmatprep.mubr.f32.mxu0 %v225
      %947 = vmatmul.mubr.f32.gmra.mrb[0].mxu0 %v224
      %v948 = vpop.f32.mrb[0].mxu0
      %v949 = vadd.f32 %v724, %v948
      %v950 = vpop.f32.mrb[0].mxu0
      %951 = vmatprep.mubr.f32.mxu0 %v234
      %952 = vmatmul.mubr.f32.gmra.mrb[0].mxu0 %v233
      %v953 = vpop.f32.mrb[0].mxu0
      %v954 = vadd.f32 %v729, %v953
      %v955 = vpop.f32.mrb[0].mxu0
      %956 = vmatprep.mubr.f32.mxu0 %v243
      %957 = vmatmul.mubr.f32.gmra.mrb[0].mxu0 %v242
      %v958 = vpop.f32.mrb[0].mxu0
      %v959 = vadd.f32 %v734, %v958
      %v960 = vpop.f32.mrb[0].mxu0
      %961 = vmatprep.mubr.f32.mxu0 %v252
      %962 = vmatmul.mubr.f32.gmra.mrb[0].mxu0 %v251
      %v963 = vpop.f32.mrb[0].mxu0
      %v964 = vadd.f32 %v739, %v963
      %v965 = vpop.f32.mrb[0].mxu0
      %966 = vmatprep.mubr.f32.mxu0 %v261
      %967 = vmatmul.mubr.f32.gmra.mrb[0].mxu0 %v260
      %v968 = vpop.f32.mrb[0].mxu0
      %v969 = vadd.f32 %v744, %v968
      %v970 = vpop.f32.mrb[0].mxu0
      %971 = vmatprep.mubr.f32.mxu0 %v270
      %972 = vmatmul.mubr.f32.gmra.mrb[0].mxu0 %v269
      %v973 = vpop.f32.mrb[0].mxu0
      %v974 = vadd.f32 %v749, %v973
      %v975 = vpop.f32.mrb[0].mxu0
      %976 = vmatprep.mubr.f32.mxu0 %v279
      %977 = vmatmul.mubr.f32.gmra.mrb[0].mxu0 %v278
      %v978 = vpop.f32.mrb[0].mxu0
      %v979 = vadd.f32 %v754, %v978
      %v980 = vpop.f32.mrb[0].mxu0
      %981 = vmatprep.mubr.f32.mxu0 %v288
      %982 = vmatmul.mubr.f32.gmra.mrb[0].mxu0 %v287
      %v983 = vpop.f32.mrb[0].mxu0
      %v984 = vadd.f32 %v759, %v983
      %v985 = vpop.f32.mrb[0].mxu0
      %986 = vmatprep.mubr.f32.mxu0 %v297
      %987 = vmatmul.mubr.f32.gmra.mrb[0].mxu0 %v296
      %v988 = vpop.f32.mrb[0].mxu0
      %v989 = vadd.f32 %v764, %v988
      %v990 = vpop.f32.mrb[0].mxu0
      %991 = vmatprep.mubr.f32.mxu0 %v306
      %992 = vmatmul.mubr.f32.gmra.mrb[0].mxu0 %v305
      %v993 = vpop.f32.mrb[0].mxu0
      %v994 = vadd.f32 %v769, %v993
      %v995 = vpop.f32.mrb[0].mxu0
      %996 = vmatprep.mubr.f32.mxu0 %v315
      %997 = vmatmul.mubr.f32.gmra.mrb[0].mxu0 %v314
      %v998 = vpop.f32.mrb[0].mxu0
      %v999 = vadd.f32 %v774, %v998
      %v1000 = vpop.f32.mrb[0].mxu0
      %1001 = vmatprep.mubr.f32.mxu0 %v324
      %1002 = vmatmul.mubr.f32.gmra.mrb[0].mxu0 %v323
      %v1003 = vpop.f32.mrb[0].mxu0
      %v1004 = vadd.f32 %v779, %v1003
      %v1005 = vpop.f32.mrb[0].mxu0
      %1006 = vmatprep.mubr.f32.mxu0 %v333
      %1007 = vmatmul.mubr.f32.gmra.mrb[0].mxu0 %v332
      %v1008 = vpop.f32.mrb[0].mxu0
      %v1009 = vadd.f32 %v784, %v1008
      %v1010 = vpop.f32.mrb[0].mxu0
      %1011 = vmatprep.mubr.f32.mxu0 %v342
      %1012 = vmatmul.mubr.f32.gmra.mrb[0].mxu0 %v341
      %v1013 = vpop.f32.mrb[0].mxu0
      %v1014 = vadd.f32 %v789, %v1013
      %v1015 = vpop.f32.mrb[0].mxu0
      %1016 = vmatprep.mubr.f32.mxu0 %v351
      %1017 = vmatmul.mubr.f32.gmra.mrb[0].mxu0 %v350
      %v1018 = vpop.f32.mrb[0].mxu0
      %v1019 = vadd.f32 %v794, %v1018
      %v1020 = vpop.f32.mrb[0].mxu0
      %1021 = vmatprep.mubr.f32.mxu0 %v360
      %1022 = vmatmul.mubr.f32.gmra.mrb[0].mxu0 %v359
      %v1023 = vpop.f32.mrb[0].mxu0
      %v1024 = vadd.f32 %v799, %v1023
      %v1025 = vpop.f32.mrb[0].mxu0
      %1026 = vmatprep.mubr.f32.mxu0 %v369
      %1027 = vmatmul.mubr.f32.gmra.mrb[0].mxu0 %v368
      %v1028 = vpop.f32.mrb[0].mxu0
      %v1029 = vadd.f32 %v804, %v1028
      %v1030 = vpop.f32.mrb[0].mxu0
      %1031 = vmatprep.mubr.f32.mxu0 %v378
      %1032 = vmatmul.mubr.f32.gmra.mrb[0].mxu0 %v377
      %v1033 = vpop.f32.mrb[0].mxu0
      %v1034 = vadd.f32 %v809, %v1033
      %v1035 = vpop.f32.mrb[0].mxu0
      %1036 = vmatprep.mubr.f32.mxu0 %v387
      %1037 = vmatmul.mubr.f32.gmra.mrb[0].mxu0 %v386
      %v1038 = vpop.f32.mrb[0].mxu0
      %v1039 = vadd.f32 %v814, %v1038
      %v1040 = vpop.f32.mrb[0].mxu0
      %1041 = vmatprep.mubr.f32.mxu0 %v396
      %1042 = vmatmul.mubr.f32.gmra.mrb[0].mxu0 %v395
      %v1043 = vpop.f32.mrb[0].mxu0
      %v1044 = vadd.f32 %v819, %v1043
      %v1045 = vpop.f32.mrb[0].mxu0
      %1046 = vmatprep.mubr.f32.mxu0 %v405
      %1047 = vmatmul.mubr.f32.gmra.mrb[0].mxu0 %v404
      %v1048 = vpop.f32.mrb[0].mxu0
      %v1049 = vadd.f32 %v824, %v1048
      %v1050 = vpop.f32.mrb[0].mxu0
      %1051 = vmatprep.mubr.f32.mxu0 %v414
      %1052 = vmatmul.mubr.f32.gmra.mrb[0].mxu0 %v413
      %v1053 = vpop.f32.mrb[0].mxu0
      %v1054 = vadd.f32 %v829, %v1053
      %v1055 = vpop.f32.mrb[0].mxu0
      %1056 = vmatprep.mubr.f32.mxu0 %v423
      %1057 = vmatmul.mubr.f32.gmra.mrb[0].mxu0 %v422
      %v1058 = vpop.f32.mrb[0].mxu0
      %v1059 = vadd.f32 %v834, %v1058
      %v1060 = vpop.f32.mrb[0].mxu0
      %1061 = vmatprep.mubr.f32.mxu0 %v432
      %1062 = vmatmul.mubr.f32.gmra.mrb[0].mxu0 %v431
      %v1063 = vpop.f32.mrb[0].mxu0
      %v1064 = vadd.f32 %v839, %v1063
      %v1065 = vpop.f32.mrb[0].mxu0
      %1066 = vmatprep.mubr.f32.mxu0 %v441
      %1067 = vmatmul.mubr.f32.gmra.mrb[0].mxu0 %v440
      %v1068 = vpop.f32.mrb[0].mxu0
      %v1069 = vadd.f32 %v844, %v1068
      %v1070 = vpop.f32.mrb[0].mxu0
      %1071 = vmatprep.mubr.f32.mxu0 %v450
      %1072 = vmatmul.mubr.f32.gmra.mrb[0].mxu0 %v449
      %v1073 = vpop.f32.mrb[0].mxu0
      %v1074 = vadd.f32 %v849, %v1073
      %v1075 = vpop.f32.mrb[0].mxu0
      %1076 = vmatprep.mubr.f32.mxu0 %v459
      %1077 = vmatmul.mubr.f32.gmra.mrb[0].mxu0 %v458
      %v1078 = vpop.f32.mrb[0].mxu0
      %v1079 = vadd.f32 %v854, %v1078
      %v1080 = vpop.f32.mrb[0].mxu0
      %1081 = vmatprep.mubr.f32.mxu0 %v468
      %1082 = vmatmul.mubr.f32.gmra.mrb[0].mxu0 %v467
      %v1083 = vpop.f32.mrb[0].mxu0
      %v1084 = vadd.f32 %v859, %v1083
      %v1085 = vpop.f32.mrb[0].mxu0
      %1086 = vmatprep.mubr.f32.mxu0 %v477
      %1087 = vmatmul.mubr.f32.gmra.mrb[0].mxu0 %v476
      %v1088 = vpop.f32.mrb[0].mxu0
      %v1089 = vadd.f32 %v864, %v1088
      %v1090 = vpop.f32.mrb[0].mxu0
      %1091 = vmatprep.mubr.f32.mxu0 %v486
      %1092 = vmatmul.mubr.f32.gmra.mrb[0].mxu0 %v485
      %v1093 = vpop.f32.mrb[0].mxu0
      %v1094 = vadd.f32 %v869, %v1093
      %v1095 = vpop.f32.mrb[0].mxu0
      %1096 = vmatprep.mubr.f32.mxu0 %v495
      %1097 = vmatmul.mubr.f32.gmra.mrb[0].mxu0 %v494
      %v1098 = vpop.f32.mrb[0].mxu0
      %v1099 = vadd.f32 %v874, %v1098
      %v1100 = vpop.f32.mrb[0].mxu0
      %1101 = vdwg.mxu0
      %1102 = vmatprep.subr.mxu0 0.0
      %1103 = vmatpush1.msra.mxu0 %v565
      %1104 = vmatprep.subr.mxu0 0.0
      %1105 = vmatpush1.msra.mxu0 %v566
      %1106 = vmatprep.subr.mxu0 0.0
      %1107 = vmatpush1.msra.mxu0 %v567
      %1108 = vmatprep.subr.mxu0 0.0
      %1109 = vmatpush1.msra.mxu0 %v568
      %1110 = vmatprep.subr.mxu0 0.0
      %1111 = vmatpush1.msra.mxu0 %v569
      %1112 = vmatprep.subr.mxu0 0.0
      %1113 = vmatpush1.msra.mxu0 %v570
      %1114 = vmatprep.subr.mxu0 0.0
      %1115 = vmatpush1.msra.mxu0 %v571
      %1116 = vmatprep.subr.mxu0 0.0
      %1117 = vmatpush1.msra.mxu0 %v572
      %1118 = vmatprep.subr.mxu0 0.0
      %1119 = vmatpush1.msra.mxu0 %v573
      %1120 = vmatprep.subr.mxu0 0.0
      %1121 = vmatpush1.msra.mxu0 %v574
      %1122 = vmatprep.subr.mxu0 0.0
      %1123 = vmatpush1.msra.mxu0 %v575
      %1124 = vmatprep.subr.mxu0 0.0
      %1125 = vmatpush1.msra.mxu0 %v576
      %1126 = vmatprep.subr.mxu0 0.0
      %1127 = vmatpush1.msra.mxu0 %v577
      %1128 = vmatprep.subr.mxu0 0.0
      %1129 = vmatpush1.msra.mxu0 %v578
      %1130 = vmatprep.subr.mxu0 0.0
      %1131 = vmatpush1.msra.mxu0 %v579
      %1132 = vmatprep.subr.mxu0 0.0
      %1133 = vmatpush1.msra.mxu0 %v580
      %1134 = vmatprep.subr.mxu0 0.0
      %1135 = vmatpush1.msra.mxu0 %v581
      %1136 = vmatprep.subr.mxu0 0.0
      %1137 = vmatpush1.msra.mxu0 %v582
      %1138 = vmatprep.subr.mxu0 0.0
      %1139 = vmatpush1.msra.mxu0 %v583
      %1140 = vmatprep.subr.mxu0 0.0
      %1141 = vmatpush1.msra.mxu0 %v584
      %1142 = vmatprep.subr.mxu0 0.0
      %1143 = vmatpush1.msra.mxu0 %v585
      %1144 = vmatprep.subr.mxu0 0.0
      %1145 = vmatpush1.msra.mxu0 %v586
      %1146 = vmatprep.subr.mxu0 0.0
      %1147 = vmatpush1.msra.mxu0 %v587
      %1148 = vmatprep.subr.mxu0 0.0
      %1149 = vmatpush1.msra.mxu0 %v588
      %1150 = vmatprep.subr.mxu0 0.0
      %1151 = vmatpush1.msra.mxu0 %v589
      %1152 = vmatprep.subr.mxu0 0.0
      %1153 = vmatpush1.msra.mxu0 %v590
      %1154 = vmatprep.subr.mxu0 0.0
      %1155 = vmatpush1.msra.mxu0 %v591
      %1156 = vmatprep.subr.mxu0 0.0
      %1157 = vmatpush1.msra.mxu0 %v592
      %1158 = vmatprep.subr.mxu0 0.0
      %1159 = vmatpush1.msra.mxu0 %v593
      %1160 = vmatprep.subr.mxu0 0.0
      %1161 = vmatpush1.msra.mxu0 %v594
      %1162 = vmatprep.subr.mxu0 0.0
      %1163 = vmatpush1.msra.mxu0 %v595
      %1164 = vmatprep.subr.mxu0 0.0
      %1165 = vmatpush1.msra.mxu0 %v596
      %1166 = vmatprep.mubr.f32.mxu0 %v218
      %1167 = vmatmul.mubr.f32.gmra.mrb[0].mxu0 %v217
      %v1168 = vpop.f32.mrb[0].mxu0
      %v1169 = vadd.f32 %v944, %v1168
      %v1170 = vpop.f32.mrb[0].mxu0
      %1171 = vmatprep.mubr.f32.mxu0 %v227
      %1172 = vmatmul.mubr.f32.gmra.mrb[0].mxu0 %v226
      %v1173 = vpop.f32.mrb[0].mxu0
      %v1174 = vadd.f32 %v949, %v1173
      %v1175 = vpop.f32.mrb[0].mxu0
      %1176 = vmatprep.mubr.f32.mxu0 %v236
      %1177 = vmatmul.mubr.f32.gmra.mrb[0].mxu0 %v235
      %v1178 = vpop.f32.mrb[0].mxu0
      %v1179 = vadd.f32 %v954, %v1178
      %v1180 = vpop.f32.mrb[0].mxu0
      %1181 = vmatprep.mubr.f32.mxu0 %v245
      %1182 = vmatmul.mubr.f32.gmra.mrb[0].mxu0 %v244
      %v1183 = vpop.f32.mrb[0].mxu0
      %v1184 = vadd.f32 %v959, %v1183
      %v1185 = vpop.f32.mrb[0].mxu0
      %1186 = vmatprep.mubr.f32.mxu0 %v254
      %1187 = vmatmul.mubr.f32.gmra.mrb[0].mxu0 %v253
      %v1188 = vpop.f32.mrb[0].mxu0
      %v1189 = vadd.f32 %v964, %v1188
      %v1190 = vpop.f32.mrb[0].mxu0
      %1191 = vmatprep.mubr.f32.mxu0 %v263
      %1192 = vmatmul.mubr.f32.gmra.mrb[0].mxu0 %v262
      %v1193 = vpop.f32.mrb[0].mxu0
      %v1194 = vadd.f32 %v969, %v1193
      %v1195 = vpop.f32.mrb[0].mxu0
      %1196 = vmatprep.mubr.f32.mxu0 %v272
      %1197 = vmatmul.mubr.f32.gmra.mrb[0].mxu0 %v271
      %v1198 = vpop.f32.mrb[0].mxu0
      %v1199 = vadd.f32 %v974, %v1198
      %v1200 = vpop.f32.mrb[0].mxu0
      %1201 = vmatprep.mubr.f32.mxu0 %v281
      %1202 = vmatmul.mubr.f32.gmra.mrb[0].mxu0 %v280
      %v1203 = vpop.f32.mrb[0].mxu0
      %v1204 = vadd.f32 %v979, %v1203
      %v1205 = vpop.f32.mrb[0].mxu0
      %1206 = vmatprep.mubr.f32.mxu0 %v290
      %1207 = vmatmul.mubr.f32.gmra.mrb[0].mxu0 %v289
      %v1208 = vpop.f32.mrb[0].mxu0
      %v1209 = vadd.f32 %v984, %v1208
      %v1210 = vpop.f32.mrb[0].mxu0
      %1211 = vmatprep.mubr.f32.mxu0 %v299
      %1212 = vmatmul.mubr.f32.gmra.mrb[0].mxu0 %v298
      %v1213 = vpop.f32.mrb[0].mxu0
      %v1214 = vadd.f32 %v989, %v1213
      %v1215 = vpop.f32.mrb[0].mxu0
      %1216 = vmatprep.mubr.f32.mxu0 %v308
      %1217 = vmatmul.mubr.f32.gmra.mrb[0].mxu0 %v307
      %v1218 = vpop.f32.mrb[0].mxu0
      %v1219 = vadd.f32 %v994, %v1218
      %v1220 = vpop.f32.mrb[0].mxu0
      %1221 = vmatprep.mubr.f32.mxu0 %v317
      %1222 = vmatmul.mubr.f32.gmra.mrb[0].mxu0 %v316
      %v1223 = vpop.f32.mrb[0].mxu0
      %v1224 = vadd.f32 %v999, %v1223
      %v1225 = vpop.f32.mrb[0].mxu0
      %1226 = vmatprep.mubr.f32.mxu0 %v326
      %1227 = vmatmul.mubr.f32.gmra.mrb[0].mxu0 %v325
      %v1228 = vpop.f32.mrb[0].mxu0
      %v1229 = vadd.f32 %v1004, %v1228
      %v1230 = vpop.f32.mrb[0].mxu0
      %1231 = vmatprep.mubr.f32.mxu0 %v335
      %1232 = vmatmul.mubr.f32.gmra.mrb[0].mxu0 %v334
      %v1233 = vpop.f32.mrb[0].mxu0
      %v1234 = vadd.f32 %v1009, %v1233
      %v1235 = vpop.f32.mrb[0].mxu0
      %1236 = vmatprep.mubr.f32.mxu0 %v344
      %1237 = vmatmul.mubr.f32.gmra.mrb[0].mxu0 %v343
      %v1238 = vpop.f32.mrb[0].mxu0
      %v1239 = vadd.f32 %v1014, %v1238
      %v1240 = vpop.f32.mrb[0].mxu0
      %1241 = vmatprep.mubr.f32.mxu0 %v353
      %1242 = vmatmul.mubr.f32.gmra.mrb[0].mxu0 %v352
      %v1243 = vpop.f32.mrb[0].mxu0
      %v1244 = vadd.f32 %v1019, %v1243
      %v1245 = vpop.f32.mrb[0].mxu0
      %1246 = vmatprep.mubr.f32.mxu0 %v362
      %1247 = vmatmul.mubr.f32.gmra.mrb[0].mxu0 %v361
      %v1248 = vpop.f32.mrb[0].mxu0
      %v1249 = vadd.f32 %v1024, %v1248
      %v1250 = vpop.f32.mrb[0].mxu0
      %1251 = vmatprep.mubr.f32.mxu0 %v371
      %1252 = vmatmul.mubr.f32.gmra.mrb[0].mxu0 %v370
      %v1253 = vpop.f32.mrb[0].mxu0
      %v1254 = vadd.f32 %v1029, %v1253
      %v1255 = vpop.f32.mrb[0].mxu0
      %1256 = vmatprep.mubr.f32.mxu0 %v380
      %1257 = vmatmul.mubr.f32.gmra.mrb[0].mxu0 %v379
      %v1258 = vpop.f32.mrb[0].mxu0
      %v1259 = vadd.f32 %v1034, %v1258
      %v1260 = vpop.f32.mrb[0].mxu0
      %1261 = vmatprep.mubr.f32.mxu0 %v389
      %1262 = vmatmul.mubr.f32.gmra.mrb[0].mxu0 %v388
      %v1263 = vpop.f32.mrb[0].mxu0
      %v1264 = vadd.f32 %v1039, %v1263
      %v1265 = vpop.f32.mrb[0].mxu0
      %1266 = vmatprep.mubr.f32.mxu0 %v398
      %1267 = vmatmul.mubr.f32.gmra.mrb[0].mxu0 %v397
      %v1268 = vpop.f32.mrb[0].mxu0
      %v1269 = vadd.f32 %v1044, %v1268
      %v1270 = vpop.f32.mrb[0].mxu0
      %1271 = vmatprep.mubr.f32.mxu0 %v407
      %1272 = vmatmul.mubr.f32.gmra.mrb[0].mxu0 %v406
      %v1273 = vpop.f32.mrb[0].mxu0
      %v1274 = vadd.f32 %v1049, %v1273
      %v1275 = vpop.f32.mrb[0].mxu0
      %1276 = vmatprep.mubr.f32.mxu0 %v416
      %1277 = vmatmul.mubr.f32.gmra.mrb[0].mxu0 %v415
      %v1278 = vpop.f32.mrb[0].mxu0
      %v1279 = vadd.f32 %v1054, %v1278
      %v1280 = vpop.f32.mrb[0].mxu0
      %1281 = vmatprep.mubr.f32.mxu0 %v425
      %1282 = vmatmul.mubr.f32.gmra.mrb[0].mxu0 %v424
      %v1283 = vpop.f32.mrb[0].mxu0
      %v1284 = vadd.f32 %v1059, %v1283
      %v1285 = vpop.f32.mrb[0].mxu0
      %1286 = vmatprep.mubr.f32.mxu0 %v434
      %1287 = vmatmul.mubr.f32.gmra.mrb[0].mxu0 %v433
      %v1288 = vpop.f32.mrb[0].mxu0
      %v1289 = vadd.f32 %v1064, %v1288
      %v1290 = vpop.f32.mrb[0].mxu0
      %1291 = vmatprep.mubr.f32.mxu0 %v443
      %1292 = vmatmul.mubr.f32.gmra.mrb[0].mxu0 %v442
      %v1293 = vpop.f32.mrb[0].mxu0
      %v1294 = vadd.f32 %v1069, %v1293
      %v1295 = vpop.f32.mrb[0].mxu0
      %1296 = vmatprep.mubr.f32.mxu0 %v452
      %1297 = vmatmul.mubr.f32.gmra.mrb[0].mxu0 %v451
      %v1298 = vpop.f32.mrb[0].mxu0
      %v1299 = vadd.f32 %v1074, %v1298
      %v1300 = vpop.f32.mrb[0].mxu0
      %1301 = vmatprep.mubr.f32.mxu0 %v461
      %1302 = vmatmul.mubr.f32.gmra.mrb[0].mxu0 %v460
      %v1303 = vpop.f32.mrb[0].mxu0
      %v1304 = vadd.f32 %v1079, %v1303
      %v1305 = vpop.f32.mrb[0].mxu0
      %1306 = vmatprep.mubr.f32.mxu0 %v470
      %1307 = vmatmul.mubr.f32.gmra.mrb[0].mxu0 %v469
      %v1308 = vpop.f32.mrb[0].mxu0
      %v1309 = vadd.f32 %v1084, %v1308
      %v1310 = vpop.f32.mrb[0].mxu0
      %1311 = vmatprep.mubr.f32.mxu0 %v479
      %1312 = vmatmul.mubr.f32.gmra.mrb[0].mxu0 %v478
      %v1313 = vpop.f32.mrb[0].mxu0
      %v1314 = vadd.f32 %v1089, %v1313
      %v1315 = vpop.f32.mrb[0].mxu0
      %1316 = vmatprep.mubr.f32.mxu0 %v488
      %1317 = vmatmul.mubr.f32.gmra.mrb[0].mxu0 %v487
      %v1318 = vpop.f32.mrb[0].mxu0
      %v1319 = vadd.f32 %v1094, %v1318
      %v1320 = vpop.f32.mrb[0].mxu0
      %1321 = vmatprep.mubr.f32.mxu0 %v497
      %1322 = vmatmul.mubr.f32.gmra.mrb[0].mxu0 %v496
      %v1323 = vpop.f32.mrb[0].mxu0
      %v1324 = vadd.f32 %v1099, %v1323
      %v1325 = vpop.f32.mrb[0].mxu0
      %1326 = vdwg.mxu0
      %1327 = vmatprep.subr.mxu0 0.0
      %1328 = vmatpush1.msra.mxu0 %v597
      %1329 = vmatprep.subr.mxu0 0.0
      %1330 = vmatpush1.msra.mxu0 %v598
      %1331 = vmatprep.subr.mxu0 0.0
      %1332 = vmatpush1.msra.mxu0 %v599
      %1333 = vmatprep.subr.mxu0 0.0
      %1334 = vmatpush1.msra.mxu0 %v600
      %1335 = vmatprep.subr.mxu0 0.0
      %1336 = vmatpush1.msra.mxu0 %v601
      %1337 = vmatprep.subr.mxu0 0.0
      %1338 = vmatpush1.msra.mxu0 %v602
      %1339 = vmatprep.subr.mxu0 0.0
      %1340 = vmatpush1.msra.mxu0 %v603
      %1341 = vmatprep.subr.mxu0 0.0
      %1342 = vmatpush1.msra.mxu0 %v604
      %1343 = vmatprep.subr.mxu0 0.0
      %1344 = vmatpush1.msra.mxu0 %v605
      %1345 = vmatprep.subr.mxu0 0.0
      %1346 = vmatpush1.msra.mxu0 %v606
      %1347 = vmatprep.subr.mxu0 0.0
      %1348 = vmatpush1.msra.mxu0 %v607
      %1349 = vmatprep.subr.mxu0 0.0
      %1350 = vmatpush1.msra.mxu0 %v608
      %1351 = vmatprep.subr.mxu0 0.0
      %1352 = vmatpush1.msra.mxu0 %v609
      %1353 = vmatprep.subr.mxu0 0.0
      %1354 = vmatpush1.msra.mxu0 %v610
      %1355 = vmatprep.subr.mxu0 0.0
      %1356 = vmatpush1.msra.mxu0 %v611
      %1357 = vmatprep.subr.mxu0 0.0
      %1358 = vmatpush1.msra.mxu0 %v612
      %1359 = vmatprep.subr.mxu0 0.0
      %1360 = vmatpush1.msra.mxu0 %v613
      %1361 = vmatprep.subr.mxu0 0.0
      %1362 = vmatpush1.msra.mxu0 %v614
      %1363 = vmatprep.subr.mxu0 0.0
      %1364 = vmatpush1.msra.mxu0 %v615
      %1365 = vmatprep.subr.mxu0 0.0
      %1366 = vmatpush1.msra.mxu0 %v616
      %1367 = vmatprep.subr.mxu0 0.0
      %1368 = vmatpush1.msra.mxu0 %v617
      %1369 = vmatprep.subr.mxu0 0.0
      %1370 = vmatpush1.msra.mxu0 %v618
      %1371 = vmatprep.subr.mxu0 0.0
      %1372 = vmatpush1.msra.mxu0 %v619
      %1373 = vmatprep.subr.mxu0 0.0
      %1374 = vmatpush1.msra.mxu0 %v620
      %1375 = vmatprep.subr.mxu0 0.0
      %1376 = vmatpush1.msra.mxu0 %v621
      %1377 = vmatprep.subr.mxu0 0.0
      %1378 = vmatpush1.msra.mxu0 %v622
      %1379 = vmatprep.subr.mxu0 0.0
      %1380 = vmatpush1.msra.mxu0 %v623
      %1381 = vmatprep.subr.mxu0 0.0
      %1382 = vmatpush1.msra.mxu0 %v624
      %1383 = vmatprep.subr.mxu0 0.0
      %1384 = vmatpush1.msra.mxu0 %v625
      %1385 = vmatprep.subr.mxu0 0.0
      %1386 = vmatpush1.msra.mxu0 %v626
      %1387 = vmatprep.subr.mxu0 0.0
      %1388 = vmatpush1.msra.mxu0 %v627
      %1389 = vmatprep.subr.mxu0 0.0
      %1390 = vmatpush1.msra.mxu0 %v628
      %1391 = vmatprep.mubr.f32.mxu0 %v220
      %1392 = vmatmul.mubr.f32.gmra.mrb[0].mxu0 %v219
      %v1393 = vpop.f32.mrb[0].mxu0
      %v1394 = vadd.f32 %v1169, %v1393
      %v1395 = vpop.f32.mrb[0].mxu0
      %1396 = vmatprep.mubr.f32.mxu0 %v229
      %1397 = vmatmul.mubr.f32.gmra.mrb[0].mxu0 %v228
      %v1398 = vpop.f32.mrb[0].mxu0
      %v1399 = vadd.f32 %v1174, %v1398
      %v1400 = vpop.f32.mrb[0].mxu0
      %1401 = vmatprep.mubr.f32.mxu0 %v238
      %1402 = vmatmul.mubr.f32.gmra.mrb[0].mxu0 %v237
      %v1403 = vpop.f32.mrb[0].mxu0
      %v1404 = vadd.f32 %v1179, %v1403
      %v1405 = vpop.f32.mrb[0].mxu0
      %1406 = vmatprep.mubr.f32.mxu0 %v247
      %1407 = vmatmul.mubr.f32.gmra.mrb[0].mxu0 %v246
      %v1408 = vpop.f32.mrb[0].mxu0
      %v1409 = vadd.f32 %v1184, %v1408
      %v1410 = vpop.f32.mrb[0].mxu0
      %1411 = vmatprep.mubr.f32.mxu0 %v256
      %1412 = vmatmul.mubr.f32.gmra.mrb[0].mxu0 %v255
      %v1413 = vpop.f32.mrb[0].mxu0
      %v1414 = vadd.f32 %v1189, %v1413
      %v1415 = vpop.f32.mrb[0].mxu0
      %1416 = vmatprep.mubr.f32.mxu0 %v265
      %1417 = vmatmul.mubr.f32.gmra.mrb[0].mxu0 %v264
      %v1418 = vpop.f32.mrb[0].mxu0
      %v1419 = vadd.f32 %v1194, %v1418
      %v1420 = vpop.f32.mrb[0].mxu0
      %1421 = vmatprep.mubr.f32.mxu0 %v274
      %1422 = vmatmul.mubr.f32.gmra.mrb[0].mxu0 %v273
      %v1423 = vpop.f32.mrb[0].mxu0
      %v1424 = vadd.f32 %v1199, %v1423
      %v1425 = vpop.f32.mrb[0].mxu0
      %1426 = vmatprep.mubr.f32.mxu0 %v283
      %1427 = vmatmul.mubr.f32.gmra.mrb[0].mxu0 %v282
      %v1428 = vpop.f32.mrb[0].mxu0
      %v1429 = vadd.f32 %v1204, %v1428
      %v1430 = vpop.f32.mrb[0].mxu0
      %1431 = vmatprep.mubr.f32.mxu0 %v292
      %1432 = vmatmul.mubr.f32.gmra.mrb[0].mxu0 %v291
      %v1433 = vpop.f32.mrb[0].mxu0
      %v1434 = vadd.f32 %v1209, %v1433
      %v1435 = vpop.f32.mrb[0].mxu0
      %1436 = vmatprep.mubr.f32.mxu0 %v301
      %1437 = vmatmul.mubr.f32.gmra.mrb[0].mxu0 %v300
      %v1438 = vpop.f32.mrb[0].mxu0
      %v1439 = vadd.f32 %v1214, %v1438
      %v1440 = vpop.f32.mrb[0].mxu0
      %1441 = vmatprep.mubr.f32.mxu0 %v310
      %1442 = vmatmul.mubr.f32.gmra.mrb[0].mxu0 %v309
      %v1443 = vpop.f32.mrb[0].mxu0
      %v1444 = vadd.f32 %v1219, %v1443
      %v1445 = vpop.f32.mrb[0].mxu0
      %1446 = vmatprep.mubr.f32.mxu0 %v319
      %1447 = vmatmul.mubr.f32.gmra.mrb[0].mxu0 %v318
      %v1448 = vpop.f32.mrb[0].mxu0
      %v1449 = vadd.f32 %v1224, %v1448
      %v1450 = vpop.f32.mrb[0].mxu0
      %1451 = vmatprep.mubr.f32.mxu0 %v328
      %1452 = vmatmul.mubr.f32.gmra.mrb[0].mxu0 %v327
      %v1453 = vpop.f32.mrb[0].mxu0
      %v1454 = vadd.f32 %v1229, %v1453
      %v1455 = vpop.f32.mrb[0].mxu0
      %1456 = vmatprep.mubr.f32.mxu0 %v337
      %1457 = vmatmul.mubr.f32.gmra.mrb[0].mxu0 %v336
      %v1458 = vpop.f32.mrb[0].mxu0
      %v1459 = vadd.f32 %v1234, %v1458
      %v1460 = vpop.f32.mrb[0].mxu0
      %1461 = vmatprep.mubr.f32.mxu0 %v346
      %1462 = vmatmul.mubr.f32.gmra.mrb[0].mxu0 %v345
      %v1463 = vpop.f32.mrb[0].mxu0
      %v1464 = vadd.f32 %v1239, %v1463
      %v1465 = vpop.f32.mrb[0].mxu0
      %1466 = vmatprep.mubr.f32.mxu0 %v355
      %1467 = vmatmul.mubr.f32.gmra.mrb[0].mxu0 %v354
      %v1468 = vpop.f32.mrb[0].mxu0
      %v1469 = vadd.f32 %v1244, %v1468
      %v1470 = vpop.f32.mrb[0].mxu0
      %1471 = vmatprep.mubr.f32.mxu0 %v364
      %1472 = vmatmul.mubr.f32.gmra.mrb[0].mxu0 %v363
      %v1473 = vpop.f32.mrb[0].mxu0
      %v1474 = vadd.f32 %v1249, %v1473
      %v1475 = vpop.f32.mrb[0].mxu0
      %1476 = vmatprep.mubr.f32.mxu0 %v373
      %1477 = vmatmul.mubr.f32.gmra.mrb[0].mxu0 %v372
      %v1478 = vpop.f32.mrb[0].mxu0
      %v1479 = vadd.f32 %v1254, %v1478
      %v1480 = vpop.f32.mrb[0].mxu0
      %1481 = vmatprep.mubr.f32.mxu0 %v382
      %1482 = vmatmul.mubr.f32.gmra.mrb[0].mxu0 %v381
      %v1483 = vpop.f32.mrb[0].mxu0
      %v1484 = vadd.f32 %v1259, %v1483
      %v1485 = vpop.f32.mrb[0].mxu0
      %1486 = vmatprep.mubr.f32.mxu0 %v391
      %1487 = vmatmul.mubr.f32.gmra.mrb[0].mxu0 %v390
      %v1488 = vpop.f32.mrb[0].mxu0
      %v1489 = vadd.f32 %v1264, %v1488
      %v1490 = vpop.f32.mrb[0].mxu0
      %1491 = vmatprep.mubr.f32.mxu0 %v400
      %1492 = vmatmul.mubr.f32.gmra.mrb[0].mxu0 %v399
      %v1493 = vpop.f32.mrb[0].mxu0
      %v1494 = vadd.f32 %v1269, %v1493
      %v1495 = vpop.f32.mrb[0].mxu0
      %1496 = vmatprep.mubr.f32.mxu0 %v409
      %1497 = vmatmul.mubr.f32.gmra.mrb[0].mxu0 %v408
      %v1498 = vpop.f32.mrb[0].mxu0
      %v1499 = vadd.f32 %v1274, %v1498
      %v1500 = vpop.f32.mrb[0].mxu0
      %1501 = vmatprep.mubr.f32.mxu0 %v418
      %1502 = vmatmul.mubr.f32.gmra.mrb[0].mxu0 %v417
      %v1503 = vpop.f32.mrb[0].mxu0
      %v1504 = vadd.f32 %v1279, %v1503
      %v1505 = vpop.f32.mrb[0].mxu0
      %1506 = vmatprep.mubr.f32.mxu0 %v427
      %1507 = vmatmul.mubr.f32.gmra.mrb[0].mxu0 %v426
      %v1508 = vpop.f32.mrb[0].mxu0
      %v1509 = vadd.f32 %v1284, %v1508
      %v1510 = vpop.f32.mrb[0].mxu0
      %1511 = vmatprep.mubr.f32.mxu0 %v436
      %1512 = vmatmul.mubr.f32.gmra.mrb[0].mxu0 %v435
      %v1513 = vpop.f32.mrb[0].mxu0
      %v1514 = vadd.f32 %v1289, %v1513
      %v1515 = vpop.f32.mrb[0].mxu0
      %1516 = vmatprep.mubr.f32.mxu0 %v445
      %1517 = vmatmul.mubr.f32.gmra.mrb[0].mxu0 %v444
      %v1518 = vpop.f32.mrb[0].mxu0
      %v1519 = vadd.f32 %v1294, %v1518
      %v1520 = vpop.f32.mrb[0].mxu0
      %1521 = vmatprep.mubr.f32.mxu0 %v454
      %1522 = vmatmul.mubr.f32.gmra.mrb[0].mxu0 %v453
      %v1523 = vpop.f32.mrb[0].mxu0
      %v1524 = vadd.f32 %v1299, %v1523
      %v1525 = vpop.f32.mrb[0].mxu0
      %1526 = vmatprep.mubr.f32.mxu0 %v463
      %1527 = vmatmul.mubr.f32.gmra.mrb[0].mxu0 %v462
      %v1528 = vpop.f32.mrb[0].mxu0
      %v1529 = vadd.f32 %v1304, %v1528
      %v1530 = vpop.f32.mrb[0].mxu0
      %1531 = vmatprep.mubr.f32.mxu0 %v472
      %1532 = vmatmul.mubr.f32.gmra.mrb[0].mxu0 %v471
      %v1533 = vpop.f32.mrb[0].mxu0
      %v1534 = vadd.f32 %v1309, %v1533
      %v1535 = vpop.f32.mrb[0].mxu0
      %1536 = vmatprep.mubr.f32.mxu0 %v481
      %1537 = vmatmul.mubr.f32.gmra.mrb[0].mxu0 %v480
      %v1538 = vpop.f32.mrb[0].mxu0
      %v1539 = vadd.f32 %v1314, %v1538
      %v1540 = vpop.f32.mrb[0].mxu0
      %1541 = vmatprep.mubr.f32.mxu0 %v490
      %1542 = vmatmul.mubr.f32.gmra.mrb[0].mxu0 %v489
      %v1543 = vpop.f32.mrb[0].mxu0
      %v1544 = vadd.f32 %v1319, %v1543
      %v1545 = vpop.f32.mrb[0].mxu0
      %1546 = vmatprep.mubr.f32.mxu0 %v499
      %1547 = vmatmul.mubr.f32.gmra.mrb[0].mxu0 %v498
      %v1548 = vpop.f32.mrb[0].mxu0
      %v1549 = vadd.f32 %v1324, %v1548
      %v1550 = vpop.f32.mrb[0].mxu0
      %1551 = vdwg.mxu0
      %1552 = vmatprep.subr.mxu0 0.0
      %1553 = vmatpush1.msra.mxu0 %v629
      %1554 = vmatprep.subr.mxu0 0.0
      %1555 = vmatpush1.msra.mxu0 %v630
      %1556 = vmatprep.subr.mxu0 0.0
      %1557 = vmatpush1.msra.mxu0 %v631
      %1558 = vmatprep.subr.mxu0 0.0
      %1559 = vmatpush1.msra.mxu0 %v632
      %1560 = vmatprep.subr.mxu0 0.0
      %1561 = vmatpush1.msra.mxu0 %v633
      %1562 = vmatprep.subr.mxu0 0.0
      %1563 = vmatpush1.msra.mxu0 %v634
      %1564 = vmatprep.subr.mxu0 0.0
      %1565 = vmatpush1.msra.mxu0 %v635
      %1566 = vmatprep.subr.mxu0 0.0
      %1567 = vmatpush1.msra.mxu0 %v636
      %1568 = vmatprep.subr.mxu0 0.0
      %1569 = vmatpush1.msra.mxu0 %v637
      %1570 = vmatprep.subr.mxu0 0.0
      %1571 = vmatpush1.msra.mxu0 %v638
      %1572 = vmatprep.subr.mxu0 0.0
      %1573 = vmatpush1.msra.mxu0 %v639
      %1574 = vmatprep.subr.mxu0 0.0
      %1575 = vmatpush1.msra.mxu0 %v640
      %1576 = vmatprep.subr.mxu0 0.0
      %1577 = vmatpush1.msra.mxu0 %v641
      %1578 = vmatprep.subr.mxu0 0.0
      %1579 = vmatpush1.msra.mxu0 %v642
      %1580 = vmatprep.subr.mxu0 0.0
      %1581 = vmatpush1.msra.mxu0 %v643
      %1582 = vmatprep.subr.mxu0 0.0
      %1583 = vmatpush1.msra.mxu0 %v644
      %1584 = vmatprep.subr.mxu0 0.0
      %1585 = vmatpush1.msra.mxu0 0.0
      %1586 = vmatprep.subr.mxu0 0.0
      %1587 = vmatpush1.msra.mxu0 0.0
      %1588 = vmatprep.subr.mxu0 0.0
      %1589 = vmatpush1.msra.mxu0 0.0
      %1590 = vmatprep.subr.mxu0 0.0
      %1591 = vmatpush1.msra.mxu0 0.0
      %1592 = vmatprep.subr.mxu0 0.0
      %1593 = vmatpush1.msra.mxu0 0.0
      %1594 = vmatprep.subr.mxu0 0.0
      %1595 = vmatpush1.msra.mxu0 0.0
      %1596 = vmatprep.subr.mxu0 0.0
      %1597 = vmatpush1.msra.mxu0 0.0
      %1598 = vmatprep.subr.mxu0 0.0
      %1599 = vmatpush1.msra.mxu0 0.0
      %1600 = vmatprep.subr.mxu0 0.0
      %1601 = vmatpush1.msra.mxu0 0.0
      %1602 = vmatprep.subr.mxu0 0.0
      %1603 = vmatpush1.msra.mxu0 0.0
      %1604 = vmatprep.subr.mxu0 0.0
      %1605 = vmatpush1.msra.mxu0 0.0
      %1606 = vmatprep.subr.mxu0 0.0
      %1607 = vmatpush1.msra.mxu0 0.0
      %1608 = vmatprep.subr.mxu0 0.0
      %1609 = vmatpush1.msra.mxu0 0.0
      %1610 = vmatprep.subr.mxu0 0.0
      %1611 = vmatpush1.msra.mxu0 0.0
      %1612 = vmatprep.subr.mxu0 0.0
      %1613 = vmatpush1.msra.mxu0 0.0
      %1614 = vmatprep.subr.mxu0 0.0
      %1615 = vmatpush1.msra.mxu0 0.0
      %1616 = vmatprep.mubr.f32.mxu0 0.0
      %1617 = vmatmul.mubr.f32.gmra.mrb[0].mxu0 %v221
      %v1618 = vpop.f32.mrb[0].mxu0
      %v1619 = vadd.f32 %v1394, %v1618
      %v1620 = vpop.f32.mrb[0].mxu0
      %1621 = vmatprep.mubr.f32.mxu0 0.0
      %1622 = vmatmul.mubr.f32.gmra.mrb[0].mxu0 %v230
      %v1623 = vpop.f32.mrb[0].mxu0
      %v1624 = vadd.f32 %v1399, %v1623
      %v1625 = vpop.f32.mrb[0].mxu0
      %1626 = vmatprep.mubr.f32.mxu0 0.0
      %1627 = vmatmul.mubr.f32.gmra.mrb[0].mxu0 %v239
      %v1628 = vpop.f32.mrb[0].mxu0
      %v1629 = vadd.f32 %v1404, %v1628
      %v1630 = vpop.f32.mrb[0].mxu0
      %1631 = vmatprep.mubr.f32.mxu0 0.0
      %1632 = vmatmul.mubr.f32.gmra.mrb[0].mxu0 %v248
      %v1633 = vpop.f32.mrb[0].mxu0
      %v1634 = vadd.f32 %v1409, %v1633
      %v1635 = vpop.f32.mrb[0].mxu0
      %1636 = vmatprep.mubr.f32.mxu0 0.0
      %1637 = vmatmul.mubr.f32.gmra.mrb[0].mxu0 %v257
      %v1638 = vpop.f32.mrb[0].mxu0
      %v1639 = vadd.f32 %v1414, %v1638
      %v1640 = vpop.f32.mrb[0].mxu0
      %1641 = vmatprep.mubr.f32.mxu0 0.0
      %1642 = vmatmul.mubr.f32.gmra.mrb[0].mxu0 %v266
      %v1643 = vpop.f32.mrb[0].mxu0
      %v1644 = vadd.f32 %v1419, %v1643
      %v1645 = vpop.f32.mrb[0].mxu0
      %1646 = vmatprep.mubr.f32.mxu0 0.0
      %1647 = vmatmul.mubr.f32.gmra.mrb[0].mxu0 %v275
      %v1648 = vpop.f32.mrb[0].mxu0
      %v1649 = vadd.f32 %v1424, %v1648
      %v1650 = vpop.f32.mrb[0].mxu0
      %1651 = vmatprep.mubr.f32.mxu0 0.0
      %1652 = vmatmul.mubr.f32.gmra.mrb[0].mxu0 %v284
      %v1653 = vpop.f32.mrb[0].mxu0
      %v1654 = vadd.f32 %v1429, %v1653
      %v1655 = vpop.f32.mrb[0].mxu0
      %1656 = vmatprep.mubr.f32.mxu0 0.0
      %1657 = vmatmul.mubr.f32.gmra.mrb[0].mxu0 %v293
      %v1658 = vpop.f32.mrb[0].mxu0
      %v1659 = vadd.f32 %v1434, %v1658
      %v1660 = vpop.f32.mrb[0].mxu0
      %1661 = vmatprep.mubr.f32.mxu0 0.0
      %1662 = vmatmul.mubr.f32.gmra.mrb[0].mxu0 %v302
      %v1663 = vpop.f32.mrb[0].mxu0
      %v1664 = vadd.f32 %v1439, %v1663
      %v1665 = vpop.f32.mrb[0].mxu0
      %1666 = vmatprep.mubr.f32.mxu0 0.0
      %1667 = vmatmul.mubr.f32.gmra.mrb[0].mxu0 %v311
      %v1668 = vpop.f32.mrb[0].mxu0
      %v1669 = vadd.f32 %v1444, %v1668
      %v1670 = vpop.f32.mrb[0].mxu0
      %1671 = vmatprep.mubr.f32.mxu0 0.0
      %1672 = vmatmul.mubr.f32.gmra.mrb[0].mxu0 %v320
      %v1673 = vpop.f32.mrb[0].mxu0
      %v1674 = vadd.f32 %v1449, %v1673
      %v1675 = vpop.f32.mrb[0].mxu0
      %1676 = vmatprep.mubr.f32.mxu0 0.0
      %1677 = vmatmul.mubr.f32.gmra.mrb[0].mxu0 %v329
      %v1678 = vpop.f32.mrb[0].mxu0
      %v1679 = vadd.f32 %v1454, %v1678
      %v1680 = vpop.f32.mrb[0].mxu0
      %1681 = vmatprep.mubr.f32.mxu0 0.0
      %1682 = vmatmul.mubr.f32.gmra.mrb[0].mxu0 %v338
      %v1683 = vpop.f32.mrb[0].mxu0
      %v1684 = vadd.f32 %v1459, %v1683
      %v1685 = vpop.f32.mrb[0].mxu0
      %1686 = vmatprep.mubr.f32.mxu0 0.0
      %1687 = vmatmul.mubr.f32.gmra.mrb[0].mxu0 %v347
      %v1688 = vpop.f32.mrb[0].mxu0
      %v1689 = vadd.f32 %v1464, %v1688
      %v1690 = vpop.f32.mrb[0].mxu0
      %1691 = vmatprep.mubr.f32.mxu0 0.0
      %1692 = vmatmul.mubr.f32.gmra.mrb[0].mxu0 %v356
      %v1693 = vpop.f32.mrb[0].mxu0
      %v1694 = vadd.f32 %v1469, %v1693
      %v1695 = vpop.f32.mrb[0].mxu0
      %1696 = vmatprep.mubr.f32.mxu0 0.0
      %1697 = vmatmul.mubr.f32.gmra.mrb[0].mxu0 %v365
      %v1698 = vpop.f32.mrb[0].mxu0
      %v1699 = vadd.f32 %v1474, %v1698
      %v1700 = vpop.f32.mrb[0].mxu0
      %1701 = vmatprep.mubr.f32.mxu0 0.0
      %1702 = vmatmul.mubr.f32.gmra.mrb[0].mxu0 %v374
      %v1703 = vpop.f32.mrb[0].mxu0
      %v1704 = vadd.f32 %v1479, %v1703
      %v1705 = vpop.f32.mrb[0].mxu0
      %1706 = vmatprep.mubr.f32.mxu0 0.0
      %1707 = vmatmul.mubr.f32.gmra.mrb[0].mxu0 %v383
      %v1708 = vpop.f32.mrb[0].mxu0
      %v1709 = vadd.f32 %v1484, %v1708
      %v1710 = vpop.f32.mrb[0].mxu0
      %1711 = vmatprep.mubr.f32.mxu0 0.0
      %1712 = vmatmul.mubr.f32.gmra.mrb[0].mxu0 %v392
      %v1713 = vpop.f32.mrb[0].mxu0
      %v1714 = vadd.f32 %v1489, %v1713
      %v1715 = vpop.f32.mrb[0].mxu0
      %1716 = vmatprep.mubr.f32.mxu0 0.0
      %1717 = vmatmul.mubr.f32.gmra.mrb[0].mxu0 %v401
      %v1718 = vpop.f32.mrb[0].mxu0
      %v1719 = vadd.f32 %v1494, %v1718
      %v1720 = vpop.f32.mrb[0].mxu0
      %1721 = vmatprep.mubr.f32.mxu0 0.0
      %1722 = vmatmul.mubr.f32.gmra.mrb[0].mxu0 %v410
      %v1723 = vpop.f32.mrb[0].mxu0
      %v1724 = vadd.f32 %v1499, %v1723
      %v1725 = vpop.f32.mrb[0].mxu0
      %1726 = vmatprep.mubr.f32.mxu0 0.0
      %1727 = vmatmul.mubr.f32.gmra.mrb[0].mxu0 %v419
      %v1728 = vpop.f32.mrb[0].mxu0
      %v1729 = vadd.f32 %v1504, %v1728
      %v1730 = vpop.f32.mrb[0].mxu0
      %1731 = vmatprep.mubr.f32.mxu0 0.0
      %1732 = vmatmul.mubr.f32.gmra.mrb[0].mxu0 %v428
      %v1733 = vpop.f32.mrb[0].mxu0
      %v1734 = vadd.f32 %v1509, %v1733
      %v1735 = vpop.f32.mrb[0].mxu0
      %1736 = vmatprep.mubr.f32.mxu0 0.0
      %1737 = vmatmul.mubr.f32.gmra.mrb[0].mxu0 %v437
      %v1738 = vpop.f32.mrb[0].mxu0
      %v1739 = vadd.f32 %v1514, %v1738
      %v1740 = vpop.f32.mrb[0].mxu0
      %1741 = vmatprep.mubr.f32.mxu0 0.0
      %1742 = vmatmul.mubr.f32.gmra.mrb[0].mxu0 %v446
      %v1743 = vpop.f32.mrb[0].mxu0
      %v1744 = vadd.f32 %v1519, %v1743
      %v1745 = vpop.f32.mrb[0].mxu0
      %1746 = vmatprep.mubr.f32.mxu0 0.0
      %1747 = vmatmul.mubr.f32.gmra.mrb[0].mxu0 %v455
      %v1748 = vpop.f32.mrb[0].mxu0
      %v1749 = vadd.f32 %v1524, %v1748
      %v1750 = vpop.f32.mrb[0].mxu0
      %1751 = vmatprep.mubr.f32.mxu0 0.0
      %1752 = vmatmul.mubr.f32.gmra.mrb[0].mxu0 %v464
      %v1753 = vpop.f32.mrb[0].mxu0
      %v1754 = vadd.f32 %v1529, %v1753
      %v1755 = vpop.f32.mrb[0].mxu0
      %1756 = vmatprep.mubr.f32.mxu0 0.0
      %1757 = vmatmul.mubr.f32.gmra.mrb[0].mxu0 %v473
      %v1758 = vpop.f32.mrb[0].mxu0
      %v1759 = vadd.f32 %v1534, %v1758
      %v1760 = vpop.f32.mrb[0].mxu0
      %1761 = vmatprep.mubr.f32.mxu0 0.0
      %1762 = vmatmul.mubr.f32.gmra.mrb[0].mxu0 %v482
      %v1763 = vpop.f32.mrb[0].mxu0
      %v1764 = vadd.f32 %v1539, %v1763
      %v1765 = vpop.f32.mrb[0].mxu0
      %1766 = vmatprep.mubr.f32.mxu0 0.0
      %1767 = vmatmul.mubr.f32.gmra.mrb[0].mxu0 %v491
      %v1768 = vpop.f32.mrb[0].mxu0
      %v1769 = vadd.f32 %v1544, %v1768
      %v1770 = vpop.f32.mrb[0].mxu0
      %1771 = vmatprep.mubr.f32.mxu0 0.0
      %1772 = vmatmul.mubr.f32.gmra.mrb[0].mxu0 %v500
      %v1773 = vpop.f32.mrb[0].mxu0
      %v1774 = vadd.f32 %v1549, %v1773
      %v1775 = vpop.f32.mrb[0].mxu0
      %1776 = vdwg.mxu0
      %v1777 = vxor.u32 %v1619, 2147483648
      %v1778 = vxor.u32 %v1624, 2147483648
      %v1779 = vxor.u32 %v1629, 2147483648
      %v1780 = vxor.u32 %v1634, 2147483648
      %v1781 = vxor.u32 %v1639, 2147483648
      %v1782 = vxor.u32 %v1644, 2147483648
      %v1783 = vxor.u32 %v1649, 2147483648
      %v1784 = vxor.u32 %v1654, 2147483648
      %v1785 = vxor.u32 %v1659, 2147483648
      %v1786 = vxor.u32 %v1664, 2147483648
      %v1787 = vxor.u32 %v1669, 2147483648
      %v1788 = vxor.u32 %v1674, 2147483648
      %v1789 = vxor.u32 %v1679, 2147483648
      %v1790 = vxor.u32 %v1684, 2147483648
      %v1791 = vxor.u32 %v1689, 2147483648
      %v1792 = vxor.u32 %v1694, 2147483648
      %v1793 = vxor.u32 %v1699, 2147483648
      %v1794 = vxor.u32 %v1704, 2147483648
      %v1795 = vxor.u32 %v1709, 2147483648
      %v1796 = vxor.u32 %v1714, 2147483648
      %v1797 = vxor.u32 %v1719, 2147483648
      %v1798 = vxor.u32 %v1724, 2147483648
      %v1799 = vxor.u32 %v1729, 2147483648
      %v1800 = vxor.u32 %v1734, 2147483648
      %v1801 = vxor.u32 %v1739, 2147483648
      %v1802 = vxor.u32 %v1744, 2147483648
      %v1803 = vxor.u32 %v1749, 2147483648
      %v1804 = vxor.u32 %v1754, 2147483648
      %v1805 = vxor.u32 %v1759, 2147483648
      %v1806 = vxor.u32 %v1764, 2147483648
      %v1807 = vxor.u32 %v1769, 2147483648
      %v1808 = vxor.u32 %v1774, 2147483648
      %v1809 = vmul.f32 %v1777, 1.442695
      %v1810 = vpow.pop %v1809
      %v1811 = vmul.f32 %v1778, 1.442695
      %v1812 = vpow.pop %v1811
      %v1813 = vmul.f32 %v1779, 1.442695
      %v1814 = vpow.pop %v1813
      %v1815 = vmul.f32 %v1780, 1.442695
      %v1816 = vpow.pop %v1815
      %v1817 = vmul.f32 %v1781, 1.442695
      %v1818 = vpow.pop %v1817
      %v1819 = vmul.f32 %v1782, 1.442695
      %v1820 = vpow.pop %v1819
      %v1821 = vmul.f32 %v1783, 1.442695
      %v1822 = vpow.pop %v1821
      %v1823 = vmul.f32 %v1784, 1.442695
      %v1824 = vpow.pop %v1823
      %v1825 = vmul.f32 %v1785, 1.442695
      %v1826 = vpow.pop %v1825
      %v1827 = vmul.f32 %v1786, 1.442695
      %v1828 = vpow.pop %v1827
      %v1829 = vmul.f32 %v1787, 1.442695
      %v1830 = vpow.pop %v1829
      %v1831 = vmul.f32 %v1788, 1.442695
      %v1832 = vpow.pop %v1831
      %v1833 = vmul.f32 %v1789, 1.442695
      %v1834 = vpow.pop %v1833
      %v1835 = vmul.f32 %v1790, 1.442695
      %v1836 = vpow.pop %v1835
      %v1837 = vmul.f32 %v1791, 1.442695
      %v1838 = vpow.pop %v1837
      %v1839 = vmul.f32 %v1792, 1.442695
      %v1840 = vpow.pop %v1839
      %v1841 = vmul.f32 %v1793, 1.442695
      %v1842 = vpow.pop %v1841
      %v1843 = vmul.f32 %v1794, 1.442695
      %v1844 = vpow.pop %v1843
      %v1845 = vmul.f32 %v1795, 1.442695
      %v1846 = vpow.pop %v1845
      %v1847 = vmul.f32 %v1796, 1.442695
      %v1848 = vpow.pop %v1847
      %v1849 = vmul.f32 %v1797, 1.442695
      %v1850 = vpow.pop %v1849
      %v1851 = vmul.f32 %v1798, 1.442695
      %v1852 = vpow.pop %v1851
      %v1853 = vmul.f32 %v1799, 1.442695
      %v1854 = vpow.pop %v1853
      %v1855 = vmul.f32 %v1800, 1.442695
      %v1856 = vpow.pop %v1855
      %v1857 = vmul.f32 %v1801, 1.442695
      %v1858 = vpow.pop %v1857
      %v1859 = vmul.f32 %v1802, 1.442695
      %v1860 = vpow.pop %v1859
      %v1861 = vmul.f32 %v1803, 1.442695
      %v1862 = vpow.pop %v1861
      %v1863 = vmul.f32 %v1804, 1.442695
      %v1864 = vpow.pop %v1863
      %v1865 = vmul.f32 %v1805, 1.442695
      %v1866 = vpow.pop %v1865
      %v1867 = vmul.f32 %v1806, 1.442695
      %v1868 = vpow.pop %v1867
      %v1869 = vmul.f32 %v1807, 1.442695
      %v1870 = vpow.pop %v1869
      %v1871 = vmul.f32 %v1808, 1.442695
      %v1872 = vpow.pop %v1871
      %v1873 = vadd.f32 %v1810, 1.0
      %v1874 = vadd.f32 %v1812, 1.0
      %v1875 = vadd.f32 %v1814, 1.0
      %v1876 = vadd.f32 %v1816, 1.0
      %v1877 = vadd.f32 %v1818, 1.0
      %v1878 = vadd.f32 %v1820, 1.0
      %v1879 = vadd.f32 %v1822, 1.0
      %v1880 = vadd.f32 %v1824, 1.0
      %v1881 = vadd.f32 %v1826, 1.0
      %v1882 = vadd.f32 %v1828, 1.0
      %v1883 = vadd.f32 %v1830, 1.0
      %v1884 = vadd.f32 %v1832, 1.0
      %v1885 = vadd.f32 %v1834, 1.0
      %v1886 = vadd.f32 %v1836, 1.0
      %v1887 = vadd.f32 %v1838, 1.0
      %v1888 = vadd.f32 %v1840, 1.0
      %v1889 = vadd.f32 %v1842, 1.0
      %v1890 = vadd.f32 %v1844, 1.0
      %v1891 = vadd.f32 %v1846, 1.0
      %v1892 = vadd.f32 %v1848, 1.0
      %v1893 = vadd.f32 %v1850, 1.0
      %v1894 = vadd.f32 %v1852, 1.0
      %v1895 = vadd.f32 %v1854, 1.0
      %v1896 = vadd.f32 %v1856, 1.0
      %v1897 = vadd.f32 %v1858, 1.0
      %v1898 = vadd.f32 %v1860, 1.0
      %v1899 = vadd.f32 %v1862, 1.0
      %v1900 = vadd.f32 %v1864, 1.0
      %v1901 = vadd.f32 %v1866, 1.0
      %v1902 = vadd.f32 %v1868, 1.0
      %v1903 = vadd.f32 %v1870, 1.0
      %v1904 = vadd.f32 %v1872, 1.0
      %v1905 = vrcp.pop %v1873
      %v1906 = vmul.f32 1.0, %v1905
      %v1907 = vrcp.pop %v1874
      %v1908 = vmul.f32 1.0, %v1907
      %v1909 = vrcp.pop %v1875
      %v1910 = vmul.f32 1.0, %v1909
      %v1911 = vrcp.pop %v1876
      %v1912 = vmul.f32 1.0, %v1911
      %v1913 = vrcp.pop %v1877
      %v1914 = vmul.f32 1.0, %v1913
      %v1915 = vrcp.pop %v1878
      %v1916 = vmul.f32 1.0, %v1915
      %v1917 = vrcp.pop %v1879
      %v1918 = vmul.f32 1.0, %v1917
      %v1919 = vrcp.pop %v1880
      %v1920 = vmul.f32 1.0, %v1919
      %v1921 = vrcp.pop %v1881
      %v1922 = vmul.f32 1.0, %v1921
      %v1923 = vrcp.pop %v1882
      %v1924 = vmul.f32 1.0, %v1923
      %v1925 = vrcp.pop %v1883
      %v1926 = vmul.f32 1.0, %v1925
      %v1927 = vrcp.pop %v1884
      %v1928 = vmul.f32 1.0, %v1927
      %v1929 = vrcp.pop %v1885
      %v1930 = vmul.f32 1.0, %v1929
      %v1931 = vrcp.pop %v1886
      %v1932 = vmul.f32 1.0, %v1931
      %v1933 = vrcp.pop %v1887
      %v1934 = vmul.f32 1.0, %v1933
      %v1935 = vrcp.pop %v1888
      %v1936 = vmul.f32 1.0, %v1935
      %v1937 = vrcp.pop %v1889
      %v1938 = vmul.f32 1.0, %v1937
      %v1939 = vrcp.pop %v1890
      %v1940 = vmul.f32 1.0, %v1939
      %v1941 = vrcp.pop %v1891
      %v1942 = vmul.f32 1.0, %v1941
      %v1943 = vrcp.pop %v1892
      %v1944 = vmul.f32 1.0, %v1943
      %v1945 = vrcp.pop %v1893
      %v1946 = vmul.f32 1.0, %v1945
      %v1947 = vrcp.pop %v1894
      %v1948 = vmul.f32 1.0, %v1947
      %v1949 = vrcp.pop %v1895
      %v1950 = vmul.f32 1.0, %v1949
      %v1951 = vrcp.pop %v1896
      %v1952 = vmul.f32 1.0, %v1951
      %v1953 = vrcp.pop %v1897
      %v1954 = vmul.f32 1.0, %v1953
      %v1955 = vrcp.pop %v1898
      %v1956 = vmul.f32 1.0, %v1955
      %v1957 = vrcp.pop %v1899
      %v1958 = vmul.f32 1.0, %v1957
      %v1959 = vrcp.pop %v1900
      %v1960 = vmul.f32 1.0, %v1959
      %v1961 = vrcp.pop %v1901
      %v1962 = vmul.f32 1.0, %v1961
      %v1963 = vrcp.pop %v1902
      %v1964 = vmul.f32 1.0, %v1963
      %v1965 = vrcp.pop %v1903
      %v1966 = vmul.f32 1.0, %v1965
      %v1967 = vrcp.pop %v1904
      %v1968 = vmul.f32 1.0, %v1967
      %v1969 = vmul.f32 %v1619, %v1906
      %v1970 = vmul.f32 %v1624, %v1908
      %v1971 = vmul.f32 %v1629, %v1910
      %v1972 = vmul.f32 %v1634, %v1912
      %v1973 = vmul.f32 %v1639, %v1914
      %v1974 = vmul.f32 %v1644, %v1916
      %v1975 = vmul.f32 %v1649, %v1918
      %v1976 = vmul.f32 %v1654, %v1920
      %v1977 = vmul.f32 %v1659, %v1922
      %v1978 = vmul.f32 %v1664, %v1924
      %v1979 = vmul.f32 %v1669, %v1926
      %v1980 = vmul.f32 %v1674, %v1928
      %v1981 = vmul.f32 %v1679, %v1930
      %v1982 = vmul.f32 %v1684, %v1932
      %v1983 = vmul.f32 %v1689, %v1934
      %v1984 = vmul.f32 %v1694, %v1936
      %v1985 = vmul.f32 %v1699, %v1938
      %v1986 = vmul.f32 %v1704, %v1940
      %v1987 = vmul.f32 %v1709, %v1942
      %v1988 = vmul.f32 %v1714, %v1944
      %v1989 = vmul.f32 %v1719, %v1946
      %v1990 = vmul.f32 %v1724, %v1948
      %v1991 = vmul.f32 %v1729, %v1950
      %v1992 = vmul.f32 %v1734, %v1952
      %v1993 = vmul.f32 %v1739, %v1954
      %v1994 = vmul.f32 %v1744, %v1956
      %v1995 = vmul.f32 %v1749, %v1958
      %v1996 = vmul.f32 %v1754, %v1960
      %v1997 = vmul.f32 %v1759, %v1962
      %v1998 = vmul.f32 %v1764, %v1964
      %v1999 = vmul.f32 %v1769, %v1966
      %v2000 = vmul.f32 %v1774, %v1968
      %2001 = vst [vmem:[%s211] sm:$0xff] %v1969
      %2002 = vst [vmem:[%s211 + $0x8] sm:$0xff] %v1970
      %2003 = vst [vmem:[%s211 + $0x10] sm:$0xff] %v1971
      %2004 = vst [vmem:[%s211 + $0x18] sm:$0xff] %v1972
      %2005 = vst [vmem:[%s211 + $0x20] sm:$0xff] %v1973
      %2006 = vst [vmem:[%s211 + $0x28] sm:$0xff] %v1974
      %2007 = vst [vmem:[%s211 + $0x30] sm:$0xff] %v1975
      %2008 = vst [vmem:[%s211 + $0x38] sm:$0xff] %v1976
      %2009 = vst [vmem:[%s211 + $0x40] sm:$0xff] %v1977
      %2010 = vst [vmem:[%s211 + $0x48] sm:$0xff] %v1978
      %2011 = vst [vmem:[%s211 + $0x50] sm:$0xff] %v1979
      %2012 = vst [vmem:[%s211 + $0x58] sm:$0xff] %v1980
      %2013 = vst [vmem:[%s211 + $0x60] sm:$0xff] %v1981
      %2014 = vst [vmem:[%s211 + $0x68] sm:$0xff] %v1982
      %2015 = vst [vmem:[%s211 + $0x70] sm:$0xff] %v1983
      %2016 = vst [vmem:[%s211 + $0x78] sm:$0xff] %v1984
      %2017 = vst [vmem:[%s211 + $0x80] sm:$0xff] %v1985
      %2018 = vst [vmem:[%s211 + $0x88] sm:$0xff] %v1986
      %2019 = vst [vmem:[%s211 + $0x90] sm:$0xff] %v1987
      %2020 = vst [vmem:[%s211 + $0x98] sm:$0xff] %v1988
      %2021 = vst [vmem:[%s211 + $0xa0] sm:$0xff] %v1989
      %2022 = vst [vmem:[%s211 + $0xa8] sm:$0xff] %v1990
      %2023 = vst [vmem:[%s211 + $0xb0] sm:$0xff] %v1991
      %2024 = vst [vmem:[%s211 + $0xb8] sm:$0xff] %v1992
      %2025 = vst [vmem:[%s211 + $0xc0] sm:$0xff] %v1993
      %2026 = vst [vmem:[%s211 + $0xc8] sm:$0xff] %v1994
      %2027 = vst [vmem:[%s211 + $0xd0] sm:$0xff] %v1995
      %2028 = vst [vmem:[%s211 + $0xd8] sm:$0xff] %v1996
      %2029 = vst [vmem:[%s211 + $0xe0] sm:$0xff] %v1997
      %2030 = vst [vmem:[%s211 + $0xe8] sm:$0xff] %v1998
      %2031 = vst [vmem:[%s211 + $0xf0] sm:$0xff] %v1999
      %2032 = vst [vmem:[%s211 + $0xf8] sm:$0xff] %v2000
      %s2033 = smul.u32 32, %s19
      %p2034 = scmp.lt.s32.totalorder %s18, 1
      %s2035 = scalar_select %p2034, %s18, 1
      %p2036 = scmp.lt.s32.totalorder %s2033, 31
      %s2037 = scalar_select %p2036, %s2033, 31
      %s2038 = smul.addr %s2035, 32
      %s2039 = sadd.s32 %s2037, %s2038
      %s2040 = smul.addr %s2039, 8
      %s2041 = scalar_lea.vmem %s3, %s2040
      // Predicated region
      $region33: #{bev_controlnet_embedding_forward.8} parent=31 // pred_check
        %p2042 = pneg %p116
      $region34: #{bev_controlnet_embedding_forward.8} parent=31 // pred_check_branch
        %2044 = sbr.rel (%p2042) target = $region36
      $region35: #{bev_controlnet_embedding_forward.8} parent=31 // pred_region
        %s2045 = smul.u32 32, %s19
      $region36: #{bev_controlnet_embedding_forward.8} parent=31 // pred_fallthru
        _
    $region32: #{bev_controlnet_embedding_forward.8} parent=5 // pred_fallthru
      _
    %p2046 = scmp.le.s32.totalorder 2, %s9
    // Predicated region
    $region37: #{bev_controlnet_embedding_forward.8} parent=5 // pred_check
      %p2047 = pneg %p2046
    $region38: #{bev_controlnet_embedding_forward.8} parent=5 // pred_check_branch
      %2049 = sbr.rel (%p2047) target = $region40
    $region39: #{bev_controlnet_embedding_forward.8} parent=5 // pred_region
      %s2050 = ssub.s32 %s9, 2
      // Predicated region
      $region41: #{bev_controlnet_embedding_forward.8} parent=39 // pred_check
        %p2051 = pneg %p122
      $region42: #{bev_controlnet_embedding_forward.8} parent=39 // pred_check_branch
        %2053 = sbr.rel (%p2051) target = $region44
      $region43: #{bev_controlnet_embedding_forward.8} parent=39 // pred_region
        %s2054 = smul.u32 32, %s21
        %p2055 = scmp.lt.s32.totalorder %s20, 1
        %s2056 = scalar_select %p2055, %s20, 1
        %p2057 = scmp.lt.s32.totalorder %s2054, 31
        %s2058 = scalar_select %p2057, %s2054, 31
        %s2059 = smul.addr %s2056, 32
        %s2060 = sadd.s32 %s2058, %s2059
        %s2061 = smul.addr %s2060, 8
        %s2062 = scalar_lea.vmem %s3, %s2061
      $region44: #{bev_controlnet_embedding_forward.8} parent=39 // pred_fallthru
        _
    $region40: #{bev_controlnet_embedding_forward.8} parent=5 // pred_fallthru
      _
  $region6: #{bev_controlnet_embedding_forward.8} parent=0 // loop_footer
    %s13 = sadd.s32 1, %s9
  $region7: #{bev_controlnet_embedding_forward.8} parent=0 // loop_footer_branch
    %8 = sbr.rel target = $region3
  $region8: #{bev_controlnet_embedding_forward.8} parent=0 // loop_exit
    _

// kernel: bev_controlnet_embedding_forward.10
$region0: #{bev_controlnet_embedding_forward.10}
  #allocation0 [shape = 'u32[]', space=smem, size = 0x4, offset = 0x4, fixed_abs, tag = 'smem constant byte address 0x4 - core index']
  #allocation1 [shape = 'u32[144,128]{1,0:T(1,128)}', space=vmem, size = 0x12000, scoped, tag = 'internal scratch']
  %s0 = inlined_call_operand.vmem [shape: f32[2,72,1152], index: 0, kind: input, shape index: {}]
  %s1 = inlined_call_operand.vmem [shape: f32[1152,128], index: 1, kind: input, shape index: {}]
  %s2 = inlined_call_operand.vmem [shape: f32[1,128], index: 2, kind: input, shape index: {}]
  %s3 = inlined_call_operand.vmem [shape: f32[2,72,128], index: 3, kind: output, shape index: {}]
  %s4 = sld [smem:[#allocation0]]
  $region45: #{bev_controlnet_embedding_forward.10} parent=0
    _
  %s6 = ssub.s32 1, %s4
  %s7 = scalar_select 0, %s6, %s4
  loop: start=0, step=1, limit=4
  $region2: #{bev_controlnet_embedding_forward.10} parent=0 // loop_pre_header
    _
  $region3: #{bev_controlnet_embedding_forward.10} parent=0 // loop_header
    %s9 = sphi 0, %s13
    %p10 = scmp.ge.s32.totalorder %s9, 4
    %s16 = sphi 0, %s28
    %s17 = sphi 0, %s24
    %s18 = sphi 0, %s16
    %s19 = sphi 0, %s17
    %s20 = sphi 0, %s18
    %s21 = sphi 0, %s19
    %s33 = sphi 0, %s35
    %s36 = sphi 0, %s33
    %s37 = sphi 0, %s36
    %s53 = sphi 0, %s37
    %s57 = sphi 0, %s57
    %s59 = sphi 0, %s57
    %s60 = sphi 0, %s59
    %s74 = sphi 0, %s60
    %s78 = sphi 0, %s78
    %s80 = sphi 0, %s78
    %s81 = sphi 0, %s80
    %s95 = sphi 0, %s81
    %s103 = sphi 0, %s105
    %s106 = sphi 0, %s103
    %s107 = sphi 0, %s106
    %s123 = sphi 0, %s107
  $region4: #{bev_controlnet_embedding_forward.10} parent=0 // loop_header_branch
    %12 = sbr.rel (%p10) target = $region8
  $region5: #{bev_controlnet_embedding_forward.10} parent=0 // loop_body
    %s14 = ssub.s32 %s9, 1
    %s15 = ssub.s32 %s9, 2
    %s22 = sadd.s32 1, %s17
    %p23 = scmp.ge.s32.totalorder %s22, 1
    %s24 = scalar_select %p23, 0, %s22
    %s25 = sadd.s32 1, %s16
    %s26 = scalar_select %p23, %s25, %s16
    %p27 = scmp.ge.s32.totalorder %s26, 2
    %s28 = scalar_select %p27, 0, %s26
    %s29 = ssub.s32 %s16, %s28
    %s30 = ssub.s32 %s17, %s24
    %s31 = sor.u32 %s29, %s30
    %p32 = scmp.eq.s32.totalorder %s31, 0
    %s34 = sadd.s32 %s33, 1
    %s35 = scalar_select %p32, %s33, %s34
    %p38 = pneg %p32
    %p39 = scmp.eq.s32.totalorder %s9, 1
    %p40 = por %p38, %p39
    %p41 = scmp.ne.s32.totalorder %s33, %s36
    %p42 = scmp.eq.s32.totalorder %s9, 0
    %p43 = por %p41, %p42
    %p44 = scmp.ne.s32.totalorder %s33, %s36
    %p45 = scmp.eq.s32.totalorder %s14, 1
    %p46 = por %p44, %p45
    %p47 = scmp.ne.s32.totalorder %s36, %s37
    %p48 = scmp.eq.s32.totalorder %s14, 0
    %p49 = por %p47, %p48
    %p50 = scmp.ne.s32.totalorder %s36, %s37
    %p51 = scmp.eq.s32.totalorder %s15, 1
    %p52 = por %p50, %p51
    %p54 = scmp.ne.s32.totalorder %s37, %s53
    %p55 = scmp.eq.s32.totalorder %s15, 0
    %p56 = por %p54, %p55
    %s58 = sadd.s32 %s57, 1
    %p61 = scmp.eq.s32.totalorder %s9, 1
    %p62 = scmp.ne.s32.totalorder %s57, %s59
    %p63 = scmp.eq.s32.totalorder %s9, 0
    %p64 = por %p62, %p63
    %p65 = scmp.ne.s32.totalorder %s57, %s59
    %p66 = scmp.eq.s32.totalorder %s14, 1
    %p67 = por %p65, %p66
    %p68 = scmp.ne.s32.totalorder %s59, %s60
    %p69 = scmp.eq.s32.totalorder %s14, 0
    %p70 = por %p68, %p69
    %p71 = scmp.ne.s32.totalorder %s59, %s60
    %p72 = scmp.eq.s32.totalorder %s15, 1
    %p73 = por %p71, %p72
    %p75 = scmp.ne.s32.totalorder %s60, %s74
    %p76 = scmp.eq.s32.totalorder %s15, 0
    %p77 = por %p75, %p76
    %s79 = sadd.s32 %s78, 1
    %p82 = scmp.eq.s32.totalorder %s9, 1
    %p83 = scmp.ne.s32.totalorder %s78, %s80
    %p84 = scmp.eq.s32.totalorder %s9, 0
    %p85 = por %p83, %p84
    %p86 = scmp.ne.s32.totalorder %s78, %s80
    %p87 = scmp.eq.s32.totalorder %s14, 1
    %p88 = por %p86, %p87
    %p89 = scmp.ne.s32.totalorder %s80, %s81
    %p90 = scmp.eq.s32.totalorder %s14, 0
    %p91 = por %p89, %p90
    %p92 = scmp.ne.s32.totalorder %s80, %s81
    %p93 = scmp.eq.s32.totalorder %s15, 1
    %p94 = por %p92, %p93
    %p96 = scmp.ne.s32.totalorder %s81, %s95
    %p97 = scmp.eq.s32.totalorder %s15, 0
    %p98 = por %p96, %p97
    %s99 = ssub.s32 %s16, %s28
    %s100 = ssub.s32 %s17, %s24
    %s101 = sor.u32 %s99, %s100
    %p102 = scmp.eq.s32.totalorder %s101, 0
    %s104 = sadd.s32 %s103, 1
    %s105 = scalar_select %p102, %s103, %s104
    %p108 = pneg %p102
    %p109 = scmp.eq.s32.totalorder %s9, 1
    %p110 = por %p108, %p109
    %p111 = scmp.ne.s32.totalorder %s103, %s106
    %p112 = scmp.eq.s32.totalorder %s9, 0
    %p113 = por %p111, %p112
    %p114 = scmp.ne.s32.totalorder %s103, %s106
    %p115 = scmp.eq.s32.totalorder %s14, 1
    %p116 = por %p114, %p115
    %p117 = scmp.ne.s32.totalorder %s106, %s107
    %p118 = scmp.eq.s32.totalorder %s14, 0
    %p119 = por %p117, %p118
    %p120 = scmp.ne.s32.totalorder %s106, %s107
    %p121 = scmp.eq.s32.totalorder %s15, 1
    %p122 = por %p120, %p121
    %p124 = scmp.ne.s32.totalorder %s107, %s123
    %p125 = scmp.eq.s32.totalorder %s15, 0
    %p126 = por %p124, %p125
    %p127 = scmp.le.s32.totalorder 1, %s9
    %p128 = scmp.lt.s32.totalorder %s9, 3
    %p129 = pnand %p127, %p128
    %p130 = pneg %p129
    // Predicated region
    $region9: #{bev_controlnet_embedding_forward.10} parent=5 // pred_check
      _
    $region10: #{bev_controlnet_embedding_forward.10} parent=5 // pred_check_branch
      %132 = sbr.rel (%p129) target = $region12
    $region11: #{bev_controlnet_embedding_forward.10} parent=5 // pred_region
      %s133 = ssub.s32 %s9, 1
      // Predicated region
      $region13: #{bev_controlnet_embedding_forward.10} parent=11 // pred_check
        %p134 = pneg %p70
      $region14: #{bev_controlnet_embedding_forward.10} parent=11 // pred_check_branch
        %136 = sbr.rel (%p134) target = $region16
      $region15: #{bev_controlnet_embedding_forward.10} parent=11 // pred_region
        _
      $region16: #{bev_controlnet_embedding_forward.10} parent=11 // pred_fallthru
        _
      // Predicated region
      $region17: #{bev_controlnet_embedding_forward.10} parent=11 // pred_check
        %p137 = pneg %p91
      $region18: #{bev_controlnet_embedding_forward.10} parent=11 // pred_check_branch
        %139 = sbr.rel (%p137) target = $region20
      $region19: #{bev_controlnet_embedding_forward.10} parent=11 // pred_region
        _
      $region20: #{bev_controlnet_embedding_forward.10} parent=11 // pred_fallthru
        _
    $region12: #{bev_controlnet_embedding_forward.10} parent=5 // pred_fallthru
      _
    %p140 = scmp.lt.s32.totalorder %s9, 2
    // Predicated region
    $region21: #{bev_controlnet_embedding_forward.10} parent=5 // pred_check
      %p141 = pneg %p140
    $region22: #{bev_controlnet_embedding_forward.10} parent=5 // pred_check_branch
      %143 = sbr.rel (%p141) target = $region24
    $region23: #{bev_controlnet_embedding_forward.10} parent=5 // pred_region
      // Predicated region
      $region25: #{bev_controlnet_embedding_forward.10} parent=23 // pred_check
        %p144 = pneg %p43
      $region26: #{bev_controlnet_embedding_forward.10} parent=23 // pred_check_branch
        %146 = sbr.rel (%p144) target = $region28
      $region27: #{bev_controlnet_embedding_forward.10} parent=23 // pred_region
        %s147 = smul.u32 9, %s17
        %p148 = scmp.lt.s32.totalorder %s16, 1
        %s149 = scalar_select %p148, %s16, 1
        %p150 = scmp.lt.s32.totalorder %s147, 8
        %s151 = scalar_select %p150, %s147, 8
        %s152 = smul.addr %s151, 9
        %s153 = smul.addr %s149, 81
        %s154 = sadd.s32 %s152, %s153
        %s155 = smul.addr %s154, 8
        %s156 = scalar_lea.vmem %s0, %s155
        %s157 = smul.u32 9, %s17
      $region28: #{bev_controlnet_embedding_forward.10} parent=23 // pred_fallthru
        _
    $region24: #{bev_controlnet_embedding_forward.10} parent=5 // pred_fallthru
      _
    %p158 = scmp.le.s32.totalorder 1, %s9
    %p159 = scmp.lt.s32.totalorder %s9, 3
    %p160 = pnand %p158, %p159
    %p161 = pneg %p160
    // Predicated region
    $region29: #{bev_controlnet_embedding_forward.10} parent=5 // pred_check
      _
    $region30: #{bev_controlnet_embedding_forward.10} parent=5 // pred_check_branch
      %163 = sbr.rel (%p160) target = $region32
    $region31: #{bev_controlnet_embedding_forward.10} parent=5 // pred_region
      %s164 = ssub.s32 %s9, 1
      %s165 = smul.u32 9, %s19
      %p166 = scmp.lt.s32.totalorder %s18, 1
      %s167 = scalar_select %p166, %s18, 1
      %p168 = scmp.lt.s32.totalorder %s165, 8
      %s169 = scalar_select %p168, %s165, 8
      %s170 = smul.addr %s169, 9
      %s171 = smul.addr %s167, 81
      %s172 = sadd.s32 %s170, %s171
      %s173 = smul.addr %s172, 8
      %s174 = scalar_lea.vmem %s0, %s173
      %p175 = pneg %p49
      %p176 = pneg %p46
      %p177 = pneg %p70
      %p178 = pneg %p67
      %p179 = pneg %p91
      %p180 = pneg %p88
      %p181 = pneg %p119
      %p182 = pneg %p116
      %s183 = smul.u32 9, %s19
      %p184 = scmp.lt.s32.totalorder %s18, 1
      %s185 = scalar_select %p184, %s18, 1
      %p186 = scmp.lt.s32.totalorder %s183, 8
      %s187 = scalar_select %p186, %s183, 8
      %s188 = smul.addr %s185, 9
      %s189 = sadd.s32 %s187, %s188
      %s190 = smul.addr %s189, 8
      %s191 = scalar_lea.vmem %s3, %s190
      %s192 = smul.u32 9, %s19
      %p193 = scmp.lt.s32.totalorder %s18, 1
      %s194 = scalar_select %p193, %s18, 1
      %p195 = scmp.lt.s32.totalorder %s192, 8
      %s196 = scalar_select %p195, %s192, 8
      %s197 = smul.addr %s196, 9
      %s198 = smul.addr %s194, 81
      %s199 = sadd.s32 %s197, %s198
      %s200 = smul.addr %s199, 8
      %s201 = scalar_lea.vmem %s0, %s200
      %s202 = smul.u32 9, %s19
      %s203 = smul.u32 9, %s19
      %p204 = scmp.lt.s32.totalorder %s18, 1
      %s205 = scalar_select %p204, %s18, 1
      %p206 = scmp.lt.s32.totalorder %s203, 8
      %s207 = scalar_select %p206, %s203, 8
      %s208 = smul.addr %s205, 9
      %s209 = sadd.s32 %s207, %s208
      %s210 = smul.addr %s209, 8
      %s211 = scalar_lea.vmem %s3, %s210
      %s212 = smul.u32 9, %s19
      %v213 = vld [vmem:[%s201] sm:$0xff]
      %v214 = vld [vmem:[%s201 + $0x8] sm:$0xff]
      %v215 = vld [vmem:[%s201 + $0x10] sm:$0xff]
      %v216 = vld [vmem:[%s201 + $0x18] sm:$0xff]
      %v217 = vld [vmem:[%s201 + $0x20] sm:$0xff]
      %v218 = vld [vmem:[%s201 + $0x28] sm:$0xff]
      %v219 = vld [vmem:[%s201 + $0x30] sm:$0xff]
      %v220 = vld [vmem:[%s201 + $0x38] sm:$0xff]
      %v221 = vld [vmem:[%s201 + $0x40] sm:$0xff]
      %v222 = vld [vmem:[%s201 + $0x48] sm:$0xff]
      %v223 = vld [vmem:[%s201 + $0x50] sm:$0xff]
      %v224 = vld [vmem:[%s201 + $0x58] sm:$0xff]
      %v225 = vld [vmem:[%s201 + $0x60] sm:$0xff]
      %v226 = vld [vmem:[%s201 + $0x68] sm:$0xff]
      %v227 = vld [vmem:[%s201 + $0x70] sm:$0xff]
      %v228 = vld [vmem:[%s201 + $0x78] sm:$0xff]
      %v229 = vld [vmem:[%s201 + $0x80] sm:$0xff]
      %v230 = vld [vmem:[%s201 + $0x88] sm:$0xff]
      %v231 = vld [vmem:[%s201 + $0x90] sm:$0xff]
      %v232 = vld [vmem:[%s201 + $0x98] sm:$0xff]
      %v233 = vld [vmem:[%s201 + $0xa0] sm:$0xff]
      %v234 = vld [vmem:[%s201 + $0xa8] sm:$0xff]
      %v235 = vld [vmem:[%s201 + $0xb0] sm:$0xff]
      %v236 = vld [vmem:[%s201 + $0xb8] sm:$0xff]
      %v237 = vld [vmem:[%s201 + $0xc0] sm:$0xff]
      %v238 = vld [vmem:[%s201 + $0xc8] sm:$0xff]
      %v239 = vld [vmem:[%s201 + $0xd0] sm:$0xff]
      %v240 = vld [vmem:[%s201 + $0xd8] sm:$0xff]
      %v241 = vld [vmem:[%s201 + $0xe0] sm:$0xff]
      %v242 = vld [vmem:[%s201 + $0xe8] sm:$0xff]
      %v243 = vld [vmem:[%s201 + $0xf0] sm:$0xff]
      %v244 = vld [vmem:[%s201 + $0xf8] sm:$0xff]
      %v245 = vld [vmem:[%s201 + $0x100] sm:$0xff]
      %v246 = vld [vmem:[%s201 + $0x108] sm:$0xff]
      %v247 = vld [vmem:[%s201 + $0x110] sm:$0xff]
      %v248 = vld [vmem:[%s201 + $0x118] sm:$0xff]
      %v249 = vld [vmem:[%s201 + $0x120] sm:$0xff]
      %v250 = vld [vmem:[%s201 + $0x128] sm:$0xff]
      %v251 = vld [vmem:[%s201 + $0x130] sm:$0xff]
      %v252 = vld [vmem:[%s201 + $0x138] sm:$0xff]
      %v253 = vld [vmem:[%s201 + $0x140] sm:$0xff]
      %v254 = vld [vmem:[%s201 + $0x148] sm:$0xff]
      %v255 = vld [vmem:[%s201 + $0x150] sm:$0xff]
      %v256 = vld [vmem:[%s201 + $0x158] sm:$0xff]
      %v257 = vld [vmem:[%s201 + $0x160] sm:$0xff]
      %v258 = vld [vmem:[%s201 + $0x168] sm:$0xff]
      %v259 = vld [vmem:[%s201 + $0x170] sm:$0xff]
      %v260 = vld [vmem:[%s201 + $0x178] sm:$0xff]
      %v261 = vld [vmem:[%s201 + $0x180] sm:$0xff]
      %v262 = vld [vmem:[%s201 + $0x188] sm:$0xff]
      %v263 = vld [vmem:[%s201 + $0x190] sm:$0xff]
      %v264 = vld [vmem:[%s201 + $0x198] sm:$0xff]
      %v265 = vld [vmem:[%s201 + $0x1a0] sm:$0xff]
      %v266 = vld [vmem:[%s201 + $0x1a8] sm:$0xff]
      %v267 = vld [vmem:[%s201 + $0x1b0] sm:$0xff]
      %v268 = vld [vmem:[%s201 + $0x1b8] sm:$0xff]
      %v269 = vld [vmem:[%s201 + $0x1c0] sm:$0xff]
      %v270 = vld [vmem:[%s201 + $0x1c8] sm:$0xff]
      %v271 = vld [vmem:[%s201 + $0x1d0] sm:$0xff]
      %v272 = vld [vmem:[%s201 + $0x1d8] sm:$0xff]
      %v273 = vld [vmem:[%s201 + $0x1e0] sm:$0xff]
      %v274 = vld [vmem:[%s201 + $0x1e8] sm:$0xff]
      %v275 = vld [vmem:[%s201 + $0x1f0] sm:$0xff]
      %v276 = vld [vmem:[%s201 + $0x1f8] sm:$0xff]
      %v277 = vld [vmem:[%s201 + $0x200] sm:$0xff]
      %v278 = vld [vmem:[%s201 + $0x208] sm:$0xff]
      %v279 = vld [vmem:[%s201 + $0x210] sm:$0xff]
      %v280 = vld [vmem:[%s201 + $0x218] sm:$0xff]
      %v281 = vld [vmem:[%s201 + $0x220] sm:$0xff]
      %v282 = vld [vmem:[%s201 + $0x228] sm:$0xff]
      %v283 = vld [vmem:[%s201 + $0x230] sm:$0xff]
      %v284 = vld [vmem:[%s201 + $0x238] sm:$0xff]
      %v285 = vld [vmem:[%s201 + $0x240] sm:$0xff]
      %v286 = vld [vmem:[%s201 + $0x248] sm:$0xff]
      %v287 = vld [vmem:[%s201 + $0x250] sm:$0xff]
      %v288 = vld [vmem:[%s201 + $0x258] sm:$0xff]
      %v289 = vld [vmem:[%s201 + $0x260] sm:$0xff]
      %v290 = vld [vmem:[%s201 + $0x268] sm:$0xff]
      %v291 = vld [vmem:[%s201 + $0x270] sm:$0xff]
      %v292 = vld [vmem:[%s201 + $0x278] sm:$0xff]
      %v293 = vld [vmem:[%s201 + $0x280] sm:$0xff]
      %v294 = vld [vmem:[%s1] sm:$0xff]
      %v295 = vld [vmem:[%s1 + $0x8] sm:$0xff]
      %v296 = vld [vmem:[%s1 + $0x10] sm:$0xff]
      %v297 = vld [vmem:[%s1 + $0x18] sm:$0xff]
      %v298 = vld [vmem:[%s1 + $0x20] sm:$0xff]
      %v299 = vld [vmem:[%s1 + $0x28] sm:$0xff]
      %v300 = vld [vmem:[%s1 + $0x30] sm:$0xff]
      %v301 = vld [vmem:[%s1 + $0x38] sm:$0xff]
      %v302 = vld [vmem:[%s1 + $0x40] sm:$0xff]
      %v303 = vld [vmem:[%s1 + $0x48] sm:$0xff]
      %v304 = vld [vmem:[%s1 + $0x50] sm:$0xff]
      %v305 = vld [vmem:[%s1 + $0x58] sm:$0xff]
      %v306 = vld [vmem:[%s1 + $0x60] sm:$0xff]
      %v307 = vld [vmem:[%s1 + $0x68] sm:$0xff]
      %v308 = vld [vmem:[%s1 + $0x70] sm:$0xff]
      %v309 = vld [vmem:[%s1 + $0x78] sm:$0xff]
      %v310 = vld [vmem:[%s1 + $0x80] sm:$0xff]
      %v311 = vld [vmem:[%s1 + $0x88] sm:$0xff]
      %v312 = vld [vmem:[%s1 + $0x90] sm:$0xff]
      %v313 = vld [vmem:[%s1 + $0x98] sm:$0xff]
      %v314 = vld [vmem:[%s1 + $0xa0] sm:$0xff]
      %v315 = vld [vmem:[%s1 + $0xa8] sm:$0xff]
      %v316 = vld [vmem:[%s1 + $0xb0] sm:$0xff]
      %v317 = vld [vmem:[%s1 + $0xb8] sm:$0xff]
      %v318 = vld [vmem:[%s1 + $0xc0] sm:$0xff]
      %v319 = vld [vmem:[%s1 + $0xc8] sm:$0xff]
      %v320 = vld [vmem:[%s1 + $0xd0] sm:$0xff]
      %v321 = vld [vmem:[%s1 + $0xd8] sm:$0xff]
      %v322 = vld [vmem:[%s1 + $0xe0] sm:$0xff]
      %v323 = vld [vmem:[%s1 + $0xe8] sm:$0xff]
      %v324 = vld [vmem:[%s1 + $0xf0] sm:$0xff]
      %v325 = vld [vmem:[%s1 + $0xf8] sm:$0xff]
      %v326 = vld [vmem:[%s1 + $0x100] sm:$0xff]
      %v327 = vld [vmem:[%s1 + $0x108] sm:$0xff]
      %v328 = vld [vmem:[%s1 + $0x110] sm:$0xff]
      %v329 = vld [vmem:[%s1 + $0x118] sm:$0xff]
      %v330 = vld [vmem:[%s1 + $0x120] sm:$0xff]
      %v331 = vld [vmem:[%s1 + $0x128] sm:$0xff]
      %v332 = vld [vmem:[%s1 + $0x130] sm:$0xff]
      %v333 = vld [vmem:[%s1 + $0x138] sm:$0xff]
      %v334 = vld [vmem:[%s1 + $0x140] sm:$0xff]
      %v335 = vld [vmem:[%s1 + $0x148] sm:$0xff]
      %v336 = vld [vmem:[%s1 + $0x150] sm:$0xff]
      %v337 = vld [vmem:[%s1 + $0x158] sm:$0xff]
      %v338 = vld [vmem:[%s1 + $0x160] sm:$0xff]
      %v339 = vld [vmem:[%s1 + $0x168] sm:$0xff]
      %v340 = vld [vmem:[%s1 + $0x170] sm:$0xff]
      %v341 = vld [vmem:[%s1 + $0x178] sm:$0xff]
      %v342 = vld [vmem:[%s1 + $0x180] sm:$0xff]
      %v343 = vld [vmem:[%s1 + $0x188] sm:$0xff]
      %v344 = vld [vmem:[%s1 + $0x190] sm:$0xff]
      %v345 = vld [vmem:[%s1 + $0x198] sm:$0xff]
      %v346 = vld [vmem:[%s1 + $0x1a0] sm:$0xff]
      %v347 = vld [vmem:[%s1 + $0x1a8] sm:$0xff]
      %v348 = vld [vmem:[%s1 + $0x1b0] sm:$0xff]
      %v349 = vld [vmem:[%s1 + $0x1b8] sm:$0xff]
      %v350 = vld [vmem:[%s1 + $0x1c0] sm:$0xff]
      %v351 = vld [vmem:[%s1 + $0x1c8] sm:$0xff]
      %v352 = vld [vmem:[%s1 + $0x1d0] sm:$0xff]
      %v353 = vld [vmem:[%s1 + $0x1d8] sm:$0xff]
      %v354 = vld [vmem:[%s1 + $0x1e0] sm:$0xff]
      %v355 = vld [vmem:[%s1 + $0x1e8] sm:$0xff]
      %v356 = vld [vmem:[%s1 + $0x1f0] sm:$0xff]
      %v357 = vld [vmem:[%s1 + $0x1f8] sm:$0xff]
      %v358 = vld [vmem:[%s1 + $0x200] sm:$0xff]
      %v359 = vld [vmem:[%s1 + $0x208] sm:$0xff]
      %v360 = vld [vmem:[%s1 + $0x210] sm:$0xff]
      %v361 = vld [vmem:[%s1 + $0x218] sm:$0xff]
      %v362 = vld [vmem:[%s1 + $0x220] sm:$0xff]
      %v363 = vld [vmem:[%s1 + $0x228] sm:$0xff]
      %v364 = vld [vmem:[%s1 + $0x230] sm:$0xff]
      %v365 = vld [vmem:[%s1 + $0x238] sm:$0xff]
      %v366 = vld [vmem:[%s1 + $0x240] sm:$0xff]
      %v367 = vld [vmem:[%s1 + $0x248] sm:$0xff]
      %v368 = vld [vmem:[%s1 + $0x250] sm:$0xff]
      %v369 = vld [vmem:[%s1 + $0x258] sm:$0xff]
      %v370 = vld [vmem:[%s1 + $0x260] sm:$0xff]
      %v371 = vld [vmem:[%s1 + $0x268] sm:$0xff]
      %v372 = vld [vmem:[%s1 + $0x270] sm:$0xff]
      %v373 = vld [vmem:[%s1 + $0x278] sm:$0xff]
      %v374 = vld [vmem:[%s1 + $0x280] sm:$0xff]
      %v375 = vld [vmem:[%s1 + $0x288] sm:$0xff]
      %v376 = vld [vmem:[%s1 + $0x290] sm:$0xff]
      %v377 = vld [vmem:[%s1 + $0x298] sm:$0xff]
      %v378 = vld [vmem:[%s1 + $0x2a0] sm:$0xff]
      %v379 = vld [vmem:[%s1 + $0x2a8] sm:$0xff]
      %v380 = vld [vmem:[%s1 + $0x2b0] sm:$0xff]
      %v381 = vld [vmem:[%s1 + $0x2b8] sm:$0xff]
      %v382 = vld [vmem:[%s1 + $0x2c0] sm:$0xff]
      %v383 = vld [vmem:[%s1 + $0x2c8] sm:$0xff]
      %v384 = vld [vmem:[%s1 + $0x2d0] sm:$0xff]
      %v385 = vld [vmem:[%s1 + $0x2d8] sm:$0xff]
      %v386 = vld [vmem:[%s1 + $0x2e0] sm:$0xff]
      %v387 = vld [vmem:[%s1 + $0x2e8] sm:$0xff]
      %v388 = vld [vmem:[%s1 + $0x2f0] sm:$0xff]
      %v389 = vld [vmem:[%s1 + $0x2f8] sm:$0xff]
      %v390 = vld [vmem:[%s1 + $0x300] sm:$0xff]
      %v391 = vld [vmem:[%s1 + $0x308] sm:$0xff]
      %v392 = vld [vmem:[%s1 + $0x310] sm:$0xff]
      %v393 = vld [vmem:[%s1 + $0x318] sm:$0xff]
      %v394 = vld [vmem:[%s1 + $0x320] sm:$0xff]
      %v395 = vld [vmem:[%s1 + $0x328] sm:$0xff]
      %v396 = vld [vmem:[%s1 + $0x330] sm:$0xff]
      %v397 = vld [vmem:[%s1 + $0x338] sm:$0xff]
      %v398 = vld [vmem:[%s1 + $0x340] sm:$0xff]
      %v399 = vld [vmem:[%s1 + $0x348] sm:$0xff]
      %v400 = vld [vmem:[%s1 + $0x350] sm:$0xff]
      %v401 = vld [vmem:[%s1 + $0x358] sm:$0xff]
      %v402 = vld [vmem:[%s1 + $0x360] sm:$0xff]
      %v403 = vld [vmem:[%s1 + $0x368] sm:$0xff]
      %v404 = vld [vmem:[%s1 + $0x370] sm:$0xff]
      %v405 = vld [vmem:[%s1 + $0x378] sm:$0xff]
      %v406 = vld [vmem:[%s1 + $0x380] sm:$0xff]
      %v407 = vld [vmem:[%s1 + $0x388] sm:$0xff]
      %v408 = vld [vmem:[%s1 + $0x390] sm:$0xff]
      %v409 = vld [vmem:[%s1 + $0x398] sm:$0xff]
      %v410 = vld [vmem:[%s1 + $0x3a0] sm:$0xff]
      %v411 = vld [vmem:[%s1 + $0x3a8] sm:$0xff]
      %v412 = vld [vmem:[%s1 + $0x3b0] sm:$0xff]
      %v413 = vld [vmem:[%s1 + $0x3b8] sm:$0xff]
      %v414 = vld [vmem:[%s1 + $0x3c0] sm:$0xff]
      %v415 = vld [vmem:[%s1 + $0x3c8] sm:$0xff]
      %v416 = vld [vmem:[%s1 + $0x3d0] sm:$0xff]
      %v417 = vld [vmem:[%s1 + $0x3d8] sm:$0xff]
      %v418 = vld [vmem:[%s1 + $0x3e0] sm:$0xff]
      %v419 = vld [vmem:[%s1 + $0x3e8] sm:$0xff]
      %v420 = vld [vmem:[%s1 + $0x3f0] sm:$0xff]
      %v421 = vld [vmem:[%s1 + $0x3f8] sm:$0xff]
      %v422 = vld [vmem:[%s1 + $0x400] sm:$0xff]
      %v423 = vld [vmem:[%s1 + $0x408] sm:$0xff]
      %v424 = vld [vmem:[%s1 + $0x410] sm:$0xff]
      %v425 = vld [vmem:[%s1 + $0x418] sm:$0xff]
      %v426 = vld [vmem:[%s1 + $0x420] sm:$0xff]
      %v427 = vld [vmem:[%s1 + $0x428] sm:$0xff]
      %v428 = vld [vmem:[%s1 + $0x430] sm:$0xff]
      %v429 = vld [vmem:[%s1 + $0x438] sm:$0xff]
      %v430 = vld [vmem:[%s1 + $0x440] sm:$0xff]
      %v431 = vld [vmem:[%s1 + $0x448] sm:$0xff]
      %v432 = vld [vmem:[%s1 + $0x450] sm:$0xff]
      %v433 = vld [vmem:[%s1 + $0x458] sm:$0xff]
      %v434 = vld [vmem:[%s1 + $0x460] sm:$0xff]
      %v435 = vld [vmem:[%s1 + $0x468] sm:$0xff]
      %v436 = vld [vmem:[%s1 + $0x470] sm:$0xff]
      %v437 = vld [vmem:[%s1 + $0x478] sm:$0xff]
      %v438 = vld [vmem:[%s2] sm:$0x1]
      %v440 = vlaneseq
      %v441 = vshrl.u32 %v440, 7
      %v442 = vsub.s32 0, %v441
      %v443 = vrot.slane %v438, %v442
      %445 = vmatprep.subr.mxu0 0.0
      %446 = vmatpush1.msra.mxu0 %v294
      %447 = vmatprep.subr.mxu0 0.0
      %448 = vmatpush1.msra.mxu0 %v295
      %449 = vmatprep.subr.mxu0 0.0
      %450 = vmatpush1.msra.mxu0 %v296
      %451 = vmatprep.subr.mxu0 0.0
      %452 = vmatpush1.msra.mxu0 %v297
      %453 = vmatprep.subr.mxu0 0.0
      %454 = vmatpush1.msra.mxu0 %v298
      %455 = vmatprep.subr.mxu0 0.0
      %456 = vmatpush1.msra.mxu0 %v299
      %457 = vmatprep.subr.mxu0 0.0
      %458 = vmatpush1.msra.mxu0 %v300
      %459 = vmatprep.subr.mxu0 0.0
      %460 = vmatpush1.msra.mxu0 %v301
      %461 = vmatprep.subr.mxu0 0.0
      %462 = vmatpush1.msra.mxu0 %v302
      %463 = vmatprep.subr.mxu0 0.0
      %464 = vmatpush1.msra.mxu0 %v303
      %465 = vmatprep.subr.mxu0 0.0
      %466 = vmatpush1.msra.mxu0 %v304
      %467 = vmatprep.subr.mxu0 0.0
      %468 = vmatpush1.msra.mxu0 %v305
      %469 = vmatprep.subr.mxu0 0.0
      %470 = vmatpush1.msra.mxu0 %v306
      %471 = vmatprep.subr.mxu0 0.0
      %472 = vmatpush1.msra.mxu0 %v307
      %473 = vmatprep.subr.mxu0 0.0
      %474 = vmatpush1.msra.mxu0 %v308
      %475 = vmatprep.subr.mxu0 0.0
      %476 = vmatpush1.msra.mxu0 %v309
      %477 = vmatprep.subr.mxu0 0.0
      %478 = vmatpush1.msra.mxu0 %v310
      %479 = vmatprep.subr.mxu0 0.0
      %480 = vmatpush1.msra.mxu0 %v311
      %481 = vmatprep.subr.mxu0 0.0
      %482 = vmatpush1.msra.mxu0 %v312
      %483 = vmatprep.subr.mxu0 0.0
      %484 = vmatpush1.msra.mxu0 %v313
      %485 = vmatprep.subr.mxu0 0.0
      %486 = vmatpush1.msra.mxu0 %v314
      %487 = vmatprep.subr.mxu0 0.0
      %488 = vmatpush1.msra.mxu0 %v315
      %489 = vmatprep.subr.mxu0 0.0
      %490 = vmatpush1.msra.mxu0 %v316
      %491 = vmatprep.subr.mxu0 0.0
      %492 = vmatpush1.msra.mxu0 %v317
      %493 = vmatprep.subr.mxu0 0.0
      %494 = vmatpush1.msra.mxu0 %v318
      %495 = vmatprep.subr.mxu0 0.0
      %496 = vmatpush1.msra.mxu0 %v319
      %497 = vmatprep.subr.mxu0 0.0
      %498 = vmatpush1.msra.mxu0 %v320
      %499 = vmatprep.subr.mxu0 0.0
      %500 = vmatpush1.msra.mxu0 %v321
      %501 = vmatprep.subr.mxu0 0.0
      %502 = vmatpush1.msra.mxu0 %v322
      %503 = vmatprep.subr.mxu0 0.0
      %504 = vmatpush1.msra.mxu0 %v323
      %505 = vmatprep.subr.mxu0 0.0
      %506 = vmatpush1.msra.mxu0 %v324
      %507 = vmatprep.subr.mxu0 0.0
      %508 = vmatpush1.msra.mxu0 %v325
      %509 = vmatprep.mubr.f32.mxu0 %v214
      %510 = vmatmul.mubr.f32.gmra.mrb[0].mxu0 %v213
      %v511 = vpop.f32.mrb[0].mxu0
      %v512 = vadd.f32 %v443, %v511
      %v513 = vpop.f32.mrb[0].mxu0
      %514 = vmatprep.mubr.f32.mxu0 %v223
      %515 = vmatmul.mubr.f32.gmra.mrb[0].mxu0 %v222
      %v516 = vpop.f32.mrb[0].mxu0
      %v517 = vadd.f32 %v443, %v516
      %v518 = vpop.f32.mrb[0].mxu0
      %519 = vmatprep.mubr.f32.mxu0 %v232
      %520 = vmatmul.mubr.f32.gmra.mrb[0].mxu0 %v231
      %v521 = vpop.f32.mrb[0].mxu0
      %v522 = vadd.f32 %v443, %v521
      %v523 = vpop.f32.mrb[0].mxu0
      %524 = vmatprep.mubr.f32.mxu0 %v241
      %525 = vmatmul.mubr.f32.gmra.mrb[0].mxu0 %v240
      %v526 = vpop.f32.mrb[0].mxu0
      %v527 = vadd.f32 %v443, %v526
      %v528 = vpop.f32.mrb[0].mxu0
      %529 = vmatprep.mubr.f32.mxu0 %v250
      %530 = vmatmul.mubr.f32.gmra.mrb[0].mxu0 %v249
      %v531 = vpop.f32.mrb[0].mxu0
      %v532 = vadd.f32 %v443, %v531
      %v533 = vpop.f32.mrb[0].mxu0
      %534 = vmatprep.mubr.f32.mxu0 %v259
      %535 = vmatmul.mubr.f32.gmra.mrb[0].mxu0 %v258
      %v536 = vpop.f32.mrb[0].mxu0
      %v537 = vadd.f32 %v443, %v536
      %v538 = vpop.f32.mrb[0].mxu0
      %539 = vmatprep.mubr.f32.mxu0 %v268
      %540 = vmatmul.mubr.f32.gmra.mrb[0].mxu0 %v267
      %v541 = vpop.f32.mrb[0].mxu0
      %v542 = vadd.f32 %v443, %v541
      %v543 = vpop.f32.mrb[0].mxu0
      %544 = vmatprep.mubr.f32.mxu0 %v277
      %545 = vmatmul.mubr.f32.gmra.mrb[0].mxu0 %v276
      %v546 = vpop.f32.mrb[0].mxu0
      %v547 = vadd.f32 %v443, %v546
      %v548 = vpop.f32.mrb[0].mxu0
      %549 = vmatprep.mubr.f32.mxu0 %v286
      %550 = vmatmul.mubr.f32.gmra.mrb[0].mxu0 %v285
      %v551 = vpop.f32.mrb[0].mxu0
      %v552 = vadd.f32 %v443, %v551
      %v553 = vpop.f32.mrb[0].mxu0
      %554 = vdwg.mxu0
      %555 = vmatprep.subr.mxu0 0.0
      %556 = vmatpush1.msra.mxu0 %v326
      %557 = vmatprep.subr.mxu0 0.0
      %558 = vmatpush1.msra.mxu0 %v327
      %559 = vmatprep.subr.mxu0 0.0
      %560 = vmatpush1.msra.mxu0 %v328
      %561 = vmatprep.subr.mxu0 0.0
      %562 = vmatpush1.msra.mxu0 %v329
      %563 = vmatprep.subr.mxu0 0.0
      %564 = vmatpush1.msra.mxu0 %v330
      %565 = vmatprep.subr.mxu0 0.0
      %566 = vmatpush1.msra.mxu0 %v331
      %567 = vmatprep.subr.mxu0 0.0
      %568 = vmatpush1.msra.mxu0 %v332
      %569 = vmatprep.subr.mxu0 0.0
      %570 = vmatpush1.msra.mxu0 %v333
      %571 = vmatprep.subr.mxu0 0.0
      %572 = vmatpush1.msra.mxu0 %v334
      %573 = vmatprep.subr.mxu0 0.0
      %574 = vmatpush1.msra.mxu0 %v335
      %575 = vmatprep.subr.mxu0 0.0
      %576 = vmatpush1.msra.mxu0 %v336
      %577 = vmatprep.subr.mxu0 0.0
      %578 = vmatpush1.msra.mxu0 %v337
      %579 = vmatprep.subr.mxu0 0.0
      %580 = vmatpush1.msra.mxu0 %v338
      %581 = vmatprep.subr.mxu0 0.0
      %582 = vmatpush1.msra.mxu0 %v339
      %583 = vmatprep.subr.mxu0 0.0
      %584 = vmatpush1.msra.mxu0 %v340
      %585 = vmatprep.subr.mxu0 0.0
      %586 = vmatpush1.msra.mxu0 %v341
      %587 = vmatprep.subr.mxu0 0.0
      %588 = vmatpush1.msra.mxu0 %v342
      %589 = vmatprep.subr.mxu0 0.0
      %590 = vmatpush1.msra.mxu0 %v343
      %591 = vmatprep.subr.mxu0 0.0
      %592 = vmatpush1.msra.mxu0 %v344
      %593 = vmatprep.subr.mxu0 0.0
      %594 = vmatpush1.msra.mxu0 %v345
      %595 = vmatprep.subr.mxu0 0.0
      %596 = vmatpush1.msra.mxu0 %v346
      %597 = vmatprep.subr.mxu0 0.0
      %598 = vmatpush1.msra.mxu0 %v347
      %599 = vmatprep.subr.mxu0 0.0
      %600 = vmatpush1.msra.mxu0 %v348
      %601 = vmatprep.subr.mxu0 0.0
      %602 = vmatpush1.msra.mxu0 %v349
      %603 = vmatprep.subr.mxu0 0.0
      %604 = vmatpush1.msra.mxu0 %v350
      %605 = vmatprep.subr.mxu0 0.0
      %606 = vmatpush1.msra.mxu0 %v351
      %607 = vmatprep.subr.mxu0 0.0
      %608 = vmatpush1.msra.mxu0 %v352
      %609 = vmatprep.subr.mxu0 0.0
      %610 = vmatpush1.msra.mxu0 %v353
      %611 = vmatprep.subr.mxu0 0.0
      %612 = vmatpush1.msra.mxu0 %v354
      %613 = vmatprep.subr.mxu0 0.0
      %614 = vmatpush1.msra.mxu0 %v355
      %615 = vmatprep.subr.mxu0 0.0
      %616 = vmatpush1.msra.mxu0 %v356
      %617 = vmatprep.subr.mxu0 0.0
      %618 = vmatpush1.msra.mxu0 %v357
      %619 = vmatprep.mubr.f32.mxu0 %v216
      %620 = vmatmul.mubr.f32.gmra.mrb[0].mxu0 %v215
      %v621 = vpop.f32.mrb[0].mxu0
      %v622 = vadd.f32 %v512, %v621
      %v623 = vpop.f32.mrb[0].mxu0
      %624 = vmatprep.mubr.f32.mxu0 %v225
      %625 = vmatmul.mubr.f32.gmra.mrb[0].mxu0 %v224
      %v626 = vpop.f32.mrb[0].mxu0
      %v627 = vadd.f32 %v517, %v626
      %v628 = vpop.f32.mrb[0].mxu0
      %629 = vmatprep.mubr.f32.mxu0 %v234
      %630 = vmatmul.mubr.f32.gmra.mrb[0].mxu0 %v233
      %v631 = vpop.f32.mrb[0].mxu0
      %v632 = vadd.f32 %v522, %v631
      %v633 = vpop.f32.mrb[0].mxu0
      %634 = vmatprep.mubr.f32.mxu0 %v243
      %635 = vmatmul.mubr.f32.gmra.mrb[0].mxu0 %v242
      %v636 = vpop.f32.mrb[0].mxu0
      %v637 = vadd.f32 %v527, %v636
      %v638 = vpop.f32.mrb[0].mxu0
      %639 = vmatprep.mubr.f32.mxu0 %v252
      %640 = vmatmul.mubr.f32.gmra.mrb[0].mxu0 %v251
      %v641 = vpop.f32.mrb[0].mxu0
      %v642 = vadd.f32 %v532, %v641
      %v643 = vpop.f32.mrb[0].mxu0
      %644 = vmatprep.mubr.f32.mxu0 %v261
      %645 = vmatmul.mubr.f32.gmra.mrb[0].mxu0 %v260
      %v646 = vpop.f32.mrb[0].mxu0
      %v647 = vadd.f32 %v537, %v646
      %v648 = vpop.f32.mrb[0].mxu0
      %649 = vmatprep.mubr.f32.mxu0 %v270
      %650 = vmatmul.mubr.f32.gmra.mrb[0].mxu0 %v269
      %v651 = vpop.f32.mrb[0].mxu0
      %v652 = vadd.f32 %v542, %v651
      %v653 = vpop.f32.mrb[0].mxu0
      %654 = vmatprep.mubr.f32.mxu0 %v279
      %655 = vmatmul.mubr.f32.gmra.mrb[0].mxu0 %v278
      %v656 = vpop.f32.mrb[0].mxu0
      %v657 = vadd.f32 %v547, %v656
      %v658 = vpop.f32.mrb[0].mxu0
      %659 = vmatprep.mubr.f32.mxu0 %v288
      %660 = vmatmul.mubr.f32.gmra.mrb[0].mxu0 %v287
      %v661 = vpop.f32.mrb[0].mxu0
      %v662 = vadd.f32 %v552, %v661
      %v663 = vpop.f32.mrb[0].mxu0
      %664 = vdwg.mxu0
      %665 = vmatprep.subr.mxu0 0.0
      %666 = vmatpush1.msra.mxu0 %v358
      %667 = vmatprep.subr.mxu0 0.0
      %668 = vmatpush1.msra.mxu0 %v359
      %669 = vmatprep.subr.mxu0 0.0
      %670 = vmatpush1.msra.mxu0 %v360
      %671 = vmatprep.subr.mxu0 0.0
      %672 = vmatpush1.msra.mxu0 %v361
      %673 = vmatprep.subr.mxu0 0.0
      %674 = vmatpush1.msra.mxu0 %v362
      %675 = vmatprep.subr.mxu0 0.0
      %676 = vmatpush1.msra.mxu0 %v363
      %677 = vmatprep.subr.mxu0 0.0
      %678 = vmatpush1.msra.mxu0 %v364
      %679 = vmatprep.subr.mxu0 0.0
      %680 = vmatpush1.msra.mxu0 %v365
      %681 = vmatprep.subr.mxu0 0.0
      %682 = vmatpush1.msra.mxu0 %v366
      %683 = vmatprep.subr.mxu0 0.0
      %684 = vmatpush1.msra.mxu0 %v367
      %685 = vmatprep.subr.mxu0 0.0
      %686 = vmatpush1.msra.mxu0 %v368
      %687 = vmatprep.subr.mxu0 0.0
      %688 = vmatpush1.msra.mxu0 %v369
      %689 = vmatprep.subr.mxu0 0.0
      %690 = vmatpush1.msra.mxu0 %v370
      %691 = vmatprep.subr.mxu0 0.0
      %692 = vmatpush1.msra.mxu0 %v371
      %693 = vmatprep.subr.mxu0 0.0
      %694 = vmatpush1.msra.mxu0 %v372
      %695 = vmatprep.subr.mxu0 0.0
      %696 = vmatpush1.msra.mxu0 %v373
      %697 = vmatprep.subr.mxu0 0.0
      %698 = vmatpush1.msra.mxu0 %v374
      %699 = vmatprep.subr.mxu0 0.0
      %700 = vmatpush1.msra.mxu0 %v375
      %701 = vmatprep.subr.mxu0 0.0
      %702 = vmatpush1.msra.mxu0 %v376
      %703 = vmatprep.subr.mxu0 0.0
      %704 = vmatpush1.msra.mxu0 %v377
      %705 = vmatprep.subr.mxu0 0.0
      %706 = vmatpush1.msra.mxu0 %v378
      %707 = vmatprep.subr.mxu0 0.0
      %708 = vmatpush1.msra.mxu0 %v379
      %709 = vmatprep.subr.mxu0 0.0
      %710 = vmatpush1.msra.mxu0 %v380
      %711 = vmatprep.subr.mxu0 0.0
      %712 = vmatpush1.msra.mxu0 %v381
      %713 = vmatprep.subr.mxu0 0.0
      %714 = vmatpush1.msra.mxu0 %v382
      %715 = vmatprep.subr.mxu0 0.0
      %716 = vmatpush1.msra.mxu0 %v383
      %717 = vmatprep.subr.mxu0 0.0
      %718 = vmatpush1.msra.mxu0 %v384
      %719 = vmatprep.subr.mxu0 0.0
      %720 = vmatpush1.msra.mxu0 %v385
      %721 = vmatprep.subr.mxu0 0.0
      %722 = vmatpush1.msra.mxu0 %v386
      %723 = vmatprep.subr.mxu0 0.0
      %724 = vmatpush1.msra.mxu0 %v387
      %725 = vmatprep.subr.mxu0 0.0
      %726 = vmatpush1.msra.mxu0 %v388
      %727 = vmatprep.subr.mxu0 0.0
      %728 = vmatpush1.msra.mxu0 %v389
      %729 = vmatprep.mubr.f32.mxu0 %v218
      %730 = vmatmul.mubr.f32.gmra.mrb[0].mxu0 %v217
      %v731 = vpop.f32.mrb[0].mxu0
      %v732 = vadd.f32 %v622, %v731
      %v733 = vpop.f32.mrb[0].mxu0
      %734 = vmatprep.mubr.f32.mxu0 %v227
      %735 = vmatmul.mubr.f32.gmra.mrb[0].mxu0 %v226
      %v736 = vpop.f32.mrb[0].mxu0
      %v737 = vadd.f32 %v627, %v736
      %v738 = vpop.f32.mrb[0].mxu0
      %739 = vmatprep.mubr.f32.mxu0 %v236
      %740 = vmatmul.mubr.f32.gmra.mrb[0].mxu0 %v235
      %v741 = vpop.f32.mrb[0].mxu0
      %v742 = vadd.f32 %v632, %v741
      %v743 = vpop.f32.mrb[0].mxu0
      %744 = vmatprep.mubr.f32.mxu0 %v245
      %745 = vmatmul.mubr.f32.gmra.mrb[0].mxu0 %v244
      %v746 = vpop.f32.mrb[0].mxu0
      %v747 = vadd.f32 %v637, %v746
      %v748 = vpop.f32.mrb[0].mxu0
      %749 = vmatprep.mubr.f32.mxu0 %v254
      %750 = vmatmul.mubr.f32.gmra.mrb[0].mxu0 %v253
      %v751 = vpop.f32.mrb[0].mxu0
      %v752 = vadd.f32 %v642, %v751
      %v753 = vpop.f32.mrb[0].mxu0
      %754 = vmatprep.mubr.f32.mxu0 %v263
      %755 = vmatmul.mubr.f32.gmra.mrb[0].mxu0 %v262
      %v756 = vpop.f32.mrb[0].mxu0
      %v757 = vadd.f32 %v647, %v756
      %v758 = vpop.f32.mrb[0].mxu0
      %759 = vmatprep.mubr.f32.mxu0 %v272
      %760 = vmatmul.mubr.f32.gmra.mrb[0].mxu0 %v271
      %v761 = vpop.f32.mrb[0].mxu0
      %v762 = vadd.f32 %v652, %v761
      %v763 = vpop.f32.mrb[0].mxu0
      %764 = vmatprep.mubr.f32.mxu0 %v281
      %765 = vmatmul.mubr.f32.gmra.mrb[0].mxu0 %v280
      %v766 = vpop.f32.mrb[0].mxu0
      %v767 = vadd.f32 %v657, %v766
      %v768 = vpop.f32.mrb[0].mxu0
      %769 = vmatprep.mubr.f32.mxu0 %v290
      %770 = vmatmul.mubr.f32.gmra.mrb[0].mxu0 %v289
      %v771 = vpop.f32.mrb[0].mxu0
      %v772 = vadd.f32 %v662, %v771
      %v773 = vpop.f32.mrb[0].mxu0
      %774 = vdwg.mxu0
      %775 = vmatprep.subr.mxu0 0.0
      %776 = vmatpush1.msra.mxu0 %v390
      %777 = vmatprep.subr.mxu0 0.0
      %778 = vmatpush1.msra.mxu0 %v391
      %779 = vmatprep.subr.mxu0 0.0
      %780 = vmatpush1.msra.mxu0 %v392
      %781 = vmatprep.subr.mxu0 0.0
      %782 = vmatpush1.msra.mxu0 %v393
      %783 = vmatprep.subr.mxu0 0.0
      %784 = vmatpush1.msra.mxu0 %v394
      %785 = vmatprep.subr.mxu0 0.0
      %786 = vmatpush1.msra.mxu0 %v395
      %787 = vmatprep.subr.mxu0 0.0
      %788 = vmatpush1.msra.mxu0 %v396
      %789 = vmatprep.subr.mxu0 0.0
      %790 = vmatpush1.msra.mxu0 %v397
      %791 = vmatprep.subr.mxu0 0.0
      %792 = vmatpush1.msra.mxu0 %v398
      %793 = vmatprep.subr.mxu0 0.0
      %794 = vmatpush1.msra.mxu0 %v399
      %795 = vmatprep.subr.mxu0 0.0
      %796 = vmatpush1.msra.mxu0 %v400
      %797 = vmatprep.subr.mxu0 0.0
      %798 = vmatpush1.msra.mxu0 %v401
      %799 = vmatprep.subr.mxu0 0.0
      %800 = vmatpush1.msra.mxu0 %v402
      %801 = vmatprep.subr.mxu0 0.0
      %802 = vmatpush1.msra.mxu0 %v403
      %803 = vmatprep.subr.mxu0 0.0
      %804 = vmatpush1.msra.mxu0 %v404
      %805 = vmatprep.subr.mxu0 0.0
      %806 = vmatpush1.msra.mxu0 %v405
      %807 = vmatprep.subr.mxu0 0.0
      %808 = vmatpush1.msra.mxu0 %v406
      %809 = vmatprep.subr.mxu0 0.0
      %810 = vmatpush1.msra.mxu0 %v407
      %811 = vmatprep.subr.mxu0 0.0
      %812 = vmatpush1.msra.mxu0 %v408
      %813 = vmatprep.subr.mxu0 0.0
      %814 = vmatpush1.msra.mxu0 %v409
      %815 = vmatprep.subr.mxu0 0.0
      %816 = vmatpush1.msra.mxu0 %v410
      %817 = vmatprep.subr.mxu0 0.0
      %818 = vmatpush1.msra.mxu0 %v411
      %819 = vmatprep.subr.mxu0 0.0
      %820 = vmatpush1.msra.mxu0 %v412
      %821 = vmatprep.subr.mxu0 0.0
      %822 = vmatpush1.msra.mxu0 %v413
      %823 = vmatprep.subr.mxu0 0.0
      %824 = vmatpush1.msra.mxu0 %v414
      %825 = vmatprep.subr.mxu0 0.0
      %826 = vmatpush1.msra.mxu0 %v415
      %827 = vmatprep.subr.mxu0 0.0
      %828 = vmatpush1.msra.mxu0 %v416
      %829 = vmatprep.subr.mxu0 0.0
      %830 = vmatpush1.msra.mxu0 %v417
      %831 = vmatprep.subr.mxu0 0.0
      %832 = vmatpush1.msra.mxu0 %v418
      %833 = vmatprep.subr.mxu0 0.0
      %834 = vmatpush1.msra.mxu0 %v419
      %835 = vmatprep.subr.mxu0 0.0
      %836 = vmatpush1.msra.mxu0 %v420
      %837 = vmatprep.subr.mxu0 0.0
      %838 = vmatpush1.msra.mxu0 %v421
      %839 = vmatprep.mubr.f32.mxu0 %v220
      %840 = vmatmul.mubr.f32.gmra.mrb[0].mxu0 %v219
      %v841 = vpop.f32.mrb[0].mxu0
      %v842 = vadd.f32 %v732, %v841
      %v843 = vpop.f32.mrb[0].mxu0
      %844 = vmatprep.mubr.f32.mxu0 %v229
      %845 = vmatmul.mubr.f32.gmra.mrb[0].mxu0 %v228
      %v846 = vpop.f32.mrb[0].mxu0
      %v847 = vadd.f32 %v737, %v846
      %v848 = vpop.f32.mrb[0].mxu0
      %849 = vmatprep.mubr.f32.mxu0 %v238
      %850 = vmatmul.mubr.f32.gmra.mrb[0].mxu0 %v237
      %v851 = vpop.f32.mrb[0].mxu0
      %v852 = vadd.f32 %v742, %v851
      %v853 = vpop.f32.mrb[0].mxu0
      %854 = vmatprep.mubr.f32.mxu0 %v247
      %855 = vmatmul.mubr.f32.gmra.mrb[0].mxu0 %v246
      %v856 = vpop.f32.mrb[0].mxu0
      %v857 = vadd.f32 %v747, %v856
      %v858 = vpop.f32.mrb[0].mxu0
      %859 = vmatprep.mubr.f32.mxu0 %v256
      %860 = vmatmul.mubr.f32.gmra.mrb[0].mxu0 %v255
      %v861 = vpop.f32.mrb[0].mxu0
      %v862 = vadd.f32 %v752, %v861
      %v863 = vpop.f32.mrb[0].mxu0
      %864 = vmatprep.mubr.f32.mxu0 %v265
      %865 = vmatmul.mubr.f32.gmra.mrb[0].mxu0 %v264
      %v866 = vpop.f32.mrb[0].mxu0
      %v867 = vadd.f32 %v757, %v866
      %v868 = vpop.f32.mrb[0].mxu0
      %869 = vmatprep.mubr.f32.mxu0 %v274
      %870 = vmatmul.mubr.f32.gmra.mrb[0].mxu0 %v273
      %v871 = vpop.f32.mrb[0].mxu0
      %v872 = vadd.f32 %v762, %v871
      %v873 = vpop.f32.mrb[0].mxu0
      %874 = vmatprep.mubr.f32.mxu0 %v283
      %875 = vmatmul.mubr.f32.gmra.mrb[0].mxu0 %v282
      %v876 = vpop.f32.mrb[0].mxu0
      %v877 = vadd.f32 %v767, %v876
      %v878 = vpop.f32.mrb[0].mxu0
      %879 = vmatprep.mubr.f32.mxu0 %v292
      %880 = vmatmul.mubr.f32.gmra.mrb[0].mxu0 %v291
      %v881 = vpop.f32.mrb[0].mxu0
      %v882 = vadd.f32 %v772, %v881
      %v883 = vpop.f32.mrb[0].mxu0
      %884 = vdwg.mxu0
      %885 = vmatprep.subr.mxu0 0.0
      %886 = vmatpush1.msra.mxu0 %v422
      %887 = vmatprep.subr.mxu0 0.0
      %888 = vmatpush1.msra.mxu0 %v423
      %889 = vmatprep.subr.mxu0 0.0
      %890 = vmatpush1.msra.mxu0 %v424
      %891 = vmatprep.subr.mxu0 0.0
      %892 = vmatpush1.msra.mxu0 %v425
      %893 = vmatprep.subr.mxu0 0.0
      %894 = vmatpush1.msra.mxu0 %v426
      %895 = vmatprep.subr.mxu0 0.0
      %896 = vmatpush1.msra.mxu0 %v427
      %897 = vmatprep.subr.mxu0 0.0
      %898 = vmatpush1.msra.mxu0 %v428
      %899 = vmatprep.subr.mxu0 0.0
      %900 = vmatpush1.msra.mxu0 %v429
      %901 = vmatprep.subr.mxu0 0.0
      %902 = vmatpush1.msra.mxu0 %v430
      %903 = vmatprep.subr.mxu0 0.0
      %904 = vmatpush1.msra.mxu0 %v431
      %905 = vmatprep.subr.mxu0 0.0
      %906 = vmatpush1.msra.mxu0 %v432
      %907 = vmatprep.subr.mxu0 0.0
      %908 = vmatpush1.msra.mxu0 %v433
      %909 = vmatprep.subr.mxu0 0.0
      %910 = vmatpush1.msra.mxu0 %v434
      %911 = vmatprep.subr.mxu0 0.0
      %912 = vmatpush1.msra.mxu0 %v435
      %913 = vmatprep.subr.mxu0 0.0
      %914 = vmatpush1.msra.mxu0 %v436
      %915 = vmatprep.subr.mxu0 0.0
      %916 = vmatpush1.msra.mxu0 %v437
      %917 = vmatprep.subr.mxu0 0.0
      %918 = vmatpush1.msra.mxu0 0.0
      %919 = vmatprep.subr.mxu0 0.0
      %920 = vmatpush1.msra.mxu0 0.0
      %921 = vmatprep.subr.mxu0 0.0
      %922 = vmatpush1.msra.mxu0 0.0
      %923 = vmatprep.subr.mxu0 0.0
      %924 = vmatpush1.msra.mxu0 0.0
      %925 = vmatprep.subr.mxu0 0.0
      %926 = vmatpush1.msra.mxu0 0.0
      %927 = vmatprep.subr.mxu0 0.0
      %928 = vmatpush1.msra.mxu0 0.0
      %929 = vmatprep.subr.mxu0 0.0
      %930 = vmatpush1.msra.mxu0 0.0
      %931 = vmatprep.subr.mxu0 0.0
      %932 = vmatpush1.msra.mxu0 0.0
      %933 = vmatprep.subr.mxu0 0.0
      %934 = vmatpush1.msra.mxu0 0.0
      %935 = vmatprep.subr.mxu0 0.0
      %936 = vmatpush1.msra.mxu0 0.0
      %937 = vmatprep.subr.mxu0 0.0
      %938 = vmatpush1.msra.mxu0 0.0
      %939 = vmatprep.subr.mxu0 0.0
      %940 = vmatpush1.msra.mxu0 0.0
      %941 = vmatprep.subr.mxu0 0.0
      %942 = vmatpush1.msra.mxu0 0.0
      %943 = vmatprep.subr.mxu0 0.0
      %944 = vmatpush1.msra.mxu0 0.0
      %945 = vmatprep.subr.mxu0 0.0
      %946 = vmatpush1.msra.mxu0 0.0
      %947 = vmatprep.subr.mxu0 0.0
      %948 = vmatpush1.msra.mxu0 0.0
      %949 = vmatprep.mubr.f32.mxu0 0.0
      %950 = vmatmul.mubr.f32.gmra.mrb[0].mxu0 %v221
      %v951 = vpop.f32.mrb[0].mxu0
      %v952 = vadd.f32 %v842, %v951
      %v953 = vpop.f32.mrb[0].mxu0
      %954 = vmatprep.mubr.f32.mxu0 0.0
      %955 = vmatmul.mubr.f32.gmra.mrb[0].mxu0 %v230
      %v956 = vpop.f32.mrb[0].mxu0
      %v957 = vadd.f32 %v847, %v956
      %v958 = vpop.f32.mrb[0].mxu0
      %959 = vmatprep.mubr.f32.mxu0 0.0
      %960 = vmatmul.mubr.f32.gmra.mrb[0].mxu0 %v239
      %v961 = vpop.f32.mrb[0].mxu0
      %v962 = vadd.f32 %v852, %v961
      %v963 = vpop.f32.mrb[0].mxu0
      %964 = vmatprep.mubr.f32.mxu0 0.0
      %965 = vmatmul.mubr.f32.gmra.mrb[0].mxu0 %v248
      %v966 = vpop.f32.mrb[0].mxu0
      %v967 = vadd.f32 %v857, %v966
      %v968 = vpop.f32.mrb[0].mxu0
      %969 = vmatprep.mubr.f32.mxu0 0.0
      %970 = vmatmul.mubr.f32.gmra.mrb[0].mxu0 %v257
      %v971 = vpop.f32.mrb[0].mxu0
      %v972 = vadd.f32 %v862, %v971
      %v973 = vpop.f32.mrb[0].mxu0
      %974 = vmatprep.mubr.f32.mxu0 0.0
      %975 = vmatmul.mubr.f32.gmra.mrb[0].mxu0 %v266
      %v976 = vpop.f32.mrb[0].mxu0
      %v977 = vadd.f32 %v867, %v976
      %v978 = vpop.f32.mrb[0].mxu0
      %979 = vmatprep.mubr.f32.mxu0 0.0
      %980 = vmatmul.mubr.f32.gmra.mrb[0].mxu0 %v275
      %v981 = vpop.f32.mrb[0].mxu0
      %v982 = vadd.f32 %v872, %v981
      %v983 = vpop.f32.mrb[0].mxu0
      %984 = vmatprep.mubr.f32.mxu0 0.0
      %985 = vmatmul.mubr.f32.gmra.mrb[0].mxu0 %v284
      %v986 = vpop.f32.mrb[0].mxu0
      %v987 = vadd.f32 %v877, %v986
      %v988 = vpop.f32.mrb[0].mxu0
      %989 = vmatprep.mubr.f32.mxu0 0.0
      %990 = vmatmul.mubr.f32.gmra.mrb[0].mxu0 %v293
      %v991 = vpop.f32.mrb[0].mxu0
      %v992 = vadd.f32 %v882, %v991
      %v993 = vpop.f32.mrb[0].mxu0
      %994 = vdwg.mxu0
      %v995 = vxor.u32 %v952, 2147483648
      %v996 = vxor.u32 %v957, 2147483648
      %v997 = vxor.u32 %v962, 2147483648
      %v998 = vxor.u32 %v967, 2147483648
      %v999 = vxor.u32 %v972, 2147483648
      %v1000 = vxor.u32 %v977, 2147483648
      %v1001 = vxor.u32 %v982, 2147483648
      %v1002 = vxor.u32 %v987, 2147483648
      %v1003 = vxor.u32 %v992, 2147483648
      %v1004 = vmul.f32 %v995, 1.442695
      %v1005 = vpow.pop %v1004
      %v1006 = vmul.f32 %v996, 1.442695
      %v1007 = vpow.pop %v1006
      %v1008 = vmul.f32 %v997, 1.442695
      %v1009 = vpow.pop %v1008
      %v1010 = vmul.f32 %v998, 1.442695
      %v1011 = vpow.pop %v1010
      %v1012 = vmul.f32 %v999, 1.442695
      %v1013 = vpow.pop %v1012
      %v1014 = vmul.f32 %v1000, 1.442695
      %v1015 = vpow.pop %v1014
      %v1016 = vmul.f32 %v1001, 1.442695
      %v1017 = vpow.pop %v1016
      %v1018 = vmul.f32 %v1002, 1.442695
      %v1019 = vpow.pop %v1018
      %v1020 = vmul.f32 %v1003, 1.442695
      %v1021 = vpow.pop %v1020
      %v1022 = vadd.f32 %v1005, 1.0
      %v1023 = vadd.f32 %v1007, 1.0
      %v1024 = vadd.f32 %v1009, 1.0
      %v1025 = vadd.f32 %v1011, 1.0
      %v1026 = vadd.f32 %v1013, 1.0
      %v1027 = vadd.f32 %v1015, 1.0
      %v1028 = vadd.f32 %v1017, 1.0
      %v1029 = vadd.f32 %v1019, 1.0
      %v1030 = vadd.f32 %v1021, 1.0
      %v1031 = vrcp.pop %v1022
      %v1032 = vmul.f32 1.0, %v1031
      %v1033 = vrcp.pop %v1023
      %v1034 = vmul.f32 1.0, %v1033
      %v1035 = vrcp.pop %v1024
      %v1036 = vmul.f32 1.0, %v1035
      %v1037 = vrcp.pop %v1025
      %v1038 = vmul.f32 1.0, %v1037
      %v1039 = vrcp.pop %v1026
      %v1040 = vmul.f32 1.0, %v1039
      %v1041 = vrcp.pop %v1027
      %v1042 = vmul.f32 1.0, %v1041
      %v1043 = vrcp.pop %v1028
      %v1044 = vmul.f32 1.0, %v1043
      %v1045 = vrcp.pop %v1029
      %v1046 = vmul.f32 1.0, %v1045
      %v1047 = vrcp.pop %v1030
      %v1048 = vmul.f32 1.0, %v1047
      %v1049 = vmul.f32 %v952, %v1032
      %v1050 = vmul.f32 %v957, %v1034
      %v1051 = vmul.f32 %v962, %v1036
      %v1052 = vmul.f32 %v967, %v1038
      %v1053 = vmul.f32 %v972, %v1040
      %v1054 = vmul.f32 %v977, %v1042
      %v1055 = vmul.f32 %v982, %v1044
      %v1056 = vmul.f32 %v987, %v1046
      %v1057 = vmul.f32 %v992, %v1048
      %1058 = vst [vmem:[%s211] sm:$0xff] %v1049
      %1059 = vst [vmem:[%s211 + $0x8] sm:$0xff] %v1050
      %1060 = vst [vmem:[%s211 + $0x10] sm:$0xff] %v1051
      %1061 = vst [vmem:[%s211 + $0x18] sm:$0xff] %v1052
      %1062 = vst [vmem:[%s211 + $0x20] sm:$0xff] %v1053
      %1063 = vst [vmem:[%s211 + $0x28] sm:$0xff] %v1054
      %1064 = vst [vmem:[%s211 + $0x30] sm:$0xff] %v1055
      %1065 = vst [vmem:[%s211 + $0x38] sm:$0xff] %v1056
      %1066 = vst [vmem:[%s211 + $0x40] sm:$0xff] %v1057
      %s1067 = smul.u32 9, %s19
      %p1068 = scmp.lt.s32.totalorder %s18, 1
      %s1069 = scalar_select %p1068, %s18, 1
      %p1070 = scmp.lt.s32.totalorder %s1067, 8
      %s1071 = scalar_select %p1070, %s1067, 8
      %s1072 = smul.addr %s1069, 9
      %s1073 = sadd.s32 %s1071, %s1072
      %s1074 = smul.addr %s1073, 8
      %s1075 = scalar_lea.vmem %s3, %s1074
      // Predicated region
      $region33: #{bev_controlnet_embedding_forward.10} parent=31 // pred_check
        %p1076 = pneg %p116
      $region34: #{bev_controlnet_embedding_forward.10} parent=31 // pred_check_branch
        %1078 = sbr.rel (%p1076) target = $region36
      $region35: #{bev_controlnet_embedding_forward.10} parent=31 // pred_region
        %s1079 = smul.u32 9, %s19
      $region36: #{bev_controlnet_embedding_forward.10} parent=31 // pred_fallthru
        _
    $region32: #{bev_controlnet_embedding_forward.10} parent=5 // pred_fallthru
      _
    %p1080 = scmp.le.s32.totalorder 2, %s9
    // Predicated region
    $region37: #{bev_controlnet_embedding_forward.10} parent=5 // pred_check
      %p1081 = pneg %p1080
    $region38: #{bev_controlnet_embedding_forward.10} parent=5 // pred_check_branch
      %1083 = sbr.rel (%p1081) target = $region40
    $region39: #{bev_controlnet_embedding_forward.10} parent=5 // pred_region
      %s1084 = ssub.s32 %s9, 2
      // Predicated region
      $region41: #{bev_controlnet_embedding_forward.10} parent=39 // pred_check
        %p1085 = pneg %p122
      $region42: #{bev_controlnet_embedding_forward.10} parent=39 // pred_check_branch
        %1087 = sbr.rel (%p1085) target = $region44
      $region43: #{bev_controlnet_embedding_forward.10} parent=39 // pred_region
        %s1088 = smul.u32 9, %s21
        %p1089 = scmp.lt.s32.totalorder %s20, 1
        %s1090 = scalar_select %p1089, %s20, 1
        %p1091 = scmp.lt.s32.totalorder %s1088, 8
        %s1092 = scalar_select %p1091, %s1088, 8
        %s1093 = smul.addr %s1090, 9
        %s1094 = sadd.s32 %s1092, %s1093
        %s1095 = smul.addr %s1094, 8
        %s1096 = scalar_lea.vmem %s3, %s1095
      $region44: #{bev_controlnet_embedding_forward.10} parent=39 // pred_fallthru
        _
    $region40: #{bev_controlnet_embedding_forward.10} parent=5 // pred_fallthru
      _
  $region6: #{bev_controlnet_embedding_forward.10} parent=0 // loop_footer
    %s13 = sadd.s32 1, %s9
  $region7: #{bev_controlnet_embedding_forward.10} parent=0 // loop_footer_branch
    %8 = sbr.rel target = $region3
  $region8: #{bev_controlnet_embedding_forward.10} parent=0 // loop_exit
    _

// kernel: bev_controlnet_embedding_forward.12
$region0: #{bev_controlnet_embedding_forward.12}
  #allocation0 [shape = 'u32[]', space=smem, size = 0x4, offset = 0x4, fixed_abs, tag = 'smem constant byte address 0x4 - core index']
  #allocation1 [shape = 'u32[144,128]{1,0:T(1,128)}', space=vmem, size = 0x12000, scoped, tag = 'internal scratch']
  %s0 = inlined_call_operand.vmem [shape: f32[2,24,1152], index: 0, kind: input, shape index: {}]
  %s1 = inlined_call_operand.vmem [shape: f32[1152,128], index: 1, kind: input, shape index: {}]
  %s2 = inlined_call_operand.vmem [shape: f32[1,128], index: 2, kind: input, shape index: {}]
  %s3 = inlined_call_operand.vmem [shape: f32[2,24,128], index: 3, kind: output, shape index: {}]
  %s4 = sld [smem:[#allocation0]]
  $region45: #{bev_controlnet_embedding_forward.12} parent=0
    _
  %s6 = ssub.s32 1, %s4
  %s7 = scalar_select 0, %s6, %s4
  loop: start=0, step=1, limit=4
  $region2: #{bev_controlnet_embedding_forward.12} parent=0 // loop_pre_header
    _
  $region3: #{bev_controlnet_embedding_forward.12} parent=0 // loop_header
    %s9 = sphi 0, %s13
    %p10 = scmp.ge.s32.totalorder %s9, 4
    %s16 = sphi 0, %s28
    %s17 = sphi 0, %s24
    %s18 = sphi 0, %s16
    %s19 = sphi 0, %s17
    %s20 = sphi 0, %s18
    %s21 = sphi 0, %s19
    %s33 = sphi 0, %s35
    %s36 = sphi 0, %s33
    %s37 = sphi 0, %s36
    %s53 = sphi 0, %s37
    %s57 = sphi 0, %s57
    %s59 = sphi 0, %s57
    %s60 = sphi 0, %s59
    %s74 = sphi 0, %s60
    %s78 = sphi 0, %s78
    %s80 = sphi 0, %s78
    %s81 = sphi 0, %s80
    %s95 = sphi 0, %s81
    %s103 = sphi 0, %s105
    %s106 = sphi 0, %s103
    %s107 = sphi 0, %s106
    %s123 = sphi 0, %s107
  $region4: #{bev_controlnet_embedding_forward.12} parent=0 // loop_header_branch
    %12 = sbr.rel (%p10) target = $region8
  $region5: #{bev_controlnet_embedding_forward.12} parent=0 // loop_body
    %s14 = ssub.s32 %s9, 1
    %s15 = ssub.s32 %s9, 2
    %s22 = sadd.s32 1, %s17
    %p23 = scmp.ge.s32.totalorder %s22, 1
    %s24 = scalar_select %p23, 0, %s22
    %s25 = sadd.s32 1, %s16
    %s26 = scalar_select %p23, %s25, %s16
    %p27 = scmp.ge.s32.totalorder %s26, 2
    %s28 = scalar_select %p27, 0, %s26
    %s29 = ssub.s32 %s16, %s28
    %s30 = ssub.s32 %s17, %s24
    %s31 = sor.u32 %s29, %s30
    %p32 = scmp.eq.s32.totalorder %s31, 0
    %s34 = sadd.s32 %s33, 1
    %s35 = scalar_select %p32, %s33, %s34
    %p38 = pneg %p32
    %p39 = scmp.eq.s32.totalorder %s9, 1
    %p40 = por %p38, %p39
    %p41 = scmp.ne.s32.totalorder %s33, %s36
    %p42 = scmp.eq.s32.totalorder %s9, 0
    %p43 = por %p41, %p42
    %p44 = scmp.ne.s32.totalorder %s33, %s36
    %p45 = scmp.eq.s32.totalorder %s14, 1
    %p46 = por %p44, %p45
    %p47 = scmp.ne.s32.totalorder %s36, %s37
    %p48 = scmp.eq.s32.totalorder %s14, 0
    %p49 = por %p47, %p48
    %p50 = scmp.ne.s32.totalorder %s36, %s37
    %p51 = scmp.eq.s32.totalorder %s15, 1
    %p52 = por %p50, %p51
    %p54 = scmp.ne.s32.totalorder %s37, %s53
    %p55 = scmp.eq.s32.totalorder %s15, 0
    %p56 = por %p54, %p55
    %s58 = sadd.s32 %s57, 1
    %p61 = scmp.eq.s32.totalorder %s9, 1
    %p62 = scmp.ne.s32.totalorder %s57, %s59
    %p63 = scmp.eq.s32.totalorder %s9, 0
    %p64 = por %p62, %p63
    %p65 = scmp.ne.s32.totalorder %s57, %s59
    %p66 = scmp.eq.s32.totalorder %s14, 1
    %p67 = por %p65, %p66
    %p68 = scmp.ne.s32.totalorder %s59, %s60
    %p69 = scmp.eq.s32.totalorder %s14, 0
    %p70 = por %p68, %p69
    %p71 = scmp.ne.s32.totalorder %s59, %s60
    %p72 = scmp.eq.s32.totalorder %s15, 1
    %p73 = por %p71, %p72
    %p75 = scmp.ne.s32.totalorder %s60, %s74
    %p76 = scmp.eq.s32.totalorder %s15, 0
    %p77 = por %p75, %p76
    %s79 = sadd.s32 %s78, 1
    %p82 = scmp.eq.s32.totalorder %s9, 1
    %p83 = scmp.ne.s32.totalorder %s78, %s80
    %p84 = scmp.eq.s32.totalorder %s9, 0
    %p85 = por %p83, %p84
    %p86 = scmp.ne.s32.totalorder %s78, %s80
    %p87 = scmp.eq.s32.totalorder %s14, 1
    %p88 = por %p86, %p87
    %p89 = scmp.ne.s32.totalorder %s80, %s81
    %p90 = scmp.eq.s32.totalorder %s14, 0
    %p91 = por %p89, %p90
    %p92 = scmp.ne.s32.totalorder %s80, %s81
    %p93 = scmp.eq.s32.totalorder %s15, 1
    %p94 = por %p92, %p93
    %p96 = scmp.ne.s32.totalorder %s81, %s95
    %p97 = scmp.eq.s32.totalorder %s15, 0
    %p98 = por %p96, %p97
    %s99 = ssub.s32 %s16, %s28
    %s100 = ssub.s32 %s17, %s24
    %s101 = sor.u32 %s99, %s100
    %p102 = scmp.eq.s32.totalorder %s101, 0
    %s104 = sadd.s32 %s103, 1
    %s105 = scalar_select %p102, %s103, %s104
    %p108 = pneg %p102
    %p109 = scmp.eq.s32.totalorder %s9, 1
    %p110 = por %p108, %p109
    %p111 = scmp.ne.s32.totalorder %s103, %s106
    %p112 = scmp.eq.s32.totalorder %s9, 0
    %p113 = por %p111, %p112
    %p114 = scmp.ne.s32.totalorder %s103, %s106
    %p115 = scmp.eq.s32.totalorder %s14, 1
    %p116 = por %p114, %p115
    %p117 = scmp.ne.s32.totalorder %s106, %s107
    %p118 = scmp.eq.s32.totalorder %s14, 0
    %p119 = por %p117, %p118
    %p120 = scmp.ne.s32.totalorder %s106, %s107
    %p121 = scmp.eq.s32.totalorder %s15, 1
    %p122 = por %p120, %p121
    %p124 = scmp.ne.s32.totalorder %s107, %s123
    %p125 = scmp.eq.s32.totalorder %s15, 0
    %p126 = por %p124, %p125
    %p127 = scmp.le.s32.totalorder 1, %s9
    %p128 = scmp.lt.s32.totalorder %s9, 3
    %p129 = pnand %p127, %p128
    %p130 = pneg %p129
    // Predicated region
    $region9: #{bev_controlnet_embedding_forward.12} parent=5 // pred_check
      _
    $region10: #{bev_controlnet_embedding_forward.12} parent=5 // pred_check_branch
      %132 = sbr.rel (%p129) target = $region12
    $region11: #{bev_controlnet_embedding_forward.12} parent=5 // pred_region
      %s133 = ssub.s32 %s9, 1
      // Predicated region
      $region13: #{bev_controlnet_embedding_forward.12} parent=11 // pred_check
        %p134 = pneg %p70
      $region14: #{bev_controlnet_embedding_forward.12} parent=11 // pred_check_branch
        %136 = sbr.rel (%p134) target = $region16
      $region15: #{bev_controlnet_embedding_forward.12} parent=11 // pred_region
        _
      $region16: #{bev_controlnet_embedding_forward.12} parent=11 // pred_fallthru
        _
      // Predicated region
      $region17: #{bev_controlnet_embedding_forward.12} parent=11 // pred_check
        %p137 = pneg %p91
      $region18: #{bev_controlnet_embedding_forward.12} parent=11 // pred_check_branch
        %139 = sbr.rel (%p137) target = $region20
      $region19: #{bev_controlnet_embedding_forward.12} parent=11 // pred_region
        _
      $region20: #{bev_controlnet_embedding_forward.12} parent=11 // pred_fallthru
        _
    $region12: #{bev_controlnet_embedding_forward.12} parent=5 // pred_fallthru
      _
    %p140 = scmp.lt.s32.totalorder %s9, 2
    // Predicated region
    $region21: #{bev_controlnet_embedding_forward.12} parent=5 // pred_check
      %p141 = pneg %p140
    $region22: #{bev_controlnet_embedding_forward.12} parent=5 // pred_check_branch
      %143 = sbr.rel (%p141) target = $region24
    $region23: #{bev_controlnet_embedding_forward.12} parent=5 // pred_region
      // Predicated region
      $region25: #{bev_controlnet_embedding_forward.12} parent=23 // pred_check
        %p144 = pneg %p43
      $region26: #{bev_controlnet_embedding_forward.12} parent=23 // pred_check_branch
        %146 = sbr.rel (%p144) target = $region28
      $region27: #{bev_controlnet_embedding_forward.12} parent=23 // pred_region
        %s147 = smul.u32 3, %s17
        %p148 = scmp.lt.s32.totalorder %s16, 1
        %s149 = scalar_select %p148, %s16, 1
        %p150 = scmp.lt.s32.totalorder %s147, 2
        %s151 = scalar_select %p150, %s147, 2
        %s152 = smul.addr %s151, 9
        %s153 = smul.addr %s149, 27
        %s154 = sadd.s32 %s152, %s153
        %s155 = smul.addr %s154, 8
        %s156 = scalar_lea.vmem %s0, %s155
        %s157 = smul.u32 3, %s17
      $region28: #{bev_controlnet_embedding_forward.12} parent=23 // pred_fallthru
        _
    $region24: #{bev_controlnet_embedding_forward.12} parent=5 // pred_fallthru
      _
    %p158 = scmp.le.s32.totalorder 1, %s9
    %p159 = scmp.lt.s32.totalorder %s9, 3
    %p160 = pnand %p158, %p159
    %p161 = pneg %p160
    // Predicated region
    $region29: #{bev_controlnet_embedding_forward.12} parent=5 // pred_check
      _
    $region30: #{bev_controlnet_embedding_forward.12} parent=5 // pred_check_branch
      %163 = sbr.rel (%p160) target = $region32
    $region31: #{bev_controlnet_embedding_forward.12} parent=5 // pred_region
      %s164 = ssub.s32 %s9, 1
      %s165 = smul.u32 3, %s19
      %p166 = scmp.lt.s32.totalorder %s18, 1
      %s167 = scalar_select %p166, %s18, 1
      %p168 = scmp.lt.s32.totalorder %s165, 2
      %s169 = scalar_select %p168, %s165, 2
      %s170 = smul.addr %s169, 9
      %s171 = smul.addr %s167, 27
      %s172 = sadd.s32 %s170, %s171
      %s173 = smul.addr %s172, 8
      %s174 = scalar_lea.vmem %s0, %s173
      %p175 = pneg %p49
      %p176 = pneg %p46
      %p177 = pneg %p70
      %p178 = pneg %p67
      %p179 = pneg %p91
      %p180 = pneg %p88
      %p181 = pneg %p119
      %p182 = pneg %p116
      %s183 = smul.u32 3, %s19
      %p184 = scmp.lt.s32.totalorder %s18, 1
      %s185 = scalar_select %p184, %s18, 1
      %p186 = scmp.lt.s32.totalorder %s183, 2
      %s187 = scalar_select %p186, %s183, 2
      %s188 = smul.addr %s185, 3
      %s189 = sadd.s32 %s187, %s188
      %s190 = smul.addr %s189, 8
      %s191 = scalar_lea.vmem %s3, %s190
      %s192 = smul.u32 3, %s19
      %p193 = scmp.lt.s32.totalorder %s18, 1
      %s194 = scalar_select %p193, %s18, 1
      %p195 = scmp.lt.s32.totalorder %s192, 2
      %s196 = scalar_select %p195, %s192, 2
      %s197 = smul.addr %s196, 9
      %s198 = smul.addr %s194, 27
      %s199 = sadd.s32 %s197, %s198
      %s200 = smul.addr %s199, 8
      %s201 = scalar_lea.vmem %s0, %s200
      %s202 = smul.u32 3, %s19
      %s203 = smul.u32 3, %s19
      %p204 = scmp.lt.s32.totalorder %s18, 1
      %s205 = scalar_select %p204, %s18, 1
      %p206 = scmp.lt.s32.totalorder %s203, 2
      %s207 = scalar_select %p206, %s203, 2
      %s208 = smul.addr %s205, 3
      %s209 = sadd.s32 %s207, %s208
      %s210 = smul.addr %s209, 8
      %s211 = scalar_lea.vmem %s3, %s210
      %s212 = smul.u32 3, %s19
      %v213 = vld [vmem:[%s201] sm:$0xff]
      %v214 = vld [vmem:[%s201 + $0x8] sm:$0xff]
      %v215 = vld [vmem:[%s201 + $0x10] sm:$0xff]
      %v216 = vld [vmem:[%s201 + $0x18] sm:$0xff]
      %v217 = vld [vmem:[%s201 + $0x20] sm:$0xff]
      %v218 = vld [vmem:[%s201 + $0x28] sm:$0xff]
      %v219 = vld [vmem:[%s201 + $0x30] sm:$0xff]
      %v220 = vld [vmem:[%s201 + $0x38] sm:$0xff]
      %v221 = vld [vmem:[%s201 + $0x40] sm:$0xff]
      %v222 = vld [vmem:[%s201 + $0x48] sm:$0xff]
      %v223 = vld [vmem:[%s201 + $0x50] sm:$0xff]
      %v224 = vld [vmem:[%s201 + $0x58] sm:$0xff]
      %v225 = vld [vmem:[%s201 + $0x60] sm:$0xff]
      %v226 = vld [vmem:[%s201 + $0x68] sm:$0xff]
      %v227 = vld [vmem:[%s201 + $0x70] sm:$0xff]
      %v228 = vld [vmem:[%s201 + $0x78] sm:$0xff]
      %v229 = vld [vmem:[%s201 + $0x80] sm:$0xff]
      %v230 = vld [vmem:[%s201 + $0x88] sm:$0xff]
      %v231 = vld [vmem:[%s201 + $0x90] sm:$0xff]
      %v232 = vld [vmem:[%s201 + $0x98] sm:$0xff]
      %v233 = vld [vmem:[%s201 + $0xa0] sm:$0xff]
      %v234 = vld [vmem:[%s201 + $0xa8] sm:$0xff]
      %v235 = vld [vmem:[%s201 + $0xb0] sm:$0xff]
      %v236 = vld [vmem:[%s201 + $0xb8] sm:$0xff]
      %v237 = vld [vmem:[%s201 + $0xc0] sm:$0xff]
      %v238 = vld [vmem:[%s201 + $0xc8] sm:$0xff]
      %v239 = vld [vmem:[%s201 + $0xd0] sm:$0xff]
      %v240 = vld [vmem:[%s1] sm:$0xff]
      %v241 = vld [vmem:[%s1 + $0x8] sm:$0xff]
      %v242 = vld [vmem:[%s1 + $0x10] sm:$0xff]
      %v243 = vld [vmem:[%s1 + $0x18] sm:$0xff]
      %v244 = vld [vmem:[%s1 + $0x20] sm:$0xff]
      %v245 = vld [vmem:[%s1 + $0x28] sm:$0xff]
      %v246 = vld [vmem:[%s1 + $0x30] sm:$0xff]
      %v247 = vld [vmem:[%s1 + $0x38] sm:$0xff]
      %v248 = vld [vmem:[%s1 + $0x40] sm:$0xff]
      %v249 = vld [vmem:[%s1 + $0x48] sm:$0xff]
      %v250 = vld [vmem:[%s1 + $0x50] sm:$0xff]
      %v251 = vld [vmem:[%s1 + $0x58] sm:$0xff]
      %v252 = vld [vmem:[%s1 + $0x60] sm:$0xff]
      %v253 = vld [vmem:[%s1 + $0x68] sm:$0xff]
      %v254 = vld [vmem:[%s1 + $0x70] sm:$0xff]
      %v255 = vld [vmem:[%s1 + $0x78] sm:$0xff]
      %v256 = vld [vmem:[%s1 + $0x80] sm:$0xff]
      %v257 = vld [vmem:[%s1 + $0x88] sm:$0xff]
      %v258 = vld [vmem:[%s1 + $0x90] sm:$0xff]
      %v259 = vld [vmem:[%s1 + $0x98] sm:$0xff]
      %v260 = vld [vmem:[%s1 + $0xa0] sm:$0xff]
      %v261 = vld [vmem:[%s1 + $0xa8] sm:$0xff]
      %v262 = vld [vmem:[%s1 + $0xb0] sm:$0xff]
      %v263 = vld [vmem:[%s1 + $0xb8] sm:$0xff]
      %v264 = vld [vmem:[%s1 + $0xc0] sm:$0xff]
      %v265 = vld [vmem:[%s1 + $0xc8] sm:$0xff]
      %v266 = vld [vmem:[%s1 + $0xd0] sm:$0xff]
      %v267 = vld [vmem:[%s1 + $0xd8] sm:$0xff]
      %v268 = vld [vmem:[%s1 + $0xe0] sm:$0xff]
      %v269 = vld [vmem:[%s1 + $0xe8] sm:$0xff]
      %v270 = vld [vmem:[%s1 + $0xf0] sm:$0xff]
      %v271 = vld [vmem:[%s1 + $0xf8] sm:$0xff]
      %v272 = vld [vmem:[%s1 + $0x100] sm:$0xff]
      %v273 = vld [vmem:[%s1 + $0x108] sm:$0xff]
      %v274 = vld [vmem:[%s1 + $0x110] sm:$0xff]
      %v275 = vld [vmem:[%s1 + $0x118] sm:$0xff]
      %v276 = vld [vmem:[%s1 + $0x120] sm:$0xff]
      %v277 = vld [vmem:[%s1 + $0x128] sm:$0xff]
      %v278 = vld [vmem:[%s1 + $0x130] sm:$0xff]
      %v279 = vld [vmem:[%s1 + $0x138] sm:$0xff]
      %v280 = vld [vmem:[%s1 + $0x140] sm:$0xff]
      %v281 = vld [vmem:[%s1 + $0x148] sm:$0xff]
      %v282 = vld [vmem:[%s1 + $0x150] sm:$0xff]
      %v283 = vld [vmem:[%s1 + $0x158] sm:$0xff]
      %v284 = vld [vmem:[%s1 + $0x160] sm:$0xff]
      %v285 = vld [vmem:[%s1 + $0x168] sm:$0xff]
      %v286 = vld [vmem:[%s1 + $0x170] sm:$0xff]
      %v287 = vld [vmem:[%s1 + $0x178] sm:$0xff]
      %v288 = vld [vmem:[%s1 + $0x180] sm:$0xff]
      %v289 = vld [vmem:[%s1 + $0x188] sm:$0xff]
      %v290 = vld [vmem:[%s1 + $0x190] sm:$0xff]
      %v291 = vld [vmem:[%s1 + $0x198] sm:$0xff]
      %v292 = vld [vmem:[%s1 + $0x1a0] sm:$0xff]
      %v293 = vld [vmem:[%s1 + $0x1a8] sm:$0xff]
      %v294 = vld [vmem:[%s1 + $0x1b0] sm:$0xff]
      %v295 = vld [vmem:[%s1 + $0x1b8] sm:$0xff]
      %v296 = vld [vmem:[%s1 + $0x1c0] sm:$0xff]
      %v297 = vld [vmem:[%s1 + $0x1c8] sm:$0xff]
      %v298 = vld [vmem:[%s1 + $0x1d0] sm:$0xff]
      %v299 = vld [vmem:[%s1 + $0x1d8] sm:$0xff]
      %v300 = vld [vmem:[%s1 + $0x1e0] sm:$0xff]
      %v301 = vld [vmem:[%s1 + $0x1e8] sm:$0xff]
      %v302 = vld [vmem:[%s1 + $0x1f0] sm:$0xff]
      %v303 = vld [vmem:[%s1 + $0x1f8] sm:$0xff]
      %v304 = vld [vmem:[%s1 + $0x200] sm:$0xff]
      %v305 = vld [vmem:[%s1 + $0x208] sm:$0xff]
      %v306 = vld [vmem:[%s1 + $0x210] sm:$0xff]
      %v307 = vld [vmem:[%s1 + $0x218] sm:$0xff]
      %v308 = vld [vmem:[%s1 + $0x220] sm:$0xff]
      %v309 = vld [vmem:[%s1 + $0x228] sm:$0xff]
      %v310 = vld [vmem:[%s1 + $0x230] sm:$0xff]
      %v311 = vld [vmem:[%s1 + $0x238] sm:$0xff]
      %v312 = vld [vmem:[%s1 + $0x240] sm:$0xff]
      %v313 = vld [vmem:[%s1 + $0x248] sm:$0xff]
      %v314 = vld [vmem:[%s1 + $0x250] sm:$0xff]
      %v315 = vld [vmem:[%s1 + $0x258] sm:$0xff]
      %v316 = vld [vmem:[%s1 + $0x260] sm:$0xff]
      %v317 = vld [vmem:[%s1 + $0x268] sm:$0xff]
      %v318 = vld [vmem:[%s1 + $0x270] sm:$0xff]
      %v319 = vld [vmem:[%s1 + $0x278] sm:$0xff]
      %v320 = vld [vmem:[%s1 + $0x280] sm:$0xff]
      %v321 = vld [vmem:[%s1 + $0x288] sm:$0xff]
      %v322 = vld [vmem:[%s1 + $0x290] sm:$0xff]
      %v323 = vld [vmem:[%s1 + $0x298] sm:$0xff]
      %v324 = vld [vmem:[%s1 + $0x2a0] sm:$0xff]
      %v325 = vld [vmem:[%s1 + $0x2a8] sm:$0xff]
      %v326 = vld [vmem:[%s1 + $0x2b0] sm:$0xff]
      %v327 = vld [vmem:[%s1 + $0x2b8] sm:$0xff]
      %v328 = vld [vmem:[%s1 + $0x2c0] sm:$0xff]
      %v329 = vld [vmem:[%s1 + $0x2c8] sm:$0xff]
      %v330 = vld [vmem:[%s1 + $0x2d0] sm:$0xff]
      %v331 = vld [vmem:[%s1 + $0x2d8] sm:$0xff]
      %v332 = vld [vmem:[%s1 + $0x2e0] sm:$0xff]
      %v333 = vld [vmem:[%s1 + $0x2e8] sm:$0xff]
      %v334 = vld [vmem:[%s1 + $0x2f0] sm:$0xff]
      %v335 = vld [vmem:[%s1 + $0x2f8] sm:$0xff]
      %v336 = vld [vmem:[%s1 + $0x300] sm:$0xff]
      %v337 = vld [vmem:[%s1 + $0x308] sm:$0xff]
      %v338 = vld [vmem:[%s1 + $0x310] sm:$0xff]
      %v339 = vld [vmem:[%s1 + $0x318] sm:$0xff]
      %v340 = vld [vmem:[%s1 + $0x320] sm:$0xff]
      %v341 = vld [vmem:[%s1 + $0x328] sm:$0xff]
      %v342 = vld [vmem:[%s1 + $0x330] sm:$0xff]
      %v343 = vld [vmem:[%s1 + $0x338] sm:$0xff]
      %v344 = vld [vmem:[%s1 + $0x340] sm:$0xff]
      %v345 = vld [vmem:[%s1 + $0x348] sm:$0xff]
      %v346 = vld [vmem:[%s1 + $0x350] sm:$0xff]
      %v347 = vld [vmem:[%s1 + $0x358] sm:$0xff]
      %v348 = vld [vmem:[%s1 + $0x360] sm:$0xff]
      %v349 = vld [vmem:[%s1 + $0x368] sm:$0xff]
      %v350 = vld [vmem:[%s1 + $0x370] sm:$0xff]
      %v351 = vld [vmem:[%s1 + $0x378] sm:$0xff]
      %v352 = vld [vmem:[%s1 + $0x380] sm:$0xff]
      %v353 = vld [vmem:[%s1 + $0x388] sm:$0xff]
      %v354 = vld [vmem:[%s1 + $0x390] sm:$0xff]
      %v355 = vld [vmem:[%s1 + $0x398] sm:$0xff]
      %v356 = vld [vmem:[%s1 + $0x3a0] sm:$0xff]
      %v357 = vld [vmem:[%s1 + $0x3a8] sm:$0xff]
      %v358 = vld [vmem:[%s1 + $0x3b0] sm:$0xff]
      %v359 = vld [vmem:[%s1 + $0x3b8] sm:$0xff]
      %v360 = vld [vmem:[%s1 + $0x3c0] sm:$0xff]
      %v361 = vld [vmem:[%s1 + $0x3c8] sm:$0xff]
      %v362 = vld [vmem:[%s1 + $0x3d0] sm:$0xff]
      %v363 = vld [vmem:[%s1 + $0x3d8] sm:$0xff]
      %v364 = vld [vmem:[%s1 + $0x3e0] sm:$0xff]
      %v365 = vld [vmem:[%s1 + $0x3e8] sm:$0xff]
      %v366 = vld [vmem:[%s1 + $0x3f0] sm:$0xff]
      %v367 = vld [vmem:[%s1 + $0x3f8] sm:$0xff]
      %v368 = vld [vmem:[%s1 + $0x400] sm:$0xff]
      %v369 = vld [vmem:[%s1 + $0x408] sm:$0xff]
      %v370 = vld [vmem:[%s1 + $0x410] sm:$0xff]
      %v371 = vld [vmem:[%s1 + $0x418] sm:$0xff]
      %v372 = vld [vmem:[%s1 + $0x420] sm:$0xff]
      %v373 = vld [vmem:[%s1 + $0x428] sm:$0xff]
      %v374 = vld [vmem:[%s1 + $0x430] sm:$0xff]
      %v375 = vld [vmem:[%s1 + $0x438] sm:$0xff]
      %v376 = vld [vmem:[%s1 + $0x440] sm:$0xff]
      %v377 = vld [vmem:[%s1 + $0x448] sm:$0xff]
      %v378 = vld [vmem:[%s1 + $0x450] sm:$0xff]
      %v379 = vld [vmem:[%s1 + $0x458] sm:$0xff]
      %v380 = vld [vmem:[%s1 + $0x460] sm:$0xff]
      %v381 = vld [vmem:[%s1 + $0x468] sm:$0xff]
      %v382 = vld [vmem:[%s1 + $0x470] sm:$0xff]
      %v383 = vld [vmem:[%s1 + $0x478] sm:$0xff]
      %v384 = vld [vmem:[%s2] sm:$0x1]
      %v386 = vlaneseq
      %v387 = vshrl.u32 %v386, 7
      %v388 = vsub.s32 0, %v387
      %v389 = vrot.slane %v384, %v388
      %391 = vmatprep.subr.mxu0 0.0
      %392 = vmatpush1.msra.mxu0 %v240
      %393 = vmatprep.subr.mxu0 0.0
      %394 = vmatpush1.msra.mxu0 %v241
      %395 = vmatprep.subr.mxu0 0.0
      %396 = vmatpush1.msra.mxu0 %v242
      %397 = vmatprep.subr.mxu0 0.0
      %398 = vmatpush1.msra.mxu0 %v243
      %399 = vmatprep.subr.mxu0 0.0
      %400 = vmatpush1.msra.mxu0 %v244
      %401 = vmatprep.subr.mxu0 0.0
      %402 = vmatpush1.msra.mxu0 %v245
      %403 = vmatprep.subr.mxu0 0.0
      %404 = vmatpush1.msra.mxu0 %v246
      %405 = vmatprep.subr.mxu0 0.0
      %406 = vmatpush1.msra.mxu0 %v247
      %407 = vmatprep.subr.mxu0 0.0
      %408 = vmatpush1.msra.mxu0 %v248
      %409 = vmatprep.subr.mxu0 0.0
      %410 = vmatpush1.msra.mxu0 %v249
      %411 = vmatprep.subr.mxu0 0.0
      %412 = vmatpush1.msra.mxu0 %v250
      %413 = vmatprep.subr.mxu0 0.0
      %414 = vmatpush1.msra.mxu0 %v251
      %415 = vmatprep.subr.mxu0 0.0
      %416 = vmatpush1.msra.mxu0 %v252
      %417 = vmatprep.subr.mxu0 0.0
      %418 = vmatpush1.msra.mxu0 %v253
      %419 = vmatprep.subr.mxu0 0.0
      %420 = vmatpush1.msra.mxu0 %v254
      %421 = vmatprep.subr.mxu0 0.0
      %422 = vmatpush1.msra.mxu0 %v255
      %423 = vmatprep.subr.mxu0 0.0
      %424 = vmatpush1.msra.mxu0 %v256
      %425 = vmatprep.subr.mxu0 0.0
      %426 = vmatpush1.msra.mxu0 %v257
      %427 = vmatprep.subr.mxu0 0.0
      %428 = vmatpush1.msra.mxu0 %v258
      %429 = vmatprep.subr.mxu0 0.0
      %430 = vmatpush1.msra.mxu0 %v259
      %431 = vmatprep.subr.mxu0 0.0
      %432 = vmatpush1.msra.mxu0 %v260
      %433 = vmatprep.subr.mxu0 0.0
      %434 = vmatpush1.msra.mxu0 %v261
      %435 = vmatprep.subr.mxu0 0.0
      %436 = vmatpush1.msra.mxu0 %v262
      %437 = vmatprep.subr.mxu0 0.0
      %438 = vmatpush1.msra.mxu0 %v263
      %439 = vmatprep.subr.mxu0 0.0
      %440 = vmatpush1.msra.mxu0 %v264
      %441 = vmatprep.subr.mxu0 0.0
      %442 = vmatpush1.msra.mxu0 %v265
      %443 = vmatprep.subr.mxu0 0.0
      %444 = vmatpush1.msra.mxu0 %v266
      %445 = vmatprep.subr.mxu0 0.0
      %446 = vmatpush1.msra.mxu0 %v267
      %447 = vmatprep.subr.mxu0 0.0
      %448 = vmatpush1.msra.mxu0 %v268
      %449 = vmatprep.subr.mxu0 0.0
      %450 = vmatpush1.msra.mxu0 %v269
      %451 = vmatprep.subr.mxu0 0.0
      %452 = vmatpush1.msra.mxu0 %v270
      %453 = vmatprep.subr.mxu0 0.0
      %454 = vmatpush1.msra.mxu0 %v271
      %455 = vmatprep.mubr.f32.mxu0 %v214
      %456 = vmatmul.mubr.f32.gmra.mrb[0].mxu0 %v213
      %v457 = vpop.f32.mrb[0].mxu0
      %v458 = vadd.f32 %v389, %v457
      %v459 = vpop.f32.mrb[0].mxu0
      %460 = vmatprep.mubr.f32.mxu0 %v223
      %461 = vmatmul.mubr.f32.gmra.mrb[0].mxu0 %v222
      %v462 = vpop.f32.mrb[0].mxu0
      %v463 = vadd.f32 %v389, %v462
      %v464 = vpop.f32.mrb[0].mxu0
      %465 = vmatprep.mubr.f32.mxu0 %v232
      %466 = vmatmul.mubr.f32.gmra.mrb[0].mxu0 %v231
      %v467 = vpop.f32.mrb[0].mxu0
      %v468 = vadd.f32 %v389, %v467
      %v469 = vpop.f32.mrb[0].mxu0
      %470 = vdwg.mxu0
      %471 = vmatprep.subr.mxu0 0.0
      %472 = vmatpush1.msra.mxu0 %v272
      %473 = vmatprep.subr.mxu0 0.0
      %474 = vmatpush1.msra.mxu0 %v273
      %475 = vmatprep.subr.mxu0 0.0
      %476 = vmatpush1.msra.mxu0 %v274
      %477 = vmatprep.subr.mxu0 0.0
      %478 = vmatpush1.msra.mxu0 %v275
      %479 = vmatprep.subr.mxu0 0.0
      %480 = vmatpush1.msra.mxu0 %v276
      %481 = vmatprep.subr.mxu0 0.0
      %482 = vmatpush1.msra.mxu0 %v277
      %483 = vmatprep.subr.mxu0 0.0
      %484 = vmatpush1.msra.mxu0 %v278
      %485 = vmatprep.subr.mxu0 0.0
      %486 = vmatpush1.msra.mxu0 %v279
      %487 = vmatprep.subr.mxu0 0.0
      %488 = vmatpush1.msra.mxu0 %v280
      %489 = vmatprep.subr.mxu0 0.0
      %490 = vmatpush1.msra.mxu0 %v281
      %491 = vmatprep.subr.mxu0 0.0
      %492 = vmatpush1.msra.mxu0 %v282
      %493 = vmatprep.subr.mxu0 0.0
      %494 = vmatpush1.msra.mxu0 %v283
      %495 = vmatprep.subr.mxu0 0.0
      %496 = vmatpush1.msra.mxu0 %v284
      %497 = vmatprep.subr.mxu0 0.0
      %498 = vmatpush1.msra.mxu0 %v285
      %499 = vmatprep.subr.mxu0 0.0
      %500 = vmatpush1.msra.mxu0 %v286
      %501 = vmatprep.subr.mxu0 0.0
      %502 = vmatpush1.msra.mxu0 %v287
      %503 = vmatprep.subr.mxu0 0.0
      %504 = vmatpush1.msra.mxu0 %v288
      %505 = vmatprep.subr.mxu0 0.0
      %506 = vmatpush1.msra.mxu0 %v289
      %507 = vmatprep.subr.mxu0 0.0
      %508 = vmatpush1.msra.mxu0 %v290
      %509 = vmatprep.subr.mxu0 0.0
      %510 = vmatpush1.msra.mxu0 %v291
      %511 = vmatprep.subr.mxu0 0.0
      %512 = vmatpush1.msra.mxu0 %v292
      %513 = vmatprep.subr.mxu0 0.0
      %514 = vmatpush1.msra.mxu0 %v293
      %515 = vmatprep.subr.mxu0 0.0
      %516 = vmatpush1.msra.mxu0 %v294
      %517 = vmatprep.subr.mxu0 0.0
      %518 = vmatpush1.msra.mxu0 %v295
      %519 = vmatprep.subr.mxu0 0.0
      %520 = vmatpush1.msra.mxu0 %v296
      %521 = vmatprep.subr.mxu0 0.0
      %522 = vmatpush1.msra.mxu0 %v297
      %523 = vmatprep.subr.mxu0 0.0
      %524 = vmatpush1.msra.mxu0 %v298
      %525 = vmatprep.subr.mxu0 0.0
      %526 = vmatpush1.msra.mxu0 %v299
      %527 = vmatprep.subr.mxu0 0.0
      %528 = vmatpush1.msra.mxu0 %v300
      %529 = vmatprep.subr.mxu0 0.0
      %530 = vmatpush1.msra.mxu0 %v301
      %531 = vmatprep.subr.mxu0 0.0
      %532 = vmatpush1.msra.mxu0 %v302
      %533 = vmatprep.subr.mxu0 0.0
      %534 = vmatpush1.msra.mxu0 %v303
      %535 = vmatprep.mubr.f32.mxu0 %v216
      %536 = vmatmul.mubr.f32.gmra.mrb[0].mxu0 %v215
      %v537 = vpop.f32.mrb[0].mxu0
      %v538 = vadd.f32 %v458, %v537
      %v539 = vpop.f32.mrb[0].mxu0
      %540 = vmatprep.mubr.f32.mxu0 %v225
      %541 = vmatmul.mubr.f32.gmra.mrb[0].mxu0 %v224
      %v542 = vpop.f32.mrb[0].mxu0
      %v543 = vadd.f32 %v463, %v542
      %v544 = vpop.f32.mrb[0].mxu0
      %545 = vmatprep.mubr.f32.mxu0 %v234
      %546 = vmatmul.mubr.f32.gmra.mrb[0].mxu0 %v233
      %v547 = vpop.f32.mrb[0].mxu0
      %v548 = vadd.f32 %v468, %v547
      %v549 = vpop.f32.mrb[0].mxu0
      %550 = vdwg.mxu0
      %551 = vmatprep.subr.mxu0 0.0
      %552 = vmatpush1.msra.mxu0 %v304
      %553 = vmatprep.subr.mxu0 0.0
      %554 = vmatpush1.msra.mxu0 %v305
      %555 = vmatprep.subr.mxu0 0.0
      %556 = vmatpush1.msra.mxu0 %v306
      %557 = vmatprep.subr.mxu0 0.0
      %558 = vmatpush1.msra.mxu0 %v307
      %559 = vmatprep.subr.mxu0 0.0
      %560 = vmatpush1.msra.mxu0 %v308
      %561 = vmatprep.subr.mxu0 0.0
      %562 = vmatpush1.msra.mxu0 %v309
      %563 = vmatprep.subr.mxu0 0.0
      %564 = vmatpush1.msra.mxu0 %v310
      %565 = vmatprep.subr.mxu0 0.0
      %566 = vmatpush1.msra.mxu0 %v311
      %567 = vmatprep.subr.mxu0 0.0
      %568 = vmatpush1.msra.mxu0 %v312
      %569 = vmatprep.subr.mxu0 0.0
      %570 = vmatpush1.msra.mxu0 %v313
      %571 = vmatprep.subr.mxu0 0.0
      %572 = vmatpush1.msra.mxu0 %v314
      %573 = vmatprep.subr.mxu0 0.0
      %574 = vmatpush1.msra.mxu0 %v315
      %575 = vmatprep.subr.mxu0 0.0
      %576 = vmatpush1.msra.mxu0 %v316
      %577 = vmatprep.subr.mxu0 0.0
      %578 = vmatpush1.msra.mxu0 %v317
      %579 = vmatprep.subr.mxu0 0.0
      %580 = vmatpush1.msra.mxu0 %v318
      %581 = vmatprep.subr.mxu0 0.0
      %582 = vmatpush1.msra.mxu0 %v319
      %583 = vmatprep.subr.mxu0 0.0
      %584 = vmatpush1.msra.mxu0 %v320
      %585 = vmatprep.subr.mxu0 0.0
      %586 = vmatpush1.msra.mxu0 %v321
      %587 = vmatprep.subr.mxu0 0.0
      %588 = vmatpush1.msra.mxu0 %v322
      %589 = vmatprep.subr.mxu0 0.0
      %590 = vmatpush1.msra.mxu0 %v323
      %591 = vmatprep.subr.mxu0 0.0
      %592 = vmatpush1.msra.mxu0 %v324
      %593 = vmatprep.subr.mxu0 0.0
      %594 = vmatpush1.msra.mxu0 %v325
      %595 = vmatprep.subr.mxu0 0.0
      %596 = vmatpush1.msra.mxu0 %v326
      %597 = vmatprep.subr.mxu0 0.0
      %598 = vmatpush1.msra.mxu0 %v327
      %599 = vmatprep.subr.mxu0 0.0
      %600 = vmatpush1.msra.mxu0 %v328
      %601 = vmatprep.subr.mxu0 0.0
      %602 = vmatpush1.msra.mxu0 %v329
      %603 = vmatprep.subr.mxu0 0.0
      %604 = vmatpush1.msra.mxu0 %v330
      %605 = vmatprep.subr.mxu0 0.0
      %606 = vmatpush1.msra.mxu0 %v331
      %607 = vmatprep.subr.mxu0 0.0
      %608 = vmatpush1.msra.mxu0 %v332
      %609 = vmatprep.subr.mxu0 0.0
      %610 = vmatpush1.msra.mxu0 %v333
      %611 = vmatprep.subr.mxu0 0.0
      %612 = vmatpush1.msra.mxu0 %v334
      %613 = vmatprep.subr.mxu0 0.0
      %614 = vmatpush1.msra.mxu0 %v335
      %615 = vmatprep.mubr.f32.mxu0 %v218
      %616 = vmatmul.mubr.f32.gmra.mrb[0].mxu0 %v217
      %v617 = vpop.f32.mrb[0].mxu0
      %v618 = vadd.f32 %v538, %v617
      %v619 = vpop.f32.mrb[0].mxu0
      %620 = vmatprep.mubr.f32.mxu0 %v227
      %621 = vmatmul.mubr.f32.gmra.mrb[0].mxu0 %v226
      %v622 = vpop.f32.mrb[0].mxu0
      %v623 = vadd.f32 %v543, %v622
      %v624 = vpop.f32.mrb[0].mxu0
      %625 = vmatprep.mubr.f32.mxu0 %v236
      %626 = vmatmul.mubr.f32.gmra.mrb[0].mxu0 %v235
      %v627 = vpop.f32.mrb[0].mxu0
      %v628 = vadd.f32 %v548, %v627
      %v629 = vpop.f32.mrb[0].mxu0
      %630 = vdwg.mxu0
      %631 = vmatprep.subr.mxu0 0.0
      %632 = vmatpush1.msra.mxu0 %v336
      %633 = vmatprep.subr.mxu0 0.0
      %634 = vmatpush1.msra.mxu0 %v337
      %635 = vmatprep.subr.mxu0 0.0
      %636 = vmatpush1.msra.mxu0 %v338
      %637 = vmatprep.subr.mxu0 0.0
      %638 = vmatpush1.msra.mxu0 %v339
      %639 = vmatprep.subr.mxu0 0.0
      %640 = vmatpush1.msra.mxu0 %v340
      %641 = vmatprep.subr.mxu0 0.0
      %642 = vmatpush1.msra.mxu0 %v341
      %643 = vmatprep.subr.mxu0 0.0
      %644 = vmatpush1.msra.mxu0 %v342
      %645 = vmatprep.subr.mxu0 0.0
      %646 = vmatpush1.msra.mxu0 %v343
      %647 = vmatprep.subr.mxu0 0.0
      %648 = vmatpush1.msra.mxu0 %v344
      %649 = vmatprep.subr.mxu0 0.0
      %650 = vmatpush1.msra.mxu0 %v345
      %651 = vmatprep.subr.mxu0 0.0
      %652 = vmatpush1.msra.mxu0 %v346
      %653 = vmatprep.subr.mxu0 0.0
      %654 = vmatpush1.msra.mxu0 %v347
      %655 = vmatprep.subr.mxu0 0.0
      %656 = vmatpush1.msra.mxu0 %v348
      %657 = vmatprep.subr.mxu0 0.0
      %658 = vmatpush1.msra.mxu0 %v349
      %659 = vmatprep.subr.mxu0 0.0
      %660 = vmatpush1.msra.mxu0 %v350
      %661 = vmatprep.subr.mxu0 0.0
      %662 = vmatpush1.msra.mxu0 %v351
      %663 = vmatprep.subr.mxu0 0.0
      %664 = vmatpush1.msra.mxu0 %v352
      %665 = vmatprep.subr.mxu0 0.0
      %666 = vmatpush1.msra.mxu0 %v353
      %667 = vmatprep.subr.mxu0 0.0
      %668 = vmatpush1.msra.mxu0 %v354
      %669 = vmatprep.subr.mxu0 0.0
      %670 = vmatpush1.msra.mxu0 %v355
      %671 = vmatprep.subr.mxu0 0.0
      %672 = vmatpush1.msra.mxu0 %v356
      %673 = vmatprep.subr.mxu0 0.0
      %674 = vmatpush1.msra.mxu0 %v357
      %675 = vmatprep.subr.mxu0 0.0
      %676 = vmatpush1.msra.mxu0 %v358
      %677 = vmatprep.subr.mxu0 0.0
      %678 = vmatpush1.msra.mxu0 %v359
      %679 = vmatprep.subr.mxu0 0.0
      %680 = vmatpush1.msra.mxu0 %v360
      %681 = vmatprep.subr.mxu0 0.0
      %682 = vmatpush1.msra.mxu0 %v361
      %683 = vmatprep.subr.mxu0 0.0
      %684 = vmatpush1.msra.mxu0 %v362
      %685 = vmatprep.subr.mxu0 0.0
      %686 = vmatpush1.msra.mxu0 %v363
      %687 = vmatprep.subr.mxu0 0.0
      %688 = vmatpush1.msra.mxu0 %v364
      %689 = vmatprep.subr.mxu0 0.0
      %690 = vmatpush1.msra.mxu0 %v365
      %691 = vmatprep.subr.mxu0 0.0
      %692 = vmatpush1.msra.mxu0 %v366
      %693 = vmatprep.subr.mxu0 0.0
      %694 = vmatpush1.msra.mxu0 %v367
      %695 = vmatprep.mubr.f32.mxu0 %v220
      %696 = vmatmul.mubr.f32.gmra.mrb[0].mxu0 %v219
      %v697 = vpop.f32.mrb[0].mxu0
      %v698 = vadd.f32 %v618, %v697
      %v699 = vpop.f32.mrb[0].mxu0
      %700 = vmatprep.mubr.f32.mxu0 %v229
      %701 = vmatmul.mubr.f32.gmra.mrb[0].mxu0 %v228
      %v702 = vpop.f32.mrb[0].mxu0
      %v703 = vadd.f32 %v623, %v702
      %v704 = vpop.f32.mrb[0].mxu0
      %705 = vmatprep.mubr.f32.mxu0 %v238
      %706 = vmatmul.mubr.f32.gmra.mrb[0].mxu0 %v237
      %v707 = vpop.f32.mrb[0].mxu0
      %v708 = vadd.f32 %v628, %v707
      %v709 = vpop.f32.mrb[0].mxu0
      %710 = vdwg.mxu0
      %711 = vmatprep.subr.mxu0 0.0
      %712 = vmatpush1.msra.mxu0 %v368
      %713 = vmatprep.subr.mxu0 0.0
      %714 = vmatpush1.msra.mxu0 %v369
      %715 = vmatprep.subr.mxu0 0.0
      %716 = vmatpush1.msra.mxu0 %v370
      %717 = vmatprep.subr.mxu0 0.0
      %718 = vmatpush1.msra.mxu0 %v371
      %719 = vmatprep.subr.mxu0 0.0
      %720 = vmatpush1.msra.mxu0 %v372
      %721 = vmatprep.subr.mxu0 0.0
      %722 = vmatpush1.msra.mxu0 %v373
      %723 = vmatprep.subr.mxu0 0.0
      %724 = vmatpush1.msra.mxu0 %v374
      %725 = vmatprep.subr.mxu0 0.0
      %726 = vmatpush1.msra.mxu0 %v375
      %727 = vmatprep.subr.mxu0 0.0
      %728 = vmatpush1.msra.mxu0 %v376
      %729 = vmatprep.subr.mxu0 0.0
      %730 = vmatpush1.msra.mxu0 %v377
      %731 = vmatprep.subr.mxu0 0.0
      %732 = vmatpush1.msra.mxu0 %v378
      %733 = vmatprep.subr.mxu0 0.0
      %734 = vmatpush1.msra.mxu0 %v379
      %735 = vmatprep.subr.mxu0 0.0
      %736 = vmatpush1.msra.mxu0 %v380
      %737 = vmatprep.subr.mxu0 0.0
      %738 = vmatpush1.msra.mxu0 %v381
      %739 = vmatprep.subr.mxu0 0.0
      %740 = vmatpush1.msra.mxu0 %v382
      %741 = vmatprep.subr.mxu0 0.0
      %742 = vmatpush1.msra.mxu0 %v383
      %743 = vmatprep.subr.mxu0 0.0
      %744 = vmatpush1.msra.mxu0 0.0
      %745 = vmatprep.subr.mxu0 0.0
      %746 = vmatpush1.msra.mxu0 0.0
      %747 = vmatprep.subr.mxu0 0.0
      %748 = vmatpush1.msra.mxu0 0.0
      %749 = vmatprep.subr.mxu0 0.0
      %750 = vmatpush1.msra.mxu0 0.0
      %751 = vmatprep.subr.mxu0 0.0
      %752 = vmatpush1.msra.mxu0 0.0
      %753 = vmatprep.subr.mxu0 0.0
      %754 = vmatpush1.msra.mxu0 0.0
      %755 = vmatprep.subr.mxu0 0.0
      %756 = vmatpush1.msra.mxu0 0.0
      %757 = vmatprep.subr.mxu0 0.0
      %758 = vmatpush1.msra.mxu0 0.0
      %759 = vmatprep.subr.mxu0 0.0
      %760 = vmatpush1.msra.mxu0 0.0
      %761 = vmatprep.subr.mxu0 0.0
      %762 = vmatpush1.msra.mxu0 0.0
      %763 = vmatprep.subr.mxu0 0.0
      %764 = vmatpush1.msra.mxu0 0.0
      %765 = vmatprep.subr.mxu0 0.0
      %766 = vmatpush1.msra.mxu0 0.0
      %767 = vmatprep.subr.mxu0 0.0
      %768 = vmatpush1.msra.mxu0 0.0
      %769 = vmatprep.subr.mxu0 0.0
      %770 = vmatpush1.msra.mxu0 0.0
      %771 = vmatprep.subr.mxu0 0.0
      %772 = vmatpush1.msra.mxu0 0.0
      %773 = vmatprep.subr.mxu0 0.0
      %774 = vmatpush1.msra.mxu0 0.0
      %775 = vmatprep.mubr.f32.mxu0 0.0
      %776 = vmatmul.mubr.f32.gmra.mrb[0].mxu0 %v221
      %v777 = vpop.f32.mrb[0].mxu0
      %v778 = vadd.f32 %v698, %v777
      %v779 = vpop.f32.mrb[0].mxu0
      %780 = vmatprep.mubr.f32.mxu0 0.0
      %781 = vmatmul.mubr.f32.gmra.mrb[0].mxu0 %v230
      %v782 = vpop.f32.mrb[0].mxu0
      %v783 = vadd.f32 %v703, %v782
      %v784 = vpop.f32.mrb[0].mxu0
      %785 = vmatprep.mubr.f32.mxu0 0.0
      %786 = vmatmul.mubr.f32.gmra.mrb[0].mxu0 %v239
      %v787 = vpop.f32.mrb[0].mxu0
      %v788 = vadd.f32 %v708, %v787
      %v789 = vpop.f32.mrb[0].mxu0
      %790 = vdwg.mxu0
      %v791 = vxor.u32 %v778, 2147483648
      %v792 = vxor.u32 %v783, 2147483648
      %v793 = vxor.u32 %v788, 2147483648
      %v794 = vmul.f32 %v791, 1.442695
      %v795 = vpow.pop %v794
      %v796 = vmul.f32 %v792, 1.442695
      %v797 = vpow.pop %v796
      %v798 = vmul.f32 %v793, 1.442695
      %v799 = vpow.pop %v798
      %v800 = vadd.f32 %v795, 1.0
      %v801 = vadd.f32 %v797, 1.0
      %v802 = vadd.f32 %v799, 1.0
      %v803 = vrcp.pop %v800
      %v804 = vmul.f32 1.0, %v803
      %v805 = vrcp.pop %v801
      %v806 = vmul.f32 1.0, %v805
      %v807 = vrcp.pop %v802
      %v808 = vmul.f32 1.0, %v807
      %v809 = vmul.f32 %v778, %v804
      %v810 = vmul.f32 %v783, %v806
      %v811 = vmul.f32 %v788, %v808
      %812 = vst [vmem:[%s211] sm:$0xff] %v809
      %813 = vst [vmem:[%s211 + $0x8] sm:$0xff] %v810
      %814 = vst [vmem:[%s211 + $0x10] sm:$0xff] %v811
      %s815 = smul.u32 3, %s19
      %p816 = scmp.lt.s32.totalorder %s18, 1
      %s817 = scalar_select %p816, %s18, 1
      %p818 = scmp.lt.s32.totalorder %s815, 2
      %s819 = scalar_select %p818, %s815, 2
      %s820 = smul.addr %s817, 3
      %s821 = sadd.s32 %s819, %s820
      %s822 = smul.addr %s821, 8
      %s823 = scalar_lea.vmem %s3, %s822
      // Predicated region
      $region33: #{bev_controlnet_embedding_forward.12} parent=31 // pred_check
        %p824 = pneg %p116
      $region34: #{bev_controlnet_embedding_forward.12} parent=31 // pred_check_branch
        %826 = sbr.rel (%p824) target = $region36
      $region35: #{bev_controlnet_embedding_forward.12} parent=31 // pred_region
        %s827 = smul.u32 3, %s19
      $region36: #{bev_controlnet_embedding_forward.12} parent=31 // pred_fallthru
        _
    $region32: #{bev_controlnet_embedding_forward.12} parent=5 // pred_fallthru
      _
    %p828 = scmp.le.s32.totalorder 2, %s9
    // Predicated region
    $region37: #{bev_controlnet_embedding_forward.12} parent=5 // pred_check
      %p829 = pneg %p828
    $region38: #{bev_controlnet_embedding_forward.12} parent=5 // pred_check_branch
      %831 = sbr.rel (%p829) target = $region40
    $region39: #{bev_controlnet_embedding_forward.12} parent=5 // pred_region
      %s832 = ssub.s32 %s9, 2
      // Predicated region
      $region41: #{bev_controlnet_embedding_forward.12} parent=39 // pred_check
        %p833 = pneg %p122
      $region42: #{bev_controlnet_embedding_forward.12} parent=39 // pred_check_branch
        %835 = sbr.rel (%p833) target = $region44
      $region43: #{bev_controlnet_embedding_forward.12} parent=39 // pred_region
        %s836 = smul.u32 3, %s21
        %p837 = scmp.lt.s32.totalorder %s20, 1
        %s838 = scalar_select %p837, %s20, 1
        %p839 = scmp.lt.s32.totalorder %s836, 2
        %s840 = scalar_select %p839, %s836, 2
        %s841 = smul.addr %s838, 3
        %s842 = sadd.s32 %s840, %s841
        %s843 = smul.addr %s842, 8
        %s844 = scalar_lea.vmem %s3, %s843
      $region44: #{bev_controlnet_embedding_forward.12} parent=39 // pred_fallthru
        _
    $region40: #{bev_controlnet_embedding_forward.12} parent=5 // pred_fallthru
      _
  $region6: #{bev_controlnet_embedding_forward.12} parent=0 // loop_footer
    %s13 = sadd.s32 1, %s9
  $region7: #{bev_controlnet_embedding_forward.12} parent=0 // loop_footer_branch
    %8 = sbr.rel target = $region3
  $region8: #{bev_controlnet_embedding_forward.12} parent=0 // loop_exit
    _

// kernel: bev_controlnet_embedding_forward.13
$region0: #{bev_controlnet_embedding_forward.13}
  #allocation0 [shape = 'u32[]', space=smem, size = 0x4, offset = 0x4, fixed_abs, tag = 'smem constant byte address 0x4 - core index']
  #allocation1 [shape = 'u32[144,128]{1,0:T(1,128)}', space=vmem, size = 0x12000, scoped, tag = 'internal scratch']
  %s0 = inlined_call_operand.vmem [shape: f32[2,32,1152], index: 0, kind: input, shape index: {}]
  %s1 = inlined_call_operand.vmem [shape: f32[1152,128], index: 1, kind: input, shape index: {}]
  %s2 = inlined_call_operand.vmem [shape: f32[1,128], index: 2, kind: input, shape index: {}]
  %s3 = inlined_call_operand.vmem [shape: f32[2,32,128], index: 3, kind: output, shape index: {}]
  %s4 = sld [smem:[#allocation0]]
  $region45: #{bev_controlnet_embedding_forward.13} parent=0
    _
  %s6 = ssub.s32 1, %s4
  %s7 = scalar_select 0, %s6, %s4
  loop: start=0, step=1, limit=4
  $region2: #{bev_controlnet_embedding_forward.13} parent=0 // loop_pre_header
    _
  $region3: #{bev_controlnet_embedding_forward.13} parent=0 // loop_header
    %s9 = sphi 0, %s13
    %p10 = scmp.ge.s32.totalorder %s9, 4
    %s16 = sphi 0, %s28
    %s17 = sphi 0, %s24
    %s18 = sphi 0, %s16
    %s19 = sphi 0, %s17
    %s20 = sphi 0, %s18
    %s21 = sphi 0, %s19
    %s33 = sphi 0, %s35
    %s36 = sphi 0, %s33
    %s37 = sphi 0, %s36
    %s53 = sphi 0, %s37
    %s57 = sphi 0, %s57
    %s59 = sphi 0, %s57
    %s60 = sphi 0, %s59
    %s74 = sphi 0, %s60
    %s78 = sphi 0, %s78
    %s80 = sphi 0, %s78
    %s81 = sphi 0, %s80
    %s95 = sphi 0, %s81
    %s103 = sphi 0, %s105
    %s106 = sphi 0, %s103
    %s107 = sphi 0, %s106
    %s123 = sphi 0, %s107
  $region4: #{bev_controlnet_embedding_forward.13} parent=0 // loop_header_branch
    %12 = sbr.rel (%p10) target = $region8
  $region5: #{bev_controlnet_embedding_forward.13} parent=0 // loop_body
    %s14 = ssub.s32 %s9, 1
    %s15 = ssub.s32 %s9, 2
    %s22 = sadd.s32 1, %s17
    %p23 = scmp.ge.s32.totalorder %s22, 1
    %s24 = scalar_select %p23, 0, %s22
    %s25 = sadd.s32 1, %s16
    %s26 = scalar_select %p23, %s25, %s16
    %p27 = scmp.ge.s32.totalorder %s26, 2
    %s28 = scalar_select %p27, 0, %s26
    %s29 = ssub.s32 %s16, %s28
    %s30 = ssub.s32 %s17, %s24
    %s31 = sor.u32 %s29, %s30
    %p32 = scmp.eq.s32.totalorder %s31, 0
    %s34 = sadd.s32 %s33, 1
    %s35 = scalar_select %p32, %s33, %s34
    %p38 = pneg %p32
    %p39 = scmp.eq.s32.totalorder %s9, 1
    %p40 = por %p38, %p39
    %p41 = scmp.ne.s32.totalorder %s33, %s36
    %p42 = scmp.eq.s32.totalorder %s9, 0
    %p43 = por %p41, %p42
    %p44 = scmp.ne.s32.totalorder %s33, %s36
    %p45 = scmp.eq.s32.totalorder %s14, 1
    %p46 = por %p44, %p45
    %p47 = scmp.ne.s32.totalorder %s36, %s37
    %p48 = scmp.eq.s32.totalorder %s14, 0
    %p49 = por %p47, %p48
    %p50 = scmp.ne.s32.totalorder %s36, %s37
    %p51 = scmp.eq.s32.totalorder %s15, 1
    %p52 = por %p50, %p51
    %p54 = scmp.ne.s32.totalorder %s37, %s53
    %p55 = scmp.eq.s32.totalorder %s15, 0
    %p56 = por %p54, %p55
    %s58 = sadd.s32 %s57, 1
    %p61 = scmp.eq.s32.totalorder %s9, 1
    %p62 = scmp.ne.s32.totalorder %s57, %s59
    %p63 = scmp.eq.s32.totalorder %s9, 0
    %p64 = por %p62, %p63
    %p65 = scmp.ne.s32.totalorder %s57, %s59
    %p66 = scmp.eq.s32.totalorder %s14, 1
    %p67 = por %p65, %p66
    %p68 = scmp.ne.s32.totalorder %s59, %s60
    %p69 = scmp.eq.s32.totalorder %s14, 0
    %p70 = por %p68, %p69
    %p71 = scmp.ne.s32.totalorder %s59, %s60
    %p72 = scmp.eq.s32.totalorder %s15, 1
    %p73 = por %p71, %p72
    %p75 = scmp.ne.s32.totalorder %s60, %s74
    %p76 = scmp.eq.s32.totalorder %s15, 0
    %p77 = por %p75, %p76
    %s79 = sadd.s32 %s78, 1
    %p82 = scmp.eq.s32.totalorder %s9, 1
    %p83 = scmp.ne.s32.totalorder %s78, %s80
    %p84 = scmp.eq.s32.totalorder %s9, 0
    %p85 = por %p83, %p84
    %p86 = scmp.ne.s32.totalorder %s78, %s80
    %p87 = scmp.eq.s32.totalorder %s14, 1
    %p88 = por %p86, %p87
    %p89 = scmp.ne.s32.totalorder %s80, %s81
    %p90 = scmp.eq.s32.totalorder %s14, 0
    %p91 = por %p89, %p90
    %p92 = scmp.ne.s32.totalorder %s80, %s81
    %p93 = scmp.eq.s32.totalorder %s15, 1
    %p94 = por %p92, %p93
    %p96 = scmp.ne.s32.totalorder %s81, %s95
    %p97 = scmp.eq.s32.totalorder %s15, 0
    %p98 = por %p96, %p97
    %s99 = ssub.s32 %s16, %s28
    %s100 = ssub.s32 %s17, %s24
    %s101 = sor.u32 %s99, %s100
    %p102 = scmp.eq.s32.totalorder %s101, 0
    %s104 = sadd.s32 %s103, 1
    %s105 = scalar_select %p102, %s103, %s104
    %p108 = pneg %p102
    %p109 = scmp.eq.s32.totalorder %s9, 1
    %p110 = por %p108, %p109
    %p111 = scmp.ne.s32.totalorder %s103, %s106
    %p112 = scmp.eq.s32.totalorder %s9, 0
    %p113 = por %p111, %p112
    %p114 = scmp.ne.s32.totalorder %s103, %s106
    %p115 = scmp.eq.s32.totalorder %s14, 1
    %p116 = por %p114, %p115
    %p117 = scmp.ne.s32.totalorder %s106, %s107
    %p118 = scmp.eq.s32.totalorder %s14, 0
    %p119 = por %p117, %p118
    %p120 = scmp.ne.s32.totalorder %s106, %s107
    %p121 = scmp.eq.s32.totalorder %s15, 1
    %p122 = por %p120, %p121
    %p124 = scmp.ne.s32.totalorder %s107, %s123
    %p125 = scmp.eq.s32.totalorder %s15, 0
    %p126 = por %p124, %p125
    %p127 = scmp.le.s32.totalorder 1, %s9
    %p128 = scmp.lt.s32.totalorder %s9, 3
    %p129 = pnand %p127, %p128
    %p130 = pneg %p129
    // Predicated region
    $region9: #{bev_controlnet_embedding_forward.13} parent=5 // pred_check
      _
    $region10: #{bev_controlnet_embedding_forward.13} parent=5 // pred_check_branch
      %132 = sbr.rel (%p129) target = $region12
    $region11: #{bev_controlnet_embedding_forward.13} parent=5 // pred_region
      %s133 = ssub.s32 %s9, 1
      // Predicated region
      $region13: #{bev_controlnet_embedding_forward.13} parent=11 // pred_check
        %p134 = pneg %p70
      $region14: #{bev_controlnet_embedding_forward.13} parent=11 // pred_check_branch
        %136 = sbr.rel (%p134) target = $region16
      $region15: #{bev_controlnet_embedding_forward.13} parent=11 // pred_region
        _
      $region16: #{bev_controlnet_embedding_forward.13} parent=11 // pred_fallthru
        _
      // Predicated region
      $region17: #{bev_controlnet_embedding_forward.13} parent=11 // pred_check
        %p137 = pneg %p91
      $region18: #{bev_controlnet_embedding_forward.13} parent=11 // pred_check_branch
        %139 = sbr.rel (%p137) target = $region20
      $region19: #{bev_controlnet_embedding_forward.13} parent=11 // pred_region
        _
      $region20: #{bev_controlnet_embedding_forward.13} parent=11 // pred_fallthru
        _
    $region12: #{bev_controlnet_embedding_forward.13} parent=5 // pred_fallthru
      _
    %p140 = scmp.lt.s32.totalorder %s9, 2
    // Predicated region
    $region21: #{bev_controlnet_embedding_forward.13} parent=5 // pred_check
      %p141 = pneg %p140
    $region22: #{bev_controlnet_embedding_forward.13} parent=5 // pred_check_branch
      %143 = sbr.rel (%p141) target = $region24
    $region23: #{bev_controlnet_embedding_forward.13} parent=5 // pred_region
      // Predicated region
      $region25: #{bev_controlnet_embedding_forward.13} parent=23 // pred_check
        %p144 = pneg %p43
      $region26: #{bev_controlnet_embedding_forward.13} parent=23 // pred_check_branch
        %146 = sbr.rel (%p144) target = $region28
      $region27: #{bev_controlnet_embedding_forward.13} parent=23 // pred_region
        %s147 = smul.u32 4, %s17
        %p148 = scmp.lt.s32.totalorder %s16, 1
        %s149 = scalar_select %p148, %s16, 1
        %p150 = scmp.lt.s32.totalorder %s147, 3
        %s151 = scalar_select %p150, %s147, 3
        %s152 = smul.addr %s151, 9
        %s153 = smul.addr %s149, 36
        %s154 = sadd.s32 %s152, %s153
        %s155 = smul.addr %s154, 8
        %s156 = scalar_lea.vmem %s0, %s155
        %s157 = smul.u32 4, %s17
      $region28: #{bev_controlnet_embedding_forward.13} parent=23 // pred_fallthru
        _
    $region24: #{bev_controlnet_embedding_forward.13} parent=5 // pred_fallthru
      _
    %p158 = scmp.le.s32.totalorder 1, %s9
    %p159 = scmp.lt.s32.totalorder %s9, 3
    %p160 = pnand %p158, %p159
    %p161 = pneg %p160
    // Predicated region
    $region29: #{bev_controlnet_embedding_forward.13} parent=5 // pred_check
      _
    $region30: #{bev_controlnet_embedding_forward.13} parent=5 // pred_check_branch
      %163 = sbr.rel (%p160) target = $region32
    $region31: #{bev_controlnet_embedding_forward.13} parent=5 // pred_region
      %s164 = ssub.s32 %s9, 1
      %s165 = smul.u32 4, %s19
      %p166 = scmp.lt.s32.totalorder %s18, 1
      %s167 = scalar_select %p166, %s18, 1
      %p168 = scmp.lt.s32.totalorder %s165, 3
      %s169 = scalar_select %p168, %s165, 3
      %s170 = smul.addr %s169, 9
      %s171 = smul.addr %s167, 36
      %s172 = sadd.s32 %s170, %s171
      %s173 = smul.addr %s172, 8
      %s174 = scalar_lea.vmem %s0, %s173
      %p175 = pneg %p49
      %p176 = pneg %p46
      %p177 = pneg %p70
      %p178 = pneg %p67
      %p179 = pneg %p91
      %p180 = pneg %p88
      %p181 = pneg %p119
      %p182 = pneg %p116
      %s183 = smul.u32 4, %s19
      %p184 = scmp.lt.s32.totalorder %s18, 1
      %s185 = scalar_select %p184, %s18, 1
      %p186 = scmp.lt.s32.totalorder %s183, 3
      %s187 = scalar_select %p186, %s183, 3
      %s188 = smul.addr %s185, 4
      %s189 = sadd.s32 %s187, %s188
      %s190 = smul.addr %s189, 8
      %s191 = scalar_lea.vmem %s3, %s190
      %s192 = smul.u32 4, %s19
      %p193 = scmp.lt.s32.totalorder %s18, 1
      %s194 = scalar_select %p193, %s18, 1
      %p195 = scmp.lt.s32.totalorder %s192, 3
      %s196 = scalar_select %p195, %s192, 3
      %s197 = smul.addr %s196, 9
      %s198 = smul.addr %s194, 36
      %s199 = sadd.s32 %s197, %s198
      %s200 = smul.addr %s199, 8
      %s201 = scalar_lea.vmem %s0, %s200
      %s202 = smul.u32 4, %s19
      %s203 = smul.u32 4, %s19
      %p204 = scmp.lt.s32.totalorder %s18, 1
      %s205 = scalar_select %p204, %s18, 1
      %p206 = scmp.lt.s32.totalorder %s203, 3
      %s207 = scalar_select %p206, %s203, 3
      %s208 = smul.addr %s205, 4
      %s209 = sadd.s32 %s207, %s208
      %s210 = smul.addr %s209, 8
      %s211 = scalar_lea.vmem %s3, %s210
      %s212 = smul.u32 4, %s19
      %v213 = vld [vmem:[%s201] sm:$0xff]
      %v214 = vld [vmem:[%s201 + $0x8] sm:$0xff]
      %v215 = vld [vmem:[%s201 + $0x10] sm:$0xff]
      %v216 = vld [vmem:[%s201 + $0x18] sm:$0xff]
      %v217 = vld [vmem:[%s201 + $0x20] sm:$0xff]
      %v218 = vld [vmem:[%s201 + $0x28] sm:$0xff]
      %v219 = vld [vmem:[%s201 + $0x30] sm:$0xff]
      %v220 = vld [vmem:[%s201 + $0x38] sm:$0xff]
      %v221 = vld [vmem:[%s201 + $0x40] sm:$0xff]
      %v222 = vld [vmem:[%s201 + $0x48] sm:$0xff]
      %v223 = vld [vmem:[%s201 + $0x50] sm:$0xff]
      %v224 = vld [vmem:[%s201 + $0x58] sm:$0xff]
      %v225 = vld [vmem:[%s201 + $0x60] sm:$0xff]
      %v226 = vld [vmem:[%s201 + $0x68] sm:$0xff]
      %v227 = vld [vmem:[%s201 + $0x70] sm:$0xff]
      %v228 = vld [vmem:[%s201 + $0x78] sm:$0xff]
      %v229 = vld [vmem:[%s201 + $0x80] sm:$0xff]
      %v230 = vld [vmem:[%s201 + $0x88] sm:$0xff]
      %v231 = vld [vmem:[%s201 + $0x90] sm:$0xff]
      %v232 = vld [vmem:[%s201 + $0x98] sm:$0xff]
      %v233 = vld [vmem:[%s201 + $0xa0] sm:$0xff]
      %v234 = vld [vmem:[%s201 + $0xa8] sm:$0xff]
      %v235 = vld [vmem:[%s201 + $0xb0] sm:$0xff]
      %v236 = vld [vmem:[%s201 + $0xb8] sm:$0xff]
      %v237 = vld [vmem:[%s201 + $0xc0] sm:$0xff]
      %v238 = vld [vmem:[%s201 + $0xc8] sm:$0xff]
      %v239 = vld [vmem:[%s201 + $0xd0] sm:$0xff]
      %v240 = vld [vmem:[%s201 + $0xd8] sm:$0xff]
      %v241 = vld [vmem:[%s201 + $0xe0] sm:$0xff]
      %v242 = vld [vmem:[%s201 + $0xe8] sm:$0xff]
      %v243 = vld [vmem:[%s201 + $0xf0] sm:$0xff]
      %v244 = vld [vmem:[%s201 + $0xf8] sm:$0xff]
      %v245 = vld [vmem:[%s201 + $0x100] sm:$0xff]
      %v246 = vld [vmem:[%s201 + $0x108] sm:$0xff]
      %v247 = vld [vmem:[%s201 + $0x110] sm:$0xff]
      %v248 = vld [vmem:[%s201 + $0x118] sm:$0xff]
      %v249 = vld [vmem:[%s1] sm:$0xff]
      %v250 = vld [vmem:[%s1 + $0x8] sm:$0xff]
      %v251 = vld [vmem:[%s1 + $0x10] sm:$0xff]
      %v252 = vld [vmem:[%s1 + $0x18] sm:$0xff]
      %v253 = vld [vmem:[%s1 + $0x20] sm:$0xff]
      %v254 = vld [vmem:[%s1 + $0x28] sm:$0xff]
      %v255 = vld [vmem:[%s1 + $0x30] sm:$0xff]
      %v256 = vld [vmem:[%s1 + $0x38] sm:$0xff]
      %v257 = vld [vmem:[%s1 + $0x40] sm:$0xff]
      %v258 = vld [vmem:[%s1 + $0x48] sm:$0xff]
      %v259 = vld [vmem:[%s1 + $0x50] sm:$0xff]
      %v260 = vld [vmem:[%s1 + $0x58] sm:$0xff]
      %v261 = vld [vmem:[%s1 + $0x60] sm:$0xff]
      %v262 = vld [vmem:[%s1 + $0x68] sm:$0xff]
      %v263 = vld [vmem:[%s1 + $0x70] sm:$0xff]
      %v264 = vld [vmem:[%s1 + $0x78] sm:$0xff]
      %v265 = vld [vmem:[%s1 + $0x80] sm:$0xff]
      %v266 = vld [vmem:[%s1 + $0x88] sm:$0xff]
      %v267 = vld [vmem:[%s1 + $0x90] sm:$0xff]
      %v268 = vld [vmem:[%s1 + $0x98] sm:$0xff]
      %v269 = vld [vmem:[%s1 + $0xa0] sm:$0xff]
      %v270 = vld [vmem:[%s1 + $0xa8] sm:$0xff]
      %v271 = vld [vmem:[%s1 + $0xb0] sm:$0xff]
      %v272 = vld [vmem:[%s1 + $0xb8] sm:$0xff]
      %v273 = vld [vmem:[%s1 + $0xc0] sm:$0xff]
      %v274 = vld [vmem:[%s1 + $0xc8] sm:$0xff]
      %v275 = vld [vmem:[%s1 + $0xd0] sm:$0xff]
      %v276 = vld [vmem:[%s1 + $0xd8] sm:$0xff]
      %v277 = vld [vmem:[%s1 + $0xe0] sm:$0xff]
      %v278 = vld [vmem:[%s1 + $0xe8] sm:$0xff]
      %v279 = vld [vmem:[%s1 + $0xf0] sm:$0xff]
      %v280 = vld [vmem:[%s1 + $0xf8] sm:$0xff]
      %v281 = vld [vmem:[%s1 + $0x100] sm:$0xff]
      %v282 = vld [vmem:[%s1 + $0x108] sm:$0xff]
      %v283 = vld [vmem:[%s1 + $0x110] sm:$0xff]
      %v284 = vld [vmem:[%s1 + $0x118] sm:$0xff]
      %v285 = vld [vmem:[%s1 + $0x120] sm:$0xff]
      %v286 = vld [vmem:[%s1 + $0x128] sm:$0xff]
      %v287 = vld [vmem:[%s1 + $0x130] sm:$0xff]
      %v288 = vld [vmem:[%s1 + $0x138] sm:$0xff]
      %v289 = vld [vmem:[%s1 + $0x140] sm:$0xff]
      %v290 = vld [vmem:[%s1 + $0x148] sm:$0xff]
      %v291 = vld [vmem:[%s1 + $0x150] sm:$0xff]
      %v292 = vld [vmem:[%s1 + $0x158] sm:$0xff]
      %v293 = vld [vmem:[%s1 + $0x160] sm:$0xff]
      %v294 = vld [vmem:[%s1 + $0x168] sm:$0xff]
      %v295 = vld [vmem:[%s1 + $0x170] sm:$0xff]
      %v296 = vld [vmem:[%s1 + $0x178] sm:$0xff]
      %v297 = vld [vmem:[%s1 + $0x180] sm:$0xff]
      %v298 = vld [vmem:[%s1 + $0x188] sm:$0xff]
      %v299 = vld [vmem:[%s1 + $0x190] sm:$0xff]
      %v300 = vld [vmem:[%s1 + $0x198] sm:$0xff]
      %v301 = vld [vmem:[%s1 + $0x1a0] sm:$0xff]
      %v302 = vld [vmem:[%s1 + $0x1a8] sm:$0xff]
      %v303 = vld [vmem:[%s1 + $0x1b0] sm:$0xff]
      %v304 = vld [vmem:[%s1 + $0x1b8] sm:$0xff]
      %v305 = vld [vmem:[%s1 + $0x1c0] sm:$0xff]
      %v306 = vld [vmem:[%s1 + $0x1c8] sm:$0xff]
      %v307 = vld [vmem:[%s1 + $0x1d0] sm:$0xff]
      %v308 = vld [vmem:[%s1 + $0x1d8] sm:$0xff]
      %v309 = vld [vmem:[%s1 + $0x1e0] sm:$0xff]
      %v310 = vld [vmem:[%s1 + $0x1e8] sm:$0xff]
      %v311 = vld [vmem:[%s1 + $0x1f0] sm:$0xff]
      %v312 = vld [vmem:[%s1 + $0x1f8] sm:$0xff]
      %v313 = vld [vmem:[%s1 + $0x200] sm:$0xff]
      %v314 = vld [vmem:[%s1 + $0x208] sm:$0xff]
      %v315 = vld [vmem:[%s1 + $0x210] sm:$0xff]
      %v316 = vld [vmem:[%s1 + $0x218] sm:$0xff]
      %v317 = vld [vmem:[%s1 + $0x220] sm:$0xff]
      %v318 = vld [vmem:[%s1 + $0x228] sm:$0xff]
      %v319 = vld [vmem:[%s1 + $0x230] sm:$0xff]
      %v320 = vld [vmem:[%s1 + $0x238] sm:$0xff]
      %v321 = vld [vmem:[%s1 + $0x240] sm:$0xff]
      %v322 = vld [vmem:[%s1 + $0x248] sm:$0xff]
      %v323 = vld [vmem:[%s1 + $0x250] sm:$0xff]
      %v324 = vld [vmem:[%s1 + $0x258] sm:$0xff]
      %v325 = vld [vmem:[%s1 + $0x260] sm:$0xff]
      %v326 = vld [vmem:[%s1 + $0x268] sm:$0xff]
      %v327 = vld [vmem:[%s1 + $0x270] sm:$0xff]
      %v328 = vld [vmem:[%s1 + $0x278] sm:$0xff]
      %v329 = vld [vmem:[%s1 + $0x280] sm:$0xff]
      %v330 = vld [vmem:[%s1 + $0x288] sm:$0xff]
      %v331 = vld [vmem:[%s1 + $0x290] sm:$0xff]
      %v332 = vld [vmem:[%s1 + $0x298] sm:$0xff]
      %v333 = vld [vmem:[%s1 + $0x2a0] sm:$0xff]
      %v334 = vld [vmem:[%s1 + $0x2a8] sm:$0xff]
      %v335 = vld [vmem:[%s1 + $0x2b0] sm:$0xff]
      %v336 = vld [vmem:[%s1 + $0x2b8] sm:$0xff]
      %v337 = vld [vmem:[%s1 + $0x2c0] sm:$0xff]
      %v338 = vld [vmem:[%s1 + $0x2c8] sm:$0xff]
      %v339 = vld [vmem:[%s1 + $0x2d0] sm:$0xff]
      %v340 = vld [vmem:[%s1 + $0x2d8] sm:$0xff]
      %v341 = vld [vmem:[%s1 + $0x2e0] sm:$0xff]
      %v342 = vld [vmem:[%s1 + $0x2e8] sm:$0xff]
      %v343 = vld [vmem:[%s1 + $0x2f0] sm:$0xff]
      %v344 = vld [vmem:[%s1 + $0x2f8] sm:$0xff]
      %v345 = vld [vmem:[%s1 + $0x300] sm:$0xff]
      %v346 = vld [vmem:[%s1 + $0x308] sm:$0xff]
      %v347 = vld [vmem:[%s1 + $0x310] sm:$0xff]
      %v348 = vld [vmem:[%s1 + $0x318] sm:$0xff]
      %v349 = vld [vmem:[%s1 + $0x320] sm:$0xff]
      %v350 = vld [vmem:[%s1 + $0x328] sm:$0xff]
      %v351 = vld [vmem:[%s1 + $0x330] sm:$0xff]
      %v352 = vld [vmem:[%s1 + $0x338] sm:$0xff]
      %v353 = vld [vmem:[%s1 + $0x340] sm:$0xff]
      %v354 = vld [vmem:[%s1 + $0x348] sm:$0xff]
      %v355 = vld [vmem:[%s1 + $0x350] sm:$0xff]
      %v356 = vld [vmem:[%s1 + $0x358] sm:$0xff]
      %v357 = vld [vmem:[%s1 + $0x360] sm:$0xff]
      %v358 = vld [vmem:[%s1 + $0x368] sm:$0xff]
      %v359 = vld [vmem:[%s1 + $0x370] sm:$0xff]
      %v360 = vld [vmem:[%s1 + $0x378] sm:$0xff]
      %v361 = vld [vmem:[%s1 + $0x380] sm:$0xff]
      %v362 = vld [vmem:[%s1 + $0x388] sm:$0xff]
      %v363 = vld [vmem:[%s1 + $0x390] sm:$0xff]
      %v364 = vld [vmem:[%s1 + $0x398] sm:$0xff]
      %v365 = vld [vmem:[%s1 + $0x3a0] sm:$0xff]
      %v366 = vld [vmem:[%s1 + $0x3a8] sm:$0xff]
      %v367 = vld [vmem:[%s1 + $0x3b0] sm:$0xff]
      %v368 = vld [vmem:[%s1 + $0x3b8] sm:$0xff]
      %v369 = vld [vmem:[%s1 + $0x3c0] sm:$0xff]
      %v370 = vld [vmem:[%s1 + $0x3c8] sm:$0xff]
      %v371 = vld [vmem:[%s1 + $0x3d0] sm:$0xff]
      %v372 = vld [vmem:[%s1 + $0x3d8] sm:$0xff]
      %v373 = vld [vmem:[%s1 + $0x3e0] sm:$0xff]
      %v374 = vld [vmem:[%s1 + $0x3e8] sm:$0xff]
      %v375 = vld [vmem:[%s1 + $0x3f0] sm:$0xff]
      %v376 = vld [vmem:[%s1 + $0x3f8] sm:$0xff]
      %v377 = vld [vmem:[%s1 + $0x400] sm:$0xff]
      %v378 = vld [vmem:[%s1 + $0x408] sm:$0xff]
      %v379 = vld [vmem:[%s1 + $0x410] sm:$0xff]
      %v380 = vld [vmem:[%s1 + $0x418] sm:$0xff]
      %v381 = vld [vmem:[%s1 + $0x420] sm:$0xff]
      %v382 = vld [vmem:[%s1 + $0x428] sm:$0xff]
      %v383 = vld [vmem:[%s1 + $0x430] sm:$0xff]
      %v384 = vld [vmem:[%s1 + $0x438] sm:$0xff]
      %v385 = vld [vmem:[%s1 + $0x440] sm:$0xff]
      %v386 = vld [vmem:[%s1 + $0x448] sm:$0xff]
      %v387 = vld [vmem:[%s1 + $0x450] sm:$0xff]
      %v388 = vld [vmem:[%s1 + $0x458] sm:$0xff]
      %v389 = vld [vmem:[%s1 + $0x460] sm:$0xff]
      %v390 = vld [vmem:[%s1 + $0x468] sm:$0xff]
      %v391 = vld [vmem:[%s1 + $0x470] sm:$0xff]
      %v392 = vld [vmem:[%s1 + $0x478] sm:$0xff]
      %v393 = vld [vmem:[%s2] sm:$0x1]
      %v395 = vlaneseq
      %v396 = vshrl.u32 %v395, 7
      %v397 = vsub.s32 0, %v396
      %v398 = vrot.slane %v393, %v397
      %400 = vmatprep.subr.mxu0 0.0
      %401 = vmatpush1.msra.mxu0 %v249
      %402 = vmatprep.subr.mxu0 0.0
      %403 = vmatpush1.msra.mxu0 %v250
      %404 = vmatprep.subr.mxu0 0.0
      %405 = vmatpush1.msra.mxu0 %v251
      %406 = vmatprep.subr.mxu0 0.0
      %407 = vmatpush1.msra.mxu0 %v252
      %408 = vmatprep.subr.mxu0 0.0
      %409 = vmatpush1.msra.mxu0 %v253
      %410 = vmatprep.subr.mxu0 0.0
      %411 = vmatpush1.msra.mxu0 %v254
      %412 = vmatprep.subr.mxu0 0.0
      %413 = vmatpush1.msra.mxu0 %v255
      %414 = vmatprep.subr.mxu0 0.0
      %415 = vmatpush1.msra.mxu0 %v256
      %416 = vmatprep.subr.mxu0 0.0
      %417 = vmatpush1.msra.mxu0 %v257
      %418 = vmatprep.subr.mxu0 0.0
      %419 = vmatpush1.msra.mxu0 %v258
      %420 = vmatprep.subr.mxu0 0.0
      %421 = vmatpush1.msra.mxu0 %v259
      %422 = vmatprep.subr.mxu0 0.0
      %423 = vmatpush1.msra.mxu0 %v260
      %424 = vmatprep.subr.mxu0 0.0
      %425 = vmatpush1.msra.mxu0 %v261
      %426 = vmatprep.subr.mxu0 0.0
      %427 = vmatpush1.msra.mxu0 %v262
      %428 = vmatprep.subr.mxu0 0.0
      %429 = vmatpush1.msra.mxu0 %v263
      %430 = vmatprep.subr.mxu0 0.0
      %431 = vmatpush1.msra.mxu0 %v264
      %432 = vmatprep.subr.mxu0 0.0
      %433 = vmatpush1.msra.mxu0 %v265
      %434 = vmatprep.subr.mxu0 0.0
      %435 = vmatpush1.msra.mxu0 %v266
      %436 = vmatprep.subr.mxu0 0.0
      %437 = vmatpush1.msra.mxu0 %v267
      %438 = vmatprep.subr.mxu0 0.0
      %439 = vmatpush1.msra.mxu0 %v268
      %440 = vmatprep.subr.mxu0 0.0
      %441 = vmatpush1.msra.mxu0 %v269
      %442 = vmatprep.subr.mxu0 0.0
      %443 = vmatpush1.msra.mxu0 %v270
      %444 = vmatprep.subr.mxu0 0.0
      %445 = vmatpush1.msra.mxu0 %v271
      %446 = vmatprep.subr.mxu0 0.0
      %447 = vmatpush1.msra.mxu0 %v272
      %448 = vmatprep.subr.mxu0 0.0
      %449 = vmatpush1.msra.mxu0 %v273
      %450 = vmatprep.subr.mxu0 0.0
      %451 = vmatpush1.msra.mxu0 %v274
      %452 = vmatprep.subr.mxu0 0.0
      %453 = vmatpush1.msra.mxu0 %v275
      %454 = vmatprep.subr.mxu0 0.0
      %455 = vmatpush1.msra.mxu0 %v276
      %456 = vmatprep.subr.mxu0 0.0
      %457 = vmatpush1.msra.mxu0 %v277
      %458 = vmatprep.subr.mxu0 0.0
      %459 = vmatpush1.msra.mxu0 %v278
      %460 = vmatprep.subr.mxu0 0.0
      %461 = vmatpush1.msra.mxu0 %v279
      %462 = vmatprep.subr.mxu0 0.0
      %463 = vmatpush1.msra.mxu0 %v280
      %464 = vmatprep.mubr.f32.mxu0 %v214
      %465 = vmatmul.mubr.f32.gmra.mrb[0].mxu0 %v213
      %v466 = vpop.f32.mrb[0].mxu0
      %v467 = vadd.f32 %v398, %v466
      %v468 = vpop.f32.mrb[0].mxu0
      %469 = vmatprep.mubr.f32.mxu0 %v223
      %470 = vmatmul.mubr.f32.gmra.mrb[0].mxu0 %v222
      %v471 = vpop.f32.mrb[0].mxu0
      %v472 = vadd.f32 %v398, %v471
      %v473 = vpop.f32.mrb[0].mxu0
      %474 = vmatprep.mubr.f32.mxu0 %v232
      %475 = vmatmul.mubr.f32.gmra.mrb[0].mxu0 %v231
      %v476 = vpop.f32.mrb[0].mxu0
      %v477 = vadd.f32 %v398, %v476
      %v478 = vpop.f32.mrb[0].mxu0
      %479 = vmatprep.mubr.f32.mxu0 %v241
      %480 = vmatmul.mubr.f32.gmra.mrb[0].mxu0 %v240
      %v481 = vpop.f32.mrb[0].mxu0
      %v482 = vadd.f32 %v398, %v481
      %v483 = vpop.f32.mrb[0].mxu0
      %484 = vdwg.mxu0
      %485 = vmatprep.subr.mxu0 0.0
      %486 = vmatpush1.msra.mxu0 %v281
      %487 = vmatprep.subr.mxu0 0.0
      %488 = vmatpush1.msra.mxu0 %v282
      %489 = vmatprep.subr.mxu0 0.0
      %490 = vmatpush1.msra.mxu0 %v283
      %491 = vmatprep.subr.mxu0 0.0
      %492 = vmatpush1.msra.mxu0 %v284
      %493 = vmatprep.subr.mxu0 0.0
      %494 = vmatpush1.msra.mxu0 %v285
      %495 = vmatprep.subr.mxu0 0.0
      %496 = vmatpush1.msra.mxu0 %v286
      %497 = vmatprep.subr.mxu0 0.0
      %498 = vmatpush1.msra.mxu0 %v287
      %499 = vmatprep.subr.mxu0 0.0
      %500 = vmatpush1.msra.mxu0 %v288
      %501 = vmatprep.subr.mxu0 0.0
      %502 = vmatpush1.msra.mxu0 %v289
      %503 = vmatprep.subr.mxu0 0.0
      %504 = vmatpush1.msra.mxu0 %v290
      %505 = vmatprep.subr.mxu0 0.0
      %506 = vmatpush1.msra.mxu0 %v291
      %507 = vmatprep.subr.mxu0 0.0
      %508 = vmatpush1.msra.mxu0 %v292
      %509 = vmatprep.subr.mxu0 0.0
      %510 = vmatpush1.msra.mxu0 %v293
      %511 = vmatprep.subr.mxu0 0.0
      %512 = vmatpush1.msra.mxu0 %v294
      %513 = vmatprep.subr.mxu0 0.0
      %514 = vmatpush1.msra.mxu0 %v295
      %515 = vmatprep.subr.mxu0 0.0
      %516 = vmatpush1.msra.mxu0 %v296
      %517 = vmatprep.subr.mxu0 0.0
      %518 = vmatpush1.msra.mxu0 %v297
      %519 = vmatprep.subr.mxu0 0.0
      %520 = vmatpush1.msra.mxu0 %v298
      %521 = vmatprep.subr.mxu0 0.0
      %522 = vmatpush1.msra.mxu0 %v299
      %523 = vmatprep.subr.mxu0 0.0
      %524 = vmatpush1.msra.mxu0 %v300
      %525 = vmatprep.subr.mxu0 0.0
      %526 = vmatpush1.msra.mxu0 %v301
      %527 = vmatprep.subr.mxu0 0.0
      %528 = vmatpush1.msra.mxu0 %v302
      %529 = vmatprep.subr.mxu0 0.0
      %530 = vmatpush1.msra.mxu0 %v303
      %531 = vmatprep.subr.mxu0 0.0
      %532 = vmatpush1.msra.mxu0 %v304
      %533 = vmatprep.subr.mxu0 0.0
      %534 = vmatpush1.msra.mxu0 %v305
      %535 = vmatprep.subr.mxu0 0.0
      %536 = vmatpush1.msra.mxu0 %v306
      %537 = vmatprep.subr.mxu0 0.0
      %538 = vmatpush1.msra.mxu0 %v307
      %539 = vmatprep.subr.mxu0 0.0
      %540 = vmatpush1.msra.mxu0 %v308
      %541 = vmatprep.subr.mxu0 0.0
      %542 = vmatpush1.msra.mxu0 %v309
      %543 = vmatprep.subr.mxu0 0.0
      %544 = vmatpush1.msra.mxu0 %v310
      %545 = vmatprep.subr.mxu0 0.0
      %546 = vmatpush1.msra.mxu0 %v311
      %547 = vmatprep.subr.mxu0 0.0
      %548 = vmatpush1.msra.mxu0 %v312
      %549 = vmatprep.mubr.f32.mxu0 %v216
      %550 = vmatmul.mubr.f32.gmra.mrb[0].mxu0 %v215
      %v551 = vpop.f32.mrb[0].mxu0
      %v552 = vadd.f32 %v467, %v551
      %v553 = vpop.f32.mrb[0].mxu0
      %554 = vmatprep.mubr.f32.mxu0 %v225
      %555 = vmatmul.mubr.f32.gmra.mrb[0].mxu0 %v224
      %v556 = vpop.f32.mrb[0].mxu0
      %v557 = vadd.f32 %v472, %v556
      %v558 = vpop.f32.mrb[0].mxu0
      %559 = vmatprep.mubr.f32.mxu0 %v234
      %560 = vmatmul.mubr.f32.gmra.mrb[0].mxu0 %v233
      %v561 = vpop.f32.mrb[0].mxu0
      %v562 = vadd.f32 %v477, %v561
      %v563 = vpop.f32.mrb[0].mxu0
      %564 = vmatprep.mubr.f32.mxu0 %v243
      %565 = vmatmul.mubr.f32.gmra.mrb[0].mxu0 %v242
      %v566 = vpop.f32.mrb[0].mxu0
      %v567 = vadd.f32 %v482, %v566
      %v568 = vpop.f32.mrb[0].mxu0
      %569 = vdwg.mxu0
      %570 = vmatprep.subr.mxu0 0.0
      %571 = vmatpush1.msra.mxu0 %v313
      %572 = vmatprep.subr.mxu0 0.0
      %573 = vmatpush1.msra.mxu0 %v314
      %574 = vmatprep.subr.mxu0 0.0
      %575 = vmatpush1.msra.mxu0 %v315
      %576 = vmatprep.subr.mxu0 0.0
      %577 = vmatpush1.msra.mxu0 %v316
      %578 = vmatprep.subr.mxu0 0.0
      %579 = vmatpush1.msra.mxu0 %v317
      %580 = vmatprep.subr.mxu0 0.0
      %581 = vmatpush1.msra.mxu0 %v318
      %582 = vmatprep.subr.mxu0 0.0
      %583 = vmatpush1.msra.mxu0 %v319
      %584 = vmatprep.subr.mxu0 0.0
      %585 = vmatpush1.msra.mxu0 %v320
      %586 = vmatprep.subr.mxu0 0.0
      %587 = vmatpush1.msra.mxu0 %v321
      %588 = vmatprep.subr.mxu0 0.0
      %589 = vmatpush1.msra.mxu0 %v322
      %590 = vmatprep.subr.mxu0 0.0
      %591 = vmatpush1.msra.mxu0 %v323
      %592 = vmatprep.subr.mxu0 0.0
      %593 = vmatpush1.msra.mxu0 %v324
      %594 = vmatprep.subr.mxu0 0.0
      %595 = vmatpush1.msra.mxu0 %v325
      %596 = vmatprep.subr.mxu0 0.0
      %597 = vmatpush1.msra.mxu0 %v326
      %598 = vmatprep.subr.mxu0 0.0
      %599 = vmatpush1.msra.mxu0 %v327
      %600 = vmatprep.subr.mxu0 0.0
      %601 = vmatpush1.msra.mxu0 %v328
      %602 = vmatprep.subr.mxu0 0.0
      %603 = vmatpush1.msra.mxu0 %v329
      %604 = vmatprep.subr.mxu0 0.0
      %605 = vmatpush1.msra.mxu0 %v330
      %606 = vmatprep.subr.mxu0 0.0
      %607 = vmatpush1.msra.mxu0 %v331
      %608 = vmatprep.subr.mxu0 0.0
      %609 = vmatpush1.msra.mxu0 %v332
      %610 = vmatprep.subr.mxu0 0.0
      %611 = vmatpush1.msra.mxu0 %v333
      %612 = vmatprep.subr.mxu0 0.0
      %613 = vmatpush1.msra.mxu0 %v334
      %614 = vmatprep.subr.mxu0 0.0
      %615 = vmatpush1.msra.mxu0 %v335
      %616 = vmatprep.subr.mxu0 0.0
      %617 = vmatpush1.msra.mxu0 %v336
      %618 = vmatprep.subr.mxu0 0.0
      %619 = vmatpush1.msra.mxu0 %v337
      %620 = vmatprep.subr.mxu0 0.0
      %621 = vmatpush1.msra.mxu0 %v338
      %622 = vmatprep.subr.mxu0 0.0
      %623 = vmatpush1.msra.mxu0 %v339
      %624 = vmatprep.subr.mxu0 0.0
      %625 = vmatpush1.msra.mxu0 %v340
      %626 = vmatprep.subr.mxu0 0.0
      %627 = vmatpush1.msra.mxu0 %v341
      %628 = vmatprep.subr.mxu0 0.0
      %629 = vmatpush1.msra.mxu0 %v342
      %630 = vmatprep.subr.mxu0 0.0
      %631 = vmatpush1.msra.mxu0 %v343
      %632 = vmatprep.subr.mxu0 0.0
      %633 = vmatpush1.msra.mxu0 %v344
      %634 = vmatprep.mubr.f32.mxu0 %v218
      %635 = vmatmul.mubr.f32.gmra.mrb[0].mxu0 %v217
      %v636 = vpop.f32.mrb[0].mxu0
      %v637 = vadd.f32 %v552, %v636
      %v638 = vpop.f32.mrb[0].mxu0
      %639 = vmatprep.mubr.f32.mxu0 %v227
      %640 = vmatmul.mubr.f32.gmra.mrb[0].mxu0 %v226
      %v641 = vpop.f32.mrb[0].mxu0
      %v642 = vadd.f32 %v557, %v641
      %v643 = vpop.f32.mrb[0].mxu0
      %644 = vmatprep.mubr.f32.mxu0 %v236
      %645 = vmatmul.mubr.f32.gmra.mrb[0].mxu0 %v235
      %v646 = vpop.f32.mrb[0].mxu0
      %v647 = vadd.f32 %v562, %v646
      %v648 = vpop.f32.mrb[0].mxu0
      %649 = vmatprep.mubr.f32.mxu0 %v245
      %650 = vmatmul.mubr.f32.gmra.mrb[0].mxu0 %v244
      %v651 = vpop.f32.mrb[0].mxu0
      %v652 = vadd.f32 %v567, %v651
      %v653 = vpop.f32.mrb[0].mxu0
      %654 = vdwg.mxu0
      %655 = vmatprep.subr.mxu0 0.0
      %656 = vmatpush1.msra.mxu0 %v345
      %657 = vmatprep.subr.mxu0 0.0
      %658 = vmatpush1.msra.mxu0 %v346
      %659 = vmatprep.subr.mxu0 0.0
      %660 = vmatpush1.msra.mxu0 %v347
      %661 = vmatprep.subr.mxu0 0.0
      %662 = vmatpush1.msra.mxu0 %v348
      %663 = vmatprep.subr.mxu0 0.0
      %664 = vmatpush1.msra.mxu0 %v349
      %665 = vmatprep.subr.mxu0 0.0
      %666 = vmatpush1.msra.mxu0 %v350
      %667 = vmatprep.subr.mxu0 0.0
      %668 = vmatpush1.msra.mxu0 %v351
      %669 = vmatprep.subr.mxu0 0.0
      %670 = vmatpush1.msra.mxu0 %v352
      %671 = vmatprep.subr.mxu0 0.0
      %672 = vmatpush1.msra.mxu0 %v353
      %673 = vmatprep.subr.mxu0 0.0
      %674 = vmatpush1.msra.mxu0 %v354
      %675 = vmatprep.subr.mxu0 0.0
      %676 = vmatpush1.msra.mxu0 %v355
      %677 = vmatprep.subr.mxu0 0.0
      %678 = vmatpush1.msra.mxu0 %v356
      %679 = vmatprep.subr.mxu0 0.0
      %680 = vmatpush1.msra.mxu0 %v357
      %681 = vmatprep.subr.mxu0 0.0
      %682 = vmatpush1.msra.mxu0 %v358
      %683 = vmatprep.subr.mxu0 0.0
      %684 = vmatpush1.msra.mxu0 %v359
      %685 = vmatprep.subr.mxu0 0.0
      %686 = vmatpush1.msra.mxu0 %v360
      %687 = vmatprep.subr.mxu0 0.0
      %688 = vmatpush1.msra.mxu0 %v361
      %689 = vmatprep.subr.mxu0 0.0
      %690 = vmatpush1.msra.mxu0 %v362
      %691 = vmatprep.subr.mxu0 0.0
      %692 = vmatpush1.msra.mxu0 %v363
      %693 = vmatprep.subr.mxu0 0.0
      %694 = vmatpush1.msra.mxu0 %v364
      %695 = vmatprep.subr.mxu0 0.0
      %696 = vmatpush1.msra.mxu0 %v365
      %697 = vmatprep.subr.mxu0 0.0
      %698 = vmatpush1.msra.mxu0 %v366
      %699 = vmatprep.subr.mxu0 0.0
      %700 = vmatpush1.msra.mxu0 %v367
      %701 = vmatprep.subr.mxu0 0.0
      %702 = vmatpush1.msra.mxu0 %v368
      %703 = vmatprep.subr.mxu0 0.0
      %704 = vmatpush1.msra.mxu0 %v369
      %705 = vmatprep.subr.mxu0 0.0
      %706 = vmatpush1.msra.mxu0 %v370
      %707 = vmatprep.subr.mxu0 0.0
      %708 = vmatpush1.msra.mxu0 %v371
      %709 = vmatprep.subr.mxu0 0.0
      %710 = vmatpush1.msra.mxu0 %v372
      %711 = vmatprep.subr.mxu0 0.0
      %712 = vmatpush1.msra.mxu0 %v373
      %713 = vmatprep.subr.mxu0 0.0
      %714 = vmatpush1.msra.mxu0 %v374
      %715 = vmatprep.subr.mxu0 0.0
      %716 = vmatpush1.msra.mxu0 %v375
      %717 = vmatprep.subr.mxu0 0.0
      %718 = vmatpush1.msra.mxu0 %v376
      %719 = vmatprep.mubr.f32.mxu0 %v220
      %720 = vmatmul.mubr.f32.gmra.mrb[0].mxu0 %v219
      %v721 = vpop.f32.mrb[0].mxu0
      %v722 = vadd.f32 %v637, %v721
      %v723 = vpop.f32.mrb[0].mxu0
      %724 = vmatprep.mubr.f32.mxu0 %v229
      %725 = vmatmul.mubr.f32.gmra.mrb[0].mxu0 %v228
      %v726 = vpop.f32.mrb[0].mxu0
      %v727 = vadd.f32 %v642, %v726
      %v728 = vpop.f32.mrb[0].mxu0
      %729 = vmatprep.mubr.f32.mxu0 %v238
      %730 = vmatmul.mubr.f32.gmra.mrb[0].mxu0 %v237
      %v731 = vpop.f32.mrb[0].mxu0
      %v732 = vadd.f32 %v647, %v731
      %v733 = vpop.f32.mrb[0].mxu0
      %734 = vmatprep.mubr.f32.mxu0 %v247
      %735 = vmatmul.mubr.f32.gmra.mrb[0].mxu0 %v246
      %v736 = vpop.f32.mrb[0].mxu0
      %v737 = vadd.f32 %v652, %v736
      %v738 = vpop.f32.mrb[0].mxu0
      %739 = vdwg.mxu0
      %740 = vmatprep.subr.mxu0 0.0
      %741 = vmatpush1.msra.mxu0 %v377
      %742 = vmatprep.subr.mxu0 0.0
      %743 = vmatpush1.msra.mxu0 %v378
      %744 = vmatprep.subr.mxu0 0.0
      %745 = vmatpush1.msra.mxu0 %v379
      %746 = vmatprep.subr.mxu0 0.0
      %747 = vmatpush1.msra.mxu0 %v380
      %748 = vmatprep.subr.mxu0 0.0
      %749 = vmatpush1.msra.mxu0 %v381
      %750 = vmatprep.subr.mxu0 0.0
      %751 = vmatpush1.msra.mxu0 %v382
      %752 = vmatprep.subr.mxu0 0.0
      %753 = vmatpush1.msra.mxu0 %v383
      %754 = vmatprep.subr.mxu0 0.0
      %755 = vmatpush1.msra.mxu0 %v384
      %756 = vmatprep.subr.mxu0 0.0
      %757 = vmatpush1.msra.mxu0 %v385
      %758 = vmatprep.subr.mxu0 0.0
      %759 = vmatpush1.msra.mxu0 %v386
      %760 = vmatprep.subr.mxu0 0.0
      %761 = vmatpush1.msra.mxu0 %v387
      %762 = vmatprep.subr.mxu0 0.0
      %763 = vmatpush1.msra.mxu0 %v388
      %764 = vmatprep.subr.mxu0 0.0
      %765 = vmatpush1.msra.mxu0 %v389
      %766 = vmatprep.subr.mxu0 0.0
      %767 = vmatpush1.msra.mxu0 %v390
      %768 = vmatprep.subr.mxu0 0.0
      %769 = vmatpush1.msra.mxu0 %v391
      %770 = vmatprep.subr.mxu0 0.0
      %771 = vmatpush1.msra.mxu0 %v392
      %772 = vmatprep.subr.mxu0 0.0
      %773 = vmatpush1.msra.mxu0 0.0
      %774 = vmatprep.subr.mxu0 0.0
      %775 = vmatpush1.msra.mxu0 0.0
      %776 = vmatprep.subr.mxu0 0.0
      %777 = vmatpush1.msra.mxu0 0.0
      %778 = vmatprep.subr.mxu0 0.0
      %779 = vmatpush1.msra.mxu0 0.0
      %780 = vmatprep.subr.mxu0 0.0
      %781 = vmatpush1.msra.mxu0 0.0
      %782 = vmatprep.subr.mxu0 0.0
      %783 = vmatpush1.msra.mxu0 0.0
      %784 = vmatprep.subr.mxu0 0.0
      %785 = vmatpush1.msra.mxu0 0.0
      %786 = vmatprep.subr.mxu0 0.0
      %787 = vmatpush1.msra.mxu0 0.0
      %788 = vmatprep.subr.mxu0 0.0
      %789 = vmatpush1.msra.mxu0 0.0
      %790 = vmatprep.subr.mxu0 0.0
      %791 = vmatpush1.msra.mxu0 0.0
      %792 = vmatprep.subr.mxu0 0.0
      %793 = vmatpush1.msra.mxu0 0.0
      %794 = vmatprep.subr.mxu0 0.0
      %795 = vmatpush1.msra.mxu0 0.0
      %796 = vmatprep.subr.mxu0 0.0
      %797 = vmatpush1.msra.mxu0 0.0
      %798 = vmatprep.subr.mxu0 0.0
      %799 = vmatpush1.msra.mxu0 0.0
      %800 = vmatprep.subr.mxu0 0.0
      %801 = vmatpush1.msra.mxu0 0.0
      %802 = vmatprep.subr.mxu0 0.0
      %803 = vmatpush1.msra.mxu0 0.0
      %804 = vmatprep.mubr.f32.mxu0 0.0
      %805 = vmatmul.mubr.f32.gmra.mrb[0].mxu0 %v221
      %v806 = vpop.f32.mrb[0].mxu0
      %v807 = vadd.f32 %v722, %v806
      %v808 = vpop.f32.mrb[0].mxu0
      %809 = vmatprep.mubr.f32.mxu0 0.0
      %810 = vmatmul.mubr.f32.gmra.mrb[0].mxu0 %v230
      %v811 = vpop.f32.mrb[0].mxu0
      %v812 = vadd.f32 %v727, %v811
      %v813 = vpop.f32.mrb[0].mxu0
      %814 = vmatprep.mubr.f32.mxu0 0.0
      %815 = vmatmul.mubr.f32.gmra.mrb[0].mxu0 %v239
      %v816 = vpop.f32.mrb[0].mxu0
      %v817 = vadd.f32 %v732, %v816
      %v818 = vpop.f32.mrb[0].mxu0
      %819 = vmatprep.mubr.f32.mxu0 0.0
      %820 = vmatmul.mubr.f32.gmra.mrb[0].mxu0 %v248
      %v821 = vpop.f32.mrb[0].mxu0
      %v822 = vadd.f32 %v737, %v821
      %v823 = vpop.f32.mrb[0].mxu0
      %824 = vdwg.mxu0
      %v825 = vxor.u32 %v807, 2147483648
      %v826 = vxor.u32 %v812, 2147483648
      %v827 = vxor.u32 %v817, 2147483648
      %v828 = vxor.u32 %v822, 2147483648
      %v829 = vmul.f32 %v825, 1.442695
      %v830 = vpow.pop %v829
      %v831 = vmul.f32 %v826, 1.442695
      %v832 = vpow.pop %v831
      %v833 = vmul.f32 %v827, 1.442695
      %v834 = vpow.pop %v833
      %v835 = vmul.f32 %v828, 1.442695
      %v836 = vpow.pop %v835
      %v837 = vadd.f32 %v830, 1.0
      %v838 = vadd.f32 %v832, 1.0
      %v839 = vadd.f32 %v834, 1.0
      %v840 = vadd.f32 %v836, 1.0
      %v841 = vrcp.pop %v837
      %v842 = vmul.f32 1.0, %v841
      %v843 = vrcp.pop %v838
      %v844 = vmul.f32 1.0, %v843
      %v845 = vrcp.pop %v839
      %v846 = vmul.f32 1.0, %v845
      %v847 = vrcp.pop %v840
      %v848 = vmul.f32 1.0, %v847
      %v849 = vmul.f32 %v807, %v842
      %v850 = vmul.f32 %v812, %v844
      %v851 = vmul.f32 %v817, %v846
      %v852 = vmul.f32 %v822, %v848
      %853 = vst [vmem:[%s211] sm:$0xff] %v849
      %854 = vst [vmem:[%s211 + $0x8] sm:$0xff] %v850
      %855 = vst [vmem:[%s211 + $0x10] sm:$0xff] %v851
      %856 = vst [vmem:[%s211 + $0x18] sm:$0xff] %v852
      %s857 = smul.u32 4, %s19
      %p858 = scmp.lt.s32.totalorder %s18, 1
      %s859 = scalar_select %p858, %s18, 1
      %p860 = scmp.lt.s32.totalorder %s857, 3
      %s861 = scalar_select %p860, %s857, 3
      %s862 = smul.addr %s859, 4
      %s863 = sadd.s32 %s861, %s862
      %s864 = smul.addr %s863, 8
      %s865 = scalar_lea.vmem %s3, %s864
      // Predicated region
      $region33: #{bev_controlnet_embedding_forward.13} parent=31 // pred_check
        %p866 = pneg %p116
      $region34: #{bev_controlnet_embedding_forward.13} parent=31 // pred_check_branch
        %868 = sbr.rel (%p866) target = $region36
      $region35: #{bev_controlnet_embedding_forward.13} parent=31 // pred_region
        %s869 = smul.u32 4, %s19
      $region36: #{bev_controlnet_embedding_forward.13} parent=31 // pred_fallthru
        _
    $region32: #{bev_controlnet_embedding_forward.13} parent=5 // pred_fallthru
      _
    %p870 = scmp.le.s32.totalorder 2, %s9
    // Predicated region
    $region37: #{bev_controlnet_embedding_forward.13} parent=5 // pred_check
      %p871 = pneg %p870
    $region38: #{bev_controlnet_embedding_forward.13} parent=5 // pred_check_branch
      %873 = sbr.rel (%p871) target = $region40
    $region39: #{bev_controlnet_embedding_forward.13} parent=5 // pred_region
      %s874 = ssub.s32 %s9, 2
      // Predicated region
      $region41: #{bev_controlnet_embedding_forward.13} parent=39 // pred_check
        %p875 = pneg %p122
      $region42: #{bev_controlnet_embedding_forward.13} parent=39 // pred_check_branch
        %877 = sbr.rel (%p875) target = $region44
      $region43: #{bev_controlnet_embedding_forward.13} parent=39 // pred_region
        %s878 = smul.u32 4, %s21
        %p879 = scmp.lt.s32.totalorder %s20, 1
        %s880 = scalar_select %p879, %s20, 1
        %p881 = scmp.lt.s32.totalorder %s878, 3
        %s882 = scalar_select %p881, %s878, 3
        %s883 = smul.addr %s880, 4
        %s884 = sadd.s32 %s882, %s883
        %s885 = smul.addr %s884, 8
        %s886 = scalar_lea.vmem %s3, %s885
      $region44: #{bev_controlnet_embedding_forward.13} parent=39 // pred_fallthru
        _
    $region40: #{bev_controlnet_embedding_forward.13} parent=5 // pred_fallthru
      _
  $region6: #{bev_controlnet_embedding_forward.13} parent=0 // loop_footer
    %s13 = sadd.s32 1, %s9
  $region7: #{bev_controlnet_embedding_forward.13} parent=0 // loop_footer_branch
    %8 = sbr.rel target = $region3
  $region8: #{bev_controlnet_embedding_forward.13} parent=0 // loop_exit
    _

// kernel: bev_controlnet_embedding_forward.14
$region0: #{bev_controlnet_embedding_forward.14}
  #allocation0 [shape = 'u32[]', space=smem, size = 0x4, offset = 0x4, fixed_abs, tag = 'smem constant byte address 0x4 - core index']
  #allocation1 [shape = 'u32[144,128]{1,0:T(1,128)}', space=vmem, size = 0x12000, scoped, tag = 'internal scratch']
  %s0 = inlined_call_operand.vmem [shape: f32[2,20,1152], index: 0, kind: input, shape index: {}]
  %s1 = inlined_call_operand.vmem [shape: f32[1152,128], index: 1, kind: input, shape index: {}]
  %s2 = inlined_call_operand.vmem [shape: f32[1,128], index: 2, kind: input, shape index: {}]
  %s3 = inlined_call_operand.vmem [shape: f32[2,20,128], index: 3, kind: output, shape index: {}]
  %s4 = sld [smem:[#allocation0]]
  $region45: #{bev_controlnet_embedding_forward.14} parent=0
    _
  %s6 = ssub.s32 1, %s4
  %s7 = scalar_select 0, %s6, %s4
  loop: start=0, step=1, limit=4
  $region2: #{bev_controlnet_embedding_forward.14} parent=0 // loop_pre_header
    _
  $region3: #{bev_controlnet_embedding_forward.14} parent=0 // loop_header
    %s9 = sphi 0, %s13
    %p10 = scmp.ge.s32.totalorder %s9, 4
    %s16 = sphi 0, %s28
    %s17 = sphi 0, %s24
    %s18 = sphi 0, %s16
    %s19 = sphi 0, %s17
    %s20 = sphi 0, %s18
    %s21 = sphi 0, %s19
    %s33 = sphi 0, %s35
    %s36 = sphi 0, %s33
    %s37 = sphi 0, %s36
    %s53 = sphi 0, %s37
    %s57 = sphi 0, %s57
    %s59 = sphi 0, %s57
    %s60 = sphi 0, %s59
    %s74 = sphi 0, %s60
    %s78 = sphi 0, %s78
    %s80 = sphi 0, %s78
    %s81 = sphi 0, %s80
    %s95 = sphi 0, %s81
    %s103 = sphi 0, %s105
    %s106 = sphi 0, %s103
    %s107 = sphi 0, %s106
    %s123 = sphi 0, %s107
  $region4: #{bev_controlnet_embedding_forward.14} parent=0 // loop_header_branch
    %12 = sbr.rel (%p10) target = $region8
  $region5: #{bev_controlnet_embedding_forward.14} parent=0 // loop_body
    %s14 = ssub.s32 %s9, 1
    %s15 = ssub.s32 %s9, 2
    %s22 = sadd.s32 1, %s17
    %p23 = scmp.ge.s32.totalorder %s22, 1
    %s24 = scalar_select %p23, 0, %s22
    %s25 = sadd.s32 1, %s16
    %s26 = scalar_select %p23, %s25, %s16
    %p27 = scmp.ge.s32.totalorder %s26, 2
    %s28 = scalar_select %p27, 0, %s26
    %s29 = ssub.s32 %s16, %s28
    %s30 = ssub.s32 %s17, %s24
    %s31 = sor.u32 %s29, %s30
    %p32 = scmp.eq.s32.totalorder %s31, 0
    %s34 = sadd.s32 %s33, 1
    %s35 = scalar_select %p32, %s33, %s34
    %p38 = pneg %p32
    %p39 = scmp.eq.s32.totalorder %s9, 1
    %p40 = por %p38, %p39
    %p41 = scmp.ne.s32.totalorder %s33, %s36
    %p42 = scmp.eq.s32.totalorder %s9, 0
    %p43 = por %p41, %p42
    %p44 = scmp.ne.s32.totalorder %s33, %s36
    %p45 = scmp.eq.s32.totalorder %s14, 1
    %p46 = por %p44, %p45
    %p47 = scmp.ne.s32.totalorder %s36, %s37
    %p48 = scmp.eq.s32.totalorder %s14, 0
    %p49 = por %p47, %p48
    %p50 = scmp.ne.s32.totalorder %s36, %s37
    %p51 = scmp.eq.s32.totalorder %s15, 1
    %p52 = por %p50, %p51
    %p54 = scmp.ne.s32.totalorder %s37, %s53
    %p55 = scmp.eq.s32.totalorder %s15, 0
    %p56 = por %p54, %p55
    %s58 = sadd.s32 %s57, 1
    %p61 = scmp.eq.s32.totalorder %s9, 1
    %p62 = scmp.ne.s32.totalorder %s57, %s59
    %p63 = scmp.eq.s32.totalorder %s9, 0
    %p64 = por %p62, %p63
    %p65 = scmp.ne.s32.totalorder %s57, %s59
    %p66 = scmp.eq.s32.totalorder %s14, 1
    %p67 = por %p65, %p66
    %p68 = scmp.ne.s32.totalorder %s59, %s60
    %p69 = scmp.eq.s32.totalorder %s14, 0
    %p70 = por %p68, %p69
    %p71 = scmp.ne.s32.totalorder %s59, %s60
    %p72 = scmp.eq.s32.totalorder %s15, 1
    %p73 = por %p71, %p72
    %p75 = scmp.ne.s32.totalorder %s60, %s74
    %p76 = scmp.eq.s32.totalorder %s15, 0
    %p77 = por %p75, %p76
    %s79 = sadd.s32 %s78, 1
    %p82 = scmp.eq.s32.totalorder %s9, 1
    %p83 = scmp.ne.s32.totalorder %s78, %s80
    %p84 = scmp.eq.s32.totalorder %s9, 0
    %p85 = por %p83, %p84
    %p86 = scmp.ne.s32.totalorder %s78, %s80
    %p87 = scmp.eq.s32.totalorder %s14, 1
    %p88 = por %p86, %p87
    %p89 = scmp.ne.s32.totalorder %s80, %s81
    %p90 = scmp.eq.s32.totalorder %s14, 0
    %p91 = por %p89, %p90
    %p92 = scmp.ne.s32.totalorder %s80, %s81
    %p93 = scmp.eq.s32.totalorder %s15, 1
    %p94 = por %p92, %p93
    %p96 = scmp.ne.s32.totalorder %s81, %s95
    %p97 = scmp.eq.s32.totalorder %s15, 0
    %p98 = por %p96, %p97
    %s99 = ssub.s32 %s16, %s28
    %s100 = ssub.s32 %s17, %s24
    %s101 = sor.u32 %s99, %s100
    %p102 = scmp.eq.s32.totalorder %s101, 0
    %s104 = sadd.s32 %s103, 1
    %s105 = scalar_select %p102, %s103, %s104
    %p108 = pneg %p102
    %p109 = scmp.eq.s32.totalorder %s9, 1
    %p110 = por %p108, %p109
    %p111 = scmp.ne.s32.totalorder %s103, %s106
    %p112 = scmp.eq.s32.totalorder %s9, 0
    %p113 = por %p111, %p112
    %p114 = scmp.ne.s32.totalorder %s103, %s106
    %p115 = scmp.eq.s32.totalorder %s14, 1
    %p116 = por %p114, %p115
    %p117 = scmp.ne.s32.totalorder %s106, %s107
    %p118 = scmp.eq.s32.totalorder %s14, 0
    %p119 = por %p117, %p118
    %p120 = scmp.ne.s32.totalorder %s106, %s107
    %p121 = scmp.eq.s32.totalorder %s15, 1
    %p122 = por %p120, %p121
    %p124 = scmp.ne.s32.totalorder %s107, %s123
    %p125 = scmp.eq.s32.totalorder %s15, 0
    %p126 = por %p124, %p125
    %p127 = scmp.le.s32.totalorder 1, %s9
    %p128 = scmp.lt.s32.totalorder %s9, 3
    %p129 = pnand %p127, %p128
    %p130 = pneg %p129
    // Predicated region
    $region9: #{bev_controlnet_embedding_forward.14} parent=5 // pred_check
      _
    $region10: #{bev_controlnet_embedding_forward.14} parent=5 // pred_check_branch
      %132 = sbr.rel (%p129) target = $region12
    $region11: #{bev_controlnet_embedding_forward.14} parent=5 // pred_region
      %s133 = ssub.s32 %s9, 1
      // Predicated region
      $region13: #{bev_controlnet_embedding_forward.14} parent=11 // pred_check
        %p134 = pneg %p70
      $region14: #{bev_controlnet_embedding_forward.14} parent=11 // pred_check_branch
        %136 = sbr.rel (%p134) target = $region16
      $region15: #{bev_controlnet_embedding_forward.14} parent=11 // pred_region
        _
      $region16: #{bev_controlnet_embedding_forward.14} parent=11 // pred_fallthru
        _
      // Predicated region
      $region17: #{bev_controlnet_embedding_forward.14} parent=11 // pred_check
        %p137 = pneg %p91
      $region18: #{bev_controlnet_embedding_forward.14} parent=11 // pred_check_branch
        %139 = sbr.rel (%p137) target = $region20
      $region19: #{bev_controlnet_embedding_forward.14} parent=11 // pred_region
        _
      $region20: #{bev_controlnet_embedding_forward.14} parent=11 // pred_fallthru
        _
    $region12: #{bev_controlnet_embedding_forward.14} parent=5 // pred_fallthru
      _
    %p140 = scmp.lt.s32.totalorder %s9, 2
    // Predicated region
    $region21: #{bev_controlnet_embedding_forward.14} parent=5 // pred_check
      %p141 = pneg %p140
    $region22: #{bev_controlnet_embedding_forward.14} parent=5 // pred_check_branch
      %143 = sbr.rel (%p141) target = $region24
    $region23: #{bev_controlnet_embedding_forward.14} parent=5 // pred_region
      // Predicated region
      $region25: #{bev_controlnet_embedding_forward.14} parent=23 // pred_check
        %p144 = pneg %p43
      $region26: #{bev_controlnet_embedding_forward.14} parent=23 // pred_check_branch
        %146 = sbr.rel (%p144) target = $region28
      $region27: #{bev_controlnet_embedding_forward.14} parent=23 // pred_region
        %s147 = smul.u32 3, %s17
        %p148 = scmp.lt.s32.totalorder %s16, 1
        %s149 = scalar_select %p148, %s16, 1
        %p150 = scmp.lt.s32.totalorder %s147, 2
        %s151 = scalar_select %p150, %s147, 2
        %s152 = smul.addr %s151, 9
        %s153 = smul.addr %s149, 27
        %s154 = sadd.s32 %s152, %s153
        %s155 = smul.addr %s154, 8
        %s156 = scalar_lea.vmem %s0, %s155
        %s157 = smul.u32 3, %s17
      $region28: #{bev_controlnet_embedding_forward.14} parent=23 // pred_fallthru
        _
    $region24: #{bev_controlnet_embedding_forward.14} parent=5 // pred_fallthru
      _
    %p158 = scmp.le.s32.totalorder 1, %s9
    %p159 = scmp.lt.s32.totalorder %s9, 3
    %p160 = pnand %p158, %p159
    %p161 = pneg %p160
    // Predicated region
    $region29: #{bev_controlnet_embedding_forward.14} parent=5 // pred_check
      _
    $region30: #{bev_controlnet_embedding_forward.14} parent=5 // pred_check_branch
      %163 = sbr.rel (%p160) target = $region32
    $region31: #{bev_controlnet_embedding_forward.14} parent=5 // pred_region
      %s164 = ssub.s32 %s9, 1
      %s165 = smul.u32 3, %s19
      %p166 = scmp.lt.s32.totalorder %s18, 1
      %s167 = scalar_select %p166, %s18, 1
      %p168 = scmp.lt.s32.totalorder %s165, 2
      %s169 = scalar_select %p168, %s165, 2
      %s170 = smul.addr %s169, 9
      %s171 = smul.addr %s167, 27
      %s172 = sadd.s32 %s170, %s171
      %s173 = smul.addr %s172, 8
      %s174 = scalar_lea.vmem %s0, %s173
      %p175 = pneg %p49
      %p176 = pneg %p46
      %p177 = pneg %p70
      %p178 = pneg %p67
      %p179 = pneg %p91
      %p180 = pneg %p88
      %p181 = pneg %p119
      %p182 = pneg %p116
      %s183 = smul.u32 3, %s19
      %p184 = scmp.lt.s32.totalorder %s18, 1
      %s185 = scalar_select %p184, %s18, 1
      %p186 = scmp.lt.s32.totalorder %s183, 2
      %s187 = scalar_select %p186, %s183, 2
      %s188 = smul.addr %s185, 3
      %s189 = sadd.s32 %s187, %s188
      %s190 = smul.addr %s189, 8
      %s191 = scalar_lea.vmem %s3, %s190
      %s192 = smul.u32 3, %s19
      %p193 = scmp.lt.s32.totalorder %s18, 1
      %s194 = scalar_select %p193, %s18, 1
      %p195 = scmp.lt.s32.totalorder %s192, 2
      %s196 = scalar_select %p195, %s192, 2
      %s197 = smul.addr %s196, 9
      %s198 = smul.addr %s194, 27
      %s199 = sadd.s32 %s197, %s198
      %s200 = smul.addr %s199, 8
      %s201 = scalar_lea.vmem %s0, %s200
      %s202 = smul.u32 3, %s19
      %s203 = smul.u32 3, %s19
      %p204 = scmp.lt.s32.totalorder %s18, 1
      %s205 = scalar_select %p204, %s18, 1
      %p206 = scmp.lt.s32.totalorder %s203, 2
      %s207 = scalar_select %p206, %s203, 2
      %s208 = smul.addr %s205, 3
      %s209 = sadd.s32 %s207, %s208
      %s210 = smul.addr %s209, 8
      %s211 = scalar_lea.vmem %s3, %s210
      %s212 = smul.u32 3, %s19
      %v213 = vld [vmem:[%s201] sm:$0xff]
      %v214 = vld [vmem:[%s201 + $0x8] sm:$0xff]
      %v215 = vld [vmem:[%s201 + $0x10] sm:$0xff]
      %v216 = vld [vmem:[%s201 + $0x18] sm:$0xff]
      %v217 = vld [vmem:[%s201 + $0x20] sm:$0xff]
      %v218 = vld [vmem:[%s201 + $0x28] sm:$0xff]
      %v219 = vld [vmem:[%s201 + $0x30] sm:$0xff]
      %v220 = vld [vmem:[%s201 + $0x38] sm:$0xff]
      %v221 = vld [vmem:[%s201 + $0x40] sm:$0xff]
      %v222 = vld [vmem:[%s201 + $0x48] sm:$0xff]
      %v223 = vld [vmem:[%s201 + $0x50] sm:$0xff]
      %v224 = vld [vmem:[%s201 + $0x58] sm:$0xff]
      %v225 = vld [vmem:[%s201 + $0x60] sm:$0xff]
      %v226 = vld [vmem:[%s201 + $0x68] sm:$0xff]
      %v227 = vld [vmem:[%s201 + $0x70] sm:$0xff]
      %v228 = vld [vmem:[%s201 + $0x78] sm:$0xff]
      %v229 = vld [vmem:[%s201 + $0x80] sm:$0xff]
      %v230 = vld [vmem:[%s201 + $0x88] sm:$0xff]
      %v231 = vld [vmem:[%s201 + $0x90] sm:$0xf]
      %v232 = vld [vmem:[%s201 + $0x98] sm:$0xf]
      %v233 = vld [vmem:[%s201 + $0xa0] sm:$0xf]
      %v234 = vld [vmem:[%s201 + $0xa8] sm:$0xf]
      %v235 = vld [vmem:[%s201 + $0xb0] sm:$0xf]
      %v236 = vld [vmem:[%s201 + $0xb8] sm:$0xf]
      %v237 = vld [vmem:[%s201 + $0xc0] sm:$0xf]
      %v238 = vld [vmem:[%s201 + $0xc8] sm:$0xf]
      %v239 = vld [vmem:[%s201 + $0xd0] sm:$0xf]
      %v240 = vld [vmem:[%s1] sm:$0xff]
      %v241 = vld [vmem:[%s1 + $0x8] sm:$0xff]
      %v242 = vld [vmem:[%s1 + $0x10] sm:$0xff]
      %v243 = vld [vmem:[%s1 + $0x18] sm:$0xff]
      %v244 = vld [vmem:[%s1 + $0x20] sm:$0xff]
      %v245 = vld [vmem:[%s1 + $0x28] sm:$0xff]
      %v246 = vld [vmem:[%s1 + $0x30] sm:$0xff]
      %v247 = vld [vmem:[%s1 + $0x38] sm:$0xff]
      %v248 = vld [vmem:[%s1 + $0x40] sm:$0xff]
      %v249 = vld [vmem:[%s1 + $0x48] sm:$0xff]
      %v250 = vld [vmem:[%s1 + $0x50] sm:$0xff]
      %v251 = vld [vmem:[%s1 + $0x58] sm:$0xff]
      %v252 = vld [vmem:[%s1 + $0x60] sm:$0xff]
      %v253 = vld [vmem:[%s1 + $0x68] sm:$0xff]
      %v254 = vld [vmem:[%s1 + $0x70] sm:$0xff]
      %v255 = vld [vmem:[%s1 + $0x78] sm:$0xff]
      %v256 = vld [vmem:[%s1 + $0x80] sm:$0xff]
      %v257 = vld [vmem:[%s1 + $0x88] sm:$0xff]
      %v258 = vld [vmem:[%s1 + $0x90] sm:$0xff]
      %v259 = vld [vmem:[%s1 + $0x98] sm:$0xff]
      %v260 = vld [vmem:[%s1 + $0xa0] sm:$0xff]
      %v261 = vld [vmem:[%s1 + $0xa8] sm:$0xff]
      %v262 = vld [vmem:[%s1 + $0xb0] sm:$0xff]
      %v263 = vld [vmem:[%s1 + $0xb8] sm:$0xff]
      %v264 = vld [vmem:[%s1 + $0xc0] sm:$0xff]
      %v265 = vld [vmem:[%s1 + $0xc8] sm:$0xff]
      %v266 = vld [vmem:[%s1 + $0xd0] sm:$0xff]
      %v267 = vld [vmem:[%s1 + $0xd8] sm:$0xff]
      %v268 = vld [vmem:[%s1 + $0xe0] sm:$0xff]
      %v269 = vld [vmem:[%s1 + $0xe8] sm:$0xff]
      %v270 = vld [vmem:[%s1 + $0xf0] sm:$0xff]
      %v271 = vld [vmem:[%s1 + $0xf8] sm:$0xff]
      %v272 = vld [vmem:[%s1 + $0x100] sm:$0xff]
      %v273 = vld [vmem:[%s1 + $0x108] sm:$0xff]
      %v274 = vld [vmem:[%s1 + $0x110] sm:$0xff]
      %v275 = vld [vmem:[%s1 + $0x118] sm:$0xff]
      %v276 = vld [vmem:[%s1 + $0x120] sm:$0xff]
      %v277 = vld [vmem:[%s1 + $0x128] sm:$0xff]
      %v278 = vld [vmem:[%s1 + $0x130] sm:$0xff]
      %v279 = vld [vmem:[%s1 + $0x138] sm:$0xff]
      %v280 = vld [vmem:[%s1 + $0x140] sm:$0xff]
      %v281 = vld [vmem:[%s1 + $0x148] sm:$0xff]
      %v282 = vld [vmem:[%s1 + $0x150] sm:$0xff]
      %v283 = vld [vmem:[%s1 + $0x158] sm:$0xff]
      %v284 = vld [vmem:[%s1 + $0x160] sm:$0xff]
      %v285 = vld [vmem:[%s1 + $0x168] sm:$0xff]
      %v286 = vld [vmem:[%s1 + $0x170] sm:$0xff]
      %v287 = vld [vmem:[%s1 + $0x178] sm:$0xff]
      %v288 = vld [vmem:[%s1 + $0x180] sm:$0xff]
      %v289 = vld [vmem:[%s1 + $0x188] sm:$0xff]
      %v290 = vld [vmem:[%s1 + $0x190] sm:$0xff]
      %v291 = vld [vmem:[%s1 + $0x198] sm:$0xff]
      %v292 = vld [vmem:[%s1 + $0x1a0] sm:$0xff]
      %v293 = vld [vmem:[%s1 + $0x1a8] sm:$0xff]
      %v294 = vld [vmem:[%s1 + $0x1b0] sm:$0xff]
      %v295 = vld [vmem:[%s1 + $0x1b8] sm:$0xff]
      %v296 = vld [vmem:[%s1 + $0x1c0] sm:$0xff]
      %v297 = vld [vmem:[%s1 + $0x1c8] sm:$0xff]
      %v298 = vld [vmem:[%s1 + $0x1d0] sm:$0xff]
      %v299 = vld [vmem:[%s1 + $0x1d8] sm:$0xff]
      %v300 = vld [vmem:[%s1 + $0x1e0] sm:$0xff]
      %v301 = vld [vmem:[%s1 + $0x1e8] sm:$0xff]
      %v302 = vld [vmem:[%s1 + $0x1f0] sm:$0xff]
      %v303 = vld [vmem:[%s1 + $0x1f8] sm:$0xff]
      %v304 = vld [vmem:[%s1 + $0x200] sm:$0xff]
      %v305 = vld [vmem:[%s1 + $0x208] sm:$0xff]
      %v306 = vld [vmem:[%s1 + $0x210] sm:$0xff]
      %v307 = vld [vmem:[%s1 + $0x218] sm:$0xff]
      %v308 = vld [vmem:[%s1 + $0x220] sm:$0xff]
      %v309 = vld [vmem:[%s1 + $0x228] sm:$0xff]
      %v310 = vld [vmem:[%s1 + $0x230] sm:$0xff]
      %v311 = vld [vmem:[%s1 + $0x238] sm:$0xff]
      %v312 = vld [vmem:[%s1 + $0x240] sm:$0xff]
      %v313 = vld [vmem:[%s1 + $0x248] sm:$0xff]
      %v314 = vld [vmem:[%s1 + $0x250] sm:$0xff]
      %v315 = vld [vmem:[%s1 + $0x258] sm:$0xff]
      %v316 = vld [vmem:[%s1 + $0x260] sm:$0xff]
      %v317 = vld [vmem:[%s1 + $0x268] sm:$0xff]
      %v318 = vld [vmem:[%s1 + $0x270] sm:$0xff]
      %v319 = vld [vmem:[%s1 + $0x278] sm:$0xff]
      %v320 = vld [vmem:[%s1 + $0x280] sm:$0xff]
      %v321 = vld [vmem:[%s1 + $0x288] sm:$0xff]
      %v322 = vld [vmem:[%s1 + $0x290] sm:$0xff]
      %v323 = vld [vmem:[%s1 + $0x298] sm:$0xff]
      %v324 = vld [vmem:[%s1 + $0x2a0] sm:$0xff]
      %v325 = vld [vmem:[%s1 + $0x2a8] sm:$0xff]
      %v326 = vld [vmem:[%s1 + $0x2b0] sm:$0xff]
      %v327 = vld [vmem:[%s1 + $0x2b8] sm:$0xff]
      %v328 = vld [vmem:[%s1 + $0x2c0] sm:$0xff]
      %v329 = vld [vmem:[%s1 + $0x2c8] sm:$0xff]
      %v330 = vld [vmem:[%s1 + $0x2d0] sm:$0xff]
      %v331 = vld [vmem:[%s1 + $0x2d8] sm:$0xff]
      %v332 = vld [vmem:[%s1 + $0x2e0] sm:$0xff]
      %v333 = vld [vmem:[%s1 + $0x2e8] sm:$0xff]
      %v334 = vld [vmem:[%s1 + $0x2f0] sm:$0xff]
      %v335 = vld [vmem:[%s1 + $0x2f8] sm:$0xff]
      %v336 = vld [vmem:[%s1 + $0x300] sm:$0xff]
      %v337 = vld [vmem:[%s1 + $0x308] sm:$0xff]
      %v338 = vld [vmem:[%s1 + $0x310] sm:$0xff]
      %v339 = vld [vmem:[%s1 + $0x318] sm:$0xff]
      %v340 = vld [vmem:[%s1 + $0x320] sm:$0xff]
      %v341 = vld [vmem:[%s1 + $0x328] sm:$0xff]
      %v342 = vld [vmem:[%s1 + $0x330] sm:$0xff]
      %v343 = vld [vmem:[%s1 + $0x338] sm:$0xff]
      %v344 = vld [vmem:[%s1 + $0x340] sm:$0xff]
      %v345 = vld [vmem:[%s1 + $0x348] sm:$0xff]
      %v346 = vld [vmem:[%s1 + $0x350] sm:$0xff]
      %v347 = vld [vmem:[%s1 + $0x358] sm:$0xff]
      %v348 = vld [vmem:[%s1 + $0x360] sm:$0xff]
      %v349 = vld [vmem:[%s1 + $0x368] sm:$0xff]
      %v350 = vld [vmem:[%s1 + $0x370] sm:$0xff]
      %v351 = vld [vmem:[%s1 + $0x378] sm:$0xff]
      %v352 = vld [vmem:[%s1 + $0x380] sm:$0xff]
      %v353 = vld [vmem:[%s1 + $0x388] sm:$0xff]
      %v354 = vld [vmem:[%s1 + $0x390] sm:$0xff]
      %v355 = vld [vmem:[%s1 + $0x398] sm:$0xff]
      %v356 = vld [vmem:[%s1 + $0x3a0] sm:$0xff]
      %v357 = vld [vmem:[%s1 + $0x3a8] sm:$0xff]
      %v358 = vld [vmem:[%s1 + $0x3b0] sm:$0xff]
      %v359 = vld [vmem:[%s1 + $0x3b8] sm:$0xff]
      %v360 = vld [vmem:[%s1 + $0x3c0] sm:$0xff]
      %v361 = vld [vmem:[%s1 + $0x3c8] sm:$0xff]
      %v362 = vld [vmem:[%s1 + $0x3d0] sm:$0xff]
      %v363 = vld [vmem:[%s1 + $0x3d8] sm:$0xff]
      %v364 = vld [vmem:[%s1 + $0x3e0] sm:$0xff]
      %v365 = vld [vmem:[%s1 + $0x3e8] sm:$0xff]
      %v366 = vld [vmem:[%s1 + $0x3f0] sm:$0xff]
      %v367 = vld [vmem:[%s1 + $0x3f8] sm:$0xff]
      %v368 = vld [vmem:[%s1 + $0x400] sm:$0xff]
      %v369 = vld [vmem:[%s1 + $0x408] sm:$0xff]
      %v370 = vld [vmem:[%s1 + $0x410] sm:$0xff]
      %v371 = vld [vmem:[%s1 + $0x418] sm:$0xff]
      %v372 = vld [vmem:[%s1 + $0x420] sm:$0xff]
      %v373 = vld [vmem:[%s1 + $0x428] sm:$0xff]
      %v374 = vld [vmem:[%s1 + $0x430] sm:$0xff]
      %v375 = vld [vmem:[%s1 + $0x438] sm:$0xff]
      %v376 = vld [vmem:[%s1 + $0x440] sm:$0xff]
      %v377 = vld [vmem:[%s1 + $0x448] sm:$0xff]
      %v378 = vld [vmem:[%s1 + $0x450] sm:$0xff]
      %v379 = vld [vmem:[%s1 + $0x458] sm:$0xff]
      %v380 = vld [vmem:[%s1 + $0x460] sm:$0xff]
      %v381 = vld [vmem:[%s1 + $0x468] sm:$0xff]
      %v382 = vld [vmem:[%s1 + $0x470] sm:$0xff]
      %v383 = vld [vmem:[%s1 + $0x478] sm:$0xff]
      %v384 = vld [vmem:[%s2] sm:$0x1]
      %v386 = vlaneseq
      %v387 = vshrl.u32 %v386, 7
      %v388 = vsub.s32 0, %v387
      %v389 = vrot.slane %v384, %v388
      %391 = vmatprep.subr.mxu0 0.0
      %392 = vmatpush1.msra.mxu0 %v240
      %393 = vmatprep.subr.mxu0 0.0
      %394 = vmatpush1.msra.mxu0 %v241
      %395 = vmatprep.subr.mxu0 0.0
      %396 = vmatpush1.msra.mxu0 %v242
      %397 = vmatprep.subr.mxu0 0.0
      %398 = vmatpush1.msra.mxu0 %v243
      %399 = vmatprep.subr.mxu0 0.0
      %400 = vmatpush1.msra.mxu0 %v244
      %401 = vmatprep.subr.mxu0 0.0
      %402 = vmatpush1.msra.mxu0 %v245
      %403 = vmatprep.subr.mxu0 0.0
      %404 = vmatpush1.msra.mxu0 %v246
      %405 = vmatprep.subr.mxu0 0.0
      %406 = vmatpush1.msra.mxu0 %v247
      %407 = vmatprep.subr.mxu0 0.0
      %408 = vmatpush1.msra.mxu0 %v248
      %409 = vmatprep.subr.mxu0 0.0
      %410 = vmatpush1.msra.mxu0 %v249
      %411 = vmatprep.subr.mxu0 0.0
      %412 = vmatpush1.msra.mxu0 %v250
      %413 = vmatprep.subr.mxu0 0.0
      %414 = vmatpush1.msra.mxu0 %v251
      %415 = vmatprep.subr.mxu0 0.0
      %416 = vmatpush1.msra.mxu0 %v252
      %417 = vmatprep.subr.mxu0 0.0
      %418 = vmatpush1.msra.mxu0 %v253
      %419 = vmatprep.subr.mxu0 0.0
      %420 = vmatpush1.msra.mxu0 %v254
      %421 = vmatprep.subr.mxu0 0.0
      %422 = vmatpush1.msra.mxu0 %v255
      %423 = vmatprep.subr.mxu0 0.0
      %424 = vmatpush1.msra.mxu0 %v256
      %425 = vmatprep.subr.mxu0 0.0
      %426 = vmatpush1.msra.mxu0 %v257
      %427 = vmatprep.subr.mxu0 0.0
      %428 = vmatpush1.msra.mxu0 %v258
      %429 = vmatprep.subr.mxu0 0.0
      %430 = vmatpush1.msra.mxu0 %v259
      %431 = vmatprep.subr.mxu0 0.0
      %432 = vmatpush1.msra.mxu0 %v260
      %433 = vmatprep.subr.mxu0 0.0
      %434 = vmatpush1.msra.mxu0 %v261
      %435 = vmatprep.subr.mxu0 0.0
      %436 = vmatpush1.msra.mxu0 %v262
      %437 = vmatprep.subr.mxu0 0.0
      %438 = vmatpush1.msra.mxu0 %v263
      %439 = vmatprep.subr.mxu0 0.0
      %440 = vmatpush1.msra.mxu0 %v264
      %441 = vmatprep.subr.mxu0 0.0
      %442 = vmatpush1.msra.mxu0 %v265
      %443 = vmatprep.subr.mxu0 0.0
      %444 = vmatpush1.msra.mxu0 %v266
      %445 = vmatprep.subr.mxu0 0.0
      %446 = vmatpush1.msra.mxu0 %v267
      %447 = vmatprep.subr.mxu0 0.0
      %448 = vmatpush1.msra.mxu0 %v268
      %449 = vmatprep.subr.mxu0 0.0
      %450 = vmatpush1.msra.mxu0 %v269
      %451 = vmatprep.subr.mxu0 0.0
      %452 = vmatpush1.msra.mxu0 %v270
      %453 = vmatprep.subr.mxu0 0.0
      %454 = vmatpush1.msra.mxu0 %v271
      %455 = vmatprep.mubr.f32.mxu0 %v214
      %456 = vmatmul.mubr.f32.gmra.mrb[0].mxu0 %v213
      %v457 = vpop.f32.mrb[0].mxu0
      %v458 = vadd.f32 %v389, %v457
      %v459 = vpop.f32.mrb[0].mxu0
      %460 = vmatprep.mubr.f32.mxu0 %v223
      %461 = vmatmul.mubr.f32.gmra.mrb[0].mxu0 %v222
      %v462 = vpop.f32.mrb[0].mxu0
      %v463 = vadd.f32 %v389, %v462
      %v464 = vpop.f32.mrb[0].mxu0
      %465 = vmatprep.mubr.f32.mxu0 %v232
      %466 = vmatmul.mubr.f32.gmra.mrb[0].mxu0 %v231
      %v467 = vpop.f32.mrb[0].mxu0
      %v468 = vadd.f32 %v389, %v467
      %v469 = vpop.f32.mrb[0].mxu0
      %470 = vdwg.mxu0
      %471 = vmatprep.subr.mxu0 0.0
      %472 = vmatpush1.msra.mxu0 %v272
      %473 = vmatprep.subr.mxu0 0.0
      %474 = vmatpush1.msra.mxu0 %v273
      %475 = vmatprep.subr.mxu0 0.0
      %476 = vmatpush1.msra.mxu0 %v274
      %477 = vmatprep.subr.mxu0 0.0
      %478 = vmatpush1.msra.mxu0 %v275
      %479 = vmatprep.subr.mxu0 0.0
      %480 = vmatpush1.msra.mxu0 %v276
      %481 = vmatprep.subr.mxu0 0.0
      %482 = vmatpush1.msra.mxu0 %v277
      %483 = vmatprep.subr.mxu0 0.0
      %484 = vmatpush1.msra.mxu0 %v278
      %485 = vmatprep.subr.mxu0 0.0
      %486 = vmatpush1.msra.mxu0 %v279
      %487 = vmatprep.subr.mxu0 0.0
      %488 = vmatpush1.msra.mxu0 %v280
      %489 = vmatprep.subr.mxu0 0.0
      %490 = vmatpush1.msra.mxu0 %v281
      %491 = vmatprep.subr.mxu0 0.0
      %492 = vmatpush1.msra.mxu0 %v282
      %493 = vmatprep.subr.mxu0 0.0
      %494 = vmatpush1.msra.mxu0 %v283
      %495 = vmatprep.subr.mxu0 0.0
      %496 = vmatpush1.msra.mxu0 %v284
      %497 = vmatprep.subr.mxu0 0.0
      %498 = vmatpush1.msra.mxu0 %v285
      %499 = vmatprep.subr.mxu0 0.0
      %500 = vmatpush1.msra.mxu0 %v286
      %501 = vmatprep.subr.mxu0 0.0
      %502 = vmatpush1.msra.mxu0 %v287
      %503 = vmatprep.subr.mxu0 0.0
      %504 = vmatpush1.msra.mxu0 %v288
      %505 = vmatprep.subr.mxu0 0.0
      %506 = vmatpush1.msra.mxu0 %v289
      %507 = vmatprep.subr.mxu0 0.0
      %508 = vmatpush1.msra.mxu0 %v290
      %509 = vmatprep.subr.mxu0 0.0
      %510 = vmatpush1.msra.mxu0 %v291
      %511 = vmatprep.subr.mxu0 0.0
      %512 = vmatpush1.msra.mxu0 %v292
      %513 = vmatprep.subr.mxu0 0.0
      %514 = vmatpush1.msra.mxu0 %v293
      %515 = vmatprep.subr.mxu0 0.0
      %516 = vmatpush1.msra.mxu0 %v294
      %517 = vmatprep.subr.mxu0 0.0
      %518 = vmatpush1.msra.mxu0 %v295
      %519 = vmatprep.subr.mxu0 0.0
      %520 = vmatpush1.msra.mxu0 %v296
      %521 = vmatprep.subr.mxu0 0.0
      %522 = vmatpush1.msra.mxu0 %v297
      %523 = vmatprep.subr.mxu0 0.0
      %524 = vmatpush1.msra.mxu0 %v298
      %525 = vmatprep.subr.mxu0 0.0
      %526 = vmatpush1.msra.mxu0 %v299
      %527 = vmatprep.subr.mxu0 0.0
      %528 = vmatpush1.msra.mxu0 %v300
      %529 = vmatprep.subr.mxu0 0.0
      %530 = vmatpush1.msra.mxu0 %v301
      %531 = vmatprep.subr.mxu0 0.0
      %532 = vmatpush1.msra.mxu0 %v302
      %533 = vmatprep.subr.mxu0 0.0
      %534 = vmatpush1.msra.mxu0 %v303
      %535 = vmatprep.mubr.f32.mxu0 %v216
      %536 = vmatmul.mubr.f32.gmra.mrb[0].mxu0 %v215
      %v537 = vpop.f32.mrb[0].mxu0
      %v538 = vadd.f32 %v458, %v537
      %v539 = vpop.f32.mrb[0].mxu0
      %540 = vmatprep.mubr.f32.mxu0 %v225
      %541 = vmatmul.mubr.f32.gmra.mrb[0].mxu0 %v224
      %v542 = vpop.f32.mrb[0].mxu0
      %v543 = vadd.f32 %v463, %v542
      %v544 = vpop.f32.mrb[0].mxu0
      %545 = vmatprep.mubr.f32.mxu0 %v234
      %546 = vmatmul.mubr.f32.gmra.mrb[0].mxu0 %v233
      %v547 = vpop.f32.mrb[0].mxu0
      %v548 = vadd.f32 %v468, %v547
      %v549 = vpop.f32.mrb[0].mxu0
      %550 = vdwg.mxu0
      %551 = vmatprep.subr.mxu0 0.0
      %552 = vmatpush1.msra.mxu0 %v304
      %553 = vmatprep.subr.mxu0 0.0
      %554 = vmatpush1.msra.mxu0 %v305
      %555 = vmatprep.subr.mxu0 0.0
      %556 = vmatpush1.msra.mxu0 %v306
      %557 = vmatprep.subr.mxu0 0.0
      %558 = vmatpush1.msra.mxu0 %v307
      %559 = vmatprep.subr.mxu0 0.0
      %560 = vmatpush1.msra.mxu0 %v308
      %561 = vmatprep.subr.mxu0 0.0
      %562 = vmatpush1.msra.mxu0 %v309
      %563 = vmatprep.subr.mxu0 0.0
      %564 = vmatpush1.msra.mxu0 %v310
      %565 = vmatprep.subr.mxu0 0.0
      %566 = vmatpush1.msra.mxu0 %v311
      %567 = vmatprep.subr.mxu0 0.0
      %568 = vmatpush1.msra.mxu0 %v312
      %569 = vmatprep.subr.mxu0 0.0
      %570 = vmatpush1.msra.mxu0 %v313
      %571 = vmatprep.subr.mxu0 0.0
      %572 = vmatpush1.msra.mxu0 %v314
      %573 = vmatprep.subr.mxu0 0.0
      %574 = vmatpush1.msra.mxu0 %v315
      %575 = vmatprep.subr.mxu0 0.0
      %576 = vmatpush1.msra.mxu0 %v316
      %577 = vmatprep.subr.mxu0 0.0
      %578 = vmatpush1.msra.mxu0 %v317
      %579 = vmatprep.subr.mxu0 0.0
      %580 = vmatpush1.msra.mxu0 %v318
      %581 = vmatprep.subr.mxu0 0.0
      %582 = vmatpush1.msra.mxu0 %v319
      %583 = vmatprep.subr.mxu0 0.0
      %584 = vmatpush1.msra.mxu0 %v320
      %585 = vmatprep.subr.mxu0 0.0
      %586 = vmatpush1.msra.mxu0 %v321
      %587 = vmatprep.subr.mxu0 0.0
      %588 = vmatpush1.msra.mxu0 %v322
      %589 = vmatprep.subr.mxu0 0.0
      %590 = vmatpush1.msra.mxu0 %v323
      %591 = vmatprep.subr.mxu0 0.0
      %592 = vmatpush1.msra.mxu0 %v324
      %593 = vmatprep.subr.mxu0 0.0
      %594 = vmatpush1.msra.mxu0 %v325
      %595 = vmatprep.subr.mxu0 0.0
      %596 = vmatpush1.msra.mxu0 %v326
      %597 = vmatprep.subr.mxu0 0.0
      %598 = vmatpush1.msra.mxu0 %v327
      %599 = vmatprep.subr.mxu0 0.0
      %600 = vmatpush1.msra.mxu0 %v328
      %601 = vmatprep.subr.mxu0 0.0
      %602 = vmatpush1.msra.mxu0 %v329
      %603 = vmatprep.subr.mxu0 0.0
      %604 = vmatpush1.msra.mxu0 %v330
      %605 = vmatprep.subr.mxu0 0.0
      %606 = vmatpush1.msra.mxu0 %v331
      %607 = vmatprep.subr.mxu0 0.0
      %608 = vmatpush1.msra.mxu0 %v332
      %609 = vmatprep.subr.mxu0 0.0
      %610 = vmatpush1.msra.mxu0 %v333
      %611 = vmatprep.subr.mxu0 0.0
      %612 = vmatpush1.msra.mxu0 %v334
      %613 = vmatprep.subr.mxu0 0.0
      %614 = vmatpush1.msra.mxu0 %v335
      %615 = vmatprep.mubr.f32.mxu0 %v218
      %616 = vmatmul.mubr.f32.gmra.mrb[0].mxu0 %v217
      %v617 = vpop.f32.mrb[0].mxu0
      %v618 = vadd.f32 %v538, %v617
      %v619 = vpop.f32.mrb[0].mxu0
      %620 = vmatprep.mubr.f32.mxu0 %v227
      %621 = vmatmul.mubr.f32.gmra.mrb[0].mxu0 %v226
      %v622 = vpop.f32.mrb[0].mxu0
      %v623 = vadd.f32 %v543, %v622
      %v624 = vpop.f32.mrb[0].mxu0
      %625 = vmatprep.mubr.f32.mxu0 %v236
      %626 = vmatmul.mubr.f32.gmra.mrb[0].mxu0 %v235
      %v627 = vpop.f32.mrb[0].mxu0
      %v628 = vadd.f32 %v548, %v627
      %v629 = vpop.f32.mrb[0].mxu0
      %630 = vdwg.mxu0
      %631 = vmatprep.subr.mxu0 0.0
      %632 = vmatpush1.msra.mxu0 %v336
      %633 = vmatprep.subr.mxu0 0.0
      %634 = vmatpush1.msra.mxu0 %v337
      %635 = vmatprep.subr.mxu0 0.0
      %636 = vmatpush1.msra.mxu0 %v338
      %637 = vmatprep.subr.mxu0 0.0
      %638 = vmatpush1.msra.mxu0 %v339
      %639 = vmatprep.subr.mxu0 0.0
      %640 = vmatpush1.msra.mxu0 %v340
      %641 = vmatprep.subr.mxu0 0.0
      %642 = vmatpush1.msra.mxu0 %v341
      %643 = vmatprep.subr.mxu0 0.0
      %644 = vmatpush1.msra.mxu0 %v342
      %645 = vmatprep.subr.mxu0 0.0
      %646 = vmatpush1.msra.mxu0 %v343
      %647 = vmatprep.subr.mxu0 0.0
      %648 = vmatpush1.msra.mxu0 %v344
      %649 = vmatprep.subr.mxu0 0.0
      %650 = vmatpush1.msra.mxu0 %v345
      %651 = vmatprep.subr.mxu0 0.0
      %652 = vmatpush1.msra.mxu0 %v346
      %653 = vmatprep.subr.mxu0 0.0
      %654 = vmatpush1.msra.mxu0 %v347
      %655 = vmatprep.subr.mxu0 0.0
      %656 = vmatpush1.msra.mxu0 %v348
      %657 = vmatprep.subr.mxu0 0.0
      %658 = vmatpush1.msra.mxu0 %v349
      %659 = vmatprep.subr.mxu0 0.0
      %660 = vmatpush1.msra.mxu0 %v350
      %661 = vmatprep.subr.mxu0 0.0
      %662 = vmatpush1.msra.mxu0 %v351
      %663 = vmatprep.subr.mxu0 0.0
      %664 = vmatpush1.msra.mxu0 %v352
      %665 = vmatprep.subr.mxu0 0.0
      %666 = vmatpush1.msra.mxu0 %v353
      %667 = vmatprep.subr.mxu0 0.0
      %668 = vmatpush1.msra.mxu0 %v354
      %669 = vmatprep.subr.mxu0 0.0
      %670 = vmatpush1.msra.mxu0 %v355
      %671 = vmatprep.subr.mxu0 0.0
      %672 = vmatpush1.msra.mxu0 %v356
      %673 = vmatprep.subr.mxu0 0.0
      %674 = vmatpush1.msra.mxu0 %v357
      %675 = vmatprep.subr.mxu0 0.0
      %676 = vmatpush1.msra.mxu0 %v358
      %677 = vmatprep.subr.mxu0 0.0
      %678 = vmatpush1.msra.mxu0 %v359
      %679 = vmatprep.subr.mxu0 0.0
      %680 = vmatpush1.msra.mxu0 %v360
      %681 = vmatprep.subr.mxu0 0.0
      %682 = vmatpush1.msra.mxu0 %v361
      %683 = vmatprep.subr.mxu0 0.0
      %684 = vmatpush1.msra.mxu0 %v362
      %685 = vmatprep.subr.mxu0 0.0
      %686 = vmatpush1.msra.mxu0 %v363
      %687 = vmatprep.subr.mxu0 0.0
      %688 = vmatpush1.msra.mxu0 %v364
      %689 = vmatprep.subr.mxu0 0.0
      %690 = vmatpush1.msra.mxu0 %v365
      %691 = vmatprep.subr.mxu0 0.0
      %692 = vmatpush1.msra.mxu0 %v366
      %693 = vmatprep.subr.mxu0 0.0
      %694 = vmatpush1.msra.mxu0 %v367
      %695 = vmatprep.mubr.f32.mxu0 %v220
      %696 = vmatmul.mubr.f32.gmra.mrb[0].mxu0 %v219
      %v697 = vpop.f32.mrb[0].mxu0
      %v698 = vadd.f32 %v618, %v697
      %v699 = vpop.f32.mrb[0].mxu0
      %700 = vmatprep.mubr.f32.mxu0 %v229
      %701 = vmatmul.mubr.f32.gmra.mrb[0].mxu0 %v228
      %v702 = vpop.f32.mrb[0].mxu0
      %v703 = vadd.f32 %v623, %v702
      %v704 = vpop.f32.mrb[0].mxu0
      %705 = vmatprep.mubr.f32.mxu0 %v238
      %706 = vmatmul.mubr.f32.gmra.mrb[0].mxu0 %v237
      %v707 = vpop.f32.mrb[0].mxu0
      %v708 = vadd.f32 %v628, %v707
      %v709 = vpop.f32.mrb[0].mxu0
      %710 = vdwg.mxu0
      %711 = vmatprep.subr.mxu0 0.0
      %712 = vmatpush1.msra.mxu0 %v368
      %713 = vmatprep.subr.mxu0 0.0
      %714 = vmatpush1.msra.mxu0 %v369
      %715 = vmatprep.subr.mxu0 0.0
      %716 = vmatpush1.msra.mxu0 %v370
      %717 = vmatprep.subr.mxu0 0.0
      %718 = vmatpush1.msra.mxu0 %v371
      %719 = vmatprep.subr.mxu0 0.0
      %720 = vmatpush1.msra.mxu0 %v372
      %721 = vmatprep.subr.mxu0 0.0
      %722 = vmatpush1.msra.mxu0 %v373
      %723 = vmatprep.subr.mxu0 0.0
      %724 = vmatpush1.msra.mxu0 %v374
      %725 = vmatprep.subr.mxu0 0.0
      %726 = vmatpush1.msra.mxu0 %v375
      %727 = vmatprep.subr.mxu0 0.0
      %728 = vmatpush1.msra.mxu0 %v376
      %729 = vmatprep.subr.mxu0 0.0
      %730 = vmatpush1.msra.mxu0 %v377
      %731 = vmatprep.subr.mxu0 0.0
      %732 = vmatpush1.msra.mxu0 %v378
      %733 = vmatprep.subr.mxu0 0.0
      %734 = vmatpush1.msra.mxu0 %v379
      %735 = vmatprep.subr.mxu0 0.0
      %736 = vmatpush1.msra.mxu0 %v380
      %737 = vmatprep.subr.mxu0 0.0
      %738 = vmatpush1.msra.mxu0 %v381
      %739 = vmatprep.subr.mxu0 0.0
      %740 = vmatpush1.msra.mxu0 %v382
      %741 = vmatprep.subr.mxu0 0.0
      %742 = vmatpush1.msra.mxu0 %v383
      %743 = vmatprep.subr.mxu0 0.0
      %744 = vmatpush1.msra.mxu0 0.0
      %745 = vmatprep.subr.mxu0 0.0
      %746 = vmatpush1.msra.mxu0 0.0
      %747 = vmatprep.subr.mxu0 0.0
      %748 = vmatpush1.msra.mxu0 0.0
      %749 = vmatprep.subr.mxu0 0.0
      %750 = vmatpush1.msra.mxu0 0.0
      %751 = vmatprep.subr.mxu0 0.0
      %752 = vmatpush1.msra.mxu0 0.0
      %753 = vmatprep.subr.mxu0 0.0
      %754 = vmatpush1.msra.mxu0 0.0
      %755 = vmatprep.subr.mxu0 0.0
      %756 = vmatpush1.msra.mxu0 0.0
      %757 = vmatprep.subr.mxu0 0.0
      %758 = vmatpush1.msra.mxu0 0.0
      %759 = vmatprep.subr.mxu0 0.0
      %760 = vmatpush1.msra.mxu0 0.0
      %761 = vmatprep.subr.mxu0 0.0
      %762 = vmatpush1.msra.mxu0 0.0
      %763 = vmatprep.subr.mxu0 0.0
      %764 = vmatpush1.msra.mxu0 0.0
      %765 = vmatprep.subr.mxu0 0.0
      %766 = vmatpush1.msra.mxu0 0.0
      %767 = vmatprep.subr.mxu0 0.0
      %768 = vmatpush1.msra.mxu0 0.0
      %769 = vmatprep.subr.mxu0 0.0
      %770 = vmatpush1.msra.mxu0 0.0
      %771 = vmatprep.subr.mxu0 0.0
      %772 = vmatpush1.msra.mxu0 0.0
      %773 = vmatprep.subr.mxu0 0.0
      %774 = vmatpush1.msra.mxu0 0.0
      %775 = vmatprep.mubr.f32.mxu0 0.0
      %776 = vmatmul.mubr.f32.gmra.mrb[0].mxu0 %v221
      %v777 = vpop.f32.mrb[0].mxu0
      %v778 = vadd.f32 %v698, %v777
      %v779 = vpop.f32.mrb[0].mxu0
      %780 = vmatprep.mubr.f32.mxu0 0.0
      %781 = vmatmul.mubr.f32.gmra.mrb[0].mxu0 %v230
      %v782 = vpop.f32.mrb[0].mxu0
      %v783 = vadd.f32 %v703, %v782
      %v784 = vpop.f32.mrb[0].mxu0
      %785 = vmatprep.mubr.f32.mxu0 0.0
      %786 = vmatmul.mubr.f32.gmra.mrb[0].mxu0 %v239
      %v787 = vpop.f32.mrb[0].mxu0
      %v788 = vadd.f32 %v708, %v787
      %v789 = vpop.f32.mrb[0].mxu0
      %790 = vdwg.mxu0
      %v791 = vxor.u32 %v778, 2147483648
      %v792 = vxor.u32 %v783, 2147483648
      %v793 = vxor.u32 %v788, 2147483648
      %v794 = vmul.f32 %v791, 1.442695
      %v795 = vpow.pop %v794
      %v796 = vmul.f32 %v792, 1.442695
      %v797 = vpow.pop %v796
      %v798 = vmul.f32 %v793, 1.442695
      %v799 = vpow.pop %v798
      %v800 = vadd.f32 %v795, 1.0
      %v801 = vadd.f32 %v797, 1.0
      %v802 = vadd.f32 %v799, 1.0
      %v803 = vrcp.pop %v800
      %v804 = vmul.f32 1.0, %v803
      %v805 = vrcp.pop %v801
      %v806 = vmul.f32 1.0, %v805
      %v807 = vrcp.pop %v802
      %v808 = vmul.f32 1.0, %v807
      %v809 = vmul.f32 %v778, %v804
      %v810 = vmul.f32 %v783, %v806
      %v811 = vmul.f32 %v788, %v808
      %812 = vst [vmem:[%s211] sm:$0xff] %v809
      %813 = vst [vmem:[%s211 + $0x8] sm:$0xff] %v810
      %814 = vst [vmem:[%s211 + $0x10] sm:$0xf] %v811
      %s815 = smul.u32 3, %s19
      %p816 = scmp.lt.s32.totalorder %s18, 1
      %s817 = scalar_select %p816, %s18, 1
      %p818 = scmp.lt.s32.totalorder %s815, 2
      %s819 = scalar_select %p818, %s815, 2
      %s820 = smul.addr %s817, 3
      %s821 = sadd.s32 %s819, %s820
      %s822 = smul.addr %s821, 8
      %s823 = scalar_lea.vmem %s3, %s822
      // Predicated region
      $region33: #{bev_controlnet_embedding_forward.14} parent=31 // pred_check
        %p824 = pneg %p116
      $region34: #{bev_controlnet_embedding_forward.14} parent=31 // pred_check_branch
        %826 = sbr.rel (%p824) target = $region36
      $region35: #{bev_controlnet_embedding_forward.14} parent=31 // pred_region
        %s827 = smul.u32 3, %s19
      $region36: #{bev_controlnet_embedding_forward.14} parent=31 // pred_fallthru
        _
    $region32: #{bev_controlnet_embedding_forward.14} parent=5 // pred_fallthru
      _
    %p828 = scmp.le.s32.totalorder 2, %s9
    // Predicated region
    $region37: #{bev_controlnet_embedding_forward.14} parent=5 // pred_check
      %p829 = pneg %p828
    $region38: #{bev_controlnet_embedding_forward.14} parent=5 // pred_check_branch
      %831 = sbr.rel (%p829) target = $region40
    $region39: #{bev_controlnet_embedding_forward.14} parent=5 // pred_region
      %s832 = ssub.s32 %s9, 2
      // Predicated region
      $region41: #{bev_controlnet_embedding_forward.14} parent=39 // pred_check
        %p833 = pneg %p122
      $region42: #{bev_controlnet_embedding_forward.14} parent=39 // pred_check_branch
        %835 = sbr.rel (%p833) target = $region44
      $region43: #{bev_controlnet_embedding_forward.14} parent=39 // pred_region
        %s836 = smul.u32 3, %s21
        %p837 = scmp.lt.s32.totalorder %s20, 1
        %s838 = scalar_select %p837, %s20, 1
        %p839 = scmp.lt.s32.totalorder %s836, 2
        %s840 = scalar_select %p839, %s836, 2
        %s841 = smul.addr %s838, 3
        %s842 = sadd.s32 %s840, %s841
        %s843 = smul.addr %s842, 8
        %s844 = scalar_lea.vmem %s3, %s843
      $region44: #{bev_controlnet_embedding_forward.14} parent=39 // pred_fallthru
        _
    $region40: #{bev_controlnet_embedding_forward.14} parent=5 // pred_fallthru
      _
  $region6: #{bev_controlnet_embedding_forward.14} parent=0 // loop_footer
    %s13 = sadd.s32 1, %s9
  $region7: #{bev_controlnet_embedding_forward.14} parent=0 // loop_footer_branch
    %8 = sbr.rel target = $region3
  $region8: #{bev_controlnet_embedding_forward.14} parent=0 // loop_exit
    _

// kernel: bev_controlnet_embedding_forward.15
$region0: #{bev_controlnet_embedding_forward.15}
  #allocation0 [shape = 'u32[]', space=smem, size = 0x4, offset = 0x4, fixed_abs, tag = 'smem constant byte address 0x4 - core index']
  #allocation1 [shape = 'u32[144,128]{1,0:T(1,128)}', space=vmem, size = 0x12000, scoped, tag = 'internal scratch']
  %s0 = inlined_call_operand.vmem [shape: f32[2,20,1152], index: 0, kind: input, shape index: {}]
  %s1 = inlined_call_operand.vmem [shape: f32[1152,128], index: 1, kind: input, shape index: {}]
  %s2 = inlined_call_operand.vmem [shape: f32[1,128], index: 2, kind: input, shape index: {}]
  %s3 = inlined_call_operand.vmem [shape: f32[2,20,128], index: 3, kind: output, shape index: {}]
  %s4 = sld [smem:[#allocation0]]
  $region45: #{bev_controlnet_embedding_forward.15} parent=0
    _
  %s6 = ssub.s32 1, %s4
  %s7 = scalar_select 0, %s6, %s4
  loop: start=0, step=1, limit=4
  $region2: #{bev_controlnet_embedding_forward.15} parent=0 // loop_pre_header
    _
  $region3: #{bev_controlnet_embedding_forward.15} parent=0 // loop_header
    %s9 = sphi 0, %s13
    %p10 = scmp.ge.s32.totalorder %s9, 4
    %s16 = sphi 0, %s28
    %s17 = sphi 0, %s24
    %s18 = sphi 0, %s16
    %s19 = sphi 0, %s17
    %s20 = sphi 0, %s18
    %s21 = sphi 0, %s19
    %s33 = sphi 0, %s35
    %s36 = sphi 0, %s33
    %s37 = sphi 0, %s36
    %s53 = sphi 0, %s37
    %s57 = sphi 0, %s57
    %s59 = sphi 0, %s57
    %s60 = sphi 0, %s59
    %s74 = sphi 0, %s60
    %s78 = sphi 0, %s78
    %s80 = sphi 0, %s78
    %s81 = sphi 0, %s80
    %s95 = sphi 0, %s81
    %s103 = sphi 0, %s105
    %s106 = sphi 0, %s103
    %s107 = sphi 0, %s106
    %s123 = sphi 0, %s107
  $region4: #{bev_controlnet_embedding_forward.15} parent=0 // loop_header_branch
    %12 = sbr.rel (%p10) target = $region8
  $region5: #{bev_controlnet_embedding_forward.15} parent=0 // loop_body
    %s14 = ssub.s32 %s9, 1
    %s15 = ssub.s32 %s9, 2
    %s22 = sadd.s32 1, %s17
    %p23 = scmp.ge.s32.totalorder %s22, 1
    %s24 = scalar_select %p23, 0, %s22
    %s25 = sadd.s32 1, %s16
    %s26 = scalar_select %p23, %s25, %s16
    %p27 = scmp.ge.s32.totalorder %s26, 2
    %s28 = scalar_select %p27, 0, %s26
    %s29 = ssub.s32 %s16, %s28
    %s30 = ssub.s32 %s17, %s24
    %s31 = sor.u32 %s29, %s30
    %p32 = scmp.eq.s32.totalorder %s31, 0
    %s34 = sadd.s32 %s33, 1
    %s35 = scalar_select %p32, %s33, %s34
    %p38 = pneg %p32
    %p39 = scmp.eq.s32.totalorder %s9, 1
    %p40 = por %p38, %p39
    %p41 = scmp.ne.s32.totalorder %s33, %s36
    %p42 = scmp.eq.s32.totalorder %s9, 0
    %p43 = por %p41, %p42
    %p44 = scmp.ne.s32.totalorder %s33, %s36
    %p45 = scmp.eq.s32.totalorder %s14, 1
    %p46 = por %p44, %p45
    %p47 = scmp.ne.s32.totalorder %s36, %s37
    %p48 = scmp.eq.s32.totalorder %s14, 0
    %p49 = por %p47, %p48
    %p50 = scmp.ne.s32.totalorder %s36, %s37
    %p51 = scmp.eq.s32.totalorder %s15, 1
    %p52 = por %p50, %p51
    %p54 = scmp.ne.s32.totalorder %s37, %s53
    %p55 = scmp.eq.s32.totalorder %s15, 0
    %p56 = por %p54, %p55
    %s58 = sadd.s32 %s57, 1
    %p61 = scmp.eq.s32.totalorder %s9, 1
    %p62 = scmp.ne.s32.totalorder %s57, %s59
    %p63 = scmp.eq.s32.totalorder %s9, 0
    %p64 = por %p62, %p63
    %p65 = scmp.ne.s32.totalorder %s57, %s59
    %p66 = scmp.eq.s32.totalorder %s14, 1
    %p67 = por %p65, %p66
    %p68 = scmp.ne.s32.totalorder %s59, %s60
    %p69 = scmp.eq.s32.totalorder %s14, 0
    %p70 = por %p68, %p69
    %p71 = scmp.ne.s32.totalorder %s59, %s60
    %p72 = scmp.eq.s32.totalorder %s15, 1
    %p73 = por %p71, %p72
    %p75 = scmp.ne.s32.totalorder %s60, %s74
    %p76 = scmp.eq.s32.totalorder %s15, 0
    %p77 = por %p75, %p76
    %s79 = sadd.s32 %s78, 1
    %p82 = scmp.eq.s32.totalorder %s9, 1
    %p83 = scmp.ne.s32.totalorder %s78, %s80
    %p84 = scmp.eq.s32.totalorder %s9, 0
    %p85 = por %p83, %p84
    %p86 = scmp.ne.s32.totalorder %s78, %s80
    %p87 = scmp.eq.s32.totalorder %s14, 1
    %p88 = por %p86, %p87
    %p89 = scmp.ne.s32.totalorder %s80, %s81
    %p90 = scmp.eq.s32.totalorder %s14, 0
    %p91 = por %p89, %p90
    %p92 = scmp.ne.s32.totalorder %s80, %s81
    %p93 = scmp.eq.s32.totalorder %s15, 1
    %p94 = por %p92, %p93
    %p96 = scmp.ne.s32.totalorder %s81, %s95
    %p97 = scmp.eq.s32.totalorder %s15, 0
    %p98 = por %p96, %p97
    %s99 = ssub.s32 %s16, %s28
    %s100 = ssub.s32 %s17, %s24
    %s101 = sor.u32 %s99, %s100
    %p102 = scmp.eq.s32.totalorder %s101, 0
    %s104 = sadd.s32 %s103, 1
    %s105 = scalar_select %p102, %s103, %s104
    %p108 = pneg %p102
    %p109 = scmp.eq.s32.totalorder %s9, 1
    %p110 = por %p108, %p109
    %p111 = scmp.ne.s32.totalorder %s103, %s106
    %p112 = scmp.eq.s32.totalorder %s9, 0
    %p113 = por %p111, %p112
    %p114 = scmp.ne.s32.totalorder %s103, %s106
    %p115 = scmp.eq.s32.totalorder %s14, 1
    %p116 = por %p114, %p115
    %p117 = scmp.ne.s32.totalorder %s106, %s107
    %p118 = scmp.eq.s32.totalorder %s14, 0
    %p119 = por %p117, %p118
    %p120 = scmp.ne.s32.totalorder %s106, %s107
    %p121 = scmp.eq.s32.totalorder %s15, 1
    %p122 = por %p120, %p121
    %p124 = scmp.ne.s32.totalorder %s107, %s123
    %p125 = scmp.eq.s32.totalorder %s15, 0
    %p126 = por %p124, %p125
    %p127 = scmp.le.s32.totalorder 1, %s9
    %p128 = scmp.lt.s32.totalorder %s9, 3
    %p129 = pnand %p127, %p128
    %p130 = pneg %p129
    // Predicated region
    $region9: #{bev_controlnet_embedding_forward.15} parent=5 // pred_check
      _
    $region10: #{bev_controlnet_embedding_forward.15} parent=5 // pred_check_branch
      %132 = sbr.rel (%p129) target = $region12
    $region11: #{bev_controlnet_embedding_forward.15} parent=5 // pred_region
      %s133 = ssub.s32 %s9, 1
      // Predicated region
      $region13: #{bev_controlnet_embedding_forward.15} parent=11 // pred_check
        %p134 = pneg %p70
      $region14: #{bev_controlnet_embedding_forward.15} parent=11 // pred_check_branch
        %136 = sbr.rel (%p134) target = $region16
      $region15: #{bev_controlnet_embedding_forward.15} parent=11 // pred_region
        _
      $region16: #{bev_controlnet_embedding_forward.15} parent=11 // pred_fallthru
        _
      // Predicated region
      $region17: #{bev_controlnet_embedding_forward.15} parent=11 // pred_check
        %p137 = pneg %p91
      $region18: #{bev_controlnet_embedding_forward.15} parent=11 // pred_check_branch
        %139 = sbr.rel (%p137) target = $region20
      $region19: #{bev_controlnet_embedding_forward.15} parent=11 // pred_region
        _
      $region20: #{bev_controlnet_embedding_forward.15} parent=11 // pred_fallthru
        _
    $region12: #{bev_controlnet_embedding_forward.15} parent=5 // pred_fallthru
      _
    %p140 = scmp.lt.s32.totalorder %s9, 2
    // Predicated region
    $region21: #{bev_controlnet_embedding_forward.15} parent=5 // pred_check
      %p141 = pneg %p140
    $region22: #{bev_controlnet_embedding_forward.15} parent=5 // pred_check_branch
      %143 = sbr.rel (%p141) target = $region24
    $region23: #{bev_controlnet_embedding_forward.15} parent=5 // pred_region
      // Predicated region
      $region25: #{bev_controlnet_embedding_forward.15} parent=23 // pred_check
        %p144 = pneg %p43
      $region26: #{bev_controlnet_embedding_forward.15} parent=23 // pred_check_branch
        %146 = sbr.rel (%p144) target = $region28
      $region27: #{bev_controlnet_embedding_forward.15} parent=23 // pred_region
        %s147 = smul.u32 3, %s17
        %p148 = scmp.lt.s32.totalorder %s16, 1
        %s149 = scalar_select %p148, %s16, 1
        %p150 = scmp.lt.s32.totalorder %s147, 2
        %s151 = scalar_select %p150, %s147, 2
        %s152 = smul.addr %s151, 9
        %s153 = smul.addr %s149, 27
        %s154 = sadd.s32 %s152, %s153
        %s155 = smul.addr %s154, 8
        %s156 = scalar_lea.vmem %s0, %s155
        %s157 = smul.u32 3, %s17
      $region28: #{bev_controlnet_embedding_forward.15} parent=23 // pred_fallthru
        _
    $region24: #{bev_controlnet_embedding_forward.15} parent=5 // pred_fallthru
      _
    %p158 = scmp.le.s32.totalorder 1, %s9
    %p159 = scmp.lt.s32.totalorder %s9, 3
    %p160 = pnand %p158, %p159
    %p161 = pneg %p160
    // Predicated region
    $region29: #{bev_controlnet_embedding_forward.15} parent=5 // pred_check
      _
    $region30: #{bev_controlnet_embedding_forward.15} parent=5 // pred_check_branch
      %163 = sbr.rel (%p160) target = $region32
    $region31: #{bev_controlnet_embedding_forward.15} parent=5 // pred_region
      %s164 = ssub.s32 %s9, 1
      %s165 = smul.u32 3, %s19
      %p166 = scmp.lt.s32.totalorder %s18, 1
      %s167 = scalar_select %p166, %s18, 1
      %p168 = scmp.lt.s32.totalorder %s165, 2
      %s169 = scalar_select %p168, %s165, 2
      %s170 = smul.addr %s169, 9
      %s171 = smul.addr %s167, 27
      %s172 = sadd.s32 %s170, %s171
      %s173 = smul.addr %s172, 8
      %s174 = scalar_lea.vmem %s0, %s173
      %p175 = pneg %p49
      %p176 = pneg %p46
      %p177 = pneg %p70
      %p178 = pneg %p67
      %p179 = pneg %p91
      %p180 = pneg %p88
      %p181 = pneg %p119
      %p182 = pneg %p116
      %s183 = smul.u32 3, %s19
      %p184 = scmp.lt.s32.totalorder %s18, 1
      %s185 = scalar_select %p184, %s18, 1
      %p186 = scmp.lt.s32.totalorder %s183, 2
      %s187 = scalar_select %p186, %s183, 2
      %s188 = smul.addr %s185, 3
      %s189 = sadd.s32 %s187, %s188
      %s190 = smul.addr %s189, 8
      %s191 = scalar_lea.vmem %s3, %s190
      %s192 = smul.u32 3, %s19
      %p193 = scmp.lt.s32.totalorder %s18, 1
      %s194 = scalar_select %p193, %s18, 1
      %p195 = scmp.lt.s32.totalorder %s192, 2
      %s196 = scalar_select %p195, %s192, 2
      %s197 = smul.addr %s196, 9
      %s198 = smul.addr %s194, 27
      %s199 = sadd.s32 %s197, %s198
      %s200 = smul.addr %s199, 8
      %s201 = scalar_lea.vmem %s0, %s200
      %s202 = smul.u32 3, %s19
      %s203 = smul.u32 3, %s19
      %p204 = scmp.lt.s32.totalorder %s18, 1
      %s205 = scalar_select %p204, %s18, 1
      %p206 = scmp.lt.s32.totalorder %s203, 2
      %s207 = scalar_select %p206, %s203, 2
      %s208 = smul.addr %s205, 3
      %s209 = sadd.s32 %s207, %s208
      %s210 = smul.addr %s209, 8
      %s211 = scalar_lea.vmem %s3, %s210
      %s212 = smul.u32 3, %s19
      %v213 = vld [vmem:[%s201] sm:$0xff]
      %v214 = vld [vmem:[%s201 + $0x8] sm:$0xff]
      %v215 = vld [vmem:[%s201 + $0x10] sm:$0xff]
      %v216 = vld [vmem:[%s201 + $0x18] sm:$0xff]
      %v217 = vld [vmem:[%s201 + $0x20] sm:$0xff]
      %v218 = vld [vmem:[%s201 + $0x28] sm:$0xff]
      %v219 = vld [vmem:[%s201 + $0x30] sm:$0xff]
      %v220 = vld [vmem:[%s201 + $0x38] sm:$0xff]
      %v221 = vld [vmem:[%s201 + $0x40] sm:$0xff]
      %v222 = vld [vmem:[%s201 + $0x48] sm:$0xff]
      %v223 = vld [vmem:[%s201 + $0x50] sm:$0xff]
      %v224 = vld [vmem:[%s201 + $0x58] sm:$0xff]
      %v225 = vld [vmem:[%s201 + $0x60] sm:$0xff]
      %v226 = vld [vmem:[%s201 + $0x68] sm:$0xff]
      %v227 = vld [vmem:[%s201 + $0x70] sm:$0xff]
      %v228 = vld [vmem:[%s201 + $0x78] sm:$0xff]
      %v229 = vld [vmem:[%s201 + $0x80] sm:$0xff]
      %v230 = vld [vmem:[%s201 + $0x88] sm:$0xff]
      %v231 = vld [vmem:[%s201 + $0x90] sm:$0xf]
      %v232 = vld [vmem:[%s201 + $0x98] sm:$0xf]
      %v233 = vld [vmem:[%s201 + $0xa0] sm:$0xf]
      %v234 = vld [vmem:[%s201 + $0xa8] sm:$0xf]
      %v235 = vld [vmem:[%s201 + $0xb0] sm:$0xf]
      %v236 = vld [vmem:[%s201 + $0xb8] sm:$0xf]
      %v237 = vld [vmem:[%s201 + $0xc0] sm:$0xf]
      %v238 = vld [vmem:[%s201 + $0xc8] sm:$0xf]
      %v239 = vld [vmem:[%s201 + $0xd0] sm:$0xf]
      %v240 = vld [vmem:[%s1] sm:$0xff]
      %v241 = vld [vmem:[%s1 + $0x8] sm:$0xff]
      %v242 = vld [vmem:[%s1 + $0x10] sm:$0xff]
      %v243 = vld [vmem:[%s1 + $0x18] sm:$0xff]
      %v244 = vld [vmem:[%s1 + $0x20] sm:$0xff]
      %v245 = vld [vmem:[%s1 + $0x28] sm:$0xff]
      %v246 = vld [vmem:[%s1 + $0x30] sm:$0xff]
      %v247 = vld [vmem:[%s1 + $0x38] sm:$0xff]
      %v248 = vld [vmem:[%s1 + $0x40] sm:$0xff]
      %v249 = vld [vmem:[%s1 + $0x48] sm:$0xff]
      %v250 = vld [vmem:[%s1 + $0x50] sm:$0xff]
      %v251 = vld [vmem:[%s1 + $0x58] sm:$0xff]
      %v252 = vld [vmem:[%s1 + $0x60] sm:$0xff]
      %v253 = vld [vmem:[%s1 + $0x68] sm:$0xff]
      %v254 = vld [vmem:[%s1 + $0x70] sm:$0xff]
      %v255 = vld [vmem:[%s1 + $0x78] sm:$0xff]
      %v256 = vld [vmem:[%s1 + $0x80] sm:$0xff]
      %v257 = vld [vmem:[%s1 + $0x88] sm:$0xff]
      %v258 = vld [vmem:[%s1 + $0x90] sm:$0xff]
      %v259 = vld [vmem:[%s1 + $0x98] sm:$0xff]
      %v260 = vld [vmem:[%s1 + $0xa0] sm:$0xff]
      %v261 = vld [vmem:[%s1 + $0xa8] sm:$0xff]
      %v262 = vld [vmem:[%s1 + $0xb0] sm:$0xff]
      %v263 = vld [vmem:[%s1 + $0xb8] sm:$0xff]
      %v264 = vld [vmem:[%s1 + $0xc0] sm:$0xff]
      %v265 = vld [vmem:[%s1 + $0xc8] sm:$0xff]
      %v266 = vld [vmem:[%s1 + $0xd0] sm:$0xff]
      %v267 = vld [vmem:[%s1 + $0xd8] sm:$0xff]
      %v268 = vld [vmem:[%s1 + $0xe0] sm:$0xff]
      %v269 = vld [vmem:[%s1 + $0xe8] sm:$0xff]
      %v270 = vld [vmem:[%s1 + $0xf0] sm:$0xff]
      %v271 = vld [vmem:[%s1 + $0xf8] sm:$0xff]
      %v272 = vld [vmem:[%s1 + $0x100] sm:$0xff]
      %v273 = vld [vmem:[%s1 + $0x108] sm:$0xff]
      %v274 = vld [vmem:[%s1 + $0x110] sm:$0xff]
      %v275 = vld [vmem:[%s1 + $0x118] sm:$0xff]
      %v276 = vld [vmem:[%s1 + $0x120] sm:$0xff]
      %v277 = vld [vmem:[%s1 + $0x128] sm:$0xff]
      %v278 = vld [vmem:[%s1 + $0x130] sm:$0xff]
      %v279 = vld [vmem:[%s1 + $0x138] sm:$0xff]
      %v280 = vld [vmem:[%s1 + $0x140] sm:$0xff]
      %v281 = vld [vmem:[%s1 + $0x148] sm:$0xff]
      %v282 = vld [vmem:[%s1 + $0x150] sm:$0xff]
      %v283 = vld [vmem:[%s1 + $0x158] sm:$0xff]
      %v284 = vld [vmem:[%s1 + $0x160] sm:$0xff]
      %v285 = vld [vmem:[%s1 + $0x168] sm:$0xff]
      %v286 = vld [vmem:[%s1 + $0x170] sm:$0xff]
      %v287 = vld [vmem:[%s1 + $0x178] sm:$0xff]
      %v288 = vld [vmem:[%s1 + $0x180] sm:$0xff]
      %v289 = vld [vmem:[%s1 + $0x188] sm:$0xff]
      %v290 = vld [vmem:[%s1 + $0x190] sm:$0xff]
      %v291 = vld [vmem:[%s1 + $0x198] sm:$0xff]
      %v292 = vld [vmem:[%s1 + $0x1a0] sm:$0xff]
      %v293 = vld [vmem:[%s1 + $0x1a8] sm:$0xff]
      %v294 = vld [vmem:[%s1 + $0x1b0] sm:$0xff]
      %v295 = vld [vmem:[%s1 + $0x1b8] sm:$0xff]
      %v296 = vld [vmem:[%s1 + $0x1c0] sm:$0xff]
      %v297 = vld [vmem:[%s1 + $0x1c8] sm:$0xff]
      %v298 = vld [vmem:[%s1 + $0x1d0] sm:$0xff]
      %v299 = vld [vmem:[%s1 + $0x1d8] sm:$0xff]
      %v300 = vld [vmem:[%s1 + $0x1e0] sm:$0xff]
      %v301 = vld [vmem:[%s1 + $0x1e8] sm:$0xff]
      %v302 = vld [vmem:[%s1 + $0x1f0] sm:$0xff]
      %v303 = vld [vmem:[%s1 + $0x1f8] sm:$0xff]
      %v304 = vld [vmem:[%s1 + $0x200] sm:$0xff]
      %v305 = vld [vmem:[%s1 + $0x208] sm:$0xff]
      %v306 = vld [vmem:[%s1 + $0x210] sm:$0xff]
      %v307 = vld [vmem:[%s1 + $0x218] sm:$0xff]
      %v308 = vld [vmem:[%s1 + $0x220] sm:$0xff]
      %v309 = vld [vmem:[%s1 + $0x228] sm:$0xff]
      %v310 = vld [vmem:[%s1 + $0x230] sm:$0xff]
      %v311 = vld [vmem:[%s1 + $0x238] sm:$0xff]
      %v312 = vld [vmem:[%s1 + $0x240] sm:$0xff]
      %v313 = vld [vmem:[%s1 + $0x248] sm:$0xff]
      %v314 = vld [vmem:[%s1 + $0x250] sm:$0xff]
      %v315 = vld [vmem:[%s1 + $0x258] sm:$0xff]
      %v316 = vld [vmem:[%s1 + $0x260] sm:$0xff]
      %v317 = vld [vmem:[%s1 + $0x268] sm:$0xff]
      %v318 = vld [vmem:[%s1 + $0x270] sm:$0xff]
      %v319 = vld [vmem:[%s1 + $0x278] sm:$0xff]
      %v320 = vld [vmem:[%s1 + $0x280] sm:$0xff]
      %v321 = vld [vmem:[%s1 + $0x288] sm:$0xff]
      %v322 = vld [vmem:[%s1 + $0x290] sm:$0xff]
      %v323 = vld [vmem:[%s1 + $0x298] sm:$0xff]
      %v324 = vld [vmem:[%s1 + $0x2a0] sm:$0xff]
      %v325 = vld [vmem:[%s1 + $0x2a8] sm:$0xff]
      %v326 = vld [vmem:[%s1 + $0x2b0] sm:$0xff]
      %v327 = vld [vmem:[%s1 + $0x2b8] sm:$0xff]
      %v328 = vld [vmem:[%s1 + $0x2c0] sm:$0xff]
      %v329 = vld [vmem:[%s1 + $0x2c8] sm:$0xff]
      %v330 = vld [vmem:[%s1 + $0x2d0] sm:$0xff]
      %v331 = vld [vmem:[%s1 + $0x2d8] sm:$0xff]
      %v332 = vld [vmem:[%s1 + $0x2e0] sm:$0xff]
      %v333 = vld [vmem:[%s1 + $0x2e8] sm:$0xff]
      %v334 = vld [vmem:[%s1 + $0x2f0] sm:$0xff]
      %v335 = vld [vmem:[%s1 + $0x2f8] sm:$0xff]
      %v336 = vld [vmem:[%s1 + $0x300] sm:$0xff]
      %v337 = vld [vmem:[%s1 + $0x308] sm:$0xff]
      %v338 = vld [vmem:[%s1 + $0x310] sm:$0xff]
      %v339 = vld [vmem:[%s1 + $0x318] sm:$0xff]
      %v340 = vld [vmem:[%s1 + $0x320] sm:$0xff]
      %v341 = vld [vmem:[%s1 + $0x328] sm:$0xff]
      %v342 = vld [vmem:[%s1 + $0x330] sm:$0xff]
      %v343 = vld [vmem:[%s1 + $0x338] sm:$0xff]
      %v344 = vld [vmem:[%s1 + $0x340] sm:$0xff]
      %v345 = vld [vmem:[%s1 + $0x348] sm:$0xff]
      %v346 = vld [vmem:[%s1 + $0x350] sm:$0xff]
      %v347 = vld [vmem:[%s1 + $0x358] sm:$0xff]
      %v348 = vld [vmem:[%s1 + $0x360] sm:$0xff]
      %v349 = vld [vmem:[%s1 + $0x368] sm:$0xff]
      %v350 = vld [vmem:[%s1 + $0x370] sm:$0xff]
      %v351 = vld [vmem:[%s1 + $0x378] sm:$0xff]
      %v352 = vld [vmem:[%s1 + $0x380] sm:$0xff]
      %v353 = vld [vmem:[%s1 + $0x388] sm:$0xff]
      %v354 = vld [vmem:[%s1 + $0x390] sm:$0xff]
      %v355 = vld [vmem:[%s1 + $0x398] sm:$0xff]
      %v356 = vld [vmem:[%s1 + $0x3a0] sm:$0xff]
      %v357 = vld [vmem:[%s1 + $0x3a8] sm:$0xff]
      %v358 = vld [vmem:[%s1 + $0x3b0] sm:$0xff]
      %v359 = vld [vmem:[%s1 + $0x3b8] sm:$0xff]
      %v360 = vld [vmem:[%s1 + $0x3c0] sm:$0xff]
      %v361 = vld [vmem:[%s1 + $0x3c8] sm:$0xff]
      %v362 = vld [vmem:[%s1 + $0x3d0] sm:$0xff]
      %v363 = vld [vmem:[%s1 + $0x3d8] sm:$0xff]
      %v364 = vld [vmem:[%s1 + $0x3e0] sm:$0xff]
      %v365 = vld [vmem:[%s1 + $0x3e8] sm:$0xff]
      %v366 = vld [vmem:[%s1 + $0x3f0] sm:$0xff]
      %v367 = vld [vmem:[%s1 + $0x3f8] sm:$0xff]
      %v368 = vld [vmem:[%s1 + $0x400] sm:$0xff]
      %v369 = vld [vmem:[%s1 + $0x408] sm:$0xff]
      %v370 = vld [vmem:[%s1 + $0x410] sm:$0xff]
      %v371 = vld [vmem:[%s1 + $0x418] sm:$0xff]
      %v372 = vld [vmem:[%s1 + $0x420] sm:$0xff]
      %v373 = vld [vmem:[%s1 + $0x428] sm:$0xff]
      %v374 = vld [vmem:[%s1 + $0x430] sm:$0xff]
      %v375 = vld [vmem:[%s1 + $0x438] sm:$0xff]
      %v376 = vld [vmem:[%s1 + $0x440] sm:$0xff]
      %v377 = vld [vmem:[%s1 + $0x448] sm:$0xff]
      %v378 = vld [vmem:[%s1 + $0x450] sm:$0xff]
      %v379 = vld [vmem:[%s1 + $0x458] sm:$0xff]
      %v380 = vld [vmem:[%s1 + $0x460] sm:$0xff]
      %v381 = vld [vmem:[%s1 + $0x468] sm:$0xff]
      %v382 = vld [vmem:[%s1 + $0x470] sm:$0xff]
      %v383 = vld [vmem:[%s1 + $0x478] sm:$0xff]
      %v384 = vld [vmem:[%s2] sm:$0x1]
      %v386 = vlaneseq
      %v387 = vshrl.u32 %v386, 7
      %v388 = vsub.s32 0, %v387
      %v389 = vrot.slane %v384, %v388
      %391 = vmatprep.subr.mxu0 0.0
      %392 = vmatpush1.msra.mxu0 %v240
      %393 = vmatprep.subr.mxu0 0.0
      %394 = vmatpush1.msra.mxu0 %v241
      %395 = vmatprep.subr.mxu0 0.0
      %396 = vmatpush1.msra.mxu0 %v242
      %397 = vmatprep.subr.mxu0 0.0
      %398 = vmatpush1.msra.mxu0 %v243
      %399 = vmatprep.subr.mxu0 0.0
      %400 = vmatpush1.msra.mxu0 %v244
      %401 = vmatprep.subr.mxu0 0.0
      %402 = vmatpush1.msra.mxu0 %v245
      %403 = vmatprep.subr.mxu0 0.0
      %404 = vmatpush1.msra.mxu0 %v246
      %405 = vmatprep.subr.mxu0 0.0
      %406 = vmatpush1.msra.mxu0 %v247
      %407 = vmatprep.subr.mxu0 0.0
      %408 = vmatpush1.msra.mxu0 %v248
      %409 = vmatprep.subr.mxu0 0.0
      %410 = vmatpush1.msra.mxu0 %v249
      %411 = vmatprep.subr.mxu0 0.0
      %412 = vmatpush1.msra.mxu0 %v250
      %413 = vmatprep.subr.mxu0 0.0
      %414 = vmatpush1.msra.mxu0 %v251
      %415 = vmatprep.subr.mxu0 0.0
      %416 = vmatpush1.msra.mxu0 %v252
      %417 = vmatprep.subr.mxu0 0.0
      %418 = vmatpush1.msra.mxu0 %v253
      %419 = vmatprep.subr.mxu0 0.0
      %420 = vmatpush1.msra.mxu0 %v254
      %421 = vmatprep.subr.mxu0 0.0
      %422 = vmatpush1.msra.mxu0 %v255
      %423 = vmatprep.subr.mxu0 0.0
      %424 = vmatpush1.msra.mxu0 %v256
      %425 = vmatprep.subr.mxu0 0.0
      %426 = vmatpush1.msra.mxu0 %v257
      %427 = vmatprep.subr.mxu0 0.0
      %428 = vmatpush1.msra.mxu0 %v258
      %429 = vmatprep.subr.mxu0 0.0
      %430 = vmatpush1.msra.mxu0 %v259
      %431 = vmatprep.subr.mxu0 0.0
      %432 = vmatpush1.msra.mxu0 %v260
      %433 = vmatprep.subr.mxu0 0.0
      %434 = vmatpush1.msra.mxu0 %v261
      %435 = vmatprep.subr.mxu0 0.0
      %436 = vmatpush1.msra.mxu0 %v262
      %437 = vmatprep.subr.mxu0 0.0
      %438 = vmatpush1.msra.mxu0 %v263
      %439 = vmatprep.subr.mxu0 0.0
      %440 = vmatpush1.msra.mxu0 %v264
      %441 = vmatprep.subr.mxu0 0.0
      %442 = vmatpush1.msra.mxu0 %v265
      %443 = vmatprep.subr.mxu0 0.0
      %444 = vmatpush1.msra.mxu0 %v266
      %445 = vmatprep.subr.mxu0 0.0
      %446 = vmatpush1.msra.mxu0 %v267
      %447 = vmatprep.subr.mxu0 0.0
      %448 = vmatpush1.msra.mxu0 %v268
      %449 = vmatprep.subr.mxu0 0.0
      %450 = vmatpush1.msra.mxu0 %v269
      %451 = vmatprep.subr.mxu0 0.0
      %452 = vmatpush1.msra.mxu0 %v270
      %453 = vmatprep.subr.mxu0 0.0
      %454 = vmatpush1.msra.mxu0 %v271
      %455 = vmatprep.mubr.f32.mxu0 %v214
      %456 = vmatmul.mubr.f32.gmra.mrb[0].mxu0 %v213
      %v457 = vpop.f32.mrb[0].mxu0
      %v458 = vadd.f32 %v389, %v457
      %v459 = vpop.f32.mrb[0].mxu0
      %460 = vmatprep.mubr.f32.mxu0 %v223
      %461 = vmatmul.mubr.f32.gmra.mrb[0].mxu0 %v222
      %v462 = vpop.f32.mrb[0].mxu0
      %v463 = vadd.f32 %v389, %v462
      %v464 = vpop.f32.mrb[0].mxu0
      %465 = vmatprep.mubr.f32.mxu0 %v232
      %466 = vmatmul.mubr.f32.gmra.mrb[0].mxu0 %v231
      %v467 = vpop.f32.mrb[0].mxu0
      %v468 = vadd.f32 %v389, %v467
      %v469 = vpop.f32.mrb[0].mxu0
      %470 = vdwg.mxu0
      %471 = vmatprep.subr.mxu0 0.0
      %472 = vmatpush1.msra.mxu0 %v272
      %473 = vmatprep.subr.mxu0 0.0
      %474 = vmatpush1.msra.mxu0 %v273
      %475 = vmatprep.subr.mxu0 0.0
      %476 = vmatpush1.msra.mxu0 %v274
      %477 = vmatprep.subr.mxu0 0.0
      %478 = vmatpush1.msra.mxu0 %v275
      %479 = vmatprep.subr.mxu0 0.0
      %480 = vmatpush1.msra.mxu0 %v276
      %481 = vmatprep.subr.mxu0 0.0
      %482 = vmatpush1.msra.mxu0 %v277
      %483 = vmatprep.subr.mxu0 0.0
      %484 = vmatpush1.msra.mxu0 %v278
      %485 = vmatprep.subr.mxu0 0.0
      %486 = vmatpush1.msra.mxu0 %v279
      %487 = vmatprep.subr.mxu0 0.0
      %488 = vmatpush1.msra.mxu0 %v280
      %489 = vmatprep.subr.mxu0 0.0
      %490 = vmatpush1.msra.mxu0 %v281
      %491 = vmatprep.subr.mxu0 0.0
      %492 = vmatpush1.msra.mxu0 %v282
      %493 = vmatprep.subr.mxu0 0.0
      %494 = vmatpush1.msra.mxu0 %v283
      %495 = vmatprep.subr.mxu0 0.0
      %496 = vmatpush1.msra.mxu0 %v284
      %497 = vmatprep.subr.mxu0 0.0
      %498 = vmatpush1.msra.mxu0 %v285
      %499 = vmatprep.subr.mxu0 0.0
      %500 = vmatpush1.msra.mxu0 %v286
      %501 = vmatprep.subr.mxu0 0.0
      %502 = vmatpush1.msra.mxu0 %v287
      %503 = vmatprep.subr.mxu0 0.0
      %504 = vmatpush1.msra.mxu0 %v288
      %505 = vmatprep.subr.mxu0 0.0
      %506 = vmatpush1.msra.mxu0 %v289
      %507 = vmatprep.subr.mxu0 0.0
      %508 = vmatpush1.msra.mxu0 %v290
      %509 = vmatprep.subr.mxu0 0.0
      %510 = vmatpush1.msra.mxu0 %v291
      %511 = vmatprep.subr.mxu0 0.0
      %512 = vmatpush1.msra.mxu0 %v292
      %513 = vmatprep.subr.mxu0 0.0
      %514 = vmatpush1.msra.mxu0 %v293
      %515 = vmatprep.subr.mxu0 0.0
      %516 = vmatpush1.msra.mxu0 %v294
      %517 = vmatprep.subr.mxu0 0.0
      %518 = vmatpush1.msra.mxu0 %v295
      %519 = vmatprep.subr.mxu0 0.0
      %520 = vmatpush1.msra.mxu0 %v296
      %521 = vmatprep.subr.mxu0 0.0
      %522 = vmatpush1.msra.mxu0 %v297
      %523 = vmatprep.subr.mxu0 0.0
      %524 = vmatpush1.msra.mxu0 %v298
      %525 = vmatprep.subr.mxu0 0.0
      %526 = vmatpush1.msra.mxu0 %v299
      %527 = vmatprep.subr.mxu0 0.0
      %528 = vmatpush1.msra.mxu0 %v300
      %529 = vmatprep.subr.mxu0 0.0
      %530 = vmatpush1.msra.mxu0 %v301
      %531 = vmatprep.subr.mxu0 0.0
      %532 = vmatpush1.msra.mxu0 %v302
      %533 = vmatprep.subr.mxu0 0.0
      %534 = vmatpush1.msra.mxu0 %v303
      %535 = vmatprep.mubr.f32.mxu0 %v216
      %536 = vmatmul.mubr.f32.gmra.mrb[0].mxu0 %v215
      %v537 = vpop.f32.mrb[0].mxu0
      %v538 = vadd.f32 %v458, %v537
      %v539 = vpop.f32.mrb[0].mxu0
      %540 = vmatprep.mubr.f32.mxu0 %v225
      %541 = vmatmul.mubr.f32.gmra.mrb[0].mxu0 %v224
      %v542 = vpop.f32.mrb[0].mxu0
      %v543 = vadd.f32 %v463, %v542
      %v544 = vpop.f32.mrb[0].mxu0
      %545 = vmatprep.mubr.f32.mxu0 %v234
      %546 = vmatmul.mubr.f32.gmra.mrb[0].mxu0 %v233
      %v547 = vpop.f32.mrb[0].mxu0
      %v548 = vadd.f32 %v468, %v547
      %v549 = vpop.f32.mrb[0].mxu0
      %550 = vdwg.mxu0
      %551 = vmatprep.subr.mxu0 0.0
      %552 = vmatpush1.msra.mxu0 %v304
      %553 = vmatprep.subr.mxu0 0.0
      %554 = vmatpush1.msra.mxu0 %v305
      %555 = vmatprep.subr.mxu0 0.0
      %556 = vmatpush1.msra.mxu0 %v306
      %557 = vmatprep.subr.mxu0 0.0
      %558 = vmatpush1.msra.mxu0 %v307
      %559 = vmatprep.subr.mxu0 0.0
      %560 = vmatpush1.msra.mxu0 %v308
      %561 = vmatprep.subr.mxu0 0.0
      %562 = vmatpush1.msra.mxu0 %v309
      %563 = vmatprep.subr.mxu0 0.0
      %564 = vmatpush1.msra.mxu0 %v310
      %565 = vmatprep.subr.mxu0 0.0
      %566 = vmatpush1.msra.mxu0 %v311
      %567 = vmatprep.subr.mxu0 0.0
      %568 = vmatpush1.msra.mxu0 %v312
      %569 = vmatprep.subr.mxu0 0.0
      %570 = vmatpush1.msra.mxu0 %v313
      %571 = vmatprep.subr.mxu0 0.0
      %572 = vmatpush1.msra.mxu0 %v314
      %573 = vmatprep.subr.mxu0 0.0
      %574 = vmatpush1.msra.mxu0 %v315
      %575 = vmatprep.subr.mxu0 0.0
      %576 = vmatpush1.msra.mxu0 %v316
      %577 = vmatprep.subr.mxu0 0.0
      %578 = vmatpush1.msra.mxu0 %v317
      %579 = vmatprep.subr.mxu0 0.0
      %580 = vmatpush1.msra.mxu0 %v318
      %581 = vmatprep.subr.mxu0 0.0
      %582 = vmatpush1.msra.mxu0 %v319
      %583 = vmatprep.subr.mxu0 0.0
      %584 = vmatpush1.msra.mxu0 %v320
      %585 = vmatprep.subr.mxu0 0.0
      %586 = vmatpush1.msra.mxu0 %v321
      %587 = vmatprep.subr.mxu0 0.0
      %588 = vmatpush1.msra.mxu0 %v322
      %589 = vmatprep.subr.mxu0 0.0
      %590 = vmatpush1.msra.mxu0 %v323
      %591 = vmatprep.subr.mxu0 0.0
      %592 = vmatpush1.msra.mxu0 %v324
      %593 = vmatprep.subr.mxu0 0.0
      %594 = vmatpush1.msra.mxu0 %v325
      %595 = vmatprep.subr.mxu0 0.0
      %596 = vmatpush1.msra.mxu0 %v326
      %597 = vmatprep.subr.mxu0 0.0
      %598 = vmatpush1.msra.mxu0 %v327
      %599 = vmatprep.subr.mxu0 0.0
      %600 = vmatpush1.msra.mxu0 %v328
      %601 = vmatprep.subr.mxu0 0.0
      %602 = vmatpush1.msra.mxu0 %v329
      %603 = vmatprep.subr.mxu0 0.0
      %604 = vmatpush1.msra.mxu0 %v330
      %605 = vmatprep.subr.mxu0 0.0
      %606 = vmatpush1.msra.mxu0 %v331
      %607 = vmatprep.subr.mxu0 0.0
      %608 = vmatpush1.msra.mxu0 %v332
      %609 = vmatprep.subr.mxu0 0.0
      %610 = vmatpush1.msra.mxu0 %v333
      %611 = vmatprep.subr.mxu0 0.0
      %612 = vmatpush1.msra.mxu0 %v334
      %613 = vmatprep.subr.mxu0 0.0
      %614 = vmatpush1.msra.mxu0 %v335
      %615 = vmatprep.mubr.f32.mxu0 %v218
      %616 = vmatmul.mubr.f32.gmra.mrb[0].mxu0 %v217
      %v617 = vpop.f32.mrb[0].mxu0
      %v618 = vadd.f32 %v538, %v617
      %v619 = vpop.f32.mrb[0].mxu0
      %620 = vmatprep.mubr.f32.mxu0 %v227
      %621 = vmatmul.mubr.f32.gmra.mrb[0].mxu0 %v226
      %v622 = vpop.f32.mrb[0].mxu0
      %v623 = vadd.f32 %v543, %v622
      %v624 = vpop.f32.mrb[0].mxu0
      %625 = vmatprep.mubr.f32.mxu0 %v236
      %626 = vmatmul.mubr.f32.gmra.mrb[0].mxu0 %v235
      %v627 = vpop.f32.mrb[0].mxu0
      %v628 = vadd.f32 %v548, %v627
      %v629 = vpop.f32.mrb[0].mxu0
      %630 = vdwg.mxu0
      %631 = vmatprep.subr.mxu0 0.0
      %632 = vmatpush1.msra.mxu0 %v336
      %633 = vmatprep.subr.mxu0 0.0
      %634 = vmatpush1.msra.mxu0 %v337
      %635 = vmatprep.subr.mxu0 0.0
      %636 = vmatpush1.msra.mxu0 %v338
      %637 = vmatprep.subr.mxu0 0.0
      %638 = vmatpush1.msra.mxu0 %v339
      %639 = vmatprep.subr.mxu0 0.0
      %640 = vmatpush1.msra.mxu0 %v340
      %641 = vmatprep.subr.mxu0 0.0
      %642 = vmatpush1.msra.mxu0 %v341
      %643 = vmatprep.subr.mxu0 0.0
      %644 = vmatpush1.msra.mxu0 %v342
      %645 = vmatprep.subr.mxu0 0.0
      %646 = vmatpush1.msra.mxu0 %v343
      %647 = vmatprep.subr.mxu0 0.0
      %648 = vmatpush1.msra.mxu0 %v344
      %649 = vmatprep.subr.mxu0 0.0
      %650 = vmatpush1.msra.mxu0 %v345
      %651 = vmatprep.subr.mxu0 0.0
      %652 = vmatpush1.msra.mxu0 %v346
      %653 = vmatprep.subr.mxu0 0.0
      %654 = vmatpush1.msra.mxu0 %v347
      %655 = vmatprep.subr.mxu0 0.0
      %656 = vmatpush1.msra.mxu0 %v348
      %657 = vmatprep.subr.mxu0 0.0
      %658 = vmatpush1.msra.mxu0 %v349
      %659 = vmatprep.subr.mxu0 0.0
      %660 = vmatpush1.msra.mxu0 %v350
      %661 = vmatprep.subr.mxu0 0.0
      %662 = vmatpush1.msra.mxu0 %v351
      %663 = vmatprep.subr.mxu0 0.0
      %664 = vmatpush1.msra.mxu0 %v352
      %665 = vmatprep.subr.mxu0 0.0
      %666 = vmatpush1.msra.mxu0 %v353
      %667 = vmatprep.subr.mxu0 0.0
      %668 = vmatpush1.msra.mxu0 %v354
      %669 = vmatprep.subr.mxu0 0.0
      %670 = vmatpush1.msra.mxu0 %v355
      %671 = vmatprep.subr.mxu0 0.0
      %672 = vmatpush1.msra.mxu0 %v356
      %673 = vmatprep.subr.mxu0 0.0
      %674 = vmatpush1.msra.mxu0 %v357
      %675 = vmatprep.subr.mxu0 0.0
      %676 = vmatpush1.msra.mxu0 %v358
      %677 = vmatprep.subr.mxu0 0.0
      %678 = vmatpush1.msra.mxu0 %v359
      %679 = vmatprep.subr.mxu0 0.0
      %680 = vmatpush1.msra.mxu0 %v360
      %681 = vmatprep.subr.mxu0 0.0
      %682 = vmatpush1.msra.mxu0 %v361
      %683 = vmatprep.subr.mxu0 0.0
      %684 = vmatpush1.msra.mxu0 %v362
      %685 = vmatprep.subr.mxu0 0.0
      %686 = vmatpush1.msra.mxu0 %v363
      %687 = vmatprep.subr.mxu0 0.0
      %688 = vmatpush1.msra.mxu0 %v364
      %689 = vmatprep.subr.mxu0 0.0
      %690 = vmatpush1.msra.mxu0 %v365
      %691 = vmatprep.subr.mxu0 0.0
      %692 = vmatpush1.msra.mxu0 %v366
      %693 = vmatprep.subr.mxu0 0.0
      %694 = vmatpush1.msra.mxu0 %v367
      %695 = vmatprep.mubr.f32.mxu0 %v220
      %696 = vmatmul.mubr.f32.gmra.mrb[0].mxu0 %v219
      %v697 = vpop.f32.mrb[0].mxu0
      %v698 = vadd.f32 %v618, %v697
      %v699 = vpop.f32.mrb[0].mxu0
      %700 = vmatprep.mubr.f32.mxu0 %v229
      %701 = vmatmul.mubr.f32.gmra.mrb[0].mxu0 %v228
      %v702 = vpop.f32.mrb[0].mxu0
      %v703 = vadd.f32 %v623, %v702
      %v704 = vpop.f32.mrb[0].mxu0
      %705 = vmatprep.mubr.f32.mxu0 %v238
      %706 = vmatmul.mubr.f32.gmra.mrb[0].mxu0 %v237
      %v707 = vpop.f32.mrb[0].mxu0
      %v708 = vadd.f32 %v628, %v707
      %v709 = vpop.f32.mrb[0].mxu0
      %710 = vdwg.mxu0
      %711 = vmatprep.subr.mxu0 0.0
      %712 = vmatpush1.msra.mxu0 %v368
      %713 = vmatprep.subr.mxu0 0.0
      %714 = vmatpush1.msra.mxu0 %v369
      %715 = vmatprep.subr.mxu0 0.0
      %716 = vmatpush1.msra.mxu0 %v370
      %717 = vmatprep.subr.mxu0 0.0
      %718 = vmatpush1.msra.mxu0 %v371
      %719 = vmatprep.subr.mxu0 0.0
      %720 = vmatpush1.msra.mxu0 %v372
      %721 = vmatprep.subr.mxu0 0.0
      %722 = vmatpush1.msra.mxu0 %v373
      %723 = vmatprep.subr.mxu0 0.0
      %724 = vmatpush1.msra.mxu0 %v374
      %725 = vmatprep.subr.mxu0 0.0
      %726 = vmatpush1.msra.mxu0 %v375
      %727 = vmatprep.subr.mxu0 0.0
      %728 = vmatpush1.msra.mxu0 %v376
      %729 = vmatprep.subr.mxu0 0.0
      %730 = vmatpush1.msra.mxu0 %v377
      %731 = vmatprep.subr.mxu0 0.0
      %732 = vmatpush1.msra.mxu0 %v378
      %733 = vmatprep.subr.mxu0 0.0
      %734 = vmatpush1.msra.mxu0 %v379
      %735 = vmatprep.subr.mxu0 0.0
      %736 = vmatpush1.msra.mxu0 %v380
      %737 = vmatprep.subr.mxu0 0.0
      %738 = vmatpush1.msra.mxu0 %v381
      %739 = vmatprep.subr.mxu0 0.0
      %740 = vmatpush1.msra.mxu0 %v382
      %741 = vmatprep.subr.mxu0 0.0
      %742 = vmatpush1.msra.mxu0 %v383
      %743 = vmatprep.subr.mxu0 0.0
      %744 = vmatpush1.msra.mxu0 0.0
      %745 = vmatprep.subr.mxu0 0.0
      %746 = vmatpush1.msra.mxu0 0.0
      %747 = vmatprep.subr.mxu0 0.0
      %748 = vmatpush1.msra.mxu0 0.0
      %749 = vmatprep.subr.mxu0 0.0
      %750 = vmatpush1.msra.mxu0 0.0
      %751 = vmatprep.subr.mxu0 0.0
      %752 = vmatpush1.msra.mxu0 0.0
      %753 = vmatprep.subr.mxu0 0.0
      %754 = vmatpush1.msra.mxu0 0.0
      %755 = vmatprep.subr.mxu0 0.0
      %756 = vmatpush1.msra.mxu0 0.0
      %757 = vmatprep.subr.mxu0 0.0
      %758 = vmatpush1.msra.mxu0 0.0
      %759 = vmatprep.subr.mxu0 0.0
      %760 = vmatpush1.msra.mxu0 0.0
      %761 = vmatprep.subr.mxu0 0.0
      %762 = vmatpush1.msra.mxu0 0.0
      %763 = vmatprep.subr.mxu0 0.0
      %764 = vmatpush1.msra.mxu0 0.0
      %765 = vmatprep.subr.mxu0 0.0
      %766 = vmatpush1.msra.mxu0 0.0
      %767 = vmatprep.subr.mxu0 0.0
      %768 = vmatpush1.msra.mxu0 0.0
      %769 = vmatprep.subr.mxu0 0.0
      %770 = vmatpush1.msra.mxu0 0.0
      %771 = vmatprep.subr.mxu0 0.0
      %772 = vmatpush1.msra.mxu0 0.0
      %773 = vmatprep.subr.mxu0 0.0
      %774 = vmatpush1.msra.mxu0 0.0
      %775 = vmatprep.mubr.f32.mxu0 0.0
      %776 = vmatmul.mubr.f32.gmra.mrb[0].mxu0 %v221
      %v777 = vpop.f32.mrb[0].mxu0
      %v778 = vadd.f32 %v698, %v777
      %v779 = vpop.f32.mrb[0].mxu0
      %780 = vmatprep.mubr.f32.mxu0 0.0
      %781 = vmatmul.mubr.f32.gmra.mrb[0].mxu0 %v230
      %v782 = vpop.f32.mrb[0].mxu0
      %v783 = vadd.f32 %v703, %v782
      %v784 = vpop.f32.mrb[0].mxu0
      %785 = vmatprep.mubr.f32.mxu0 0.0
      %786 = vmatmul.mubr.f32.gmra.mrb[0].mxu0 %v239
      %v787 = vpop.f32.mrb[0].mxu0
      %v788 = vadd.f32 %v708, %v787
      %v789 = vpop.f32.mrb[0].mxu0
      %790 = vdwg.mxu0
      %791 = vst [vmem:[%s211] sm:$0xff] %v778
      %792 = vst [vmem:[%s211 + $0x8] sm:$0xff] %v783
      %793 = vst [vmem:[%s211 + $0x10] sm:$0xf] %v788
      %s794 = smul.u32 3, %s19
      %p795 = scmp.lt.s32.totalorder %s18, 1
      %s796 = scalar_select %p795, %s18, 1
      %p797 = scmp.lt.s32.totalorder %s794, 2
      %s798 = scalar_select %p797, %s794, 2
      %s799 = smul.addr %s796, 3
      %s800 = sadd.s32 %s798, %s799
      %s801 = smul.addr %s800, 8
      %s802 = scalar_lea.vmem %s3, %s801
      // Predicated region
      $region33: #{bev_controlnet_embedding_forward.15} parent=31 // pred_check
        %p803 = pneg %p116
      $region34: #{bev_controlnet_embedding_forward.15} parent=31 // pred_check_branch
        %805 = sbr.rel (%p803) target = $region36
      $region35: #{bev_controlnet_embedding_forward.15} parent=31 // pred_region
        %s806 = smul.u32 3, %s19
      $region36: #{bev_controlnet_embedding_forward.15} parent=31 // pred_fallthru
        _
    $region32: #{bev_controlnet_embedding_forward.15} parent=5 // pred_fallthru
      _
    %p807 = scmp.le.s32.totalorder 2, %s9
    // Predicated region
    $region37: #{bev_controlnet_embedding_forward.15} parent=5 // pred_check
      %p808 = pneg %p807
    $region38: #{bev_controlnet_embedding_forward.15} parent=5 // pred_check_branch
      %810 = sbr.rel (%p808) target = $region40
    $region39: #{bev_controlnet_embedding_forward.15} parent=5 // pred_region
      %s811 = ssub.s32 %s9, 2
      // Predicated region
      $region41: #{bev_controlnet_embedding_forward.15} parent=39 // pred_check
        %p812 = pneg %p122
      $region42: #{bev_controlnet_embedding_forward.15} parent=39 // pred_check_branch
        %814 = sbr.rel (%p812) target = $region44
      $region43: #{bev_controlnet_embedding_forward.15} parent=39 // pred_region
        %s815 = smul.u32 3, %s21
        %p816 = scmp.lt.s32.totalorder %s20, 1
        %s817 = scalar_select %p816, %s20, 1
        %p818 = scmp.lt.s32.totalorder %s815, 2
        %s819 = scalar_select %p818, %s815, 2
        %s820 = smul.addr %s817, 3
        %s821 = sadd.s32 %s819, %s820
        %s822 = smul.addr %s821, 8
        %s823 = scalar_lea.vmem %s3, %s822
      $region44: #{bev_controlnet_embedding_forward.15} parent=39 // pred_fallthru
        _
    $region40: #{bev_controlnet_embedding_forward.15} parent=5 // pred_fallthru
      _
  $region6: #{bev_controlnet_embedding_forward.15} parent=0 // loop_footer
    %s13 = sadd.s32 1, %s9
  $region7: #{bev_controlnet_embedding_forward.15} parent=0 // loop_footer_branch
    %8 = sbr.rel target = $region3
  $region8: #{bev_controlnet_embedding_forward.15} parent=0 // loop_exit
    _

</llo_original>
